<compile_context>
chip_gen: v6e
topology: v6e:2x2x1
jax: 0.10.0
libtpu: 0.0.40
codegen_flags: <defaults>
</compile_context>

<pallas_src>
import math
import functools

import numpy as np
import jax
import jax.numpy as jnp
from jax import lax
from jax.experimental import pallas as pl
from jax.experimental.pallas import tpu as pltpu

EPS = 1e-5  # nn.LayerNorm default eps


def _vmem():
    # whole-array block resident in VMEM (shapes here are tiny)
    return pl.BlockSpec(memory_space=pltpu.MemorySpace.VMEM)


def _layernorm(x, gamma, beta):
    mu = jnp.mean(x, axis=-1, keepdims=True)
    var = jnp.mean((x - mu) ** 2, axis=-1, keepdims=True)
    return (x - mu) * lax.rsqrt(var + EPS) * gamma + beta


# --------------------------------------------------------------------------
# The one fused kernel: embedding -> L encoder layers -> classification head.
# --------------------------------------------------------------------------
def fused_forward_kernel(tok_ref, mask_ref, emb_ref, pe_ref, bias_ref, pst_ref,
                         wqkvc_ref, bqkvc_ref, woc_ref, bo_ref, g_ref, b_ref,
                         w1_ref, b1_ref, w2_ref, b2_ref,
                         gm_ref, g1_ref, be1_ref, esel_ref, wac_ref, ba_ref,
                         g2_ref, be2_ref, wb_ref, bb_ref, out_ref,
                         *, num_layers):
    f32 = jnp.float32
    BS, H = pe_ref.shape                       # B*S, h_dim
    VP = emb_ref.shape[0]                      # padded vocab rows
    nchunk, G, _ = pst_ref.shape               # H // dph, B*nh*S
    dph = wqkvc_ref.shape[2] // 3
    S = esel_ref.shape[0]

    # ---- word embedding (one-hot gather on the MXU) + positional enc + mask ----
    tok = tok_ref[...]                                                    # (BS, 1) int32
    onehot = (tok == lax.broadcasted_iota(jnp.int32, (BS, VP), 1)).astype(f32)
    x = jnp.dot(onehot, emb_ref[...], preferred_element_type=f32)         # (BS, H)
    x = (x + pe_ref[...]) * mask_ref[...]                                 # Dropout == identity (eval)

    att_bias = bias_ref[...]                                              # (G, G) block-diag bias
    gamma, beta = g_ref[...], b_ref[...]

    # ---- encoder layers (the reference module re-uses the SAME mhattn / norm /
    #      ffn weights every layer, so the unrolled loop re-reads the same
    #      VMEM-resident weights; nothing leaves VMEM between layers) ----
    for _ in range(num_layers):
        # fused block-diag QKV projection + head-split relayout, all on the MXU.
        # chunk c of qkvh rows <- (row r, lane-chunk c) dph-chunks of the
        # (BS, 3H) qkv matrix, placed by the precomputed permutation pst[c].
        qkvh = jnp.zeros((G, 3 * dph), f32)
        for c in range(nchunk):
            chunk = (jnp.dot(x, wqkvc_ref[c], preferred_element_type=f32)
                     + bqkvc_ref[c])                                      # (BS, 3*dph)
            qkvh = qkvh + jnp.dot(pst_ref[c], chunk, preferred_element_type=f32)
        qh = qkvh[:, 0:dph]                                               # (G, dph)
        kh = qkvh[:, dph:2 * dph]
        vh = qkvh[:, 2 * dph:3 * dph]

        # attention for ALL (batch, head) tiles in one MXU pass; the additive
        # block-diagonal bias keeps per-head softmax exact (scale already in W_q).
        sc = lax.dot_general(qh, kh, (((1,), (1,)), ((), ())),
                             preferred_element_type=f32) + att_bias       # (G, G)
        pr = jnp.exp(sc - jnp.max(sc, axis=-1, keepdims=True))
        # approx reciprocal (EUP slot): deliberate ~1e-3-level inference approximation.
        pr = pr * pl.reciprocal(jnp.sum(pr, axis=-1, keepdims=True), approx=True)
        att_h = jnp.dot(pr, vh, preferred_element_type=f32)               # (G, dph)

        # head merge + output projection: wo is pre-chunked by rows so the merge
        # (inverse placement) fuses directly into the projection matmuls.
        attp = bo_ref[...]
        for c in range(nchunk):
            rows = lax.dot_general(pst_ref[c], att_h, (((0,), (0,)), ((), ())),
                                   preferred_element_type=f32)            # (BS, dph)
            attp = attp + jnp.dot(rows, woc_ref[c], preferred_element_type=f32)
        x = _layernorm(x + attp, gamma, beta)                             # norm(x + mhattn)

        # feed-forward + residual LayerNorm
        h = jnp.dot(x, w1_ref[...], preferred_element_type=f32) + b1_ref[...]
        h = jnp.maximum(h, 0.0)                                           # ReLU
        h = jnp.dot(h, w2_ref[...], preferred_element_type=f32) + b2_ref[...]
        x = _layernorm(x + h, gamma, beta)                                # norm(x + ffn(x))

    # ---- final head.  The Flatten to (B, S*H) is folded away:
    #      LayerNorm(S*H) uses per-batch group statistics computed in the
    #      (B*S, H) layout, and Linear(S*H, H) is accumulated per position. ----
    gm = gm_ref[...]                                                      # (B, BS) batch grouping
    n_feat = float(S * H)
    rsum = jnp.sum(x, axis=-1, keepdims=True)                             # (BS, 1)
    rsq = jnp.sum(x * x, axis=-1, keepdims=True)
    mean = jnp.dot(gm, rsum, preferred_element_type=f32) / n_feat         # (B, 1)
    var = jnp.dot(gm, rsq, preferred_element_type=f32) / n_feat - mean * mean
    mean_r = lax.dot_general(gm, mean, (((0,), (0,)), ((), ())),
                             preferred_element_type=f32)                  # (BS, 1)
    inv_r = lax.dot_general(gm, lax.rsqrt(var + EPS), (((0,), (0,)), ((), ())),
                            preferred_element_type=f32)
    xn = (x - mean_r) * inv_r * g1_ref[...] + be1_ref[...]                # LayerNorm(S*H)
    xn = jnp.clip(xn, 0.0, 6.0)                                           # ReLU6

    y = ba_ref[...]                                                       # (1, H) -> broadcasts
    for s in range(S):
        rows = jnp.dot(esel_ref[s], xn, preferred_element_type=f32)       # (B, H): row b*S+s
        y = y + jnp.dot(rows, wac_ref[s], preferred_element_type=f32)     # Linear(S*H, H) chunk
    y = _layernorm(y, g2_ref[...], be2_ref[...])
    y = jnp.clip(y, 0.0, 6.0)
    out_ref[...] = jnp.dot(y, wb_ref[...], preferred_element_type=f32) + bb_ref[...]


# --------------------------------------------------------------------------
# Parameters (deterministic, synthetic) + all precomputed placement machinery.
# The reference WordEmbedding hardcodes nn.Embedding(30522, 768); the table is
# shrunk to (vocab, h_dim) so the script runs at small shapes.
# --------------------------------------------------------------------------
def init_params(key, *, vocab, B, S, H, nh, dff):
    dph = H // nh
    BS = B * S
    nchunk = H // dph              # == nh
    G = B * nh * S                 # == nchunk * BS
    VP = ((vocab + 127) // 128) * 128
    scale = 1.0 / math.sqrt(dph)   # ScaledDotProductAttention uses sqrt(dim_per_head)

    ks = jax.random.split(key, 16)
    rn = lambda k, shape, sc=0.02: jax.random.normal(k, shape, jnp.float32) * sc
    p = {}

    # word-embedding table, zero-padded to a lane-friendly row count
    p['emb'] = jnp.zeros((VP, H), jnp.float32).at[:vocab].set(rn(ks[0], (vocab, H)))

    # PositionalEmbedding (reproduces the PyTorch construction exactly), pre-tiled
    # over batch ONCE at init (zero per-forward cost, nothing to do in XLA).
    seq = jnp.arange(S, dtype=jnp.float32).reshape(-1, 1)
    freq = jnp.power(
        10000.0,
        2.0 * jnp.floor(jnp.arange(S, dtype=jnp.float32) * 0.5) / H).reshape(-1, 1)
    pe = jnp.broadcast_to(seq / freq, (S, H))
    pe = pe.at[:, ::2].set(jnp.sin(pe[:, ::2]))
    pe = pe.at[:, 1::2].set(jnp.cos(pe[:, 1::2]))
    p['pe2d'] = jnp.tile(pe, (B, 1)).astype(jnp.float32)          # (BS, H)

    # per-head q/k/v linears (shared over heads and layers); the per-head
    # (dph,dph) linear applied after x.reshape(B,nh,S,dph) == block-diagonal
    # (H,H) linear on the (.., H) layout.  Softmax scale folded into Q.
    wq = np.asarray(rn(ks[1], (dph, dph))) * scale
    bq = np.asarray(rn(ks[2], (1, dph))) * scale
    wk, bk = np.asarray(rn(ks[3], (dph, dph))), np.asarray(rn(ks[4], (1, dph)))
    wv, bv = np.asarray(rn(ks[5], (dph, dph))), np.asarray(rn(ks[6], (1, dph)))
    eye = np.eye(nh, dtype=np.float32)
    wqkv = np.concatenate([np.kron(eye, wq), np.kron(eye, wk), np.kron(eye, wv)],
                          axis=1).astype(np.float32)              # (H, 3H)
    bqkv = np.concatenate([np.tile(bq, (1, nh)), np.tile(bk, (1, nh)),
                           np.tile(bv, (1, nh))], axis=1).astype(np.float32)

    # lane-chunked QKV weights: chunk c carries q/k/v columns [c*dph, (c+1)*dph)
    def _chunk_cols(m, c):
        return np.concatenate([m[:, c * dph:(c + 1) * dph],
                               m[:, H + c * dph:H + (c + 1) * dph],
                               m[:, 2 * H + c * dph:2 * H + (c + 1) * dph]], axis=1)
    p['wqkv_c'] = jnp.asarray(np.stack([_chunk_cols(wqkv, c) for c in range(nchunk)]))
    p['bqkv_c'] = jnp.asarray(np.stack([_chunk_cols(bqkv, c) for c in range(nchunk)]))

    # head-layout placement permutations: pst[c][g, r] = 1 iff head-layout row g
    # is the (row=r, lane-chunk=c) dph-chunk of the (BS, H) matrix — this is the
    # flat regroup performed by x.reshape(B, nh, S, dph) in the reference.
    pst = np.zeros((nchunk, G, BS), np.float32)
    for g in range(G):
        b, h, s = g // (nh * S), (g // S) % nh, g % S
        cg = b * S * nchunk + h * S + s
        pst[cg % nchunk, g, cg // nchunk] = 1.0
    p['pst'] = jnp.asarray(pst)

    # precomputed additive block-diagonal attention mask (loop-invariant)
    blk = np.arange(G) // S
    p['att_bias'] = jnp.asarray(
        np.where(blk[:, None] == blk[None, :], 0.0, -1e30).astype(np.float32))

    # MultiHeadAttention output projection, row-chunked so the head merge fuses in
    wo = np.asarray(rn(ks[7], (H, H)))
    p['wo_c'] = jnp.asarray(wo.reshape(nchunk, dph, H).astype(np.float32))
    p['bo'] = rn(ks[8], (1, H))

    # shared residual LayerNorm (same module used for both norms) and FFN
    p['gamma'], p['beta'] = jnp.ones((1, H), jnp.float32), jnp.zeros((1, H), jnp.float32)
    p['w1'], p['b1'] = rn(ks[9], (H, dff)), rn(ks[10], (1, dff))
    p['w2'], p['b2'] = rn(ks[11], (dff, H)), rn(ks[12], (1, H))

    # final head: Flatten -> LayerNorm(S*H) -> ReLU6 -> Linear(S*H,H) -> LayerNorm(H)
    #             -> ReLU6 -> Linear(H,2); flatten handled via group stats + chunks.
    gm = np.zeros((B, BS), np.float32)
    gm[np.arange(BS) // S, np.arange(BS)] = 1.0
    p['gm'] = jnp.asarray(gm)
    p['g1_2d'] = jnp.ones((BS, H), jnp.float32)     # LayerNorm(S*H) weight, (S,H)-view tiled
    p['be1_2d'] = jnp.zeros((BS, H), jnp.float32)
    esel = np.zeros((S, B, BS), np.float32)
    for s in range(S):
        esel[s, np.arange(B), np.arange(B) * S + s] = 1.0
    p['esel'] = jnp.asarray(esel)
    p['wa_c'] = rn(ks[13], (S * H, H)).reshape(S, H, H)            # Linear(S*H,H), chunked by s
    p['ba'] = jnp.zeros((1, H), jnp.float32)
    p['g2'], p['be2'] = jnp.ones((1, H), jnp.float32), jnp.zeros((1, H), jnp.float32)
    p['wb'], p['bb'] = rn(ks[14], (H, 2)), jnp.zeros((1, 2), jnp.float32)
    return p


# --------------------------------------------------------------------------
# Full forward pass: ONE pallas_call for everything.
# --------------------------------------------------------------------------
def transformer_encoder(tokens, masks, p, *, B, S, H, nh, num_layers):
    BS = B * S
    kernel = functools.partial(fused_forward_kernel, num_layers=num_layers)
    args = (tokens.reshape(BS, 1).astype(jnp.int32),
            masks.astype(jnp.float32).reshape(BS, 1),
            p['emb'], p['pe2d'], p['att_bias'], p['pst'],
            p['wqkv_c'], p['bqkv_c'], p['wo_c'], p['bo'],
            p['gamma'], p['beta'], p['w1'], p['b1'], p['w2'], p['b2'],
            p['gm'], p['g1_2d'], p['be1_2d'], p['esel'], p['wa_c'], p['ba'],
            p['g2'], p['be2'], p['wb'], p['bb'])
    return pl.pallas_call(
        kernel,
        out_shape=jax.ShapeDtypeStruct((B, 2), jnp.float32),
        in_specs=[_vmem() for _ in args],
        out_specs=_vmem(),
    )(*args)


if __name__ == "__main__":
    B, S, H, nh, dff, L, vocab = 2, 8, 64, 8, 128, 2, 100

    key = jax.random.PRNGKey(0)
    kp, kt, km = jax.random.split(key, 3)
    params = init_params(kp, vocab=vocab, B=B, S=S, H=H, nh=nh, dff=dff)

    tokens = jax.random.randint(kt, (B, S), 0, vocab, dtype=jnp.int32)
    masks = (jax.random.uniform(km, (B, S)) > 0.2).astype(jnp.float32)

    fwd = jax.jit(functools.partial(transformer_encoder,
                                    B=B, S=S, H=H, nh=nh, num_layers=L))
    out = fwd(tokens, masks, params)
    out = jax.block_until_ready(out)
    assert out.shape == (B, 2) and out.dtype == jnp.float32
    print("KERNEL_OK")
</pallas_src>

<mosaic_0001>
module attributes {stable_mosaic.version = 11 : i64} {
  func.func @fused_forward_kernel(%arg0: memref<16x1xi32, #tpu.memory_space<vmem>>, %arg1: memref<16x1xf32, #tpu.memory_space<vmem>>, %arg2: memref<128x64xf32, #tpu.memory_space<vmem>>, %arg3: memref<16x64xf32, #tpu.memory_space<vmem>>, %arg4: memref<128x128xf32, #tpu.memory_space<vmem>>, %arg5: memref<8x128x16xf32, #tpu.memory_space<vmem>>, %arg6: memref<8x64x24xf32, #tpu.memory_space<vmem>>, %arg7: memref<8x1x24xf32, #tpu.memory_space<vmem>>, %arg8: memref<8x8x64xf32, #tpu.memory_space<vmem>>, %arg9: memref<1x64xf32, #tpu.memory_space<vmem>>, %arg10: memref<1x64xf32, #tpu.memory_space<vmem>>, %arg11: memref<1x64xf32, #tpu.memory_space<vmem>>, %arg12: memref<64x128xf32, #tpu.memory_space<vmem>>, %arg13: memref<1x128xf32, #tpu.memory_space<vmem>>, %arg14: memref<128x64xf32, #tpu.memory_space<vmem>>, %arg15: memref<1x64xf32, #tpu.memory_space<vmem>>, %arg16: memref<2x16xf32, #tpu.memory_space<vmem>>, %arg17: memref<16x64xf32, #tpu.memory_space<vmem>>, %arg18: memref<16x64xf32, #tpu.memory_space<vmem>>, %arg19: memref<8x2x16xf32, #tpu.memory_space<vmem>>, %arg20: memref<8x64x64xf32, #tpu.memory_space<vmem>>, %arg21: memref<1x64xf32, #tpu.memory_space<vmem>>, %arg22: memref<1x64xf32, #tpu.memory_space<vmem>>, %arg23: memref<1x64xf32, #tpu.memory_space<vmem>>, %arg24: memref<64x2xf32, #tpu.memory_space<vmem>>, %arg25: memref<1x2xf32, #tpu.memory_space<vmem>>, %arg26: memref<2x2xf32, #tpu.memory_space<vmem>>) attributes {dimension_semantics = [], scalar_prefetch = 0 : i64, scratch_operands = 0 : i64, tpu.core_type = #tpu.core_type<tc>} {
    %c0 = arith.constant 0 : index
    %c0_0 = arith.constant 0 : index
    %0 = vector.load %arg0[%c0, %c0_0] : memref<16x1xi32, #tpu.memory_space<vmem>>, vector<16x1xi32>
    %1 = tpu.iota {dimensions = array<i32: 1>} : vector<16x128xi32>
    %2 = vector.broadcast %0 : vector<16x1xi32> to vector<16x128xi32>
    %3 = arith.cmpi eq, %2, %1 : vector<16x128xi32>
    %4 = arith.extui %3 : vector<16x128xi1> to vector<16x128xi32>
    %5 = arith.sitofp %4 : vector<16x128xi32> to vector<16x128xf32>
    %c0_1 = arith.constant 0 : index
    %c0_2 = arith.constant 0 : index
    %6 = vector.load %arg2[%c0_1, %c0_2] : memref<128x64xf32, #tpu.memory_space<vmem>>, vector<128x64xf32>
    %cst = arith.constant dense<0.000000e+00> : vector<16x64xf32>
    %7 = tpu.matmul %5, %6, %cst {dimension_numbers = #tpu.dot_dimension_numbers<[1], [0], [0], [1], [0, 0, 1, 1], [], []>} : vector<16x128xf32>, vector<128x64xf32>, vector<16x64xf32> -> vector<16x64xf32>
    %c0_3 = arith.constant 0 : index
    %c0_4 = arith.constant 0 : index
    %8 = vector.load %arg3[%c0_3, %c0_4] : memref<16x64xf32, #tpu.memory_space<vmem>>, vector<16x64xf32>
    %9 = arith.addf %7, %8 : vector<16x64xf32>
    %c0_5 = arith.constant 0 : index
    %c0_6 = arith.constant 0 : index
    %10 = vector.load %arg1[%c0_5, %c0_6] : memref<16x1xf32, #tpu.memory_space<vmem>>, vector<16x1xf32>
    %11 = vector.broadcast %10 : vector<16x1xf32> to vector<16x64xf32>
    %12 = arith.mulf %9, %11 : vector<16x64xf32>
    %c0_7 = arith.constant 0 : index
    %c0_8 = arith.constant 0 : index
    %13 = vector.load %arg4[%c0_7, %c0_8] : memref<128x128xf32, #tpu.memory_space<vmem>>, vector<128x128xf32>
    %c0_9 = arith.constant 0 : index
    %c0_10 = arith.constant 0 : index
    %14 = vector.load %arg10[%c0_9, %c0_10] : memref<1x64xf32, #tpu.memory_space<vmem>>, vector<1x64xf32>
    %c0_11 = arith.constant 0 : index
    %c0_12 = arith.constant 0 : index
    %15 = vector.load %arg11[%c0_11, %c0_12] : memref<1x64xf32, #tpu.memory_space<vmem>>, vector<1x64xf32>
    %cst_13 = arith.constant 0.000000e+00 : f32
    %16 = vector.broadcast %cst_13 : f32 to vector<128x24xf32>
    %c0_14 = arith.constant 0 : index
    %c0_15 = arith.constant 0 : index
    %c0_16 = arith.constant 0 : index
    %17 = vector.load %arg6[%c0_14, %c0_15, %c0_16] : memref<8x64x24xf32, #tpu.memory_space<vmem>>, vector<1x64x24xf32>
    %18 = vector.shape_cast %17 : vector<1x64x24xf32> to vector<64x24xf32>
    %cst_17 = arith.constant dense<0.000000e+00> : vector<16x24xf32>
    %19 = tpu.matmul %12, %18, %cst_17 {dimension_numbers = #tpu.dot_dimension_numbers<[1], [0], [0], [1], [0, 0, 1, 1], [], []>} : vector<16x64xf32>, vector<64x24xf32>, vector<16x24xf32> -> vector<16x24xf32>
    %c0_18 = arith.constant 0 : index
    %c0_19 = arith.constant 0 : index
    %c0_20 = arith.constant 0 : index
    %20 = vector.load %arg7[%c0_18, %c0_19, %c0_20] : memref<8x1x24xf32, #tpu.memory_space<vmem>>, vector<1x1x24xf32>
    %21 = vector.shape_cast %20 : vector<1x1x24xf32> to vector<1x24xf32>
    %22 = vector.broadcast %21 : vector<1x24xf32> to vector<16x24xf32>
    %23 = arith.addf %19, %22 : vector<16x24xf32>
    %c0_21 = arith.constant 0 : index
    %c0_22 = arith.constant 0 : index
    %c0_23 = arith.constant 0 : index
    %24 = vector.load %arg5[%c0_21, %c0_22, %c0_23] : memref<8x128x16xf32, #tpu.memory_space<vmem>>, vector<1x128x16xf32>
    %25 = vector.shape_cast %24 : vector<1x128x16xf32> to vector<128x16xf32>
    %cst_24 = arith.constant dense<0.000000e+00> : vector<128x24xf32>
    %26 = tpu.matmul %25, %23, %cst_24 {dimension_numbers = #tpu.dot_dimension_numbers<[1], [0], [0], [1], [0, 0, 1, 1], [], []>} : vector<128x16xf32>, vector<16x24xf32>, vector<128x24xf32> -> vector<128x24xf32>
    %27 = arith.addf %16, %26 : vector<128x24xf32>
    %c1 = arith.constant 1 : index
    %c0_25 = arith.constant 0 : index
    %c0_26 = arith.constant 0 : index
    %28 = vector.load %arg6[%c1, %c0_25, %c0_26] : memref<8x64x24xf32, #tpu.memory_space<vmem>>, vector<1x64x24xf32>
    %29 = vector.shape_cast %28 : vector<1x64x24xf32> to vector<64x24xf32>
    %cst_27 = arith.constant dense<0.000000e+00> : vector<16x24xf32>
    %30 = tpu.matmul %12, %29, %cst_27 {dimension_numbers = #tpu.dot_dimension_numbers<[1], [0], [0], [1], [0, 0, 1, 1], [], []>} : vector<16x64xf32>, vector<64x24xf32>, vector<16x24xf32> -> vector<16x24xf32>
    %c1_28 = arith.constant 1 : index
    %c0_29 = arith.constant 0 : index
    %c0_30 = arith.constant 0 : index
    %31 = vector.load %arg7[%c1_28, %c0_29, %c0_30] : memref<8x1x24xf32, #tpu.memory_space<vmem>>, vector<1x1x24xf32>
    %32 = vector.shape_cast %31 : vector<1x1x24xf32> to vector<1x24xf32>
    %33 = vector.broadcast %32 : vector<1x24xf32> to vector<16x24xf32>
    %34 = arith.addf %30, %33 : vector<16x24xf32>
    %c1_31 = arith.constant 1 : index
    %c0_32 = arith.constant 0 : index
    %c0_33 = arith.constant 0 : index
    %35 = vector.load %arg5[%c1_31, %c0_32, %c0_33] : memref<8x128x16xf32, #tpu.memory_space<vmem>>, vector<1x128x16xf32>
    %36 = vector.shape_cast %35 : vector<1x128x16xf32> to vector<128x16xf32>
    %cst_34 = arith.constant dense<0.000000e+00> : vector<128x24xf32>
    %37 = tpu.matmul %36, %34, %cst_34 {dimension_numbers = #tpu.dot_dimension_numbers<[1], [0], [0], [1], [0, 0, 1, 1], [], []>} : vector<128x16xf32>, vector<16x24xf32>, vector<128x24xf32> -> vector<128x24xf32>
    %38 = arith.addf %27, %37 : vector<128x24xf32>
    %c2 = arith.constant 2 : index
    %c0_35 = arith.constant 0 : index
    %c0_36 = arith.constant 0 : index
    %39 = vector.load %arg6[%c2, %c0_35, %c0_36] : memref<8x64x24xf32, #tpu.memory_space<vmem>>, vector<1x64x24xf32>
    %40 = vector.shape_cast %39 : vector<1x64x24xf32> to vector<64x24xf32>
    %cst_37 = arith.constant dense<0.000000e+00> : vector<16x24xf32>
    %41 = tpu.matmul %12, %40, %cst_37 {dimension_numbers = #tpu.dot_dimension_numbers<[1], [0], [0], [1], [0, 0, 1, 1], [], []>} : vector<16x64xf32>, vector<64x24xf32>, vector<16x24xf32> -> vector<16x24xf32>
    %c2_38 = arith.constant 2 : index
    %c0_39 = arith.constant 0 : index
    %c0_40 = arith.constant 0 : index
    %42 = vector.load %arg7[%c2_38, %c0_39, %c0_40] : memref<8x1x24xf32, #tpu.memory_space<vmem>>, vector<1x1x24xf32>
    %43 = vector.shape_cast %42 : vector<1x1x24xf32> to vector<1x24xf32>
    %44 = vector.broadcast %43 : vector<1x24xf32> to vector<16x24xf32>
    %45 = arith.addf %41, %44 : vector<16x24xf32>
    %c2_41 = arith.constant 2 : index
    %c0_42 = arith.constant 0 : index
    %c0_43 = arith.constant 0 : index
    %46 = vector.load %arg5[%c2_41, %c0_42, %c0_43] : memref<8x128x16xf32, #tpu.memory_space<vmem>>, vector<1x128x16xf32>
    %47 = vector.shape_cast %46 : vector<1x128x16xf32> to vector<128x16xf32>
    %cst_44 = arith.constant dense<0.000000e+00> : vector<128x24xf32>
    %48 = tpu.matmul %47, %45, %cst_44 {dimension_numbers = #tpu.dot_dimension_numbers<[1], [0], [0], [1], [0, 0, 1, 1], [], []>} : vector<128x16xf32>, vector<16x24xf32>, vector<128x24xf32> -> vector<128x24xf32>
    %49 = arith.addf %38, %48 : vector<128x24xf32>
    %c3 = arith.constant 3 : index
    %c0_45 = arith.constant 0 : index
    %c0_46 = arith.constant 0 : index
    %50 = vector.load %arg6[%c3, %c0_45, %c0_46] : memref<8x64x24xf32, #tpu.memory_space<vmem>>, vector<1x64x24xf32>
    %51 = vector.shape_cast %50 : vector<1x64x24xf32> to vector<64x24xf32>
    %cst_47 = arith.constant dense<0.000000e+00> : vector<16x24xf32>
    %52 = tpu.matmul %12, %51, %cst_47 {dimension_numbers = #tpu.dot_dimension_numbers<[1], [0], [0], [1], [0, 0, 1, 1], [], []>} : vector<16x64xf32>, vector<64x24xf32>, vector<16x24xf32> -> vector<16x24xf32>
    %c3_48 = arith.constant 3 : index
    %c0_49 = arith.constant 0 : index
    %c0_50 = arith.constant 0 : index
    %53 = vector.load %arg7[%c3_48, %c0_49, %c0_50] : memref<8x1x24xf32, #tpu.memory_space<vmem>>, vector<1x1x24xf32>
    %54 = vector.shape_cast %53 : vector<1x1x24xf32> to vector<1x24xf32>
    %55 = vector.broadcast %54 : vector<1x24xf32> to vector<16x24xf32>
    %56 = arith.addf %52, %55 : vector<16x24xf32>
    %c3_51 = arith.constant 3 : index
    %c0_52 = arith.constant 0 : index
    %c0_53 = arith.constant 0 : index
    %57 = vector.load %arg5[%c3_51, %c0_52, %c0_53] : memref<8x128x16xf32, #tpu.memory_space<vmem>>, vector<1x128x16xf32>
    %58 = vector.shape_cast %57 : vector<1x128x16xf32> to vector<128x16xf32>
    %cst_54 = arith.constant dense<0.000000e+00> : vector<128x24xf32>
    %59 = tpu.matmul %58, %56, %cst_54 {dimension_numbers = #tpu.dot_dimension_numbers<[1], [0], [0], [1], [0, 0, 1, 1], [], []>} : vector<128x16xf32>, vector<16x24xf32>, vector<128x24xf32> -> vector<128x24xf32>
    %60 = arith.addf %49, %59 : vector<128x24xf32>
    %c4 = arith.constant 4 : index
    %c0_55 = arith.constant 0 : index
    %c0_56 = arith.constant 0 : index
    %61 = vector.load %arg6[%c4, %c0_55, %c0_56] : memref<8x64x24xf32, #tpu.memory_space<vmem>>, vector<1x64x24xf32>
    %62 = vector.shape_cast %61 : vector<1x64x24xf32> to vector<64x24xf32>
    %cst_57 = arith.constant dense<0.000000e+00> : vector<16x24xf32>
    %63 = tpu.matmul %12, %62, %cst_57 {dimension_numbers = #tpu.dot_dimension_numbers<[1], [0], [0], [1], [0, 0, 1, 1], [], []>} : vector<16x64xf32>, vector<64x24xf32>, vector<16x24xf32> -> vector<16x24xf32>
    %c4_58 = arith.constant 4 : index
    %c0_59 = arith.constant 0 : index
    %c0_60 = arith.constant 0 : index
    %64 = vector.load %arg7[%c4_58, %c0_59, %c0_60] : memref<8x1x24xf32, #tpu.memory_space<vmem>>, vector<1x1x24xf32>
    %65 = vector.shape_cast %64 : vector<1x1x24xf32> to vector<1x24xf32>
    %66 = vector.broadcast %65 : vector<1x24xf32> to vector<16x24xf32>
    %67 = arith.addf %63, %66 : vector<16x24xf32>
    %c4_61 = arith.constant 4 : index
    %c0_62 = arith.constant 0 : index
    %c0_63 = arith.constant 0 : index
    %68 = vector.load %arg5[%c4_61, %c0_62, %c0_63] : memref<8x128x16xf32, #tpu.memory_space<vmem>>, vector<1x128x16xf32>
    %69 = vector.shape_cast %68 : vector<1x128x16xf32> to vector<128x16xf32>
    %cst_64 = arith.constant dense<0.000000e+00> : vector<128x24xf32>
    %70 = tpu.matmul %69, %67, %cst_64 {dimension_numbers = #tpu.dot_dimension_numbers<[1], [0], [0], [1], [0, 0, 1, 1], [], []>} : vector<128x16xf32>, vector<16x24xf32>, vector<128x24xf32> -> vector<128x24xf32>
    %71 = arith.addf %60, %70 : vector<128x24xf32>
    %c5 = arith.constant 5 : index
    %c0_65 = arith.constant 0 : index
    %c0_66 = arith.constant 0 : index
    %72 = vector.load %arg6[%c5, %c0_65, %c0_66] : memref<8x64x24xf32, #tpu.memory_space<vmem>>, vector<1x64x24xf32>
    %73 = vector.shape_cast %72 : vector<1x64x24xf32> to vector<64x24xf32>
    %cst_67 = arith.constant dense<0.000000e+00> : vector<16x24xf32>
    %74 = tpu.matmul %12, %73, %cst_67 {dimension_numbers = #tpu.dot_dimension_numbers<[1], [0], [0], [1], [0, 0, 1, 1], [], []>} : vector<16x64xf32>, vector<64x24xf32>, vector<16x24xf32> -> vector<16x24xf32>
    %c5_68 = arith.constant 5 : index
    %c0_69 = arith.constant 0 : index
    %c0_70 = arith.constant 0 : index
    %75 = vector.load %arg7[%c5_68, %c0_69, %c0_70] : memref<8x1x24xf32, #tpu.memory_space<vmem>>, vector<1x1x24xf32>
    %76 = vector.shape_cast %75 : vector<1x1x24xf32> to vector<1x24xf32>
    %77 = vector.broadcast %76 : vector<1x24xf32> to vector<16x24xf32>
    %78 = arith.addf %74, %77 : vector<16x24xf32>
    %c5_71 = arith.constant 5 : index
    %c0_72 = arith.constant 0 : index
    %c0_73 = arith.constant 0 : index
    %79 = vector.load %arg5[%c5_71, %c0_72, %c0_73] : memref<8x128x16xf32, #tpu.memory_space<vmem>>, vector<1x128x16xf32>
    %80 = vector.shape_cast %79 : vector<1x128x16xf32> to vector<128x16xf32>
    %cst_74 = arith.constant dense<0.000000e+00> : vector<128x24xf32>
    %81 = tpu.matmul %80, %78, %cst_74 {dimension_numbers = #tpu.dot_dimension_numbers<[1], [0], [0], [1], [0, 0, 1, 1], [], []>} : vector<128x16xf32>, vector<16x24xf32>, vector<128x24xf32> -> vector<128x24xf32>
    %82 = arith.addf %71, %81 : vector<128x24xf32>
    %c6 = arith.constant 6 : index
    %c0_75 = arith.constant 0 : index
    %c0_76 = arith.constant 0 : index
    %83 = vector.load %arg6[%c6, %c0_75, %c0_76] : memref<8x64x24xf32, #tpu.memory_space<vmem>>, vector<1x64x24xf32>
    %84 = vector.shape_cast %83 : vector<1x64x24xf32> to vector<64x24xf32>
    %cst_77 = arith.constant dense<0.000000e+00> : vector<16x24xf32>
    %85 = tpu.matmul %12, %84, %cst_77 {dimension_numbers = #tpu.dot_dimension_numbers<[1], [0], [0], [1], [0, 0, 1, 1], [], []>} : vector<16x64xf32>, vector<64x24xf32>, vector<16x24xf32> -> vector<16x24xf32>
    %c6_78 = arith.constant 6 : index
    %c0_79 = arith.constant 0 : index
    %c0_80 = arith.constant 0 : index
    %86 = vector.load %arg7[%c6_78, %c0_79, %c0_80] : memref<8x1x24xf32, #tpu.memory_space<vmem>>, vector<1x1x24xf32>
    %87 = vector.shape_cast %86 : vector<1x1x24xf32> to vector<1x24xf32>
    %88 = vector.broadcast %87 : vector<1x24xf32> to vector<16x24xf32>
    %89 = arith.addf %85, %88 : vector<16x24xf32>
    %c6_81 = arith.constant 6 : index
    %c0_82 = arith.constant 0 : index
    %c0_83 = arith.constant 0 : index
    %90 = vector.load %arg5[%c6_81, %c0_82, %c0_83] : memref<8x128x16xf32, #tpu.memory_space<vmem>>, vector<1x128x16xf32>
    %91 = vector.shape_cast %90 : vector<1x128x16xf32> to vector<128x16xf32>
    %cst_84 = arith.constant dense<0.000000e+00> : vector<128x24xf32>
    %92 = tpu.matmul %91, %89, %cst_84 {dimension_numbers = #tpu.dot_dimension_numbers<[1], [0], [0], [1], [0, 0, 1, 1], [], []>} : vector<128x16xf32>, vector<16x24xf32>, vector<128x24xf32> -> vector<128x24xf32>
    %93 = arith.addf %82, %92 : vector<128x24xf32>
    %c7 = arith.constant 7 : index
    %c0_85 = arith.constant 0 : index
    %c0_86 = arith.constant 0 : index
    %94 = vector.load %arg6[%c7, %c0_85, %c0_86] : memref<8x64x24xf32, #tpu.memory_space<vmem>>, vector<1x64x24xf32>
    %95 = vector.shape_cast %94 : vector<1x64x24xf32> to vector<64x24xf32>
    %cst_87 = arith.constant dense<0.000000e+00> : vector<16x24xf32>
    %96 = tpu.matmul %12, %95, %cst_87 {dimension_numbers = #tpu.dot_dimension_numbers<[1], [0], [0], [1], [0, 0, 1, 1], [], []>} : vector<16x64xf32>, vector<64x24xf32>, vector<16x24xf32> -> vector<16x24xf32>
    %c7_88 = arith.constant 7 : index
    %c0_89 = arith.constant 0 : index
    %c0_90 = arith.constant 0 : index
    %97 = vector.load %arg7[%c7_88, %c0_89, %c0_90] : memref<8x1x24xf32, #tpu.memory_space<vmem>>, vector<1x1x24xf32>
    %98 = vector.shape_cast %97 : vector<1x1x24xf32> to vector<1x24xf32>
    %99 = vector.broadcast %98 : vector<1x24xf32> to vector<16x24xf32>
    %100 = arith.addf %96, %99 : vector<16x24xf32>
    %c7_91 = arith.constant 7 : index
    %c0_92 = arith.constant 0 : index
    %c0_93 = arith.constant 0 : index
    %101 = vector.load %arg5[%c7_91, %c0_92, %c0_93] : memref<8x128x16xf32, #tpu.memory_space<vmem>>, vector<1x128x16xf32>
    %102 = vector.shape_cast %101 : vector<1x128x16xf32> to vector<128x16xf32>
    %cst_94 = arith.constant dense<0.000000e+00> : vector<128x24xf32>
    %103 = tpu.matmul %102, %100, %cst_94 {dimension_numbers = #tpu.dot_dimension_numbers<[1], [0], [0], [1], [0, 0, 1, 1], [], []>} : vector<128x16xf32>, vector<16x24xf32>, vector<128x24xf32> -> vector<128x24xf32>
    %104 = arith.addf %93, %103 : vector<128x24xf32>
    %105 = vector.extract_strided_slice %104 {offsets = [0, 0], sizes = [128, 8], strides = [1, 1]} : vector<128x24xf32> to vector<128x8xf32>
    %106 = vector.extract_strided_slice %104 {offsets = [0, 8], sizes = [128, 8], strides = [1, 1]} : vector<128x24xf32> to vector<128x8xf32>
    %107 = vector.extract_strided_slice %104 {offsets = [0, 16], sizes = [128, 8], strides = [1, 1]} : vector<128x24xf32> to vector<128x8xf32>
    %cst_95 = arith.constant dense<0.000000e+00> : vector<128x128xf32>
    %108 = tpu.matmul %105, %106, %cst_95 {dimension_numbers = #tpu.dot_dimension_numbers<[1], [1], [0], [0], [0, 0, 1, 0], [], []>} : vector<128x8xf32>, vector<128x8xf32>, vector<128x128xf32> -> vector<128x128xf32>
    %109 = arith.addf %108, %13 : vector<128x128xf32>
    %cst_96 = arith.constant dense<0xFF800000> : vector<128xf32>
    %110 = vector.multi_reduction <maximumf>, %109, %cst_96 [1] : vector<128x128xf32> to vector<128xf32>
    %111 = vector.shape_cast %110 : vector<128xf32> to vector<128x1xf32>
    %112 = vector.broadcast %111 : vector<128x1xf32> to vector<128x128xf32>
    %113 = arith.subf %109, %112 : vector<128x128xf32>
    %114 = math.exp %113 : vector<128x128xf32>
    %cst_97 = arith.constant dense<0.000000e+00> : vector<128xf32>
    %115 = vector.multi_reduction <add>, %114, %cst_97 [1] : vector<128x128xf32> to vector<128xf32>
    %116 = vector.shape_cast %115 : vector<128xf32> to vector<128x1xf32>
    %117 = tpu.reciprocal %116 {approx = true} : vector<128x1xf32> -> vector<128x1xf32>
    %118 = vector.broadcast %117 : vector<128x1xf32> to vector<128x128xf32>
    %119 = arith.mulf %114, %118 : vector<128x128xf32>
    %cst_98 = arith.constant dense<0.000000e+00> : vector<128x8xf32>
    %120 = tpu.matmul %119, %107, %cst_98 {dimension_numbers = #tpu.dot_dimension_numbers<[1], [0], [0], [1], [0, 0, 1, 1], [], []>} : vector<128x128xf32>, vector<128x8xf32>, vector<128x8xf32> -> vector<128x8xf32>
    %c0_99 = arith.constant 0 : index
    %c0_100 = arith.constant 0 : index
    %121 = vector.load %arg9[%c0_99, %c0_100] : memref<1x64xf32, #tpu.memory_space<vmem>>, vector<1x64xf32>
    %c0_101 = arith.constant 0 : index
    %c0_102 = arith.constant 0 : index
    %c0_103 = arith.constant 0 : index
    %122 = vector.load %arg5[%c0_101, %c0_102, %c0_103] : memref<8x128x16xf32, #tpu.memory_space<vmem>>, vector<1x128x16xf32>
    %123 = vector.shape_cast %122 : vector<1x128x16xf32> to vector<128x16xf32>
    %cst_104 = arith.constant dense<0.000000e+00> : vector<16x8xf32>
    %124 = tpu.matmul %123, %120, %cst_104 {dimension_numbers = #tpu.dot_dimension_numbers<[0], [0], [1], [1], [0, 1, 1, 1], [], []>} : vector<128x16xf32>, vector<128x8xf32>, vector<16x8xf32> -> vector<16x8xf32>
    %c0_105 = arith.constant 0 : index
    %c0_106 = arith.constant 0 : index
    %c0_107 = arith.constant 0 : index
    %125 = vector.load %arg8[%c0_105, %c0_106, %c0_107] : memref<8x8x64xf32, #tpu.memory_space<vmem>>, vector<1x8x64xf32>
    %126 = vector.shape_cast %125 : vector<1x8x64xf32> to vector<8x64xf32>
    %cst_108 = arith.constant dense<0.000000e+00> : vector<16x64xf32>
    %127 = tpu.matmul %124, %126, %cst_108 {dimension_numbers = #tpu.dot_dimension_numbers<[1], [0], [0], [1], [0, 0, 1, 1], [], []>} : vector<16x8xf32>, vector<8x64xf32>, vector<16x64xf32> -> vector<16x64xf32>
    %128 = vector.broadcast %121 : vector<1x64xf32> to vector<16x64xf32>
    %129 = arith.addf %128, %127 : vector<16x64xf32>
    %c1_109 = arith.constant 1 : index
    %c0_110 = arith.constant 0 : index
    %c0_111 = arith.constant 0 : index
    %130 = vector.load %arg5[%c1_109, %c0_110, %c0_111] : memref<8x128x16xf32, #tpu.memory_space<vmem>>, vector<1x128x16xf32>
    %131 = vector.shape_cast %130 : vector<1x128x16xf32> to vector<128x16xf32>
    %cst_112 = arith.constant dense<0.000000e+00> : vector<16x8xf32>
    %132 = tpu.matmul %131, %120, %cst_112 {dimension_numbers = #tpu.dot_dimension_numbers<[0], [0], [1], [1], [0, 1, 1, 1], [], []>} : vector<128x16xf32>, vector<128x8xf32>, vector<16x8xf32> -> vector<16x8xf32>
    %c1_113 = arith.constant 1 : index
    %c0_114 = arith.constant 0 : index
    %c0_115 = arith.constant 0 : index
    %133 = vector.load %arg8[%c1_113, %c0_114, %c0_115] : memref<8x8x64xf32, #tpu.memory_space<vmem>>, vector<1x8x64xf32>
    %134 = vector.shape_cast %133 : vector<1x8x64xf32> to vector<8x64xf32>
    %cst_116 = arith.constant dense<0.000000e+00> : vector<16x64xf32>
    %135 = tpu.matmul %132, %134, %cst_116 {dimension_numbers = #tpu.dot_dimension_numbers<[1], [0], [0], [1], [0, 0, 1, 1], [], []>} : vector<16x8xf32>, vector<8x64xf32>, vector<16x64xf32> -> vector<16x64xf32>
    %136 = arith.addf %129, %135 : vector<16x64xf32>
    %c2_117 = arith.constant 2 : index
    %c0_118 = arith.constant 0 : index
    %c0_119 = arith.constant 0 : index
    %137 = vector.load %arg5[%c2_117, %c0_118, %c0_119] : memref<8x128x16xf32, #tpu.memory_space<vmem>>, vector<1x128x16xf32>
    %138 = vector.shape_cast %137 : vector<1x128x16xf32> to vector<128x16xf32>
    %cst_120 = arith.constant dense<0.000000e+00> : vector<16x8xf32>
    %139 = tpu.matmul %138, %120, %cst_120 {dimension_numbers = #tpu.dot_dimension_numbers<[0], [0], [1], [1], [0, 1, 1, 1], [], []>} : vector<128x16xf32>, vector<128x8xf32>, vector<16x8xf32> -> vector<16x8xf32>
    %c2_121 = arith.constant 2 : index
    %c0_122 = arith.constant 0 : index
    %c0_123 = arith.constant 0 : index
    %140 = vector.load %arg8[%c2_121, %c0_122, %c0_123] : memref<8x8x64xf32, #tpu.memory_space<vmem>>, vector<1x8x64xf32>
    %141 = vector.shape_cast %140 : vector<1x8x64xf32> to vector<8x64xf32>
    %cst_124 = arith.constant dense<0.000000e+00> : vector<16x64xf32>
    %142 = tpu.matmul %139, %141, %cst_124 {dimension_numbers = #tpu.dot_dimension_numbers<[1], [0], [0], [1], [0, 0, 1, 1], [], []>} : vector<16x8xf32>, vector<8x64xf32>, vector<16x64xf32> -> vector<16x64xf32>
    %143 = arith.addf %136, %142 : vector<16x64xf32>
    %c3_125 = arith.constant 3 : index
    %c0_126 = arith.constant 0 : index
    %c0_127 = arith.constant 0 : index
    %144 = vector.load %arg5[%c3_125, %c0_126, %c0_127] : memref<8x128x16xf32, #tpu.memory_space<vmem>>, vector<1x128x16xf32>
    %145 = vector.shape_cast %144 : vector<1x128x16xf32> to vector<128x16xf32>
    %cst_128 = arith.constant dense<0.000000e+00> : vector<16x8xf32>
    %146 = tpu.matmul %145, %120, %cst_128 {dimension_numbers = #tpu.dot_dimension_numbers<[0], [0], [1], [1], [0, 1, 1, 1], [], []>} : vector<128x16xf32>, vector<128x8xf32>, vector<16x8xf32> -> vector<16x8xf32>
    %c3_129 = arith.constant 3 : index
    %c0_130 = arith.constant 0 : index
    %c0_131 = arith.constant 0 : index
    %147 = vector.load %arg8[%c3_129, %c0_130, %c0_131] : memref<8x8x64xf32, #tpu.memory_space<vmem>>, vector<1x8x64xf32>
    %148 = vector.shape_cast %147 : vector<1x8x64xf32> to vector<8x64xf32>
    %cst_132 = arith.constant dense<0.000000e+00> : vector<16x64xf32>
    %149 = tpu.matmul %146, %148, %cst_132 {dimension_numbers = #tpu.dot_dimension_numbers<[1], [0], [0], [1], [0, 0, 1, 1], [], []>} : vector<16x8xf32>, vector<8x64xf32>, vector<16x64xf32> -> vector<16x64xf32>
    %150 = arith.addf %143, %149 : vector<16x64xf32>
    %c4_133 = arith.constant 4 : index
    %c0_134 = arith.constant 0 : index
    %c0_135 = arith.constant 0 : index
    %151 = vector.load %arg5[%c4_133, %c0_134, %c0_135] : memref<8x128x16xf32, #tpu.memory_space<vmem>>, vector<1x128x16xf32>
    %152 = vector.shape_cast %151 : vector<1x128x16xf32> to vector<128x16xf32>
    %cst_136 = arith.constant dense<0.000000e+00> : vector<16x8xf32>
    %153 = tpu.matmul %152, %120, %cst_136 {dimension_numbers = #tpu.dot_dimension_numbers<[0], [0], [1], [1], [0, 1, 1, 1], [], []>} : vector<128x16xf32>, vector<128x8xf32>, vector<16x8xf32> -> vector<16x8xf32>
    %c4_137 = arith.constant 4 : index
    %c0_138 = arith.constant 0 : index
    %c0_139 = arith.constant 0 : index
    %154 = vector.load %arg8[%c4_137, %c0_138, %c0_139] : memref<8x8x64xf32, #tpu.memory_space<vmem>>, vector<1x8x64xf32>
    %155 = vector.shape_cast %154 : vector<1x8x64xf32> to vector<8x64xf32>
    %cst_140 = arith.constant dense<0.000000e+00> : vector<16x64xf32>
    %156 = tpu.matmul %153, %155, %cst_140 {dimension_numbers = #tpu.dot_dimension_numbers<[1], [0], [0], [1], [0, 0, 1, 1], [], []>} : vector<16x8xf32>, vector<8x64xf32>, vector<16x64xf32> -> vector<16x64xf32>
    %157 = arith.addf %150, %156 : vector<16x64xf32>
    %c5_141 = arith.constant 5 : index
    %c0_142 = arith.constant 0 : index
    %c0_143 = arith.constant 0 : index
    %158 = vector.load %arg5[%c5_141, %c0_142, %c0_143] : memref<8x128x16xf32, #tpu.memory_space<vmem>>, vector<1x128x16xf32>
    %159 = vector.shape_cast %158 : vector<1x128x16xf32> to vector<128x16xf32>
    %cst_144 = arith.constant dense<0.000000e+00> : vector<16x8xf32>
    %160 = tpu.matmul %159, %120, %cst_144 {dimension_numbers = #tpu.dot_dimension_numbers<[0], [0], [1], [1], [0, 1, 1, 1], [], []>} : vector<128x16xf32>, vector<128x8xf32>, vector<16x8xf32> -> vector<16x8xf32>
    %c5_145 = arith.constant 5 : index
    %c0_146 = arith.constant 0 : index
    %c0_147 = arith.constant 0 : index
    %161 = vector.load %arg8[%c5_145, %c0_146, %c0_147] : memref<8x8x64xf32, #tpu.memory_space<vmem>>, vector<1x8x64xf32>
    %162 = vector.shape_cast %161 : vector<1x8x64xf32> to vector<8x64xf32>
    %cst_148 = arith.constant dense<0.000000e+00> : vector<16x64xf32>
    %163 = tpu.matmul %160, %162, %cst_148 {dimension_numbers = #tpu.dot_dimension_numbers<[1], [0], [0], [1], [0, 0, 1, 1], [], []>} : vector<16x8xf32>, vector<8x64xf32>, vector<16x64xf32> -> vector<16x64xf32>
    %164 = arith.addf %157, %163 : vector<16x64xf32>
    %c6_149 = arith.constant 6 : index
    %c0_150 = arith.constant 0 : index
    %c0_151 = arith.constant 0 : index
    %165 = vector.load %arg5[%c6_149, %c0_150, %c0_151] : memref<8x128x16xf32, #tpu.memory_space<vmem>>, vector<1x128x16xf32>
    %166 = vector.shape_cast %165 : vector<1x128x16xf32> to vector<128x16xf32>
    %cst_152 = arith.constant dense<0.000000e+00> : vector<16x8xf32>
    %167 = tpu.matmul %166, %120, %cst_152 {dimension_numbers = #tpu.dot_dimension_numbers<[0], [0], [1], [1], [0, 1, 1, 1], [], []>} : vector<128x16xf32>, vector<128x8xf32>, vector<16x8xf32> -> vector<16x8xf32>
    %c6_153 = arith.constant 6 : index
    %c0_154 = arith.constant 0 : index
    %c0_155 = arith.constant 0 : index
    %168 = vector.load %arg8[%c6_153, %c0_154, %c0_155] : memref<8x8x64xf32, #tpu.memory_space<vmem>>, vector<1x8x64xf32>
    %169 = vector.shape_cast %168 : vector<1x8x64xf32> to vector<8x64xf32>
    %cst_156 = arith.constant dense<0.000000e+00> : vector<16x64xf32>
    %170 = tpu.matmul %167, %169, %cst_156 {dimension_numbers = #tpu.dot_dimension_numbers<[1], [0], [0], [1], [0, 0, 1, 1], [], []>} : vector<16x8xf32>, vector<8x64xf32>, vector<16x64xf32> -> vector<16x64xf32>
    %171 = arith.addf %164, %170 : vector<16x64xf32>
    %c7_157 = arith.constant 7 : index
    %c0_158 = arith.constant 0 : index
    %c0_159 = arith.constant 0 : index
    %172 = vector.load %arg5[%c7_157, %c0_158, %c0_159] : memref<8x128x16xf32, #tpu.memory_space<vmem>>, vector<1x128x16xf32>
    %173 = vector.shape_cast %172 : vector<1x128x16xf32> to vector<128x16xf32>
    %cst_160 = arith.constant dense<0.000000e+00> : vector<16x8xf32>
    %174 = tpu.matmul %173, %120, %cst_160 {dimension_numbers = #tpu.dot_dimension_numbers<[0], [0], [1], [1], [0, 1, 1, 1], [], []>} : vector<128x16xf32>, vector<128x8xf32>, vector<16x8xf32> -> vector<16x8xf32>
    %c7_161 = arith.constant 7 : index
    %c0_162 = arith.constant 0 : index
    %c0_163 = arith.constant 0 : index
    %175 = vector.load %arg8[%c7_161, %c0_162, %c0_163] : memref<8x8x64xf32, #tpu.memory_space<vmem>>, vector<1x8x64xf32>
    %176 = vector.shape_cast %175 : vector<1x8x64xf32> to vector<8x64xf32>
    %cst_164 = arith.constant dense<0.000000e+00> : vector<16x64xf32>
    %177 = tpu.matmul %174, %176, %cst_164 {dimension_numbers = #tpu.dot_dimension_numbers<[1], [0], [0], [1], [0, 0, 1, 1], [], []>} : vector<16x8xf32>, vector<8x64xf32>, vector<16x64xf32> -> vector<16x64xf32>
    %178 = arith.addf %171, %177 : vector<16x64xf32>
    %179 = arith.addf %12, %178 : vector<16x64xf32>
    %cst_165 = arith.constant dense<0.000000e+00> : vector<16xf32>
    %180 = vector.multi_reduction <add>, %179, %cst_165 [1] : vector<16x64xf32> to vector<16xf32>
    %181 = vector.shape_cast %180 : vector<16xf32> to vector<16x1xf32>
    %cst_166 = arith.constant 6.400000e+01 : f32
    %182 = vector.broadcast %cst_166 : f32 to vector<16x1xf32>
    %183 = arith.divf %181, %182 : vector<16x1xf32>
    %184 = vector.broadcast %183 : vector<16x1xf32> to vector<16x64xf32>
    %185 = arith.subf %179, %184 : vector<16x64xf32>
    %186 = arith.mulf %185, %185 : vector<16x64xf32>
    %cst_167 = arith.constant dense<0.000000e+00> : vector<16xf32>
    %187 = vector.multi_reduction <add>, %186, %cst_167 [1] : vector<16x64xf32> to vector<16xf32>
    %188 = vector.shape_cast %187 : vector<16xf32> to vector<16x1xf32>
    %cst_168 = arith.constant 6.400000e+01 : f32
    %189 = vector.broadcast %cst_168 : f32 to vector<16x1xf32>
    %190 = arith.divf %188, %189 : vector<16x1xf32>
    %191 = vector.broadcast %183 : vector<16x1xf32> to vector<16x64xf32>
    %192 = arith.subf %179, %191 : vector<16x64xf32>
    %cst_169 = arith.constant 9.99999974E-6 : f32
    %193 = vector.broadcast %cst_169 : f32 to vector<16x1xf32>
    %194 = arith.addf %190, %193 : vector<16x1xf32>
    %195 = math.rsqrt %194 : vector<16x1xf32>
    %196 = vector.broadcast %195 : vector<16x1xf32> to vector<16x64xf32>
    %197 = arith.mulf %192, %196 : vector<16x64xf32>
    %198 = vector.broadcast %14 : vector<1x64xf32> to vector<16x64xf32>
    %199 = arith.mulf %197, %198 : vector<16x64xf32>
    %200 = vector.broadcast %15 : vector<1x64xf32> to vector<16x64xf32>
    %201 = arith.addf %199, %200 : vector<16x64xf32>
    %c0_170 = arith.constant 0 : index
    %c0_171 = arith.constant 0 : index
    %202 = vector.load %arg12[%c0_170, %c0_171] : memref<64x128xf32, #tpu.memory_space<vmem>>, vector<64x128xf32>
    %cst_172 = arith.constant dense<0.000000e+00> : vector<16x128xf32>
    %203 = tpu.matmul %201, %202, %cst_172 {dimension_numbers = #tpu.dot_dimension_numbers<[1], [0], [0], [1], [0, 0, 1, 1], [], []>} : vector<16x64xf32>, vector<64x128xf32>, vector<16x128xf32> -> vector<16x128xf32>
    %c0_173 = arith.constant 0 : index
    %c0_174 = arith.constant 0 : index
    %204 = vector.load %arg13[%c0_173, %c0_174] : memref<1x128xf32, #tpu.memory_space<vmem>>, vector<1x128xf32>
    %205 = vector.broadcast %204 : vector<1x128xf32> to vector<16x128xf32>
    %206 = arith.addf %203, %205 : vector<16x128xf32>
    %cst_175 = arith.constant 0.000000e+00 : f32
    %207 = vector.broadcast %cst_175 : f32 to vector<16x128xf32>
    %208 = arith.maximumf %206, %207 : vector<16x128xf32>
    %c0_176 = arith.constant 0 : index
    %c0_177 = arith.constant 0 : index
    %209 = vector.load %arg14[%c0_176, %c0_177] : memref<128x64xf32, #tpu.memory_space<vmem>>, vector<128x64xf32>
    %cst_178 = arith.constant dense<0.000000e+00> : vector<16x64xf32>
    %210 = tpu.matmul %208, %209, %cst_178 {dimension_numbers = #tpu.dot_dimension_numbers<[1], [0], [0], [1], [0, 0, 1, 1], [], []>} : vector<16x128xf32>, vector<128x64xf32>, vector<16x64xf32> -> vector<16x64xf32>
    %c0_179 = arith.constant 0 : index
    %c0_180 = arith.constant 0 : index
    %211 = vector.load %arg15[%c0_179, %c0_180] : memref<1x64xf32, #tpu.memory_space<vmem>>, vector<1x64xf32>
    %212 = vector.broadcast %211 : vector<1x64xf32> to vector<16x64xf32>
    %213 = arith.addf %210, %212 : vector<16x64xf32>
    %214 = arith.addf %201, %213 : vector<16x64xf32>
    %cst_181 = arith.constant dense<0.000000e+00> : vector<16xf32>
    %215 = vector.multi_reduction <add>, %214, %cst_181 [1] : vector<16x64xf32> to vector<16xf32>
    %216 = vector.shape_cast %215 : vector<16xf32> to vector<16x1xf32>
    %cst_182 = arith.constant 6.400000e+01 : f32
    %217 = vector.broadcast %cst_182 : f32 to vector<16x1xf32>
    %218 = arith.divf %216, %217 : vector<16x1xf32>
    %219 = vector.broadcast %218 : vector<16x1xf32> to vector<16x64xf32>
    %220 = arith.subf %214, %219 : vector<16x64xf32>
    %221 = arith.mulf %220, %220 : vector<16x64xf32>
    %cst_183 = arith.constant dense<0.000000e+00> : vector<16xf32>
    %222 = vector.multi_reduction <add>, %221, %cst_183 [1] : vector<16x64xf32> to vector<16xf32>
    %223 = vector.shape_cast %222 : vector<16xf32> to vector<16x1xf32>
    %cst_184 = arith.constant 6.400000e+01 : f32
    %224 = vector.broadcast %cst_184 : f32 to vector<16x1xf32>
    %225 = arith.divf %223, %224 : vector<16x1xf32>
    %226 = vector.broadcast %218 : vector<16x1xf32> to vector<16x64xf32>
    %227 = arith.subf %214, %226 : vector<16x64xf32>
    %cst_185 = arith.constant 9.99999974E-6 : f32
    %228 = vector.broadcast %cst_185 : f32 to vector<16x1xf32>
    %229 = arith.addf %225, %228 : vector<16x1xf32>
    %230 = math.rsqrt %229 : vector<16x1xf32>
    %231 = vector.broadcast %230 : vector<16x1xf32> to vector<16x64xf32>
    %232 = arith.mulf %227, %231 : vector<16x64xf32>
    %233 = vector.broadcast %14 : vector<1x64xf32> to vector<16x64xf32>
    %234 = arith.mulf %232, %233 : vector<16x64xf32>
    %235 = vector.broadcast %15 : vector<1x64xf32> to vector<16x64xf32>
    %236 = arith.addf %234, %235 : vector<16x64xf32>
    %cst_186 = arith.constant 0.000000e+00 : f32
    %237 = vector.broadcast %cst_186 : f32 to vector<128x24xf32>
    %c0_187 = arith.constant 0 : index
    %c0_188 = arith.constant 0 : index
    %c0_189 = arith.constant 0 : index
    %238 = vector.load %arg6[%c0_187, %c0_188, %c0_189] : memref<8x64x24xf32, #tpu.memory_space<vmem>>, vector<1x64x24xf32>
    %239 = vector.shape_cast %238 : vector<1x64x24xf32> to vector<64x24xf32>
    %cst_190 = arith.constant dense<0.000000e+00> : vector<16x24xf32>
    %240 = tpu.matmul %236, %239, %cst_190 {dimension_numbers = #tpu.dot_dimension_numbers<[1], [0], [0], [1], [0, 0, 1, 1], [], []>} : vector<16x64xf32>, vector<64x24xf32>, vector<16x24xf32> -> vector<16x24xf32>
    %c0_191 = arith.constant 0 : index
    %c0_192 = arith.constant 0 : index
    %c0_193 = arith.constant 0 : index
    %241 = vector.load %arg7[%c0_191, %c0_192, %c0_193] : memref<8x1x24xf32, #tpu.memory_space<vmem>>, vector<1x1x24xf32>
    %242 = vector.shape_cast %241 : vector<1x1x24xf32> to vector<1x24xf32>
    %243 = vector.broadcast %242 : vector<1x24xf32> to vector<16x24xf32>
    %244 = arith.addf %240, %243 : vector<16x24xf32>
    %c0_194 = arith.constant 0 : index
    %c0_195 = arith.constant 0 : index
    %c0_196 = arith.constant 0 : index
    %245 = vector.load %arg5[%c0_194, %c0_195, %c0_196] : memref<8x128x16xf32, #tpu.memory_space<vmem>>, vector<1x128x16xf32>
    %246 = vector.shape_cast %245 : vector<1x128x16xf32> to vector<128x16xf32>
    %cst_197 = arith.constant dense<0.000000e+00> : vector<128x24xf32>
    %247 = tpu.matmul %246, %244, %cst_197 {dimension_numbers = #tpu.dot_dimension_numbers<[1], [0], [0], [1], [0, 0, 1, 1], [], []>} : vector<128x16xf32>, vector<16x24xf32>, vector<128x24xf32> -> vector<128x24xf32>
    %248 = arith.addf %237, %247 : vector<128x24xf32>
    %c1_198 = arith.constant 1 : index
    %c0_199 = arith.constant 0 : index
    %c0_200 = arith.constant 0 : index
    %249 = vector.load %arg6[%c1_198, %c0_199, %c0_200] : memref<8x64x24xf32, #tpu.memory_space<vmem>>, vector<1x64x24xf32>
    %250 = vector.shape_cast %249 : vector<1x64x24xf32> to vector<64x24xf32>
    %cst_201 = arith.constant dense<0.000000e+00> : vector<16x24xf32>
    %251 = tpu.matmul %236, %250, %cst_201 {dimension_numbers = #tpu.dot_dimension_numbers<[1], [0], [0], [1], [0, 0, 1, 1], [], []>} : vector<16x64xf32>, vector<64x24xf32>, vector<16x24xf32> -> vector<16x24xf32>
    %c1_202 = arith.constant 1 : index
    %c0_203 = arith.constant 0 : index
    %c0_204 = arith.constant 0 : index
    %252 = vector.load %arg7[%c1_202, %c0_203, %c0_204] : memref<8x1x24xf32, #tpu.memory_space<vmem>>, vector<1x1x24xf32>
    %253 = vector.shape_cast %252 : vector<1x1x24xf32> to vector<1x24xf32>
    %254 = vector.broadcast %253 : vector<1x24xf32> to vector<16x24xf32>
    %255 = arith.addf %251, %254 : vector<16x24xf32>
    %c1_205 = arith.constant 1 : index
    %c0_206 = arith.constant 0 : index
    %c0_207 = arith.constant 0 : index
    %256 = vector.load %arg5[%c1_205, %c0_206, %c0_207] : memref<8x128x16xf32, #tpu.memory_space<vmem>>, vector<1x128x16xf32>
    %257 = vector.shape_cast %256 : vector<1x128x16xf32> to vector<128x16xf32>
    %cst_208 = arith.constant dense<0.000000e+00> : vector<128x24xf32>
    %258 = tpu.matmul %257, %255, %cst_208 {dimension_numbers = #tpu.dot_dimension_numbers<[1], [0], [0], [1], [0, 0, 1, 1], [], []>} : vector<128x16xf32>, vector<16x24xf32>, vector<128x24xf32> -> vector<128x24xf32>
    %259 = arith.addf %248, %258 : vector<128x24xf32>
    %c2_209 = arith.constant 2 : index
    %c0_210 = arith.constant 0 : index
    %c0_211 = arith.constant 0 : index
    %260 = vector.load %arg6[%c2_209, %c0_210, %c0_211] : memref<8x64x24xf32, #tpu.memory_space<vmem>>, vector<1x64x24xf32>
    %261 = vector.shape_cast %260 : vector<1x64x24xf32> to vector<64x24xf32>
    %cst_212 = arith.constant dense<0.000000e+00> : vector<16x24xf32>
    %262 = tpu.matmul %236, %261, %cst_212 {dimension_numbers = #tpu.dot_dimension_numbers<[1], [0], [0], [1], [0, 0, 1, 1], [], []>} : vector<16x64xf32>, vector<64x24xf32>, vector<16x24xf32> -> vector<16x24xf32>
    %c2_213 = arith.constant 2 : index
    %c0_214 = arith.constant 0 : index
    %c0_215 = arith.constant 0 : index
    %263 = vector.load %arg7[%c2_213, %c0_214, %c0_215] : memref<8x1x24xf32, #tpu.memory_space<vmem>>, vector<1x1x24xf32>
    %264 = vector.shape_cast %263 : vector<1x1x24xf32> to vector<1x24xf32>
    %265 = vector.broadcast %264 : vector<1x24xf32> to vector<16x24xf32>
    %266 = arith.addf %262, %265 : vector<16x24xf32>
    %c2_216 = arith.constant 2 : index
    %c0_217 = arith.constant 0 : index
    %c0_218 = arith.constant 0 : index
    %267 = vector.load %arg5[%c2_216, %c0_217, %c0_218] : memref<8x128x16xf32, #tpu.memory_space<vmem>>, vector<1x128x16xf32>
    %268 = vector.shape_cast %267 : vector<1x128x16xf32> to vector<128x16xf32>
    %cst_219 = arith.constant dense<0.000000e+00> : vector<128x24xf32>
    %269 = tpu.matmul %268, %266, %cst_219 {dimension_numbers = #tpu.dot_dimension_numbers<[1], [0], [0], [1], [0, 0, 1, 1], [], []>} : vector<128x16xf32>, vector<16x24xf32>, vector<128x24xf32> -> vector<128x24xf32>
    %270 = arith.addf %259, %269 : vector<128x24xf32>
    %c3_220 = arith.constant 3 : index
    %c0_221 = arith.constant 0 : index
    %c0_222 = arith.constant 0 : index
    %271 = vector.load %arg6[%c3_220, %c0_221, %c0_222] : memref<8x64x24xf32, #tpu.memory_space<vmem>>, vector<1x64x24xf32>
    %272 = vector.shape_cast %271 : vector<1x64x24xf32> to vector<64x24xf32>
    %cst_223 = arith.constant dense<0.000000e+00> : vector<16x24xf32>
    %273 = tpu.matmul %236, %272, %cst_223 {dimension_numbers = #tpu.dot_dimension_numbers<[1], [0], [0], [1], [0, 0, 1, 1], [], []>} : vector<16x64xf32>, vector<64x24xf32>, vector<16x24xf32> -> vector<16x24xf32>
    %c3_224 = arith.constant 3 : index
    %c0_225 = arith.constant 0 : index
    %c0_226 = arith.constant 0 : index
    %274 = vector.load %arg7[%c3_224, %c0_225, %c0_226] : memref<8x1x24xf32, #tpu.memory_space<vmem>>, vector<1x1x24xf32>
    %275 = vector.shape_cast %274 : vector<1x1x24xf32> to vector<1x24xf32>
    %276 = vector.broadcast %275 : vector<1x24xf32> to vector<16x24xf32>
    %277 = arith.addf %273, %276 : vector<16x24xf32>
    %c3_227 = arith.constant 3 : index
    %c0_228 = arith.constant 0 : index
    %c0_229 = arith.constant 0 : index
    %278 = vector.load %arg5[%c3_227, %c0_228, %c0_229] : memref<8x128x16xf32, #tpu.memory_space<vmem>>, vector<1x128x16xf32>
    %279 = vector.shape_cast %278 : vector<1x128x16xf32> to vector<128x16xf32>
    %cst_230 = arith.constant dense<0.000000e+00> : vector<128x24xf32>
    %280 = tpu.matmul %279, %277, %cst_230 {dimension_numbers = #tpu.dot_dimension_numbers<[1], [0], [0], [1], [0, 0, 1, 1], [], []>} : vector<128x16xf32>, vector<16x24xf32>, vector<128x24xf32> -> vector<128x24xf32>
    %281 = arith.addf %270, %280 : vector<128x24xf32>
    %c4_231 = arith.constant 4 : index
    %c0_232 = arith.constant 0 : index
    %c0_233 = arith.constant 0 : index
    %282 = vector.load %arg6[%c4_231, %c0_232, %c0_233] : memref<8x64x24xf32, #tpu.memory_space<vmem>>, vector<1x64x24xf32>
    %283 = vector.shape_cast %282 : vector<1x64x24xf32> to vector<64x24xf32>
    %cst_234 = arith.constant dense<0.000000e+00> : vector<16x24xf32>
    %284 = tpu.matmul %236, %283, %cst_234 {dimension_numbers = #tpu.dot_dimension_numbers<[1], [0], [0], [1], [0, 0, 1, 1], [], []>} : vector<16x64xf32>, vector<64x24xf32>, vector<16x24xf32> -> vector<16x24xf32>
    %c4_235 = arith.constant 4 : index
    %c0_236 = arith.constant 0 : index
    %c0_237 = arith.constant 0 : index
    %285 = vector.load %arg7[%c4_235, %c0_236, %c0_237] : memref<8x1x24xf32, #tpu.memory_space<vmem>>, vector<1x1x24xf32>
    %286 = vector.shape_cast %285 : vector<1x1x24xf32> to vector<1x24xf32>
    %287 = vector.broadcast %286 : vector<1x24xf32> to vector<16x24xf32>
    %288 = arith.addf %284, %287 : vector<16x24xf32>
    %c4_238 = arith.constant 4 : index
    %c0_239 = arith.constant 0 : index
    %c0_240 = arith.constant 0 : index
    %289 = vector.load %arg5[%c4_238, %c0_239, %c0_240] : memref<8x128x16xf32, #tpu.memory_space<vmem>>, vector<1x128x16xf32>
    %290 = vector.shape_cast %289 : vector<1x128x16xf32> to vector<128x16xf32>
    %cst_241 = arith.constant dense<0.000000e+00> : vector<128x24xf32>
    %291 = tpu.matmul %290, %288, %cst_241 {dimension_numbers = #tpu.dot_dimension_numbers<[1], [0], [0], [1], [0, 0, 1, 1], [], []>} : vector<128x16xf32>, vector<16x24xf32>, vector<128x24xf32> -> vector<128x24xf32>
    %292 = arith.addf %281, %291 : vector<128x24xf32>
    %c5_242 = arith.constant 5 : index
    %c0_243 = arith.constant 0 : index
    %c0_244 = arith.constant 0 : index
    %293 = vector.load %arg6[%c5_242, %c0_243, %c0_244] : memref<8x64x24xf32, #tpu.memory_space<vmem>>, vector<1x64x24xf32>
    %294 = vector.shape_cast %293 : vector<1x64x24xf32> to vector<64x24xf32>
    %cst_245 = arith.constant dense<0.000000e+00> : vector<16x24xf32>
    %295 = tpu.matmul %236, %294, %cst_245 {dimension_numbers = #tpu.dot_dimension_numbers<[1], [0], [0], [1], [0, 0, 1, 1], [], []>} : vector<16x64xf32>, vector<64x24xf32>, vector<16x24xf32> -> vector<16x24xf32>
    %c5_246 = arith.constant 5 : index
    %c0_247 = arith.constant 0 : index
    %c0_248 = arith.constant 0 : index
    %296 = vector.load %arg7[%c5_246, %c0_247, %c0_248] : memref<8x1x24xf32, #tpu.memory_space<vmem>>, vector<1x1x24xf32>
    %297 = vector.shape_cast %296 : vector<1x1x24xf32> to vector<1x24xf32>
    %298 = vector.broadcast %297 : vector<1x24xf32> to vector<16x24xf32>
    %299 = arith.addf %295, %298 : vector<16x24xf32>
    %c5_249 = arith.constant 5 : index
    %c0_250 = arith.constant 0 : index
    %c0_251 = arith.constant 0 : index
    %300 = vector.load %arg5[%c5_249, %c0_250, %c0_251] : memref<8x128x16xf32, #tpu.memory_space<vmem>>, vector<1x128x16xf32>
    %301 = vector.shape_cast %300 : vector<1x128x16xf32> to vector<128x16xf32>
    %cst_252 = arith.constant dense<0.000000e+00> : vector<128x24xf32>
    %302 = tpu.matmul %301, %299, %cst_252 {dimension_numbers = #tpu.dot_dimension_numbers<[1], [0], [0], [1], [0, 0, 1, 1], [], []>} : vector<128x16xf32>, vector<16x24xf32>, vector<128x24xf32> -> vector<128x24xf32>
    %303 = arith.addf %292, %302 : vector<128x24xf32>
    %c6_253 = arith.constant 6 : index
    %c0_254 = arith.constant 0 : index
    %c0_255 = arith.constant 0 : index
    %304 = vector.load %arg6[%c6_253, %c0_254, %c0_255] : memref<8x64x24xf32, #tpu.memory_space<vmem>>, vector<1x64x24xf32>
    %305 = vector.shape_cast %304 : vector<1x64x24xf32> to vector<64x24xf32>
    %cst_256 = arith.constant dense<0.000000e+00> : vector<16x24xf32>
    %306 = tpu.matmul %236, %305, %cst_256 {dimension_numbers = #tpu.dot_dimension_numbers<[1], [0], [0], [1], [0, 0, 1, 1], [], []>} : vector<16x64xf32>, vector<64x24xf32>, vector<16x24xf32> -> vector<16x24xf32>
    %c6_257 = arith.constant 6 : index
    %c0_258 = arith.constant 0 : index
    %c0_259 = arith.constant 0 : index
    %307 = vector.load %arg7[%c6_257, %c0_258, %c0_259] : memref<8x1x24xf32, #tpu.memory_space<vmem>>, vector<1x1x24xf32>
    %308 = vector.shape_cast %307 : vector<1x1x24xf32> to vector<1x24xf32>
    %309 = vector.broadcast %308 : vector<1x24xf32> to vector<16x24xf32>
    %310 = arith.addf %306, %309 : vector<16x24xf32>
    %c6_260 = arith.constant 6 : index
    %c0_261 = arith.constant 0 : index
    %c0_262 = arith.constant 0 : index
    %311 = vector.load %arg5[%c6_260, %c0_261, %c0_262] : memref<8x128x16xf32, #tpu.memory_space<vmem>>, vector<1x128x16xf32>
    %312 = vector.shape_cast %311 : vector<1x128x16xf32> to vector<128x16xf32>
    %cst_263 = arith.constant dense<0.000000e+00> : vector<128x24xf32>
    %313 = tpu.matmul %312, %310, %cst_263 {dimension_numbers = #tpu.dot_dimension_numbers<[1], [0], [0], [1], [0, 0, 1, 1], [], []>} : vector<128x16xf32>, vector<16x24xf32>, vector<128x24xf32> -> vector<128x24xf32>
    %314 = arith.addf %303, %313 : vector<128x24xf32>
    %c7_264 = arith.constant 7 : index
    %c0_265 = arith.constant 0 : index
    %c0_266 = arith.constant 0 : index
    %315 = vector.load %arg6[%c7_264, %c0_265, %c0_266] : memref<8x64x24xf32, #tpu.memory_space<vmem>>, vector<1x64x24xf32>
    %316 = vector.shape_cast %315 : vector<1x64x24xf32> to vector<64x24xf32>
    %cst_267 = arith.constant dense<0.000000e+00> : vector<16x24xf32>
    %317 = tpu.matmul %236, %316, %cst_267 {dimension_numbers = #tpu.dot_dimension_numbers<[1], [0], [0], [1], [0, 0, 1, 1], [], []>} : vector<16x64xf32>, vector<64x24xf32>, vector<16x24xf32> -> vector<16x24xf32>
    %c7_268 = arith.constant 7 : index
    %c0_269 = arith.constant 0 : index
    %c0_270 = arith.constant 0 : index
    %318 = vector.load %arg7[%c7_268, %c0_269, %c0_270] : memref<8x1x24xf32, #tpu.memory_space<vmem>>, vector<1x1x24xf32>
    %319 = vector.shape_cast %318 : vector<1x1x24xf32> to vector<1x24xf32>
    %320 = vector.broadcast %319 : vector<1x24xf32> to vector<16x24xf32>
    %321 = arith.addf %317, %320 : vector<16x24xf32>
    %c7_271 = arith.constant 7 : index
    %c0_272 = arith.constant 0 : index
    %c0_273 = arith.constant 0 : index
    %322 = vector.load %arg5[%c7_271, %c0_272, %c0_273] : memref<8x128x16xf32, #tpu.memory_space<vmem>>, vector<1x128x16xf32>
    %323 = vector.shape_cast %322 : vector<1x128x16xf32> to vector<128x16xf32>
    %cst_274 = arith.constant dense<0.000000e+00> : vector<128x24xf32>
    %324 = tpu.matmul %323, %321, %cst_274 {dimension_numbers = #tpu.dot_dimension_numbers<[1], [0], [0], [1], [0, 0, 1, 1], [], []>} : vector<128x16xf32>, vector<16x24xf32>, vector<128x24xf32> -> vector<128x24xf32>
    %325 = arith.addf %314, %324 : vector<128x24xf32>
    %326 = vector.extract_strided_slice %325 {offsets = [0, 0], sizes = [128, 8], strides = [1, 1]} : vector<128x24xf32> to vector<128x8xf32>
    %327 = vector.extract_strided_slice %325 {offsets = [0, 8], sizes = [128, 8], strides = [1, 1]} : vector<128x24xf32> to vector<128x8xf32>
    %328 = vector.extract_strided_slice %325 {offsets = [0, 16], sizes = [128, 8], strides = [1, 1]} : vector<128x24xf32> to vector<128x8xf32>
    %cst_275 = arith.constant dense<0.000000e+00> : vector<128x128xf32>
    %329 = tpu.matmul %326, %327, %cst_275 {dimension_numbers = #tpu.dot_dimension_numbers<[1], [1], [0], [0], [0, 0, 1, 0], [], []>} : vector<128x8xf32>, vector<128x8xf32>, vector<128x128xf32> -> vector<128x128xf32>
    %330 = arith.addf %329, %13 : vector<128x128xf32>
    %cst_276 = arith.constant dense<0xFF800000> : vector<128xf32>
    %331 = vector.multi_reduction <maximumf>, %330, %cst_276 [1] : vector<128x128xf32> to vector<128xf32>
    %332 = vector.shape_cast %331 : vector<128xf32> to vector<128x1xf32>
    %333 = vector.broadcast %332 : vector<128x1xf32> to vector<128x128xf32>
    %334 = arith.subf %330, %333 : vector<128x128xf32>
    %335 = math.exp %334 : vector<128x128xf32>
    %cst_277 = arith.constant dense<0.000000e+00> : vector<128xf32>
    %336 = vector.multi_reduction <add>, %335, %cst_277 [1] : vector<128x128xf32> to vector<128xf32>
    %337 = vector.shape_cast %336 : vector<128xf32> to vector<128x1xf32>
    %338 = tpu.reciprocal %337 {approx = true} : vector<128x1xf32> -> vector<128x1xf32>
    %339 = vector.broadcast %338 : vector<128x1xf32> to vector<128x128xf32>
    %340 = arith.mulf %335, %339 : vector<128x128xf32>
    %cst_278 = arith.constant dense<0.000000e+00> : vector<128x8xf32>
    %341 = tpu.matmul %340, %328, %cst_278 {dimension_numbers = #tpu.dot_dimension_numbers<[1], [0], [0], [1], [0, 0, 1, 1], [], []>} : vector<128x128xf32>, vector<128x8xf32>, vector<128x8xf32> -> vector<128x8xf32>
    %c0_279 = arith.constant 0 : index
    %c0_280 = arith.constant 0 : index
    %342 = vector.load %arg9[%c0_279, %c0_280] : memref<1x64xf32, #tpu.memory_space<vmem>>, vector<1x64xf32>
    %c0_281 = arith.constant 0 : index
    %c0_282 = arith.constant 0 : index
    %c0_283 = arith.constant 0 : index
    %343 = vector.load %arg5[%c0_281, %c0_282, %c0_283] : memref<8x128x16xf32, #tpu.memory_space<vmem>>, vector<1x128x16xf32>
    %344 = vector.shape_cast %343 : vector<1x128x16xf32> to vector<128x16xf32>
    %cst_284 = arith.constant dense<0.000000e+00> : vector<16x8xf32>
    %345 = tpu.matmul %344, %341, %cst_284 {dimension_numbers = #tpu.dot_dimension_numbers<[0], [0], [1], [1], [0, 1, 1, 1], [], []>} : vector<128x16xf32>, vector<128x8xf32>, vector<16x8xf32> -> vector<16x8xf32>
    %c0_285 = arith.constant 0 : index
    %c0_286 = arith.constant 0 : index
    %c0_287 = arith.constant 0 : index
    %346 = vector.load %arg8[%c0_285, %c0_286, %c0_287] : memref<8x8x64xf32, #tpu.memory_space<vmem>>, vector<1x8x64xf32>
    %347 = vector.shape_cast %346 : vector<1x8x64xf32> to vector<8x64xf32>
    %cst_288 = arith.constant dense<0.000000e+00> : vector<16x64xf32>
    %348 = tpu.matmul %345, %347, %cst_288 {dimension_numbers = #tpu.dot_dimension_numbers<[1], [0], [0], [1], [0, 0, 1, 1], [], []>} : vector<16x8xf32>, vector<8x64xf32>, vector<16x64xf32> -> vector<16x64xf32>
    %349 = vector.broadcast %342 : vector<1x64xf32> to vector<16x64xf32>
    %350 = arith.addf %349, %348 : vector<16x64xf32>
    %c1_289 = arith.constant 1 : index
    %c0_290 = arith.constant 0 : index
    %c0_291 = arith.constant 0 : index
    %351 = vector.load %arg5[%c1_289, %c0_290, %c0_291] : memref<8x128x16xf32, #tpu.memory_space<vmem>>, vector<1x128x16xf32>
    %352 = vector.shape_cast %351 : vector<1x128x16xf32> to vector<128x16xf32>
    %cst_292 = arith.constant dense<0.000000e+00> : vector<16x8xf32>
    %353 = tpu.matmul %352, %341, %cst_292 {dimension_numbers = #tpu.dot_dimension_numbers<[0], [0], [1], [1], [0, 1, 1, 1], [], []>} : vector<128x16xf32>, vector<128x8xf32>, vector<16x8xf32> -> vector<16x8xf32>
    %c1_293 = arith.constant 1 : index
    %c0_294 = arith.constant 0 : index
    %c0_295 = arith.constant 0 : index
    %354 = vector.load %arg8[%c1_293, %c0_294, %c0_295] : memref<8x8x64xf32, #tpu.memory_space<vmem>>, vector<1x8x64xf32>
    %355 = vector.shape_cast %354 : vector<1x8x64xf32> to vector<8x64xf32>
    %cst_296 = arith.constant dense<0.000000e+00> : vector<16x64xf32>
    %356 = tpu.matmul %353, %355, %cst_296 {dimension_numbers = #tpu.dot_dimension_numbers<[1], [0], [0], [1], [0, 0, 1, 1], [], []>} : vector<16x8xf32>, vector<8x64xf32>, vector<16x64xf32> -> vector<16x64xf32>
    %357 = arith.addf %350, %356 : vector<16x64xf32>
    %c2_297 = arith.constant 2 : index
    %c0_298 = arith.constant 0 : index
    %c0_299 = arith.constant 0 : index
    %358 = vector.load %arg5[%c2_297, %c0_298, %c0_299] : memref<8x128x16xf32, #tpu.memory_space<vmem>>, vector<1x128x16xf32>
    %359 = vector.shape_cast %358 : vector<1x128x16xf32> to vector<128x16xf32>
    %cst_300 = arith.constant dense<0.000000e+00> : vector<16x8xf32>
    %360 = tpu.matmul %359, %341, %cst_300 {dimension_numbers = #tpu.dot_dimension_numbers<[0], [0], [1], [1], [0, 1, 1, 1], [], []>} : vector<128x16xf32>, vector<128x8xf32>, vector<16x8xf32> -> vector<16x8xf32>
    %c2_301 = arith.constant 2 : index
    %c0_302 = arith.constant 0 : index
    %c0_303 = arith.constant 0 : index
    %361 = vector.load %arg8[%c2_301, %c0_302, %c0_303] : memref<8x8x64xf32, #tpu.memory_space<vmem>>, vector<1x8x64xf32>
    %362 = vector.shape_cast %361 : vector<1x8x64xf32> to vector<8x64xf32>
    %cst_304 = arith.constant dense<0.000000e+00> : vector<16x64xf32>
    %363 = tpu.matmul %360, %362, %cst_304 {dimension_numbers = #tpu.dot_dimension_numbers<[1], [0], [0], [1], [0, 0, 1, 1], [], []>} : vector<16x8xf32>, vector<8x64xf32>, vector<16x64xf32> -> vector<16x64xf32>
    %364 = arith.addf %357, %363 : vector<16x64xf32>
    %c3_305 = arith.constant 3 : index
    %c0_306 = arith.constant 0 : index
    %c0_307 = arith.constant 0 : index
    %365 = vector.load %arg5[%c3_305, %c0_306, %c0_307] : memref<8x128x16xf32, #tpu.memory_space<vmem>>, vector<1x128x16xf32>
    %366 = vector.shape_cast %365 : vector<1x128x16xf32> to vector<128x16xf32>
    %cst_308 = arith.constant dense<0.000000e+00> : vector<16x8xf32>
    %367 = tpu.matmul %366, %341, %cst_308 {dimension_numbers = #tpu.dot_dimension_numbers<[0], [0], [1], [1], [0, 1, 1, 1], [], []>} : vector<128x16xf32>, vector<128x8xf32>, vector<16x8xf32> -> vector<16x8xf32>
    %c3_309 = arith.constant 3 : index
    %c0_310 = arith.constant 0 : index
    %c0_311 = arith.constant 0 : index
    %368 = vector.load %arg8[%c3_309, %c0_310, %c0_311] : memref<8x8x64xf32, #tpu.memory_space<vmem>>, vector<1x8x64xf32>
    %369 = vector.shape_cast %368 : vector<1x8x64xf32> to vector<8x64xf32>
    %cst_312 = arith.constant dense<0.000000e+00> : vector<16x64xf32>
    %370 = tpu.matmul %367, %369, %cst_312 {dimension_numbers = #tpu.dot_dimension_numbers<[1], [0], [0], [1], [0, 0, 1, 1], [], []>} : vector<16x8xf32>, vector<8x64xf32>, vector<16x64xf32> -> vector<16x64xf32>
    %371 = arith.addf %364, %370 : vector<16x64xf32>
    %c4_313 = arith.constant 4 : index
    %c0_314 = arith.constant 0 : index
    %c0_315 = arith.constant 0 : index
    %372 = vector.load %arg5[%c4_313, %c0_314, %c0_315] : memref<8x128x16xf32, #tpu.memory_space<vmem>>, vector<1x128x16xf32>
    %373 = vector.shape_cast %372 : vector<1x128x16xf32> to vector<128x16xf32>
    %cst_316 = arith.constant dense<0.000000e+00> : vector<16x8xf32>
    %374 = tpu.matmul %373, %341, %cst_316 {dimension_numbers = #tpu.dot_dimension_numbers<[0], [0], [1], [1], [0, 1, 1, 1], [], []>} : vector<128x16xf32>, vector<128x8xf32>, vector<16x8xf32> -> vector<16x8xf32>
    %c4_317 = arith.constant 4 : index
    %c0_318 = arith.constant 0 : index
    %c0_319 = arith.constant 0 : index
    %375 = vector.load %arg8[%c4_317, %c0_318, %c0_319] : memref<8x8x64xf32, #tpu.memory_space<vmem>>, vector<1x8x64xf32>
    %376 = vector.shape_cast %375 : vector<1x8x64xf32> to vector<8x64xf32>
    %cst_320 = arith.constant dense<0.000000e+00> : vector<16x64xf32>
    %377 = tpu.matmul %374, %376, %cst_320 {dimension_numbers = #tpu.dot_dimension_numbers<[1], [0], [0], [1], [0, 0, 1, 1], [], []>} : vector<16x8xf32>, vector<8x64xf32>, vector<16x64xf32> -> vector<16x64xf32>
    %378 = arith.addf %371, %377 : vector<16x64xf32>
    %c5_321 = arith.constant 5 : index
    %c0_322 = arith.constant 0 : index
    %c0_323 = arith.constant 0 : index
    %379 = vector.load %arg5[%c5_321, %c0_322, %c0_323] : memref<8x128x16xf32, #tpu.memory_space<vmem>>, vector<1x128x16xf32>
    %380 = vector.shape_cast %379 : vector<1x128x16xf32> to vector<128x16xf32>
    %cst_324 = arith.constant dense<0.000000e+00> : vector<16x8xf32>
    %381 = tpu.matmul %380, %341, %cst_324 {dimension_numbers = #tpu.dot_dimension_numbers<[0], [0], [1], [1], [0, 1, 1, 1], [], []>} : vector<128x16xf32>, vector<128x8xf32>, vector<16x8xf32> -> vector<16x8xf32>
    %c5_325 = arith.constant 5 : index
    %c0_326 = arith.constant 0 : index
    %c0_327 = arith.constant 0 : index
    %382 = vector.load %arg8[%c5_325, %c0_326, %c0_327] : memref<8x8x64xf32, #tpu.memory_space<vmem>>, vector<1x8x64xf32>
    %383 = vector.shape_cast %382 : vector<1x8x64xf32> to vector<8x64xf32>
    %cst_328 = arith.constant dense<0.000000e+00> : vector<16x64xf32>
    %384 = tpu.matmul %381, %383, %cst_328 {dimension_numbers = #tpu.dot_dimension_numbers<[1], [0], [0], [1], [0, 0, 1, 1], [], []>} : vector<16x8xf32>, vector<8x64xf32>, vector<16x64xf32> -> vector<16x64xf32>
    %385 = arith.addf %378, %384 : vector<16x64xf32>
    %c6_329 = arith.constant 6 : index
    %c0_330 = arith.constant 0 : index
    %c0_331 = arith.constant 0 : index
    %386 = vector.load %arg5[%c6_329, %c0_330, %c0_331] : memref<8x128x16xf32, #tpu.memory_space<vmem>>, vector<1x128x16xf32>
    %387 = vector.shape_cast %386 : vector<1x128x16xf32> to vector<128x16xf32>
    %cst_332 = arith.constant dense<0.000000e+00> : vector<16x8xf32>
    %388 = tpu.matmul %387, %341, %cst_332 {dimension_numbers = #tpu.dot_dimension_numbers<[0], [0], [1], [1], [0, 1, 1, 1], [], []>} : vector<128x16xf32>, vector<128x8xf32>, vector<16x8xf32> -> vector<16x8xf32>
    %c6_333 = arith.constant 6 : index
    %c0_334 = arith.constant 0 : index
    %c0_335 = arith.constant 0 : index
    %389 = vector.load %arg8[%c6_333, %c0_334, %c0_335] : memref<8x8x64xf32, #tpu.memory_space<vmem>>, vector<1x8x64xf32>
    %390 = vector.shape_cast %389 : vector<1x8x64xf32> to vector<8x64xf32>
    %cst_336 = arith.constant dense<0.000000e+00> : vector<16x64xf32>
    %391 = tpu.matmul %388, %390, %cst_336 {dimension_numbers = #tpu.dot_dimension_numbers<[1], [0], [0], [1], [0, 0, 1, 1], [], []>} : vector<16x8xf32>, vector<8x64xf32>, vector<16x64xf32> -> vector<16x64xf32>
    %392 = arith.addf %385, %391 : vector<16x64xf32>
    %c7_337 = arith.constant 7 : index
    %c0_338 = arith.constant 0 : index
    %c0_339 = arith.constant 0 : index
    %393 = vector.load %arg5[%c7_337, %c0_338, %c0_339] : memref<8x128x16xf32, #tpu.memory_space<vmem>>, vector<1x128x16xf32>
    %394 = vector.shape_cast %393 : vector<1x128x16xf32> to vector<128x16xf32>
    %cst_340 = arith.constant dense<0.000000e+00> : vector<16x8xf32>
    %395 = tpu.matmul %394, %341, %cst_340 {dimension_numbers = #tpu.dot_dimension_numbers<[0], [0], [1], [1], [0, 1, 1, 1], [], []>} : vector<128x16xf32>, vector<128x8xf32>, vector<16x8xf32> -> vector<16x8xf32>
    %c7_341 = arith.constant 7 : index
    %c0_342 = arith.constant 0 : index
    %c0_343 = arith.constant 0 : index
    %396 = vector.load %arg8[%c7_341, %c0_342, %c0_343] : memref<8x8x64xf32, #tpu.memory_space<vmem>>, vector<1x8x64xf32>
    %397 = vector.shape_cast %396 : vector<1x8x64xf32> to vector<8x64xf32>
    %cst_344 = arith.constant dense<0.000000e+00> : vector<16x64xf32>
    %398 = tpu.matmul %395, %397, %cst_344 {dimension_numbers = #tpu.dot_dimension_numbers<[1], [0], [0], [1], [0, 0, 1, 1], [], []>} : vector<16x8xf32>, vector<8x64xf32>, vector<16x64xf32> -> vector<16x64xf32>
    %399 = arith.addf %392, %398 : vector<16x64xf32>
    %400 = arith.addf %236, %399 : vector<16x64xf32>
    %cst_345 = arith.constant dense<0.000000e+00> : vector<16xf32>
    %401 = vector.multi_reduction <add>, %400, %cst_345 [1] : vector<16x64xf32> to vector<16xf32>
    %402 = vector.shape_cast %401 : vector<16xf32> to vector<16x1xf32>
    %cst_346 = arith.constant 6.400000e+01 : f32
    %403 = vector.broadcast %cst_346 : f32 to vector<16x1xf32>
    %404 = arith.divf %402, %403 : vector<16x1xf32>
    %405 = vector.broadcast %404 : vector<16x1xf32> to vector<16x64xf32>
    %406 = arith.subf %400, %405 : vector<16x64xf32>
    %407 = arith.mulf %406, %406 : vector<16x64xf32>
    %cst_347 = arith.constant dense<0.000000e+00> : vector<16xf32>
    %408 = vector.multi_reduction <add>, %407, %cst_347 [1] : vector<16x64xf32> to vector<16xf32>
    %409 = vector.shape_cast %408 : vector<16xf32> to vector<16x1xf32>
    %cst_348 = arith.constant 6.400000e+01 : f32
    %410 = vector.broadcast %cst_348 : f32 to vector<16x1xf32>
    %411 = arith.divf %409, %410 : vector<16x1xf32>
    %412 = vector.broadcast %404 : vector<16x1xf32> to vector<16x64xf32>
    %413 = arith.subf %400, %412 : vector<16x64xf32>
    %cst_349 = arith.constant 9.99999974E-6 : f32
    %414 = vector.broadcast %cst_349 : f32 to vector<16x1xf32>
    %415 = arith.addf %411, %414 : vector<16x1xf32>
    %416 = math.rsqrt %415 : vector<16x1xf32>
    %417 = vector.broadcast %416 : vector<16x1xf32> to vector<16x64xf32>
    %418 = arith.mulf %413, %417 : vector<16x64xf32>
    %419 = vector.broadcast %14 : vector<1x64xf32> to vector<16x64xf32>
    %420 = arith.mulf %418, %419 : vector<16x64xf32>
    %421 = vector.broadcast %15 : vector<1x64xf32> to vector<16x64xf32>
    %422 = arith.addf %420, %421 : vector<16x64xf32>
    %c0_350 = arith.constant 0 : index
    %c0_351 = arith.constant 0 : index
    %423 = vector.load %arg12[%c0_350, %c0_351] : memref<64x128xf32, #tpu.memory_space<vmem>>, vector<64x128xf32>
    %cst_352 = arith.constant dense<0.000000e+00> : vector<16x128xf32>
    %424 = tpu.matmul %422, %423, %cst_352 {dimension_numbers = #tpu.dot_dimension_numbers<[1], [0], [0], [1], [0, 0, 1, 1], [], []>} : vector<16x64xf32>, vector<64x128xf32>, vector<16x128xf32> -> vector<16x128xf32>
    %c0_353 = arith.constant 0 : index
    %c0_354 = arith.constant 0 : index
    %425 = vector.load %arg13[%c0_353, %c0_354] : memref<1x128xf32, #tpu.memory_space<vmem>>, vector<1x128xf32>
    %426 = vector.broadcast %425 : vector<1x128xf32> to vector<16x128xf32>
    %427 = arith.addf %424, %426 : vector<16x128xf32>
    %cst_355 = arith.constant 0.000000e+00 : f32
    %428 = vector.broadcast %cst_355 : f32 to vector<16x128xf32>
    %429 = arith.maximumf %427, %428 : vector<16x128xf32>
    %c0_356 = arith.constant 0 : index
    %c0_357 = arith.constant 0 : index
    %430 = vector.load %arg14[%c0_356, %c0_357] : memref<128x64xf32, #tpu.memory_space<vmem>>, vector<128x64xf32>
    %cst_358 = arith.constant dense<0.000000e+00> : vector<16x64xf32>
    %431 = tpu.matmul %429, %430, %cst_358 {dimension_numbers = #tpu.dot_dimension_numbers<[1], [0], [0], [1], [0, 0, 1, 1], [], []>} : vector<16x128xf32>, vector<128x64xf32>, vector<16x64xf32> -> vector<16x64xf32>
    %c0_359 = arith.constant 0 : index
    %c0_360 = arith.constant 0 : index
    %432 = vector.load %arg15[%c0_359, %c0_360] : memref<1x64xf32, #tpu.memory_space<vmem>>, vector<1x64xf32>
    %433 = vector.broadcast %432 : vector<1x64xf32> to vector<16x64xf32>
    %434 = arith.addf %431, %433 : vector<16x64xf32>
    %435 = arith.addf %422, %434 : vector<16x64xf32>
    %cst_361 = arith.constant dense<0.000000e+00> : vector<16xf32>
    %436 = vector.multi_reduction <add>, %435, %cst_361 [1] : vector<16x64xf32> to vector<16xf32>
    %437 = vector.shape_cast %436 : vector<16xf32> to vector<16x1xf32>
    %cst_362 = arith.constant 6.400000e+01 : f32
    %438 = vector.broadcast %cst_362 : f32 to vector<16x1xf32>
    %439 = arith.divf %437, %438 : vector<16x1xf32>
    %440 = vector.broadcast %439 : vector<16x1xf32> to vector<16x64xf32>
    %441 = arith.subf %435, %440 : vector<16x64xf32>
    %442 = arith.mulf %441, %441 : vector<16x64xf32>
    %cst_363 = arith.constant dense<0.000000e+00> : vector<16xf32>
    %443 = vector.multi_reduction <add>, %442, %cst_363 [1] : vector<16x64xf32> to vector<16xf32>
    %444 = vector.shape_cast %443 : vector<16xf32> to vector<16x1xf32>
    %cst_364 = arith.constant 6.400000e+01 : f32
    %445 = vector.broadcast %cst_364 : f32 to vector<16x1xf32>
    %446 = arith.divf %444, %445 : vector<16x1xf32>
    %447 = vector.broadcast %439 : vector<16x1xf32> to vector<16x64xf32>
    %448 = arith.subf %435, %447 : vector<16x64xf32>
    %cst_365 = arith.constant 9.99999974E-6 : f32
    %449 = vector.broadcast %cst_365 : f32 to vector<16x1xf32>
    %450 = arith.addf %446, %449 : vector<16x1xf32>
    %451 = math.rsqrt %450 : vector<16x1xf32>
    %452 = vector.broadcast %451 : vector<16x1xf32> to vector<16x64xf32>
    %453 = arith.mulf %448, %452 : vector<16x64xf32>
    %454 = vector.broadcast %14 : vector<1x64xf32> to vector<16x64xf32>
    %455 = arith.mulf %453, %454 : vector<16x64xf32>
    %456 = vector.broadcast %15 : vector<1x64xf32> to vector<16x64xf32>
    %457 = arith.addf %455, %456 : vector<16x64xf32>
    %c0_366 = arith.constant 0 : index
    %c0_367 = arith.constant 0 : index
    %458 = vector.load %arg16[%c0_366, %c0_367] : memref<2x16xf32, #tpu.memory_space<vmem>>, vector<2x16xf32>
    %cst_368 = arith.constant dense<0.000000e+00> : vector<16xf32>
    %459 = vector.multi_reduction <add>, %457, %cst_368 [1] : vector<16x64xf32> to vector<16xf32>
    %460 = vector.shape_cast %459 : vector<16xf32> to vector<16x1xf32>
    %461 = arith.mulf %457, %457 : vector<16x64xf32>
    %cst_369 = arith.constant dense<0.000000e+00> : vector<16xf32>
    %462 = vector.multi_reduction <add>, %461, %cst_369 [1] : vector<16x64xf32> to vector<16xf32>
    %463 = vector.shape_cast %462 : vector<16xf32> to vector<16x1xf32>
    %cst_370 = arith.constant dense<0.000000e+00> : vector<2x1xf32>
    %464 = tpu.matmul %458, %460, %cst_370 {dimension_numbers = #tpu.dot_dimension_numbers<[1], [0], [0], [1], [0, 0, 1, 1], [], []>} : vector<2x16xf32>, vector<16x1xf32>, vector<2x1xf32> -> vector<2x1xf32>
    %cst_371 = arith.constant 5.120000e+02 : f32
    %465 = vector.broadcast %cst_371 : f32 to vector<2x1xf32>
    %466 = arith.divf %464, %465 : vector<2x1xf32>
    %cst_372 = arith.constant dense<0.000000e+00> : vector<2x1xf32>
    %467 = tpu.matmul %458, %463, %cst_372 {dimension_numbers = #tpu.dot_dimension_numbers<[1], [0], [0], [1], [0, 0, 1, 1], [], []>} : vector<2x16xf32>, vector<16x1xf32>, vector<2x1xf32> -> vector<2x1xf32>
    %cst_373 = arith.constant 5.120000e+02 : f32
    %468 = vector.broadcast %cst_373 : f32 to vector<2x1xf32>
    %469 = arith.divf %467, %468 : vector<2x1xf32>
    %470 = arith.mulf %466, %466 : vector<2x1xf32>
    %471 = arith.subf %469, %470 : vector<2x1xf32>
    %cst_374 = arith.constant dense<0.000000e+00> : vector<16x1xf32>
    %472 = tpu.matmul %458, %466, %cst_374 {dimension_numbers = #tpu.dot_dimension_numbers<[0], [0], [1], [1], [0, 1, 1, 1], [], []>} : vector<2x16xf32>, vector<2x1xf32>, vector<16x1xf32> -> vector<16x1xf32>
    %cst_375 = arith.constant 9.99999974E-6 : f32
    %473 = vector.broadcast %cst_375 : f32 to vector<2x1xf32>
    %474 = arith.addf %471, %473 : vector<2x1xf32>
    %475 = math.rsqrt %474 : vector<2x1xf32>
    %cst_376 = arith.constant dense<0.000000e+00> : vector<16x1xf32>
    %476 = tpu.matmul %458, %475, %cst_376 {dimension_numbers = #tpu.dot_dimension_numbers<[0], [0], [1], [1], [0, 1, 1, 1], [], []>} : vector<2x16xf32>, vector<2x1xf32>, vector<16x1xf32> -> vector<16x1xf32>
    %477 = vector.broadcast %472 : vector<16x1xf32> to vector<16x64xf32>
    %478 = arith.subf %457, %477 : vector<16x64xf32>
    %479 = vector.broadcast %476 : vector<16x1xf32> to vector<16x64xf32>
    %480 = arith.mulf %478, %479 : vector<16x64xf32>
    %c0_377 = arith.constant 0 : index
    %c0_378 = arith.constant 0 : index
    %481 = vector.load %arg17[%c0_377, %c0_378] : memref<16x64xf32, #tpu.memory_space<vmem>>, vector<16x64xf32>
    %482 = arith.mulf %480, %481 : vector<16x64xf32>
    %c0_379 = arith.constant 0 : index
    %c0_380 = arith.constant 0 : index
    %483 = vector.load %arg18[%c0_379, %c0_380] : memref<16x64xf32, #tpu.memory_space<vmem>>, vector<16x64xf32>
    %484 = arith.addf %482, %483 : vector<16x64xf32>
    %cst_381 = arith.constant 0.000000e+00 : f32
    %cst_382 = arith.constant 6.000000e+00 : f32
    %485 = vector.broadcast %cst_381 : f32 to vector<16x64xf32>
    %486 = arith.maximumf %485, %484 : vector<16x64xf32>
    %487 = vector.broadcast %cst_382 : f32 to vector<16x64xf32>
    %488 = arith.minimumf %487, %486 : vector<16x64xf32>
    %c0_383 = arith.constant 0 : index
    %c0_384 = arith.constant 0 : index
    %489 = vector.load %arg21[%c0_383, %c0_384] : memref<1x64xf32, #tpu.memory_space<vmem>>, vector<1x64xf32>
    %c0_385 = arith.constant 0 : index
    %c0_386 = arith.constant 0 : index
    %c0_387 = arith.constant 0 : index
    %490 = vector.load %arg19[%c0_385, %c0_386, %c0_387] : memref<8x2x16xf32, #tpu.memory_space<vmem>>, vector<1x2x16xf32>
    %491 = vector.shape_cast %490 : vector<1x2x16xf32> to vector<2x16xf32>
    %cst_388 = arith.constant dense<0.000000e+00> : vector<2x64xf32>
    %492 = tpu.matmul %491, %488, %cst_388 {dimension_numbers = #tpu.dot_dimension_numbers<[1], [0], [0], [1], [0, 0, 1, 1], [], []>} : vector<2x16xf32>, vector<16x64xf32>, vector<2x64xf32> -> vector<2x64xf32>
    %c0_389 = arith.constant 0 : index
    %c0_390 = arith.constant 0 : index
    %c0_391 = arith.constant 0 : index
    %493 = vector.load %arg20[%c0_389, %c0_390, %c0_391] : memref<8x64x64xf32, #tpu.memory_space<vmem>>, vector<1x64x64xf32>
    %494 = vector.shape_cast %493 : vector<1x64x64xf32> to vector<64x64xf32>
    %cst_392 = arith.constant dense<0.000000e+00> : vector<2x64xf32>
    %495 = tpu.matmul %492, %494, %cst_392 {dimension_numbers = #tpu.dot_dimension_numbers<[1], [0], [0], [1], [0, 0, 1, 1], [], []>} : vector<2x64xf32>, vector<64x64xf32>, vector<2x64xf32> -> vector<2x64xf32>
    %496 = vector.broadcast %489 : vector<1x64xf32> to vector<2x64xf32>
    %497 = arith.addf %496, %495 : vector<2x64xf32>
    %c1_393 = arith.constant 1 : index
    %c0_394 = arith.constant 0 : index
    %c0_395 = arith.constant 0 : index
    %498 = vector.load %arg19[%c1_393, %c0_394, %c0_395] : memref<8x2x16xf32, #tpu.memory_space<vmem>>, vector<1x2x16xf32>
    %499 = vector.shape_cast %498 : vector<1x2x16xf32> to vector<2x16xf32>
    %cst_396 = arith.constant dense<0.000000e+00> : vector<2x64xf32>
    %500 = tpu.matmul %499, %488, %cst_396 {dimension_numbers = #tpu.dot_dimension_numbers<[1], [0], [0], [1], [0, 0, 1, 1], [], []>} : vector<2x16xf32>, vector<16x64xf32>, vector<2x64xf32> -> vector<2x64xf32>
    %c1_397 = arith.constant 1 : index
    %c0_398 = arith.constant 0 : index
    %c0_399 = arith.constant 0 : index
    %501 = vector.load %arg20[%c1_397, %c0_398, %c0_399] : memref<8x64x64xf32, #tpu.memory_space<vmem>>, vector<1x64x64xf32>
    %502 = vector.shape_cast %501 : vector<1x64x64xf32> to vector<64x64xf32>
    %cst_400 = arith.constant dense<0.000000e+00> : vector<2x64xf32>
    %503 = tpu.matmul %500, %502, %cst_400 {dimension_numbers = #tpu.dot_dimension_numbers<[1], [0], [0], [1], [0, 0, 1, 1], [], []>} : vector<2x64xf32>, vector<64x64xf32>, vector<2x64xf32> -> vector<2x64xf32>
    %504 = arith.addf %497, %503 : vector<2x64xf32>
    %c2_401 = arith.constant 2 : index
    %c0_402 = arith.constant 0 : index
    %c0_403 = arith.constant 0 : index
    %505 = vector.load %arg19[%c2_401, %c0_402, %c0_403] : memref<8x2x16xf32, #tpu.memory_space<vmem>>, vector<1x2x16xf32>
    %506 = vector.shape_cast %505 : vector<1x2x16xf32> to vector<2x16xf32>
    %cst_404 = arith.constant dense<0.000000e+00> : vector<2x64xf32>
    %507 = tpu.matmul %506, %488, %cst_404 {dimension_numbers = #tpu.dot_dimension_numbers<[1], [0], [0], [1], [0, 0, 1, 1], [], []>} : vector<2x16xf32>, vector<16x64xf32>, vector<2x64xf32> -> vector<2x64xf32>
    %c2_405 = arith.constant 2 : index
    %c0_406 = arith.constant 0 : index
    %c0_407 = arith.constant 0 : index
    %508 = vector.load %arg20[%c2_405, %c0_406, %c0_407] : memref<8x64x64xf32, #tpu.memory_space<vmem>>, vector<1x64x64xf32>
    %509 = vector.shape_cast %508 : vector<1x64x64xf32> to vector<64x64xf32>
    %cst_408 = arith.constant dense<0.000000e+00> : vector<2x64xf32>
    %510 = tpu.matmul %507, %509, %cst_408 {dimension_numbers = #tpu.dot_dimension_numbers<[1], [0], [0], [1], [0, 0, 1, 1], [], []>} : vector<2x64xf32>, vector<64x64xf32>, vector<2x64xf32> -> vector<2x64xf32>
    %511 = arith.addf %504, %510 : vector<2x64xf32>
    %c3_409 = arith.constant 3 : index
    %c0_410 = arith.constant 0 : index
    %c0_411 = arith.constant 0 : index
    %512 = vector.load %arg19[%c3_409, %c0_410, %c0_411] : memref<8x2x16xf32, #tpu.memory_space<vmem>>, vector<1x2x16xf32>
    %513 = vector.shape_cast %512 : vector<1x2x16xf32> to vector<2x16xf32>
    %cst_412 = arith.constant dense<0.000000e+00> : vector<2x64xf32>
    %514 = tpu.matmul %513, %488, %cst_412 {dimension_numbers = #tpu.dot_dimension_numbers<[1], [0], [0], [1], [0, 0, 1, 1], [], []>} : vector<2x16xf32>, vector<16x64xf32>, vector<2x64xf32> -> vector<2x64xf32>
    %c3_413 = arith.constant 3 : index
    %c0_414 = arith.constant 0 : index
    %c0_415 = arith.constant 0 : index
    %515 = vector.load %arg20[%c3_413, %c0_414, %c0_415] : memref<8x64x64xf32, #tpu.memory_space<vmem>>, vector<1x64x64xf32>
    %516 = vector.shape_cast %515 : vector<1x64x64xf32> to vector<64x64xf32>
    %cst_416 = arith.constant dense<0.000000e+00> : vector<2x64xf32>
    %517 = tpu.matmul %514, %516, %cst_416 {dimension_numbers = #tpu.dot_dimension_numbers<[1], [0], [0], [1], [0, 0, 1, 1], [], []>} : vector<2x64xf32>, vector<64x64xf32>, vector<2x64xf32> -> vector<2x64xf32>
    %518 = arith.addf %511, %517 : vector<2x64xf32>
    %c4_417 = arith.constant 4 : index
    %c0_418 = arith.constant 0 : index
    %c0_419 = arith.constant 0 : index
    %519 = vector.load %arg19[%c4_417, %c0_418, %c0_419] : memref<8x2x16xf32, #tpu.memory_space<vmem>>, vector<1x2x16xf32>
    %520 = vector.shape_cast %519 : vector<1x2x16xf32> to vector<2x16xf32>
    %cst_420 = arith.constant dense<0.000000e+00> : vector<2x64xf32>
    %521 = tpu.matmul %520, %488, %cst_420 {dimension_numbers = #tpu.dot_dimension_numbers<[1], [0], [0], [1], [0, 0, 1, 1], [], []>} : vector<2x16xf32>, vector<16x64xf32>, vector<2x64xf32> -> vector<2x64xf32>
    %c4_421 = arith.constant 4 : index
    %c0_422 = arith.constant 0 : index
    %c0_423 = arith.constant 0 : index
    %522 = vector.load %arg20[%c4_421, %c0_422, %c0_423] : memref<8x64x64xf32, #tpu.memory_space<vmem>>, vector<1x64x64xf32>
    %523 = vector.shape_cast %522 : vector<1x64x64xf32> to vector<64x64xf32>
    %cst_424 = arith.constant dense<0.000000e+00> : vector<2x64xf32>
    %524 = tpu.matmul %521, %523, %cst_424 {dimension_numbers = #tpu.dot_dimension_numbers<[1], [0], [0], [1], [0, 0, 1, 1], [], []>} : vector<2x64xf32>, vector<64x64xf32>, vector<2x64xf32> -> vector<2x64xf32>
    %525 = arith.addf %518, %524 : vector<2x64xf32>
    %c5_425 = arith.constant 5 : index
    %c0_426 = arith.constant 0 : index
    %c0_427 = arith.constant 0 : index
    %526 = vector.load %arg19[%c5_425, %c0_426, %c0_427] : memref<8x2x16xf32, #tpu.memory_space<vmem>>, vector<1x2x16xf32>
    %527 = vector.shape_cast %526 : vector<1x2x16xf32> to vector<2x16xf32>
    %cst_428 = arith.constant dense<0.000000e+00> : vector<2x64xf32>
    %528 = tpu.matmul %527, %488, %cst_428 {dimension_numbers = #tpu.dot_dimension_numbers<[1], [0], [0], [1], [0, 0, 1, 1], [], []>} : vector<2x16xf32>, vector<16x64xf32>, vector<2x64xf32> -> vector<2x64xf32>
    %c5_429 = arith.constant 5 : index
    %c0_430 = arith.constant 0 : index
    %c0_431 = arith.constant 0 : index
    %529 = vector.load %arg20[%c5_429, %c0_430, %c0_431] : memref<8x64x64xf32, #tpu.memory_space<vmem>>, vector<1x64x64xf32>
    %530 = vector.shape_cast %529 : vector<1x64x64xf32> to vector<64x64xf32>
    %cst_432 = arith.constant dense<0.000000e+00> : vector<2x64xf32>
    %531 = tpu.matmul %528, %530, %cst_432 {dimension_numbers = #tpu.dot_dimension_numbers<[1], [0], [0], [1], [0, 0, 1, 1], [], []>} : vector<2x64xf32>, vector<64x64xf32>, vector<2x64xf32> -> vector<2x64xf32>
    %532 = arith.addf %525, %531 : vector<2x64xf32>
    %c6_433 = arith.constant 6 : index
    %c0_434 = arith.constant 0 : index
    %c0_435 = arith.constant 0 : index
    %533 = vector.load %arg19[%c6_433, %c0_434, %c0_435] : memref<8x2x16xf32, #tpu.memory_space<vmem>>, vector<1x2x16xf32>
    %534 = vector.shape_cast %533 : vector<1x2x16xf32> to vector<2x16xf32>
    %cst_436 = arith.constant dense<0.000000e+00> : vector<2x64xf32>
    %535 = tpu.matmul %534, %488, %cst_436 {dimension_numbers = #tpu.dot_dimension_numbers<[1], [0], [0], [1], [0, 0, 1, 1], [], []>} : vector<2x16xf32>, vector<16x64xf32>, vector<2x64xf32> -> vector<2x64xf32>
    %c6_437 = arith.constant 6 : index
    %c0_438 = arith.constant 0 : index
    %c0_439 = arith.constant 0 : index
    %536 = vector.load %arg20[%c6_437, %c0_438, %c0_439] : memref<8x64x64xf32, #tpu.memory_space<vmem>>, vector<1x64x64xf32>
    %537 = vector.shape_cast %536 : vector<1x64x64xf32> to vector<64x64xf32>
    %cst_440 = arith.constant dense<0.000000e+00> : vector<2x64xf32>
    %538 = tpu.matmul %535, %537, %cst_440 {dimension_numbers = #tpu.dot_dimension_numbers<[1], [0], [0], [1], [0, 0, 1, 1], [], []>} : vector<2x64xf32>, vector<64x64xf32>, vector<2x64xf32> -> vector<2x64xf32>
    %539 = arith.addf %532, %538 : vector<2x64xf32>
    %c7_441 = arith.constant 7 : index
    %c0_442 = arith.constant 0 : index
    %c0_443 = arith.constant 0 : index
    %540 = vector.load %arg19[%c7_441, %c0_442, %c0_443] : memref<8x2x16xf32, #tpu.memory_space<vmem>>, vector<1x2x16xf32>
    %541 = vector.shape_cast %540 : vector<1x2x16xf32> to vector<2x16xf32>
    %cst_444 = arith.constant dense<0.000000e+00> : vector<2x64xf32>
    %542 = tpu.matmul %541, %488, %cst_444 {dimension_numbers = #tpu.dot_dimension_numbers<[1], [0], [0], [1], [0, 0, 1, 1], [], []>} : vector<2x16xf32>, vector<16x64xf32>, vector<2x64xf32> -> vector<2x64xf32>
    %c7_445 = arith.constant 7 : index
    %c0_446 = arith.constant 0 : index
    %c0_447 = arith.constant 0 : index
    %543 = vector.load %arg20[%c7_445, %c0_446, %c0_447] : memref<8x64x64xf32, #tpu.memory_space<vmem>>, vector<1x64x64xf32>
    %544 = vector.shape_cast %543 : vector<1x64x64xf32> to vector<64x64xf32>
    %cst_448 = arith.constant dense<0.000000e+00> : vector<2x64xf32>
    %545 = tpu.matmul %542, %544, %cst_448 {dimension_numbers = #tpu.dot_dimension_numbers<[1], [0], [0], [1], [0, 0, 1, 1], [], []>} : vector<2x64xf32>, vector<64x64xf32>, vector<2x64xf32> -> vector<2x64xf32>
    %546 = arith.addf %539, %545 : vector<2x64xf32>
    %c0_449 = arith.constant 0 : index
    %c0_450 = arith.constant 0 : index
    %547 = vector.load %arg22[%c0_449, %c0_450] : memref<1x64xf32, #tpu.memory_space<vmem>>, vector<1x64xf32>
    %c0_451 = arith.constant 0 : index
    %c0_452 = arith.constant 0 : index
    %548 = vector.load %arg23[%c0_451, %c0_452] : memref<1x64xf32, #tpu.memory_space<vmem>>, vector<1x64xf32>
    %cst_453 = arith.constant dense<0.000000e+00> : vector<2xf32>
    %549 = vector.multi_reduction <add>, %546, %cst_453 [1] : vector<2x64xf32> to vector<2xf32>
    %550 = vector.shape_cast %549 : vector<2xf32> to vector<2x1xf32>
    %cst_454 = arith.constant 6.400000e+01 : f32
    %551 = vector.broadcast %cst_454 : f32 to vector<2x1xf32>
    %552 = arith.divf %550, %551 : vector<2x1xf32>
    %553 = vector.broadcast %552 : vector<2x1xf32> to vector<2x64xf32>
    %554 = arith.subf %546, %553 : vector<2x64xf32>
    %555 = arith.mulf %554, %554 : vector<2x64xf32>
    %cst_455 = arith.constant dense<0.000000e+00> : vector<2xf32>
    %556 = vector.multi_reduction <add>, %555, %cst_455 [1] : vector<2x64xf32> to vector<2xf32>
    %557 = vector.shape_cast %556 : vector<2xf32> to vector<2x1xf32>
    %cst_456 = arith.constant 6.400000e+01 : f32
    %558 = vector.broadcast %cst_456 : f32 to vector<2x1xf32>
    %559 = arith.divf %557, %558 : vector<2x1xf32>
    %560 = vector.broadcast %552 : vector<2x1xf32> to vector<2x64xf32>
    %561 = arith.subf %546, %560 : vector<2x64xf32>
    %cst_457 = arith.constant 9.99999974E-6 : f32
    %562 = vector.broadcast %cst_457 : f32 to vector<2x1xf32>
    %563 = arith.addf %559, %562 : vector<2x1xf32>
    %564 = math.rsqrt %563 : vector<2x1xf32>
    %565 = vector.broadcast %564 : vector<2x1xf32> to vector<2x64xf32>
    %566 = arith.mulf %561, %565 : vector<2x64xf32>
    %567 = vector.broadcast %547 : vector<1x64xf32> to vector<2x64xf32>
    %568 = arith.mulf %566, %567 : vector<2x64xf32>
    %569 = vector.broadcast %548 : vector<1x64xf32> to vector<2x64xf32>
    %570 = arith.addf %568, %569 : vector<2x64xf32>
    %cst_458 = arith.constant 0.000000e+00 : f32
    %cst_459 = arith.constant 6.000000e+00 : f32
    %571 = vector.broadcast %cst_458 : f32 to vector<2x64xf32>
    %572 = arith.maximumf %571, %570 : vector<2x64xf32>
    %573 = vector.broadcast %cst_459 : f32 to vector<2x64xf32>
    %574 = arith.minimumf %573, %572 : vector<2x64xf32>
    %c0_460 = arith.constant 0 : index
    %c0_461 = arith.constant 0 : index
    %575 = vector.load %arg24[%c0_460, %c0_461] : memref<64x2xf32, #tpu.memory_space<vmem>>, vector<64x2xf32>
    %cst_462 = arith.constant dense<0.000000e+00> : vector<2x2xf32>
    %576 = tpu.matmul %574, %575, %cst_462 {dimension_numbers = #tpu.dot_dimension_numbers<[1], [0], [0], [1], [0, 0, 1, 1], [], []>} : vector<2x64xf32>, vector<64x2xf32>, vector<2x2xf32> -> vector<2x2xf32>
    %c0_463 = arith.constant 0 : index
    %c0_464 = arith.constant 0 : index
    %577 = vector.load %arg25[%c0_463, %c0_464] : memref<1x2xf32, #tpu.memory_space<vmem>>, vector<1x2xf32>
    %578 = vector.broadcast %577 : vector<1x2xf32> to vector<2x2xf32>
    %579 = arith.addf %576, %578 : vector<2x2xf32>
    %c0_465 = arith.constant 0 : index
    %c0_466 = arith.constant 0 : index
    %580 = vector.load %arg26[%c0_465, %c0_466] : memref<2x2xf32, #tpu.memory_space<vmem>>, vector<2x2xf32>
    tpu.vector_store %arg26[%c0_465, %c0_466], %579 {strides = array<i32>} : memref<2x2xf32, #tpu.memory_space<vmem>>, vector<2x2xf32>,
    return
  }
}

</mosaic_0001>

<llo_original>
// kernel: transformer_encoder.1
$region0: #{transformer_encoder.1}
  #allocation0 [shape = 'u32[]', space=smem, size = 0x4, offset = 0x4, fixed_abs, tag = 'smem constant byte address 0x4 - core index']
  #allocation1 [shape = 'u32[144,128]{1,0:T(1,128)}', space=vmem, size = 0x12000, scoped, tag = 'internal scratch']
  %s0 = inlined_call_operand.vmem [shape: s32[16,1], index: 0, kind: input, shape index: {}]
  %s1 = inlined_call_operand.vmem [shape: f32[16,1], index: 1, kind: input, shape index: {}]
  %s2 = inlined_call_operand.vmem [shape: f32[128,64], index: 2, kind: input, shape index: {}]
  %s3 = inlined_call_operand.vmem [shape: f32[16,64], index: 3, kind: input, shape index: {}]
  %s4 = inlined_call_operand.vmem [shape: f32[128,128], index: 4, kind: input, shape index: {}]
  %s5 = inlined_call_operand.vmem [shape: f32[8,128,16], index: 5, kind: input, shape index: {}]
  %s6 = inlined_call_operand.vmem [shape: f32[8,64,24], index: 6, kind: input, shape index: {}]
  %s7 = inlined_call_operand.vmem [shape: f32[8,1,24], index: 7, kind: input, shape index: {}]
  %s8 = inlined_call_operand.vmem [shape: f32[8,8,64], index: 8, kind: input, shape index: {}]
  %s9 = inlined_call_operand.vmem [shape: f32[1,64], index: 9, kind: input, shape index: {}]
  %s10 = inlined_call_operand.vmem [shape: f32[1,64], index: 10, kind: input, shape index: {}]
  %s11 = inlined_call_operand.vmem [shape: f32[1,64], index: 11, kind: input, shape index: {}]
  %s12 = inlined_call_operand.vmem [shape: f32[64,128], index: 12, kind: input, shape index: {}]
  %s13 = inlined_call_operand.vmem [shape: f32[1,128], index: 13, kind: input, shape index: {}]
  %s14 = inlined_call_operand.vmem [shape: f32[128,64], index: 14, kind: input, shape index: {}]
  %s15 = inlined_call_operand.vmem [shape: f32[1,64], index: 15, kind: input, shape index: {}]
  %s16 = inlined_call_operand.vmem [shape: f32[2,16], index: 16, kind: input, shape index: {}]
  %s17 = inlined_call_operand.vmem [shape: f32[16,64], index: 17, kind: input, shape index: {}]
  %s18 = inlined_call_operand.vmem [shape: f32[16,64], index: 18, kind: input, shape index: {}]
  %s19 = inlined_call_operand.vmem [shape: f32[8,2,16], index: 19, kind: input, shape index: {}]
  %s20 = inlined_call_operand.vmem [shape: f32[8,64,64], index: 20, kind: input, shape index: {}]
  %s21 = inlined_call_operand.vmem [shape: f32[1,64], index: 21, kind: input, shape index: {}]
  %s22 = inlined_call_operand.vmem [shape: f32[1,64], index: 22, kind: input, shape index: {}]
  %s23 = inlined_call_operand.vmem [shape: f32[1,64], index: 23, kind: input, shape index: {}]
  %s24 = inlined_call_operand.vmem [shape: f32[64,2], index: 24, kind: input, shape index: {}]
  %s25 = inlined_call_operand.vmem [shape: f32[1,2], index: 25, kind: input, shape index: {}]
  %s26 = inlined_call_operand.hbm [shape: f32[2,2], index: 26, kind: output, shape index: {}]
  %s27 = sld [smem:[#allocation0]]
  $region114: #{transformer_encoder.1} parent=0
    _
  %s29 = ssub.s32 1, %s27
  %s30 = scalar_select 0, %s29, %s27
  $region1: #{transformer_encoder.1} parent=0
    #allocation2 [shape = 'u8[1024]{0}', space=vmem, size = 0x400, scoped, tag = 'output window, operand 0, single buffered']
    #allocation3 [shape = 's32[1]{0}', space=sflag, size = 0x4, scoped, tag = 'scoped memory for transformer_encoder.1']
    %31 = vsyncpa [#allocation3], 0
    // Predicated region
    $region2: #{transformer_encoder.1} parent=1 // pred_check
      _
    $region3: #{transformer_encoder.1} parent=1 // pred_check_branch
      %33 = sbr.rel (0) target = $region5
    $region4: #{transformer_encoder.1} parent=1 // pred_region
      _
    $region5: #{transformer_encoder.1} parent=1 // pred_fallthru
      _
    // Predicated region
    $region6: #{transformer_encoder.1} parent=1 // pred_check
      _
    $region7: #{transformer_encoder.1} parent=1 // pred_check_branch
      %35 = sbr.rel (0) target = $region9
    $region8: #{transformer_encoder.1} parent=1 // pred_region
      _
    $region9: #{transformer_encoder.1} parent=1 // pred_fallthru
      _
    // Predicated region
    $region10: #{transformer_encoder.1} parent=1 // pred_check
      _
    $region11: #{transformer_encoder.1} parent=1 // pred_check_branch
      %37 = sbr.rel (0) target = $region13
    $region12: #{transformer_encoder.1} parent=1 // pred_region
      _
    $region13: #{transformer_encoder.1} parent=1 // pred_fallthru
      _
    // Predicated region
    $region14: #{transformer_encoder.1} parent=1 // pred_check
      _
    $region15: #{transformer_encoder.1} parent=1 // pred_check_branch
      %39 = sbr.rel (0) target = $region17
    $region16: #{transformer_encoder.1} parent=1 // pred_region
      _
    $region17: #{transformer_encoder.1} parent=1 // pred_fallthru
      _
    // Predicated region
    $region18: #{transformer_encoder.1} parent=1 // pred_check
      _
    $region19: #{transformer_encoder.1} parent=1 // pred_check_branch
      %41 = sbr.rel (0) target = $region21
    $region20: #{transformer_encoder.1} parent=1 // pred_region
      _
    $region21: #{transformer_encoder.1} parent=1 // pred_fallthru
      _
    // Predicated region
    $region22: #{transformer_encoder.1} parent=1 // pred_check
      _
    $region23: #{transformer_encoder.1} parent=1 // pred_check_branch
      %43 = sbr.rel (0) target = $region25
    $region24: #{transformer_encoder.1} parent=1 // pred_region
      _
    $region25: #{transformer_encoder.1} parent=1 // pred_fallthru
      _
    // Predicated region
    $region26: #{transformer_encoder.1} parent=1 // pred_check
      _
    $region27: #{transformer_encoder.1} parent=1 // pred_check_branch
      %45 = sbr.rel (0) target = $region29
    $region28: #{transformer_encoder.1} parent=1 // pred_region
      _
    $region29: #{transformer_encoder.1} parent=1 // pred_fallthru
      _
    // Predicated region
    $region30: #{transformer_encoder.1} parent=1 // pred_check
      _
    $region31: #{transformer_encoder.1} parent=1 // pred_check_branch
      %47 = sbr.rel (0) target = $region33
    $region32: #{transformer_encoder.1} parent=1 // pred_region
      _
    $region33: #{transformer_encoder.1} parent=1 // pred_fallthru
      _
    // Predicated region
    $region34: #{transformer_encoder.1} parent=1 // pred_check
      _
    $region35: #{transformer_encoder.1} parent=1 // pred_check_branch
      %49 = sbr.rel (0) target = $region37
    $region36: #{transformer_encoder.1} parent=1 // pred_region
      _
    $region37: #{transformer_encoder.1} parent=1 // pred_fallthru
      _
    // Predicated region
    $region38: #{transformer_encoder.1} parent=1 // pred_check
      _
    $region39: #{transformer_encoder.1} parent=1 // pred_check_branch
      %51 = sbr.rel (0) target = $region41
    $region40: #{transformer_encoder.1} parent=1 // pred_region
      _
    $region41: #{transformer_encoder.1} parent=1 // pred_fallthru
      _
    // Predicated region
    $region42: #{transformer_encoder.1} parent=1 // pred_check
      _
    $region43: #{transformer_encoder.1} parent=1 // pred_check_branch
      %53 = sbr.rel (0) target = $region45
    $region44: #{transformer_encoder.1} parent=1 // pred_region
      _
    $region45: #{transformer_encoder.1} parent=1 // pred_fallthru
      _
    // Predicated region
    $region46: #{transformer_encoder.1} parent=1 // pred_check
      _
    $region47: #{transformer_encoder.1} parent=1 // pred_check_branch
      %55 = sbr.rel (0) target = $region49
    $region48: #{transformer_encoder.1} parent=1 // pred_region
      _
    $region49: #{transformer_encoder.1} parent=1 // pred_fallthru
      _
    // Predicated region
    $region50: #{transformer_encoder.1} parent=1 // pred_check
      _
    $region51: #{transformer_encoder.1} parent=1 // pred_check_branch
      %57 = sbr.rel (0) target = $region53
    $region52: #{transformer_encoder.1} parent=1 // pred_region
      _
    $region53: #{transformer_encoder.1} parent=1 // pred_fallthru
      _
    // Predicated region
    $region54: #{transformer_encoder.1} parent=1 // pred_check
      _
    $region55: #{transformer_encoder.1} parent=1 // pred_check_branch
      %59 = sbr.rel (0) target = $region57
    $region56: #{transformer_encoder.1} parent=1 // pred_region
      _
    $region57: #{transformer_encoder.1} parent=1 // pred_fallthru
      _
    // Predicated region
    $region58: #{transformer_encoder.1} parent=1 // pred_check
      _
    $region59: #{transformer_encoder.1} parent=1 // pred_check_branch
      %61 = sbr.rel (0) target = $region61
    $region60: #{transformer_encoder.1} parent=1 // pred_region
      _
    $region61: #{transformer_encoder.1} parent=1 // pred_fallthru
      _
    // Predicated region
    $region62: #{transformer_encoder.1} parent=1 // pred_check
      _
    $region63: #{transformer_encoder.1} parent=1 // pred_check_branch
      %63 = sbr.rel (0) target = $region65
    $region64: #{transformer_encoder.1} parent=1 // pred_region
      _
    $region65: #{transformer_encoder.1} parent=1 // pred_fallthru
      _
    // Predicated region
    $region66: #{transformer_encoder.1} parent=1 // pred_check
      _
    $region67: #{transformer_encoder.1} parent=1 // pred_check_branch
      %65 = sbr.rel (0) target = $region69
    $region68: #{transformer_encoder.1} parent=1 // pred_region
      _
    $region69: #{transformer_encoder.1} parent=1 // pred_fallthru
      _
    // Predicated region
    $region70: #{transformer_encoder.1} parent=1 // pred_check
      _
    $region71: #{transformer_encoder.1} parent=1 // pred_check_branch
      %67 = sbr.rel (0) target = $region73
    $region72: #{transformer_encoder.1} parent=1 // pred_region
      _
    $region73: #{transformer_encoder.1} parent=1 // pred_fallthru
      _
    // Predicated region
    $region74: #{transformer_encoder.1} parent=1 // pred_check
      _
    $region75: #{transformer_encoder.1} parent=1 // pred_check_branch
      %69 = sbr.rel (0) target = $region77
    $region76: #{transformer_encoder.1} parent=1 // pred_region
      _
    $region77: #{transformer_encoder.1} parent=1 // pred_fallthru
      _
    // Predicated region
    $region78: #{transformer_encoder.1} parent=1 // pred_check
      _
    $region79: #{transformer_encoder.1} parent=1 // pred_check_branch
      %71 = sbr.rel (0) target = $region81
    $region80: #{transformer_encoder.1} parent=1 // pred_region
      _
    $region81: #{transformer_encoder.1} parent=1 // pred_fallthru
      _
    // Predicated region
    $region82: #{transformer_encoder.1} parent=1 // pred_check
      _
    $region83: #{transformer_encoder.1} parent=1 // pred_check_branch
      %73 = sbr.rel (0) target = $region85
    $region84: #{transformer_encoder.1} parent=1 // pred_region
      _
    $region85: #{transformer_encoder.1} parent=1 // pred_fallthru
      _
    // Predicated region
    $region86: #{transformer_encoder.1} parent=1 // pred_check
      _
    $region87: #{transformer_encoder.1} parent=1 // pred_check_branch
      %75 = sbr.rel (0) target = $region89
    $region88: #{transformer_encoder.1} parent=1 // pred_region
      _
    $region89: #{transformer_encoder.1} parent=1 // pred_fallthru
      _
    // Predicated region
    $region90: #{transformer_encoder.1} parent=1 // pred_check
      _
    $region91: #{transformer_encoder.1} parent=1 // pred_check_branch
      %77 = sbr.rel (0) target = $region93
    $region92: #{transformer_encoder.1} parent=1 // pred_region
      _
    $region93: #{transformer_encoder.1} parent=1 // pred_fallthru
      _
    // Predicated region
    $region94: #{transformer_encoder.1} parent=1 // pred_check
      _
    $region95: #{transformer_encoder.1} parent=1 // pred_check_branch
      %79 = sbr.rel (0) target = $region97
    $region96: #{transformer_encoder.1} parent=1 // pred_region
      _
    $region97: #{transformer_encoder.1} parent=1 // pred_fallthru
      _
    // Predicated region
    $region98: #{transformer_encoder.1} parent=1 // pred_check
      _
    $region99: #{transformer_encoder.1} parent=1 // pred_check_branch
      %81 = sbr.rel (0) target = $region101
    $region100: #{transformer_encoder.1} parent=1 // pred_region
      _
    $region101: #{transformer_encoder.1} parent=1 // pred_fallthru
      _
    // Predicated region
    $region102: #{transformer_encoder.1} parent=1 // pred_check
      _
    $region103: #{transformer_encoder.1} parent=1 // pred_check_branch
      %83 = sbr.rel (0) target = $region105
    $region104: #{transformer_encoder.1} parent=1 // pred_region
      _
    $region105: #{transformer_encoder.1} parent=1 // pred_fallthru
      _
    %v84 = vld [vmem:[%s0] sm:$0xff]
    %v85 = vld [vmem:[%s0 + $0x8] sm:$0xff]
    %v86 = vlaneseq
    %v87 = vand.u32 %v86, 127
    %88 = vset.pattern.permute.xlu0 0
    %89 = vperm.xlu0 %88, %v84
    %v90 = vpop.permute.xlu0 %89
    %91 = vset.pattern.permute.xlu0 0
    %92 = vperm.xlu0 %91, %v85
    %v93 = vpop.permute.xlu0 %92
    %vm94 = vcmp.eq.s32.totalorder %v90, %v87
    %vm95 = vcmp.eq.s32.totalorder %v93, %v87
    %v96 = vsel %vm94, 1, 0
    %v97 = vsel %vm95, 1, 0
    %v98 = vcvt.s32.f32 %v96
    %v99 = vcvt.s32.f32 %v97
    %v100 = vld [vmem:[%s2] sm:$0xff]
    %v101 = vld [vmem:[%s2 + $0x8] sm:$0xff]
    %v102 = vld [vmem:[%s2 + $0x10] sm:$0xff]
    %v103 = vld [vmem:[%s2 + $0x18] sm:$0xff]
    %v104 = vld [vmem:[%s2 + $0x20] sm:$0xff]
    %v105 = vld [vmem:[%s2 + $0x28] sm:$0xff]
    %v106 = vld [vmem:[%s2 + $0x30] sm:$0xff]
    %v107 = vld [vmem:[%s2 + $0x38] sm:$0xff]
    %v108 = vld [vmem:[%s2 + $0x40] sm:$0xff]
    %v109 = vld [vmem:[%s2 + $0x48] sm:$0xff]
    %v110 = vld [vmem:[%s2 + $0x50] sm:$0xff]
    %v111 = vld [vmem:[%s2 + $0x58] sm:$0xff]
    %v112 = vld [vmem:[%s2 + $0x60] sm:$0xff]
    %v113 = vld [vmem:[%s2 + $0x68] sm:$0xff]
    %v114 = vld [vmem:[%s2 + $0x70] sm:$0xff]
    %v115 = vld [vmem:[%s2 + $0x78] sm:$0xff]
    %v116 = vld [vmem:[%s3] sm:$0xff]
    %v117 = vld [vmem:[%s3 + $0x8] sm:$0xff]
    %118 = vmatprep.subr.mxu0 0.0
    %119 = vmatpush1.msra.mxu0 %v115
    %120 = vmatprep.subr.mxu0 0.0
    %121 = vmatpush1.msra.mxu0 %v114
    %122 = vmatprep.subr.mxu0 0.0
    %123 = vmatpush1.msra.mxu0 %v113
    %124 = vmatprep.subr.mxu0 0.0
    %125 = vmatpush1.msra.mxu0 %v112
    %126 = vmatprep.subr.mxu0 0.0
    %127 = vmatpush1.msra.mxu0 %v111
    %128 = vmatprep.subr.mxu0 0.0
    %129 = vmatpush1.msra.mxu0 %v110
    %130 = vmatprep.subr.mxu0 0.0
    %131 = vmatpush1.msra.mxu0 %v109
    %132 = vmatprep.subr.mxu0 0.0
    %133 = vmatpush1.msra.mxu0 %v108
    %134 = vmatprep.subr.mxu0 0.0
    %135 = vmatpush1.msra.mxu0 %v107
    %136 = vmatprep.subr.mxu0 0.0
    %137 = vmatpush1.msra.mxu0 %v106
    %138 = vmatprep.subr.mxu0 0.0
    %139 = vmatpush1.msra.mxu0 %v105
    %140 = vmatprep.subr.mxu0 0.0
    %141 = vmatpush1.msra.mxu0 %v104
    %142 = vmatprep.subr.mxu0 0.0
    %143 = vmatpush1.msra.mxu0 %v103
    %144 = vmatprep.subr.mxu0 0.0
    %145 = vmatpush1.msra.mxu0 %v102
    %146 = vmatprep.subr.mxu0 0.0
    %147 = vmatpush1.msra.mxu0 %v101
    %148 = vmatprep.subr.mxu0 0.0
    %149 = vmatpush1.msra.mxu0 %v100
    %150 = vmatprep.subr.mxu0 0.0
    %151 = vmatpush2.msra.mxu0 0.0
    %152 = vmatprep.subr.mxu0 0.0
    %153 = vmatpush2.msra.mxu0 0.0
    %154 = vmatprep.subr.mxu0 0.0
    %155 = vmatpush2.msra.mxu0 0.0
    %156 = vmatprep.subr.mxu0 0.0
    %157 = vmatpush2.msra.mxu0 0.0
    %158 = vmatprep.subr.mxu0 0.0
    %159 = vmatpush2.msra.mxu0 0.0
    %160 = vmatprep.subr.mxu0 0.0
    %161 = vmatpush2.msra.mxu0 0.0
    %162 = vmatprep.subr.mxu0 0.0
    %163 = vmatpush2.msra.mxu0 0.0
    %164 = vmatprep.subr.mxu0 0.0
    %165 = vmatpush2.msra.mxu0 0.0
    %166 = vmatprep.subr.mxu0 0.0
    %167 = vmatpush2.msra.mxu0 0.0
    %168 = vmatprep.subr.mxu0 0.0
    %169 = vmatpush2.msra.mxu0 0.0
    %170 = vmatprep.subr.mxu0 0.0
    %171 = vmatpush2.msra.mxu0 0.0
    %172 = vmatprep.subr.mxu0 0.0
    %173 = vmatpush2.msra.mxu0 0.0
    %174 = vmatprep.subr.mxu0 0.0
    %175 = vmatpush2.msra.mxu0 0.0
    %176 = vmatprep.subr.mxu0 0.0
    %177 = vmatpush2.msra.mxu0 0.0
    %178 = vmatprep.subr.mxu0 0.0
    %179 = vmatpush2.msra.mxu0 0.0
    %180 = vmatprep.subr.mxu0 0.0
    %181 = vmatpush2.msra.mxu0 0.0
    %182 = vmatprep.mubr.f32.mxu0 0.0
    %183 = vmatmul.mubr.f32.gmra.mxu0 %v98
    %v184 = vpop.f32.mrf.mxu0
    %v185 = vadd.f32 %v116, %v184
    %v186 = vpop.f32.mrf.mxu0
    %187 = vmatprep.mubr.f32.mxu0 0.0
    %188 = vmatmul.mubr.f32.gmra.mxu0 %v99
    %v189 = vpop.f32.mrf.mxu0
    %v190 = vadd.f32 %v117, %v189
    %v191 = vpop.f32.mrf.mxu0
    %192 = vdwg.mxu0
    %v193 = vld [vmem:[%s1] sm:$0xff]
    %v194 = vld [vmem:[%s1 + $0x8] sm:$0xff]
    %196 = vset.pattern.permute.xlu0 0
    %197 = vperm.xlu0 %196, %v193
    %v198 = vpop.permute.xlu0 %197
    %201 = vset.pattern.permute.xlu0 0
    %202 = vperm.xlu0 %201, %v194
    %v203 = vpop.permute.xlu0 %202
    %v205 = vmul.f32 %v185, %v198
    %v206 = vmul.f32 %v190, %v203
    %v207 = vld [vmem:[%s4] sm:$0xff]
    %v208 = vld [vmem:[%s4 + $0x8] sm:$0xff]
    %v209 = vld [vmem:[%s4 + $0x10] sm:$0xff]
    %v210 = vld [vmem:[%s4 + $0x18] sm:$0xff]
    %v211 = vld [vmem:[%s4 + $0x20] sm:$0xff]
    %v212 = vld [vmem:[%s4 + $0x28] sm:$0xff]
    %v213 = vld [vmem:[%s4 + $0x30] sm:$0xff]
    %v214 = vld [vmem:[%s4 + $0x38] sm:$0xff]
    %v215 = vld [vmem:[%s4 + $0x40] sm:$0xff]
    %v216 = vld [vmem:[%s4 + $0x48] sm:$0xff]
    %v217 = vld [vmem:[%s4 + $0x50] sm:$0xff]
    %v218 = vld [vmem:[%s4 + $0x58] sm:$0xff]
    %v219 = vld [vmem:[%s4 + $0x60] sm:$0xff]
    %v220 = vld [vmem:[%s4 + $0x68] sm:$0xff]
    %v221 = vld [vmem:[%s4 + $0x70] sm:$0xff]
    %v222 = vld [vmem:[%s4 + $0x78] sm:$0xff]
    %v223 = vld [vmem:[%s10] sm:$0x1]
    %v224 = vld [vmem:[%s11] sm:$0x1]
    %v225 = vld [vmem:[%s6] sm:$0xff]
    %v226 = vld [vmem:[%s6 + $0x8] sm:$0xff]
    %v227 = vld [vmem:[%s6 + $0x10] sm:$0xff]
    %v228 = vld [vmem:[%s6 + $0x18] sm:$0xff]
    %v229 = vld [vmem:[%s6 + $0x20] sm:$0xff]
    %v230 = vld [vmem:[%s6 + $0x28] sm:$0xff]
    %v231 = vld [vmem:[%s6 + $0x30] sm:$0xff]
    %v232 = vld [vmem:[%s6 + $0x38] sm:$0xff]
    %v233 = vld [vmem:[%s7] sm:$0x1]
    %v235 = vlaneseq
    %v236 = vshrl.u32 %v235, 7
    %v237 = vsub.s32 0, %v236
    %v238 = vrot.slane %v233, %v237
    %vm240 = vcmask 523264
    %v242 = vsel %vm240, %v205, 0
    %v245 = vsel %vm240, %v206, 0
    %247 = vmatprep.subr.mxu0 0.0
    %248 = vmatpush1.msra.mxu0 0.0
    %249 = vmatprep.subr.mxu0 0.0
    %250 = vmatpush1.msra.mxu0 0.0
    %251 = vmatprep.subr.mxu0 0.0
    %252 = vmatpush1.msra.mxu0 0.0
    %253 = vmatprep.subr.mxu0 0.0
    %254 = vmatpush1.msra.mxu0 0.0
    %255 = vmatprep.subr.mxu0 0.0
    %256 = vmatpush1.msra.mxu0 0.0
    %257 = vmatprep.subr.mxu0 0.0
    %258 = vmatpush1.msra.mxu0 0.0
    %259 = vmatprep.subr.mxu0 0.0
    %260 = vmatpush1.msra.mxu0 0.0
    %261 = vmatprep.subr.mxu0 0.0
    %262 = vmatpush1.msra.mxu0 0.0
    %263 = vmatprep.subr.mxu0 0.0
    %264 = vmatpush1.msra.mxu0 %v232
    %265 = vmatprep.subr.mxu0 0.0
    %266 = vmatpush1.msra.mxu0 %v231
    %267 = vmatprep.subr.mxu0 0.0
    %268 = vmatpush1.msra.mxu0 %v230
    %269 = vmatprep.subr.mxu0 0.0
    %270 = vmatpush1.msra.mxu0 %v229
    %271 = vmatprep.subr.mxu0 0.0
    %272 = vmatpush1.msra.mxu0 %v228
    %273 = vmatprep.subr.mxu0 0.0
    %274 = vmatpush1.msra.mxu0 %v227
    %275 = vmatprep.subr.mxu0 0.0
    %276 = vmatpush1.msra.mxu0 %v226
    %277 = vmatprep.subr.mxu0 0.0
    %278 = vmatpush1.msra.mxu0 %v225
    %279 = vmatprep.subr.mxu0 0.0
    %280 = vmatpush2.msra.mxu0 0.0
    %281 = vmatprep.subr.mxu0 0.0
    %282 = vmatpush2.msra.mxu0 0.0
    %283 = vmatprep.subr.mxu0 0.0
    %284 = vmatpush2.msra.mxu0 0.0
    %285 = vmatprep.subr.mxu0 0.0
    %286 = vmatpush2.msra.mxu0 0.0
    %287 = vmatprep.subr.mxu0 0.0
    %288 = vmatpush2.msra.mxu0 0.0
    %289 = vmatprep.subr.mxu0 0.0
    %290 = vmatpush2.msra.mxu0 0.0
    %291 = vmatprep.subr.mxu0 0.0
    %292 = vmatpush2.msra.mxu0 0.0
    %293 = vmatprep.subr.mxu0 0.0
    %294 = vmatpush2.msra.mxu0 0.0
    %295 = vmatprep.subr.mxu0 0.0
    %296 = vmatpush2.msra.mxu0 0.0
    %297 = vmatprep.subr.mxu0 0.0
    %298 = vmatpush2.msra.mxu0 0.0
    %299 = vmatprep.subr.mxu0 0.0
    %300 = vmatpush2.msra.mxu0 0.0
    %301 = vmatprep.subr.mxu0 0.0
    %302 = vmatpush2.msra.mxu0 0.0
    %303 = vmatprep.subr.mxu0 0.0
    %304 = vmatpush2.msra.mxu0 0.0
    %305 = vmatprep.subr.mxu0 0.0
    %306 = vmatpush2.msra.mxu0 0.0
    %307 = vmatprep.subr.mxu0 0.0
    %308 = vmatpush2.msra.mxu0 0.0
    %309 = vmatprep.subr.mxu0 0.0
    %310 = vmatpush2.msra.mxu0 0.0
    %311 = vmatprep.mubr.f32.mxu0 0.0
    %312 = vmatmul.mubr.f32.gmra.mxu0 %v242
    %v313 = vpop.f32.mrf.mxu0
    %v314 = vadd.f32 %v238, %v313
    %v315 = vpop.f32.mrf.mxu0
    %316 = vmatprep.mubr.f32.mxu0 0.0
    %317 = vmatmul.mubr.f32.gmra.mxu0 %v245
    %v318 = vpop.f32.mrf.mxu0
    %v319 = vadd.f32 %v238, %v318
    %v320 = vpop.f32.mrf.mxu0
    %321 = vdwg.mxu0
    %v322 = vld [vmem:[%s5] sm:$0xff]
    %v323 = vld [vmem:[%s5 + $0x8] sm:$0xff]
    %v324 = vld [vmem:[%s5 + $0x10] sm:$0xff]
    %v325 = vld [vmem:[%s5 + $0x18] sm:$0xff]
    %v326 = vld [vmem:[%s5 + $0x20] sm:$0xff]
    %v327 = vld [vmem:[%s5 + $0x28] sm:$0xff]
    %v328 = vld [vmem:[%s5 + $0x30] sm:$0xff]
    %v329 = vld [vmem:[%s5 + $0x38] sm:$0xff]
    %v330 = vld [vmem:[%s5 + $0x40] sm:$0xff]
    %v331 = vld [vmem:[%s5 + $0x48] sm:$0xff]
    %v332 = vld [vmem:[%s5 + $0x50] sm:$0xff]
    %v333 = vld [vmem:[%s5 + $0x58] sm:$0xff]
    %v334 = vld [vmem:[%s5 + $0x60] sm:$0xff]
    %v335 = vld [vmem:[%s5 + $0x68] sm:$0xff]
    %v336 = vld [vmem:[%s5 + $0x70] sm:$0xff]
    %v337 = vld [vmem:[%s5 + $0x78] sm:$0xff]
    %s338 = scalar_lea.vmem %s6, 64
    %v339 = vld [vmem:[%s338] sm:$0xff]
    %v340 = vld [vmem:[%s338 + $0x8] sm:$0xff]
    %v341 = vld [vmem:[%s338 + $0x10] sm:$0xff]
    %v342 = vld [vmem:[%s338 + $0x18] sm:$0xff]
    %v343 = vld [vmem:[%s338 + $0x20] sm:$0xff]
    %v344 = vld [vmem:[%s338 + $0x28] sm:$0xff]
    %v345 = vld [vmem:[%s338 + $0x30] sm:$0xff]
    %v346 = vld [vmem:[%s338 + $0x38] sm:$0xff]
    %s347 = scalar_lea.vmem %s7, 1
    %v348 = vld [vmem:[%s347] sm:$0x1]
    %v350 = vlaneseq
    %v351 = vshrl.u32 %v350, 7
    %v352 = vsub.s32 0, %v351
    %v353 = vrot.slane %v348, %v352
    %355 = vmatprep.subr.mxu0 0.0
    %356 = vmatpush1.msra.mxu0 0.0
    %357 = vmatprep.subr.mxu0 0.0
    %358 = vmatpush1.msra.mxu0 0.0
    %359 = vmatprep.subr.mxu0 0.0
    %360 = vmatpush1.msra.mxu0 0.0
    %361 = vmatprep.subr.mxu0 0.0
    %362 = vmatpush1.msra.mxu0 0.0
    %363 = vmatprep.subr.mxu0 0.0
    %364 = vmatpush1.msra.mxu0 0.0
    %365 = vmatprep.subr.mxu0 0.0
    %366 = vmatpush1.msra.mxu0 0.0
    %367 = vmatprep.subr.mxu0 0.0
    %368 = vmatpush1.msra.mxu0 0.0
    %369 = vmatprep.subr.mxu0 0.0
    %370 = vmatpush1.msra.mxu0 0.0
    %371 = vmatprep.subr.mxu0 0.0
    %372 = vmatpush1.msra.mxu0 %v346
    %373 = vmatprep.subr.mxu0 0.0
    %374 = vmatpush1.msra.mxu0 %v345
    %375 = vmatprep.subr.mxu0 0.0
    %376 = vmatpush1.msra.mxu0 %v344
    %377 = vmatprep.subr.mxu0 0.0
    %378 = vmatpush1.msra.mxu0 %v343
    %379 = vmatprep.subr.mxu0 0.0
    %380 = vmatpush1.msra.mxu0 %v342
    %381 = vmatprep.subr.mxu0 0.0
    %382 = vmatpush1.msra.mxu0 %v341
    %383 = vmatprep.subr.mxu0 0.0
    %384 = vmatpush1.msra.mxu0 %v340
    %385 = vmatprep.subr.mxu0 0.0
    %386 = vmatpush1.msra.mxu0 %v339
    %387 = vmatprep.subr.mxu0 0.0
    %388 = vmatpush2.msra.mxu0 0.0
    %389 = vmatprep.subr.mxu0 0.0
    %390 = vmatpush2.msra.mxu0 0.0
    %391 = vmatprep.subr.mxu0 0.0
    %392 = vmatpush2.msra.mxu0 0.0
    %393 = vmatprep.subr.mxu0 0.0
    %394 = vmatpush2.msra.mxu0 0.0
    %395 = vmatprep.subr.mxu0 0.0
    %396 = vmatpush2.msra.mxu0 0.0
    %397 = vmatprep.subr.mxu0 0.0
    %398 = vmatpush2.msra.mxu0 0.0
    %399 = vmatprep.subr.mxu0 0.0
    %400 = vmatpush2.msra.mxu0 0.0
    %401 = vmatprep.subr.mxu0 0.0
    %402 = vmatpush2.msra.mxu0 0.0
    %403 = vmatprep.subr.mxu0 0.0
    %404 = vmatpush2.msra.mxu0 0.0
    %405 = vmatprep.subr.mxu0 0.0
    %406 = vmatpush2.msra.mxu0 0.0
    %407 = vmatprep.subr.mxu0 0.0
    %408 = vmatpush2.msra.mxu0 0.0
    %409 = vmatprep.subr.mxu0 0.0
    %410 = vmatpush2.msra.mxu0 0.0
    %411 = vmatprep.subr.mxu0 0.0
    %412 = vmatpush2.msra.mxu0 0.0
    %413 = vmatprep.subr.mxu0 0.0
    %414 = vmatpush2.msra.mxu0 0.0
    %415 = vmatprep.subr.mxu0 0.0
    %416 = vmatpush2.msra.mxu0 0.0
    %417 = vmatprep.subr.mxu0 0.0
    %418 = vmatpush2.msra.mxu0 0.0
    %419 = vmatprep.mubr.f32.mxu0 0.0
    %420 = vmatmul.mubr.f32.gmra.mxu0 %v242
    %v421 = vpop.f32.mrf.mxu0
    %v422 = vadd.f32 %v353, %v421
    %v423 = vpop.f32.mrf.mxu0
    %424 = vmatprep.mubr.f32.mxu0 0.0
    %425 = vmatmul.mubr.f32.gmra.mxu0 %v245
    %v426 = vpop.f32.mrf.mxu0
    %v427 = vadd.f32 %v353, %v426
    %v428 = vpop.f32.mrf.mxu0
    %429 = vdwg.mxu0
    %s430 = scalar_lea.vmem %s5, 128
    %v431 = vld [vmem:[%s430] sm:$0xff]
    %v432 = vld [vmem:[%s430 + $0x8] sm:$0xff]
    %v433 = vld [vmem:[%s430 + $0x10] sm:$0xff]
    %v434 = vld [vmem:[%s430 + $0x18] sm:$0xff]
    %v435 = vld [vmem:[%s430 + $0x20] sm:$0xff]
    %v436 = vld [vmem:[%s430 + $0x28] sm:$0xff]
    %v437 = vld [vmem:[%s430 + $0x30] sm:$0xff]
    %v438 = vld [vmem:[%s430 + $0x38] sm:$0xff]
    %v439 = vld [vmem:[%s430 + $0x40] sm:$0xff]
    %v440 = vld [vmem:[%s430 + $0x48] sm:$0xff]
    %v441 = vld [vmem:[%s430 + $0x50] sm:$0xff]
    %v442 = vld [vmem:[%s430 + $0x58] sm:$0xff]
    %v443 = vld [vmem:[%s430 + $0x60] sm:$0xff]
    %v444 = vld [vmem:[%s430 + $0x68] sm:$0xff]
    %v445 = vld [vmem:[%s430 + $0x70] sm:$0xff]
    %v446 = vld [vmem:[%s430 + $0x78] sm:$0xff]
    %vm447 = vcmask 130048
    %v449 = vsel %vm447, %v431, 0
    %v452 = vsel %vm447, %v432, 0
    %v455 = vsel %vm447, %v433, 0
    %v458 = vsel %vm447, %v434, 0
    %v461 = vsel %vm447, %v435, 0
    %v464 = vsel %vm447, %v436, 0
    %v467 = vsel %vm447, %v437, 0
    %v470 = vsel %vm447, %v438, 0
    %v473 = vsel %vm447, %v439, 0
    %v476 = vsel %vm447, %v440, 0
    %v479 = vsel %vm447, %v441, 0
    %v482 = vsel %vm447, %v442, 0
    %v485 = vsel %vm447, %v443, 0
    %v488 = vsel %vm447, %v444, 0
    %v491 = vsel %vm447, %v445, 0
    %v494 = vsel %vm447, %v446, 0
    %496 = vmatprep.subr.mxu0 0.0
    %497 = vmatpush1.msra.mxu0 0.0
    %498 = vmatprep.subr.mxu0 0.0
    %499 = vmatpush1.msra.mxu0 0.0
    %500 = vmatprep.subr.mxu0 0.0
    %501 = vmatpush1.msra.mxu0 0.0
    %502 = vmatprep.subr.mxu0 0.0
    %503 = vmatpush1.msra.mxu0 0.0
    %504 = vmatprep.subr.mxu0 0.0
    %505 = vmatpush1.msra.mxu0 0.0
    %506 = vmatprep.subr.mxu0 0.0
    %507 = vmatpush1.msra.mxu0 0.0
    %508 = vmatprep.subr.mxu0 0.0
    %509 = vmatpush1.msra.mxu0 0.0
    %510 = vmatprep.subr.mxu0 0.0
    %511 = vmatpush1.msra.mxu0 0.0
    %512 = vmatprep.subr.mxu0 0.0
    %513 = vmatpush1.msra.mxu0 0.0
    %514 = vmatprep.subr.mxu0 0.0
    %515 = vmatpush1.msra.mxu0 0.0
    %516 = vmatprep.subr.mxu0 0.0
    %517 = vmatpush1.msra.mxu0 0.0
    %518 = vmatprep.subr.mxu0 0.0
    %519 = vmatpush1.msra.mxu0 0.0
    %520 = vmatprep.subr.mxu0 0.0
    %521 = vmatpush1.msra.mxu0 0.0
    %522 = vmatprep.subr.mxu0 0.0
    %523 = vmatpush1.msra.mxu0 0.0
    %524 = vmatprep.subr.mxu0 0.0
    %525 = vmatpush1.msra.mxu0 %v427
    %526 = vmatprep.subr.mxu0 0.0
    %527 = vmatpush1.msra.mxu0 %v422
    %528 = vmatprep.subr.mxu0 0.0
    %529 = vmatpush2.msra.mxu0 0.0
    %530 = vmatprep.subr.mxu0 0.0
    %531 = vmatpush2.msra.mxu0 0.0
    %532 = vmatprep.subr.mxu0 0.0
    %533 = vmatpush2.msra.mxu0 0.0
    %534 = vmatprep.subr.mxu0 0.0
    %535 = vmatpush2.msra.mxu0 0.0
    %536 = vmatprep.subr.mxu0 0.0
    %537 = vmatpush2.msra.mxu0 0.0
    %538 = vmatprep.subr.mxu0 0.0
    %539 = vmatpush2.msra.mxu0 0.0
    %540 = vmatprep.subr.mxu0 0.0
    %541 = vmatpush2.msra.mxu0 0.0
    %542 = vmatprep.subr.mxu0 0.0
    %543 = vmatpush2.msra.mxu0 0.0
    %544 = vmatprep.subr.mxu0 0.0
    %545 = vmatpush2.msra.mxu0 0.0
    %546 = vmatprep.subr.mxu0 0.0
    %547 = vmatpush2.msra.mxu0 0.0
    %548 = vmatprep.subr.mxu0 0.0
    %549 = vmatpush2.msra.mxu0 0.0
    %550 = vmatprep.subr.mxu0 0.0
    %551 = vmatpush2.msra.mxu0 0.0
    %552 = vmatprep.subr.mxu0 0.0
    %553 = vmatpush2.msra.mxu0 0.0
    %554 = vmatprep.subr.mxu0 0.0
    %555 = vmatpush2.msra.mxu0 0.0
    %556 = vmatprep.subr.mxu0 0.0
    %557 = vmatpush2.msra.mxu0 0.0
    %558 = vmatprep.subr.mxu0 0.0
    %559 = vmatpush2.msra.mxu0 0.0
    %560 = vmatprep.mubr.f32.mxu0 0.0
    %561 = vmatmul.mubr.f32.gmra.mxu0 %v449
    %v562 = vpop.f32.mrf.mxu0
    %v563 = vadd.f32 0.0, %v562
    %v564 = vpop.f32.mrf.mxu0
    %565 = vmatprep.mubr.f32.mxu0 0.0
    %566 = vmatmul.mubr.f32.gmra.mxu0 %v452
    %v567 = vpop.f32.mrf.mxu0
    %v568 = vadd.f32 0.0, %v567
    %v569 = vpop.f32.mrf.mxu0
    %570 = vmatprep.mubr.f32.mxu0 0.0
    %571 = vmatmul.mubr.f32.gmra.mxu0 %v455
    %v572 = vpop.f32.mrf.mxu0
    %v573 = vadd.f32 0.0, %v572
    %v574 = vpop.f32.mrf.mxu0
    %575 = vmatprep.mubr.f32.mxu0 0.0
    %576 = vmatmul.mubr.f32.gmra.mxu0 %v458
    %v577 = vpop.f32.mrf.mxu0
    %v578 = vadd.f32 0.0, %v577
    %v579 = vpop.f32.mrf.mxu0
    %580 = vmatprep.mubr.f32.mxu0 0.0
    %581 = vmatmul.mubr.f32.gmra.mxu0 %v461
    %v582 = vpop.f32.mrf.mxu0
    %v583 = vadd.f32 0.0, %v582
    %v584 = vpop.f32.mrf.mxu0
    %585 = vmatprep.mubr.f32.mxu0 0.0
    %586 = vmatmul.mubr.f32.gmra.mxu0 %v464
    %v587 = vpop.f32.mrf.mxu0
    %v588 = vadd.f32 0.0, %v587
    %v589 = vpop.f32.mrf.mxu0
    %590 = vmatprep.mubr.f32.mxu0 0.0
    %591 = vmatmul.mubr.f32.gmra.mxu0 %v467
    %v592 = vpop.f32.mrf.mxu0
    %v593 = vadd.f32 0.0, %v592
    %v594 = vpop.f32.mrf.mxu0
    %595 = vmatprep.mubr.f32.mxu0 0.0
    %596 = vmatmul.mubr.f32.gmra.mxu0 %v470
    %v597 = vpop.f32.mrf.mxu0
    %v598 = vadd.f32 0.0, %v597
    %v599 = vpop.f32.mrf.mxu0
    %600 = vmatprep.mubr.f32.mxu0 0.0
    %601 = vmatmul.mubr.f32.gmra.mxu0 %v473
    %v602 = vpop.f32.mrf.mxu0
    %v603 = vadd.f32 0.0, %v602
    %v604 = vpop.f32.mrf.mxu0
    %605 = vmatprep.mubr.f32.mxu0 0.0
    %606 = vmatmul.mubr.f32.gmra.mxu0 %v476
    %v607 = vpop.f32.mrf.mxu0
    %v608 = vadd.f32 0.0, %v607
    %v609 = vpop.f32.mrf.mxu0
    %610 = vmatprep.mubr.f32.mxu0 0.0
    %611 = vmatmul.mubr.f32.gmra.mxu0 %v479
    %v612 = vpop.f32.mrf.mxu0
    %v613 = vadd.f32 0.0, %v612
    %v614 = vpop.f32.mrf.mxu0
    %615 = vmatprep.mubr.f32.mxu0 0.0
    %616 = vmatmul.mubr.f32.gmra.mxu0 %v482
    %v617 = vpop.f32.mrf.mxu0
    %v618 = vadd.f32 0.0, %v617
    %v619 = vpop.f32.mrf.mxu0
    %620 = vmatprep.mubr.f32.mxu0 0.0
    %621 = vmatmul.mubr.f32.gmra.mxu0 %v485
    %v622 = vpop.f32.mrf.mxu0
    %v623 = vadd.f32 0.0, %v622
    %v624 = vpop.f32.mrf.mxu0
    %625 = vmatprep.mubr.f32.mxu0 0.0
    %626 = vmatmul.mubr.f32.gmra.mxu0 %v488
    %v627 = vpop.f32.mrf.mxu0
    %v628 = vadd.f32 0.0, %v627
    %v629 = vpop.f32.mrf.mxu0
    %630 = vmatprep.mubr.f32.mxu0 0.0
    %631 = vmatmul.mubr.f32.gmra.mxu0 %v491
    %v632 = vpop.f32.mrf.mxu0
    %v633 = vadd.f32 0.0, %v632
    %v634 = vpop.f32.mrf.mxu0
    %635 = vmatprep.mubr.f32.mxu0 0.0
    %636 = vmatmul.mubr.f32.gmra.mxu0 %v494
    %v637 = vpop.f32.mrf.mxu0
    %v638 = vadd.f32 0.0, %v637
    %v639 = vpop.f32.mrf.mxu0
    %640 = vdwg.mxu0
    %v642 = vsel %vm447, %v322, 0
    %v645 = vsel %vm447, %v323, 0
    %v648 = vsel %vm447, %v324, 0
    %v651 = vsel %vm447, %v325, 0
    %v654 = vsel %vm447, %v326, 0
    %v657 = vsel %vm447, %v327, 0
    %v660 = vsel %vm447, %v328, 0
    %v663 = vsel %vm447, %v329, 0
    %v666 = vsel %vm447, %v330, 0
    %v669 = vsel %vm447, %v331, 0
    %v672 = vsel %vm447, %v332, 0
    %v675 = vsel %vm447, %v333, 0
    %v678 = vsel %vm447, %v334, 0
    %v681 = vsel %vm447, %v335, 0
    %v684 = vsel %vm447, %v336, 0
    %v687 = vsel %vm447, %v337, 0
    %689 = vmatprep.subr.mxu0 0.0
    %690 = vmatpush1.msra.mxu0 0.0
    %691 = vmatprep.subr.mxu0 0.0
    %692 = vmatpush1.msra.mxu0 0.0
    %693 = vmatprep.subr.mxu0 0.0
    %694 = vmatpush1.msra.mxu0 0.0
    %695 = vmatprep.subr.mxu0 0.0
    %696 = vmatpush1.msra.mxu0 0.0
    %697 = vmatprep.subr.mxu0 0.0
    %698 = vmatpush1.msra.mxu0 0.0
    %699 = vmatprep.subr.mxu0 0.0
    %700 = vmatpush1.msra.mxu0 0.0
    %701 = vmatprep.subr.mxu0 0.0
    %702 = vmatpush1.msra.mxu0 0.0
    %703 = vmatprep.subr.mxu0 0.0
    %704 = vmatpush1.msra.mxu0 0.0
    %705 = vmatprep.subr.mxu0 0.0
    %706 = vmatpush1.msra.mxu0 0.0
    %707 = vmatprep.subr.mxu0 0.0
    %708 = vmatpush1.msra.mxu0 0.0
    %709 = vmatprep.subr.mxu0 0.0
    %710 = vmatpush1.msra.mxu0 0.0
    %711 = vmatprep.subr.mxu0 0.0
    %712 = vmatpush1.msra.mxu0 0.0
    %713 = vmatprep.subr.mxu0 0.0
    %714 = vmatpush1.msra.mxu0 0.0
    %715 = vmatprep.subr.mxu0 0.0
    %716 = vmatpush1.msra.mxu0 0.0
    %717 = vmatprep.subr.mxu0 0.0
    %718 = vmatpush1.msra.mxu0 %v319
    %719 = vmatprep.subr.mxu0 0.0
    %720 = vmatpush1.msra.mxu0 %v314
    %721 = vmatprep.subr.mxu0 0.0
    %722 = vmatpush2.msra.mxu0 0.0
    %723 = vmatprep.subr.mxu0 0.0
    %724 = vmatpush2.msra.mxu0 0.0
    %725 = vmatprep.subr.mxu0 0.0
    %726 = vmatpush2.msra.mxu0 0.0
    %727 = vmatprep.subr.mxu0 0.0
    %728 = vmatpush2.msra.mxu0 0.0
    %729 = vmatprep.subr.mxu0 0.0
    %730 = vmatpush2.msra.mxu0 0.0
    %731 = vmatprep.subr.mxu0 0.0
    %732 = vmatpush2.msra.mxu0 0.0
    %733 = vmatprep.subr.mxu0 0.0
    %734 = vmatpush2.msra.mxu0 0.0
    %735 = vmatprep.subr.mxu0 0.0
    %736 = vmatpush2.msra.mxu0 0.0
    %737 = vmatprep.subr.mxu0 0.0
    %738 = vmatpush2.msra.mxu0 0.0
    %739 = vmatprep.subr.mxu0 0.0
    %740 = vmatpush2.msra.mxu0 0.0
    %741 = vmatprep.subr.mxu0 0.0
    %742 = vmatpush2.msra.mxu0 0.0
    %743 = vmatprep.subr.mxu0 0.0
    %744 = vmatpush2.msra.mxu0 0.0
    %745 = vmatprep.subr.mxu0 0.0
    %746 = vmatpush2.msra.mxu0 0.0
    %747 = vmatprep.subr.mxu0 0.0
    %748 = vmatpush2.msra.mxu0 0.0
    %749 = vmatprep.subr.mxu0 0.0
    %750 = vmatpush2.msra.mxu0 0.0
    %751 = vmatprep.subr.mxu0 0.0
    %752 = vmatpush2.msra.mxu0 0.0
    %753 = vmatprep.mubr.f32.mxu0 0.0
    %754 = vmatmul.mubr.f32.gmra.mxu0 %v642
    %v755 = vpop.f32.mrf.mxu0
    %v756 = vadd.f32 %v563, %v755
    %v757 = vpop.f32.mrf.mxu0
    %758 = vmatprep.mubr.f32.mxu0 0.0
    %759 = vmatmul.mubr.f32.gmra.mxu0 %v645
    %v760 = vpop.f32.mrf.mxu0
    %v761 = vadd.f32 %v568, %v760
    %v762 = vpop.f32.mrf.mxu0
    %763 = vmatprep.mubr.f32.mxu0 0.0
    %764 = vmatmul.mubr.f32.gmra.mxu0 %v648
    %v765 = vpop.f32.mrf.mxu0
    %v766 = vadd.f32 %v573, %v765
    %v767 = vpop.f32.mrf.mxu0
    %768 = vmatprep.mubr.f32.mxu0 0.0
    %769 = vmatmul.mubr.f32.gmra.mxu0 %v651
    %v770 = vpop.f32.mrf.mxu0
    %v771 = vadd.f32 %v578, %v770
    %v772 = vpop.f32.mrf.mxu0
    %773 = vmatprep.mubr.f32.mxu0 0.0
    %774 = vmatmul.mubr.f32.gmra.mxu0 %v654
    %v775 = vpop.f32.mrf.mxu0
    %v776 = vadd.f32 %v583, %v775
    %v777 = vpop.f32.mrf.mxu0
    %778 = vmatprep.mubr.f32.mxu0 0.0
    %779 = vmatmul.mubr.f32.gmra.mxu0 %v657
    %v780 = vpop.f32.mrf.mxu0
    %v781 = vadd.f32 %v588, %v780
    %v782 = vpop.f32.mrf.mxu0
    %783 = vmatprep.mubr.f32.mxu0 0.0
    %784 = vmatmul.mubr.f32.gmra.mxu0 %v660
    %v785 = vpop.f32.mrf.mxu0
    %v786 = vadd.f32 %v593, %v785
    %v787 = vpop.f32.mrf.mxu0
    %788 = vmatprep.mubr.f32.mxu0 0.0
    %789 = vmatmul.mubr.f32.gmra.mxu0 %v663
    %v790 = vpop.f32.mrf.mxu0
    %v791 = vadd.f32 %v598, %v790
    %v792 = vpop.f32.mrf.mxu0
    %793 = vmatprep.mubr.f32.mxu0 0.0
    %794 = vmatmul.mubr.f32.gmra.mxu0 %v666
    %v795 = vpop.f32.mrf.mxu0
    %v796 = vadd.f32 %v603, %v795
    %v797 = vpop.f32.mrf.mxu0
    %798 = vmatprep.mubr.f32.mxu0 0.0
    %799 = vmatmul.mubr.f32.gmra.mxu0 %v669
    %v800 = vpop.f32.mrf.mxu0
    %v801 = vadd.f32 %v608, %v800
    %v802 = vpop.f32.mrf.mxu0
    %803 = vmatprep.mubr.f32.mxu0 0.0
    %804 = vmatmul.mubr.f32.gmra.mxu0 %v672
    %v805 = vpop.f32.mrf.mxu0
    %v806 = vadd.f32 %v613, %v805
    %v807 = vpop.f32.mrf.mxu0
    %808 = vmatprep.mubr.f32.mxu0 0.0
    %809 = vmatmul.mubr.f32.gmra.mxu0 %v675
    %v810 = vpop.f32.mrf.mxu0
    %v811 = vadd.f32 %v618, %v810
    %v812 = vpop.f32.mrf.mxu0
    %813 = vmatprep.mubr.f32.mxu0 0.0
    %814 = vmatmul.mubr.f32.gmra.mxu0 %v678
    %v815 = vpop.f32.mrf.mxu0
    %v816 = vadd.f32 %v623, %v815
    %v817 = vpop.f32.mrf.mxu0
    %818 = vmatprep.mubr.f32.mxu0 0.0
    %819 = vmatmul.mubr.f32.gmra.mxu0 %v681
    %v820 = vpop.f32.mrf.mxu0
    %v821 = vadd.f32 %v628, %v820
    %v822 = vpop.f32.mrf.mxu0
    %823 = vmatprep.mubr.f32.mxu0 0.0
    %824 = vmatmul.mubr.f32.gmra.mxu0 %v684
    %v825 = vpop.f32.mrf.mxu0
    %v826 = vadd.f32 %v633, %v825
    %v827 = vpop.f32.mrf.mxu0
    %828 = vmatprep.mubr.f32.mxu0 0.0
    %829 = vmatmul.mubr.f32.gmra.mxu0 %v687
    %v830 = vpop.f32.mrf.mxu0
    %v831 = vadd.f32 %v638, %v830
    %v832 = vpop.f32.mrf.mxu0
    %833 = vdwg.mxu0
    %s834 = scalar_lea.vmem %s6, 128
    %v835 = vld [vmem:[%s834] sm:$0xff]
    %v836 = vld [vmem:[%s834 + $0x8] sm:$0xff]
    %v837 = vld [vmem:[%s834 + $0x10] sm:$0xff]
    %v838 = vld [vmem:[%s834 + $0x18] sm:$0xff]
    %v839 = vld [vmem:[%s834 + $0x20] sm:$0xff]
    %v840 = vld [vmem:[%s834 + $0x28] sm:$0xff]
    %v841 = vld [vmem:[%s834 + $0x30] sm:$0xff]
    %v842 = vld [vmem:[%s834 + $0x38] sm:$0xff]
    %s843 = scalar_lea.vmem %s7, 2
    %v844 = vld [vmem:[%s843] sm:$0x1]
    %v846 = vlaneseq
    %v847 = vshrl.u32 %v846, 7
    %v848 = vsub.s32 0, %v847
    %v849 = vrot.slane %v844, %v848
    %851 = vmatprep.subr.mxu0 0.0
    %852 = vmatpush1.msra.mxu0 0.0
    %853 = vmatprep.subr.mxu0 0.0
    %854 = vmatpush1.msra.mxu0 0.0
    %855 = vmatprep.subr.mxu0 0.0
    %856 = vmatpush1.msra.mxu0 0.0
    %857 = vmatprep.subr.mxu0 0.0
    %858 = vmatpush1.msra.mxu0 0.0
    %859 = vmatprep.subr.mxu0 0.0
    %860 = vmatpush1.msra.mxu0 0.0
    %861 = vmatprep.subr.mxu0 0.0
    %862 = vmatpush1.msra.mxu0 0.0
    %863 = vmatprep.subr.mxu0 0.0
    %864 = vmatpush1.msra.mxu0 0.0
    %865 = vmatprep.subr.mxu0 0.0
    %866 = vmatpush1.msra.mxu0 0.0
    %867 = vmatprep.subr.mxu0 0.0
    %868 = vmatpush1.msra.mxu0 %v842
    %869 = vmatprep.subr.mxu0 0.0
    %870 = vmatpush1.msra.mxu0 %v841
    %871 = vmatprep.subr.mxu0 0.0
    %872 = vmatpush1.msra.mxu0 %v840
    %873 = vmatprep.subr.mxu0 0.0
    %874 = vmatpush1.msra.mxu0 %v839
    %875 = vmatprep.subr.mxu0 0.0
    %876 = vmatpush1.msra.mxu0 %v838
    %877 = vmatprep.subr.mxu0 0.0
    %878 = vmatpush1.msra.mxu0 %v837
    %879 = vmatprep.subr.mxu0 0.0
    %880 = vmatpush1.msra.mxu0 %v836
    %881 = vmatprep.subr.mxu0 0.0
    %882 = vmatpush1.msra.mxu0 %v835
    %883 = vmatprep.subr.mxu0 0.0
    %884 = vmatpush2.msra.mxu0 0.0
    %885 = vmatprep.subr.mxu0 0.0
    %886 = vmatpush2.msra.mxu0 0.0
    %887 = vmatprep.subr.mxu0 0.0
    %888 = vmatpush2.msra.mxu0 0.0
    %889 = vmatprep.subr.mxu0 0.0
    %890 = vmatpush2.msra.mxu0 0.0
    %891 = vmatprep.subr.mxu0 0.0
    %892 = vmatpush2.msra.mxu0 0.0
    %893 = vmatprep.subr.mxu0 0.0
    %894 = vmatpush2.msra.mxu0 0.0
    %895 = vmatprep.subr.mxu0 0.0
    %896 = vmatpush2.msra.mxu0 0.0
    %897 = vmatprep.subr.mxu0 0.0
    %898 = vmatpush2.msra.mxu0 0.0
    %899 = vmatprep.subr.mxu0 0.0
    %900 = vmatpush2.msra.mxu0 0.0
    %901 = vmatprep.subr.mxu0 0.0
    %902 = vmatpush2.msra.mxu0 0.0
    %903 = vmatprep.subr.mxu0 0.0
    %904 = vmatpush2.msra.mxu0 0.0
    %905 = vmatprep.subr.mxu0 0.0
    %906 = vmatpush2.msra.mxu0 0.0
    %907 = vmatprep.subr.mxu0 0.0
    %908 = vmatpush2.msra.mxu0 0.0
    %909 = vmatprep.subr.mxu0 0.0
    %910 = vmatpush2.msra.mxu0 0.0
    %911 = vmatprep.subr.mxu0 0.0
    %912 = vmatpush2.msra.mxu0 0.0
    %913 = vmatprep.subr.mxu0 0.0
    %914 = vmatpush2.msra.mxu0 0.0
    %915 = vmatprep.mubr.f32.mxu0 0.0
    %916 = vmatmul.mubr.f32.gmra.mxu0 %v242
    %v917 = vpop.f32.mrf.mxu0
    %v918 = vadd.f32 %v849, %v917
    %v919 = vpop.f32.mrf.mxu0
    %920 = vmatprep.mubr.f32.mxu0 0.0
    %921 = vmatmul.mubr.f32.gmra.mxu0 %v245
    %v922 = vpop.f32.mrf.mxu0
    %v923 = vadd.f32 %v849, %v922
    %v924 = vpop.f32.mrf.mxu0
    %925 = vdwg.mxu0
    %s926 = scalar_lea.vmem %s5, 256
    %v927 = vld [vmem:[%s926] sm:$0xff]
    %v928 = vld [vmem:[%s926 + $0x8] sm:$0xff]
    %v929 = vld [vmem:[%s926 + $0x10] sm:$0xff]
    %v930 = vld [vmem:[%s926 + $0x18] sm:$0xff]
    %v931 = vld [vmem:[%s926 + $0x20] sm:$0xff]
    %v932 = vld [vmem:[%s926 + $0x28] sm:$0xff]
    %v933 = vld [vmem:[%s926 + $0x30] sm:$0xff]
    %v934 = vld [vmem:[%s926 + $0x38] sm:$0xff]
    %v935 = vld [vmem:[%s926 + $0x40] sm:$0xff]
    %v936 = vld [vmem:[%s926 + $0x48] sm:$0xff]
    %v937 = vld [vmem:[%s926 + $0x50] sm:$0xff]
    %v938 = vld [vmem:[%s926 + $0x58] sm:$0xff]
    %v939 = vld [vmem:[%s926 + $0x60] sm:$0xff]
    %v940 = vld [vmem:[%s926 + $0x68] sm:$0xff]
    %v941 = vld [vmem:[%s926 + $0x70] sm:$0xff]
    %v942 = vld [vmem:[%s926 + $0x78] sm:$0xff]
    %v944 = vsel %vm447, %v927, 0
    %v947 = vsel %vm447, %v928, 0
    %v950 = vsel %vm447, %v929, 0
    %v953 = vsel %vm447, %v930, 0
    %v956 = vsel %vm447, %v931, 0
    %v959 = vsel %vm447, %v932, 0
    %v962 = vsel %vm447, %v933, 0
    %v965 = vsel %vm447, %v934, 0
    %v968 = vsel %vm447, %v935, 0
    %v971 = vsel %vm447, %v936, 0
    %v974 = vsel %vm447, %v937, 0
    %v977 = vsel %vm447, %v938, 0
    %v980 = vsel %vm447, %v939, 0
    %v983 = vsel %vm447, %v940, 0
    %v986 = vsel %vm447, %v941, 0
    %v989 = vsel %vm447, %v942, 0
    %991 = vmatprep.subr.mxu0 0.0
    %992 = vmatpush1.msra.mxu0 0.0
    %993 = vmatprep.subr.mxu0 0.0
    %994 = vmatpush1.msra.mxu0 0.0
    %995 = vmatprep.subr.mxu0 0.0
    %996 = vmatpush1.msra.mxu0 0.0
    %997 = vmatprep.subr.mxu0 0.0
    %998 = vmatpush1.msra.mxu0 0.0
    %999 = vmatprep.subr.mxu0 0.0
    %1000 = vmatpush1.msra.mxu0 0.0
    %1001 = vmatprep.subr.mxu0 0.0
    %1002 = vmatpush1.msra.mxu0 0.0
    %1003 = vmatprep.subr.mxu0 0.0
    %1004 = vmatpush1.msra.mxu0 0.0
    %1005 = vmatprep.subr.mxu0 0.0
    %1006 = vmatpush1.msra.mxu0 0.0
    %1007 = vmatprep.subr.mxu0 0.0
    %1008 = vmatpush1.msra.mxu0 0.0
    %1009 = vmatprep.subr.mxu0 0.0
    %1010 = vmatpush1.msra.mxu0 0.0
    %1011 = vmatprep.subr.mxu0 0.0
    %1012 = vmatpush1.msra.mxu0 0.0
    %1013 = vmatprep.subr.mxu0 0.0
    %1014 = vmatpush1.msra.mxu0 0.0
    %1015 = vmatprep.subr.mxu0 0.0
    %1016 = vmatpush1.msra.mxu0 0.0
    %1017 = vmatprep.subr.mxu0 0.0
    %1018 = vmatpush1.msra.mxu0 0.0
    %1019 = vmatprep.subr.mxu0 0.0
    %1020 = vmatpush1.msra.mxu0 %v923
    %1021 = vmatprep.subr.mxu0 0.0
    %1022 = vmatpush1.msra.mxu0 %v918
    %1023 = vmatprep.subr.mxu0 0.0
    %1024 = vmatpush2.msra.mxu0 0.0
    %1025 = vmatprep.subr.mxu0 0.0
    %1026 = vmatpush2.msra.mxu0 0.0
    %1027 = vmatprep.subr.mxu0 0.0
    %1028 = vmatpush2.msra.mxu0 0.0
    %1029 = vmatprep.subr.mxu0 0.0
    %1030 = vmatpush2.msra.mxu0 0.0
    %1031 = vmatprep.subr.mxu0 0.0
    %1032 = vmatpush2.msra.mxu0 0.0
    %1033 = vmatprep.subr.mxu0 0.0
    %1034 = vmatpush2.msra.mxu0 0.0
    %1035 = vmatprep.subr.mxu0 0.0
    %1036 = vmatpush2.msra.mxu0 0.0
    %1037 = vmatprep.subr.mxu0 0.0
    %1038 = vmatpush2.msra.mxu0 0.0
    %1039 = vmatprep.subr.mxu0 0.0
    %1040 = vmatpush2.msra.mxu0 0.0
    %1041 = vmatprep.subr.mxu0 0.0
    %1042 = vmatpush2.msra.mxu0 0.0
    %1043 = vmatprep.subr.mxu0 0.0
    %1044 = vmatpush2.msra.mxu0 0.0
    %1045 = vmatprep.subr.mxu0 0.0
    %1046 = vmatpush2.msra.mxu0 0.0
    %1047 = vmatprep.subr.mxu0 0.0
    %1048 = vmatpush2.msra.mxu0 0.0
    %1049 = vmatprep.subr.mxu0 0.0
    %1050 = vmatpush2.msra.mxu0 0.0
    %1051 = vmatprep.subr.mxu0 0.0
    %1052 = vmatpush2.msra.mxu0 0.0
    %1053 = vmatprep.subr.mxu0 0.0
    %1054 = vmatpush2.msra.mxu0 0.0
    %1055 = vmatprep.mubr.f32.mxu0 0.0
    %1056 = vmatmul.mubr.f32.gmra.mxu0 %v944
    %v1057 = vpop.f32.mrf.mxu0
    %v1058 = vadd.f32 0.0, %v1057
    %v1059 = vpop.f32.mrf.mxu0
    %1060 = vmatprep.mubr.f32.mxu0 0.0
    %1061 = vmatmul.mubr.f32.gmra.mxu0 %v947
    %v1062 = vpop.f32.mrf.mxu0
    %v1063 = vadd.f32 0.0, %v1062
    %v1064 = vpop.f32.mrf.mxu0
    %1065 = vmatprep.mubr.f32.mxu0 0.0
    %1066 = vmatmul.mubr.f32.gmra.mxu0 %v950
    %v1067 = vpop.f32.mrf.mxu0
    %v1068 = vadd.f32 0.0, %v1067
    %v1069 = vpop.f32.mrf.mxu0
    %1070 = vmatprep.mubr.f32.mxu0 0.0
    %1071 = vmatmul.mubr.f32.gmra.mxu0 %v953
    %v1072 = vpop.f32.mrf.mxu0
    %v1073 = vadd.f32 0.0, %v1072
    %v1074 = vpop.f32.mrf.mxu0
    %1075 = vmatprep.mubr.f32.mxu0 0.0
    %1076 = vmatmul.mubr.f32.gmra.mxu0 %v956
    %v1077 = vpop.f32.mrf.mxu0
    %v1078 = vadd.f32 0.0, %v1077
    %v1079 = vpop.f32.mrf.mxu0
    %1080 = vmatprep.mubr.f32.mxu0 0.0
    %1081 = vmatmul.mubr.f32.gmra.mxu0 %v959
    %v1082 = vpop.f32.mrf.mxu0
    %v1083 = vadd.f32 0.0, %v1082
    %v1084 = vpop.f32.mrf.mxu0
    %1085 = vmatprep.mubr.f32.mxu0 0.0
    %1086 = vmatmul.mubr.f32.gmra.mxu0 %v962
    %v1087 = vpop.f32.mrf.mxu0
    %v1088 = vadd.f32 0.0, %v1087
    %v1089 = vpop.f32.mrf.mxu0
    %1090 = vmatprep.mubr.f32.mxu0 0.0
    %1091 = vmatmul.mubr.f32.gmra.mxu0 %v965
    %v1092 = vpop.f32.mrf.mxu0
    %v1093 = vadd.f32 0.0, %v1092
    %v1094 = vpop.f32.mrf.mxu0
    %1095 = vmatprep.mubr.f32.mxu0 0.0
    %1096 = vmatmul.mubr.f32.gmra.mxu0 %v968
    %v1097 = vpop.f32.mrf.mxu0
    %v1098 = vadd.f32 0.0, %v1097
    %v1099 = vpop.f32.mrf.mxu0
    %1100 = vmatprep.mubr.f32.mxu0 0.0
    %1101 = vmatmul.mubr.f32.gmra.mxu0 %v971
    %v1102 = vpop.f32.mrf.mxu0
    %v1103 = vadd.f32 0.0, %v1102
    %v1104 = vpop.f32.mrf.mxu0
    %1105 = vmatprep.mubr.f32.mxu0 0.0
    %1106 = vmatmul.mubr.f32.gmra.mxu0 %v974
    %v1107 = vpop.f32.mrf.mxu0
    %v1108 = vadd.f32 0.0, %v1107
    %v1109 = vpop.f32.mrf.mxu0
    %1110 = vmatprep.mubr.f32.mxu0 0.0
    %1111 = vmatmul.mubr.f32.gmra.mxu0 %v977
    %v1112 = vpop.f32.mrf.mxu0
    %v1113 = vadd.f32 0.0, %v1112
    %v1114 = vpop.f32.mrf.mxu0
    %1115 = vmatprep.mubr.f32.mxu0 0.0
    %1116 = vmatmul.mubr.f32.gmra.mxu0 %v980
    %v1117 = vpop.f32.mrf.mxu0
    %v1118 = vadd.f32 0.0, %v1117
    %v1119 = vpop.f32.mrf.mxu0
    %1120 = vmatprep.mubr.f32.mxu0 0.0
    %1121 = vmatmul.mubr.f32.gmra.mxu0 %v983
    %v1122 = vpop.f32.mrf.mxu0
    %v1123 = vadd.f32 0.0, %v1122
    %v1124 = vpop.f32.mrf.mxu0
    %1125 = vmatprep.mubr.f32.mxu0 0.0
    %1126 = vmatmul.mubr.f32.gmra.mxu0 %v986
    %v1127 = vpop.f32.mrf.mxu0
    %v1128 = vadd.f32 0.0, %v1127
    %v1129 = vpop.f32.mrf.mxu0
    %1130 = vmatprep.mubr.f32.mxu0 0.0
    %1131 = vmatmul.mubr.f32.gmra.mxu0 %v989
    %v1132 = vpop.f32.mrf.mxu0
    %v1133 = vadd.f32 0.0, %v1132
    %v1134 = vpop.f32.mrf.mxu0
    %1135 = vdwg.mxu0
    %v1136 = vadd.f32 %v756, %v1058
    %v1137 = vadd.f32 %v761, %v1063
    %v1138 = vadd.f32 %v766, %v1068
    %v1139 = vadd.f32 %v771, %v1073
    %v1140 = vadd.f32 %v776, %v1078
    %v1141 = vadd.f32 %v781, %v1083
    %v1142 = vadd.f32 %v786, %v1088
    %v1143 = vadd.f32 %v791, %v1093
    %v1144 = vadd.f32 %v796, %v1098
    %v1145 = vadd.f32 %v801, %v1103
    %v1146 = vadd.f32 %v806, %v1108
    %v1147 = vadd.f32 %v811, %v1113
    %v1148 = vadd.f32 %v816, %v1118
    %v1149 = vadd.f32 %v821, %v1123
    %v1150 = vadd.f32 %v826, %v1128
    %v1151 = vadd.f32 %v831, %v1133
    %s1152 = scalar_lea.vmem %s6, 192
    %v1153 = vld [vmem:[%s1152] sm:$0xff]
    %v1154 = vld [vmem:[%s1152 + $0x8] sm:$0xff]
    %v1155 = vld [vmem:[%s1152 + $0x10] sm:$0xff]
    %v1156 = vld [vmem:[%s1152 + $0x18] sm:$0xff]
    %v1157 = vld [vmem:[%s1152 + $0x20] sm:$0xff]
    %v1158 = vld [vmem:[%s1152 + $0x28] sm:$0xff]
    %v1159 = vld [vmem:[%s1152 + $0x30] sm:$0xff]
    %v1160 = vld [vmem:[%s1152 + $0x38] sm:$0xff]
    %s1161 = scalar_lea.vmem %s7, 3
    %v1162 = vld [vmem:[%s1161] sm:$0x1]
    %v1164 = vlaneseq
    %v1165 = vshrl.u32 %v1164, 7
    %v1166 = vsub.s32 0, %v1165
    %v1167 = vrot.slane %v1162, %v1166
    %1169 = vmatprep.subr.mxu0 0.0
    %1170 = vmatpush1.msra.mxu0 0.0
    %1171 = vmatprep.subr.mxu0 0.0
    %1172 = vmatpush1.msra.mxu0 0.0
    %1173 = vmatprep.subr.mxu0 0.0
    %1174 = vmatpush1.msra.mxu0 0.0
    %1175 = vmatprep.subr.mxu0 0.0
    %1176 = vmatpush1.msra.mxu0 0.0
    %1177 = vmatprep.subr.mxu0 0.0
    %1178 = vmatpush1.msra.mxu0 0.0
    %1179 = vmatprep.subr.mxu0 0.0
    %1180 = vmatpush1.msra.mxu0 0.0
    %1181 = vmatprep.subr.mxu0 0.0
    %1182 = vmatpush1.msra.mxu0 0.0
    %1183 = vmatprep.subr.mxu0 0.0
    %1184 = vmatpush1.msra.mxu0 0.0
    %1185 = vmatprep.subr.mxu0 0.0
    %1186 = vmatpush1.msra.mxu0 %v1160
    %1187 = vmatprep.subr.mxu0 0.0
    %1188 = vmatpush1.msra.mxu0 %v1159
    %1189 = vmatprep.subr.mxu0 0.0
    %1190 = vmatpush1.msra.mxu0 %v1158
    %1191 = vmatprep.subr.mxu0 0.0
    %1192 = vmatpush1.msra.mxu0 %v1157
    %1193 = vmatprep.subr.mxu0 0.0
    %1194 = vmatpush1.msra.mxu0 %v1156
    %1195 = vmatprep.subr.mxu0 0.0
    %1196 = vmatpush1.msra.mxu0 %v1155
    %1197 = vmatprep.subr.mxu0 0.0
    %1198 = vmatpush1.msra.mxu0 %v1154
    %1199 = vmatprep.subr.mxu0 0.0
    %1200 = vmatpush1.msra.mxu0 %v1153
    %1201 = vmatprep.subr.mxu0 0.0
    %1202 = vmatpush2.msra.mxu0 0.0
    %1203 = vmatprep.subr.mxu0 0.0
    %1204 = vmatpush2.msra.mxu0 0.0
    %1205 = vmatprep.subr.mxu0 0.0
    %1206 = vmatpush2.msra.mxu0 0.0
    %1207 = vmatprep.subr.mxu0 0.0
    %1208 = vmatpush2.msra.mxu0 0.0
    %1209 = vmatprep.subr.mxu0 0.0
    %1210 = vmatpush2.msra.mxu0 0.0
    %1211 = vmatprep.subr.mxu0 0.0
    %1212 = vmatpush2.msra.mxu0 0.0
    %1213 = vmatprep.subr.mxu0 0.0
    %1214 = vmatpush2.msra.mxu0 0.0
    %1215 = vmatprep.subr.mxu0 0.0
    %1216 = vmatpush2.msra.mxu0 0.0
    %1217 = vmatprep.subr.mxu0 0.0
    %1218 = vmatpush2.msra.mxu0 0.0
    %1219 = vmatprep.subr.mxu0 0.0
    %1220 = vmatpush2.msra.mxu0 0.0
    %1221 = vmatprep.subr.mxu0 0.0
    %1222 = vmatpush2.msra.mxu0 0.0
    %1223 = vmatprep.subr.mxu0 0.0
    %1224 = vmatpush2.msra.mxu0 0.0
    %1225 = vmatprep.subr.mxu0 0.0
    %1226 = vmatpush2.msra.mxu0 0.0
    %1227 = vmatprep.subr.mxu0 0.0
    %1228 = vmatpush2.msra.mxu0 0.0
    %1229 = vmatprep.subr.mxu0 0.0
    %1230 = vmatpush2.msra.mxu0 0.0
    %1231 = vmatprep.subr.mxu0 0.0
    %1232 = vmatpush2.msra.mxu0 0.0
    %1233 = vmatprep.mubr.f32.mxu0 0.0
    %1234 = vmatmul.mubr.f32.gmra.mxu0 %v242
    %v1235 = vpop.f32.mrf.mxu0
    %v1236 = vadd.f32 %v1167, %v1235
    %v1237 = vpop.f32.mrf.mxu0
    %1238 = vmatprep.mubr.f32.mxu0 0.0
    %1239 = vmatmul.mubr.f32.gmra.mxu0 %v245
    %v1240 = vpop.f32.mrf.mxu0
    %v1241 = vadd.f32 %v1167, %v1240
    %v1242 = vpop.f32.mrf.mxu0
    %1243 = vdwg.mxu0
    %s1244 = scalar_lea.vmem %s5, 384
    %v1245 = vld [vmem:[%s1244] sm:$0xff]
    %v1246 = vld [vmem:[%s1244 + $0x8] sm:$0xff]
    %v1247 = vld [vmem:[%s1244 + $0x10] sm:$0xff]
    %v1248 = vld [vmem:[%s1244 + $0x18] sm:$0xff]
    %v1249 = vld [vmem:[%s1244 + $0x20] sm:$0xff]
    %v1250 = vld [vmem:[%s1244 + $0x28] sm:$0xff]
    %v1251 = vld [vmem:[%s1244 + $0x30] sm:$0xff]
    %v1252 = vld [vmem:[%s1244 + $0x38] sm:$0xff]
    %v1253 = vld [vmem:[%s1244 + $0x40] sm:$0xff]
    %v1254 = vld [vmem:[%s1244 + $0x48] sm:$0xff]
    %v1255 = vld [vmem:[%s1244 + $0x50] sm:$0xff]
    %v1256 = vld [vmem:[%s1244 + $0x58] sm:$0xff]
    %v1257 = vld [vmem:[%s1244 + $0x60] sm:$0xff]
    %v1258 = vld [vmem:[%s1244 + $0x68] sm:$0xff]
    %v1259 = vld [vmem:[%s1244 + $0x70] sm:$0xff]
    %v1260 = vld [vmem:[%s1244 + $0x78] sm:$0xff]
    %v1262 = vsel %vm447, %v1245, 0
    %v1265 = vsel %vm447, %v1246, 0
    %v1268 = vsel %vm447, %v1247, 0
    %v1271 = vsel %vm447, %v1248, 0
    %v1274 = vsel %vm447, %v1249, 0
    %v1277 = vsel %vm447, %v1250, 0
    %v1280 = vsel %vm447, %v1251, 0
    %v1283 = vsel %vm447, %v1252, 0
    %v1286 = vsel %vm447, %v1253, 0
    %v1289 = vsel %vm447, %v1254, 0
    %v1292 = vsel %vm447, %v1255, 0
    %v1295 = vsel %vm447, %v1256, 0
    %v1298 = vsel %vm447, %v1257, 0
    %v1301 = vsel %vm447, %v1258, 0
    %v1304 = vsel %vm447, %v1259, 0
    %v1307 = vsel %vm447, %v1260, 0
    %1309 = vmatprep.subr.mxu0 0.0
    %1310 = vmatpush1.msra.mxu0 0.0
    %1311 = vmatprep.subr.mxu0 0.0
    %1312 = vmatpush1.msra.mxu0 0.0
    %1313 = vmatprep.subr.mxu0 0.0
    %1314 = vmatpush1.msra.mxu0 0.0
    %1315 = vmatprep.subr.mxu0 0.0
    %1316 = vmatpush1.msra.mxu0 0.0
    %1317 = vmatprep.subr.mxu0 0.0
    %1318 = vmatpush1.msra.mxu0 0.0
    %1319 = vmatprep.subr.mxu0 0.0
    %1320 = vmatpush1.msra.mxu0 0.0
    %1321 = vmatprep.subr.mxu0 0.0
    %1322 = vmatpush1.msra.mxu0 0.0
    %1323 = vmatprep.subr.mxu0 0.0
    %1324 = vmatpush1.msra.mxu0 0.0
    %1325 = vmatprep.subr.mxu0 0.0
    %1326 = vmatpush1.msra.mxu0 0.0
    %1327 = vmatprep.subr.mxu0 0.0
    %1328 = vmatpush1.msra.mxu0 0.0
    %1329 = vmatprep.subr.mxu0 0.0
    %1330 = vmatpush1.msra.mxu0 0.0
    %1331 = vmatprep.subr.mxu0 0.0
    %1332 = vmatpush1.msra.mxu0 0.0
    %1333 = vmatprep.subr.mxu0 0.0
    %1334 = vmatpush1.msra.mxu0 0.0
    %1335 = vmatprep.subr.mxu0 0.0
    %1336 = vmatpush1.msra.mxu0 0.0
    %1337 = vmatprep.subr.mxu0 0.0
    %1338 = vmatpush1.msra.mxu0 %v1241
    %1339 = vmatprep.subr.mxu0 0.0
    %1340 = vmatpush1.msra.mxu0 %v1236
    %1341 = vmatprep.subr.mxu0 0.0
    %1342 = vmatpush2.msra.mxu0 0.0
    %1343 = vmatprep.subr.mxu0 0.0
    %1344 = vmatpush2.msra.mxu0 0.0
    %1345 = vmatprep.subr.mxu0 0.0
    %1346 = vmatpush2.msra.mxu0 0.0
    %1347 = vmatprep.subr.mxu0 0.0
    %1348 = vmatpush2.msra.mxu0 0.0
    %1349 = vmatprep.subr.mxu0 0.0
    %1350 = vmatpush2.msra.mxu0 0.0
    %1351 = vmatprep.subr.mxu0 0.0
    %1352 = vmatpush2.msra.mxu0 0.0
    %1353 = vmatprep.subr.mxu0 0.0
    %1354 = vmatpush2.msra.mxu0 0.0
    %1355 = vmatprep.subr.mxu0 0.0
    %1356 = vmatpush2.msra.mxu0 0.0
    %1357 = vmatprep.subr.mxu0 0.0
    %1358 = vmatpush2.msra.mxu0 0.0
    %1359 = vmatprep.subr.mxu0 0.0
    %1360 = vmatpush2.msra.mxu0 0.0
    %1361 = vmatprep.subr.mxu0 0.0
    %1362 = vmatpush2.msra.mxu0 0.0
    %1363 = vmatprep.subr.mxu0 0.0
    %1364 = vmatpush2.msra.mxu0 0.0
    %1365 = vmatprep.subr.mxu0 0.0
    %1366 = vmatpush2.msra.mxu0 0.0
    %1367 = vmatprep.subr.mxu0 0.0
    %1368 = vmatpush2.msra.mxu0 0.0
    %1369 = vmatprep.subr.mxu0 0.0
    %1370 = vmatpush2.msra.mxu0 0.0
    %1371 = vmatprep.subr.mxu0 0.0
    %1372 = vmatpush2.msra.mxu0 0.0
    %1373 = vmatprep.mubr.f32.mxu0 0.0
    %1374 = vmatmul.mubr.f32.gmra.mxu0 %v1262
    %v1375 = vpop.f32.mrf.mxu0
    %v1376 = vadd.f32 0.0, %v1375
    %v1377 = vpop.f32.mrf.mxu0
    %1378 = vmatprep.mubr.f32.mxu0 0.0
    %1379 = vmatmul.mubr.f32.gmra.mxu0 %v1265
    %v1380 = vpop.f32.mrf.mxu0
    %v1381 = vadd.f32 0.0, %v1380
    %v1382 = vpop.f32.mrf.mxu0
    %1383 = vmatprep.mubr.f32.mxu0 0.0
    %1384 = vmatmul.mubr.f32.gmra.mxu0 %v1268
    %v1385 = vpop.f32.mrf.mxu0
    %v1386 = vadd.f32 0.0, %v1385
    %v1387 = vpop.f32.mrf.mxu0
    %1388 = vmatprep.mubr.f32.mxu0 0.0
    %1389 = vmatmul.mubr.f32.gmra.mxu0 %v1271
    %v1390 = vpop.f32.mrf.mxu0
    %v1391 = vadd.f32 0.0, %v1390
    %v1392 = vpop.f32.mrf.mxu0
    %1393 = vmatprep.mubr.f32.mxu0 0.0
    %1394 = vmatmul.mubr.f32.gmra.mxu0 %v1274
    %v1395 = vpop.f32.mrf.mxu0
    %v1396 = vadd.f32 0.0, %v1395
    %v1397 = vpop.f32.mrf.mxu0
    %1398 = vmatprep.mubr.f32.mxu0 0.0
    %1399 = vmatmul.mubr.f32.gmra.mxu0 %v1277
    %v1400 = vpop.f32.mrf.mxu0
    %v1401 = vadd.f32 0.0, %v1400
    %v1402 = vpop.f32.mrf.mxu0
    %1403 = vmatprep.mubr.f32.mxu0 0.0
    %1404 = vmatmul.mubr.f32.gmra.mxu0 %v1280
    %v1405 = vpop.f32.mrf.mxu0
    %v1406 = vadd.f32 0.0, %v1405
    %v1407 = vpop.f32.mrf.mxu0
    %1408 = vmatprep.mubr.f32.mxu0 0.0
    %1409 = vmatmul.mubr.f32.gmra.mxu0 %v1283
    %v1410 = vpop.f32.mrf.mxu0
    %v1411 = vadd.f32 0.0, %v1410
    %v1412 = vpop.f32.mrf.mxu0
    %1413 = vmatprep.mubr.f32.mxu0 0.0
    %1414 = vmatmul.mubr.f32.gmra.mxu0 %v1286
    %v1415 = vpop.f32.mrf.mxu0
    %v1416 = vadd.f32 0.0, %v1415
    %v1417 = vpop.f32.mrf.mxu0
    %1418 = vmatprep.mubr.f32.mxu0 0.0
    %1419 = vmatmul.mubr.f32.gmra.mxu0 %v1289
    %v1420 = vpop.f32.mrf.mxu0
    %v1421 = vadd.f32 0.0, %v1420
    %v1422 = vpop.f32.mrf.mxu0
    %1423 = vmatprep.mubr.f32.mxu0 0.0
    %1424 = vmatmul.mubr.f32.gmra.mxu0 %v1292
    %v1425 = vpop.f32.mrf.mxu0
    %v1426 = vadd.f32 0.0, %v1425
    %v1427 = vpop.f32.mrf.mxu0
    %1428 = vmatprep.mubr.f32.mxu0 0.0
    %1429 = vmatmul.mubr.f32.gmra.mxu0 %v1295
    %v1430 = vpop.f32.mrf.mxu0
    %v1431 = vadd.f32 0.0, %v1430
    %v1432 = vpop.f32.mrf.mxu0
    %1433 = vmatprep.mubr.f32.mxu0 0.0
    %1434 = vmatmul.mubr.f32.gmra.mxu0 %v1298
    %v1435 = vpop.f32.mrf.mxu0
    %v1436 = vadd.f32 0.0, %v1435
    %v1437 = vpop.f32.mrf.mxu0
    %1438 = vmatprep.mubr.f32.mxu0 0.0
    %1439 = vmatmul.mubr.f32.gmra.mxu0 %v1301
    %v1440 = vpop.f32.mrf.mxu0
    %v1441 = vadd.f32 0.0, %v1440
    %v1442 = vpop.f32.mrf.mxu0
    %1443 = vmatprep.mubr.f32.mxu0 0.0
    %1444 = vmatmul.mubr.f32.gmra.mxu0 %v1304
    %v1445 = vpop.f32.mrf.mxu0
    %v1446 = vadd.f32 0.0, %v1445
    %v1447 = vpop.f32.mrf.mxu0
    %1448 = vmatprep.mubr.f32.mxu0 0.0
    %1449 = vmatmul.mubr.f32.gmra.mxu0 %v1307
    %v1450 = vpop.f32.mrf.mxu0
    %v1451 = vadd.f32 0.0, %v1450
    %v1452 = vpop.f32.mrf.mxu0
    %1453 = vdwg.mxu0
    %v1454 = vadd.f32 %v1136, %v1376
    %v1455 = vadd.f32 %v1137, %v1381
    %v1456 = vadd.f32 %v1138, %v1386
    %v1457 = vadd.f32 %v1139, %v1391
    %v1458 = vadd.f32 %v1140, %v1396
    %v1459 = vadd.f32 %v1141, %v1401
    %v1460 = vadd.f32 %v1142, %v1406
    %v1461 = vadd.f32 %v1143, %v1411
    %v1462 = vadd.f32 %v1144, %v1416
    %v1463 = vadd.f32 %v1145, %v1421
    %v1464 = vadd.f32 %v1146, %v1426
    %v1465 = vadd.f32 %v1147, %v1431
    %v1466 = vadd.f32 %v1148, %v1436
    %v1467 = vadd.f32 %v1149, %v1441
    %v1468 = vadd.f32 %v1150, %v1446
    %v1469 = vadd.f32 %v1151, %v1451
    %s1470 = scalar_lea.vmem %s6, 256
    %v1471 = vld [vmem:[%s1470] sm:$0xff]
    %v1472 = vld [vmem:[%s1470 + $0x8] sm:$0xff]
    %v1473 = vld [vmem:[%s1470 + $0x10] sm:$0xff]
    %v1474 = vld [vmem:[%s1470 + $0x18] sm:$0xff]
    %v1475 = vld [vmem:[%s1470 + $0x20] sm:$0xff]
    %v1476 = vld [vmem:[%s1470 + $0x28] sm:$0xff]
    %v1477 = vld [vmem:[%s1470 + $0x30] sm:$0xff]
    %v1478 = vld [vmem:[%s1470 + $0x38] sm:$0xff]
    %s1479 = scalar_lea.vmem %s7, 4
    %v1480 = vld [vmem:[%s1479] sm:$0x1]
    %v1482 = vlaneseq
    %v1483 = vshrl.u32 %v1482, 7
    %v1484 = vsub.s32 0, %v1483
    %v1485 = vrot.slane %v1480, %v1484
    %1487 = vmatprep.subr.mxu0 0.0
    %1488 = vmatpush1.msra.mxu0 0.0
    %1489 = vmatprep.subr.mxu0 0.0
    %1490 = vmatpush1.msra.mxu0 0.0
    %1491 = vmatprep.subr.mxu0 0.0
    %1492 = vmatpush1.msra.mxu0 0.0
    %1493 = vmatprep.subr.mxu0 0.0
    %1494 = vmatpush1.msra.mxu0 0.0
    %1495 = vmatprep.subr.mxu0 0.0
    %1496 = vmatpush1.msra.mxu0 0.0
    %1497 = vmatprep.subr.mxu0 0.0
    %1498 = vmatpush1.msra.mxu0 0.0
    %1499 = vmatprep.subr.mxu0 0.0
    %1500 = vmatpush1.msra.mxu0 0.0
    %1501 = vmatprep.subr.mxu0 0.0
    %1502 = vmatpush1.msra.mxu0 0.0
    %1503 = vmatprep.subr.mxu0 0.0
    %1504 = vmatpush1.msra.mxu0 %v1478
    %1505 = vmatprep.subr.mxu0 0.0
    %1506 = vmatpush1.msra.mxu0 %v1477
    %1507 = vmatprep.subr.mxu0 0.0
    %1508 = vmatpush1.msra.mxu0 %v1476
    %1509 = vmatprep.subr.mxu0 0.0
    %1510 = vmatpush1.msra.mxu0 %v1475
    %1511 = vmatprep.subr.mxu0 0.0
    %1512 = vmatpush1.msra.mxu0 %v1474
    %1513 = vmatprep.subr.mxu0 0.0
    %1514 = vmatpush1.msra.mxu0 %v1473
    %1515 = vmatprep.subr.mxu0 0.0
    %1516 = vmatpush1.msra.mxu0 %v1472
    %1517 = vmatprep.subr.mxu0 0.0
    %1518 = vmatpush1.msra.mxu0 %v1471
    %1519 = vmatprep.subr.mxu0 0.0
    %1520 = vmatpush2.msra.mxu0 0.0
    %1521 = vmatprep.subr.mxu0 0.0
    %1522 = vmatpush2.msra.mxu0 0.0
    %1523 = vmatprep.subr.mxu0 0.0
    %1524 = vmatpush2.msra.mxu0 0.0
    %1525 = vmatprep.subr.mxu0 0.0
    %1526 = vmatpush2.msra.mxu0 0.0
    %1527 = vmatprep.subr.mxu0 0.0
    %1528 = vmatpush2.msra.mxu0 0.0
    %1529 = vmatprep.subr.mxu0 0.0
    %1530 = vmatpush2.msra.mxu0 0.0
    %1531 = vmatprep.subr.mxu0 0.0
    %1532 = vmatpush2.msra.mxu0 0.0
    %1533 = vmatprep.subr.mxu0 0.0
    %1534 = vmatpush2.msra.mxu0 0.0
    %1535 = vmatprep.subr.mxu0 0.0
    %1536 = vmatpush2.msra.mxu0 0.0
    %1537 = vmatprep.subr.mxu0 0.0
    %1538 = vmatpush2.msra.mxu0 0.0
    %1539 = vmatprep.subr.mxu0 0.0
    %1540 = vmatpush2.msra.mxu0 0.0
    %1541 = vmatprep.subr.mxu0 0.0
    %1542 = vmatpush2.msra.mxu0 0.0
    %1543 = vmatprep.subr.mxu0 0.0
    %1544 = vmatpush2.msra.mxu0 0.0
    %1545 = vmatprep.subr.mxu0 0.0
    %1546 = vmatpush2.msra.mxu0 0.0
    %1547 = vmatprep.subr.mxu0 0.0
    %1548 = vmatpush2.msra.mxu0 0.0
    %1549 = vmatprep.subr.mxu0 0.0
    %1550 = vmatpush2.msra.mxu0 0.0
    %1551 = vmatprep.mubr.f32.mxu0 0.0
    %1552 = vmatmul.mubr.f32.gmra.mxu0 %v242
    %v1553 = vpop.f32.mrf.mxu0
    %v1554 = vadd.f32 %v1485, %v1553
    %v1555 = vpop.f32.mrf.mxu0
    %1556 = vmatprep.mubr.f32.mxu0 0.0
    %1557 = vmatmul.mubr.f32.gmra.mxu0 %v245
    %v1558 = vpop.f32.mrf.mxu0
    %v1559 = vadd.f32 %v1485, %v1558
    %v1560 = vpop.f32.mrf.mxu0
    %1561 = vdwg.mxu0
    %s1562 = scalar_lea.vmem %s5, 512
    %v1563 = vld [vmem:[%s1562] sm:$0xff]
    %v1564 = vld [vmem:[%s1562 + $0x8] sm:$0xff]
    %v1565 = vld [vmem:[%s1562 + $0x10] sm:$0xff]
    %v1566 = vld [vmem:[%s1562 + $0x18] sm:$0xff]
    %v1567 = vld [vmem:[%s1562 + $0x20] sm:$0xff]
    %v1568 = vld [vmem:[%s1562 + $0x28] sm:$0xff]
    %v1569 = vld [vmem:[%s1562 + $0x30] sm:$0xff]
    %v1570 = vld [vmem:[%s1562 + $0x38] sm:$0xff]
    %v1571 = vld [vmem:[%s1562 + $0x40] sm:$0xff]
    %v1572 = vld [vmem:[%s1562 + $0x48] sm:$0xff]
    %v1573 = vld [vmem:[%s1562 + $0x50] sm:$0xff]
    %v1574 = vld [vmem:[%s1562 + $0x58] sm:$0xff]
    %v1575 = vld [vmem:[%s1562 + $0x60] sm:$0xff]
    %v1576 = vld [vmem:[%s1562 + $0x68] sm:$0xff]
    %v1577 = vld [vmem:[%s1562 + $0x70] sm:$0xff]
    %v1578 = vld [vmem:[%s1562 + $0x78] sm:$0xff]
    %v1580 = vsel %vm447, %v1563, 0
    %v1583 = vsel %vm447, %v1564, 0
    %v1586 = vsel %vm447, %v1565, 0
    %v1589 = vsel %vm447, %v1566, 0
    %v1592 = vsel %vm447, %v1567, 0
    %v1595 = vsel %vm447, %v1568, 0
    %v1598 = vsel %vm447, %v1569, 0
    %v1601 = vsel %vm447, %v1570, 0
    %v1604 = vsel %vm447, %v1571, 0
    %v1607 = vsel %vm447, %v1572, 0
    %v1610 = vsel %vm447, %v1573, 0
    %v1613 = vsel %vm447, %v1574, 0
    %v1616 = vsel %vm447, %v1575, 0
    %v1619 = vsel %vm447, %v1576, 0
    %v1622 = vsel %vm447, %v1577, 0
    %v1625 = vsel %vm447, %v1578, 0
    %1627 = vmatprep.subr.mxu0 0.0
    %1628 = vmatpush1.msra.mxu0 0.0
    %1629 = vmatprep.subr.mxu0 0.0
    %1630 = vmatpush1.msra.mxu0 0.0
    %1631 = vmatprep.subr.mxu0 0.0
    %1632 = vmatpush1.msra.mxu0 0.0
    %1633 = vmatprep.subr.mxu0 0.0
    %1634 = vmatpush1.msra.mxu0 0.0
    %1635 = vmatprep.subr.mxu0 0.0
    %1636 = vmatpush1.msra.mxu0 0.0
    %1637 = vmatprep.subr.mxu0 0.0
    %1638 = vmatpush1.msra.mxu0 0.0
    %1639 = vmatprep.subr.mxu0 0.0
    %1640 = vmatpush1.msra.mxu0 0.0
    %1641 = vmatprep.subr.mxu0 0.0
    %1642 = vmatpush1.msra.mxu0 0.0
    %1643 = vmatprep.subr.mxu0 0.0
    %1644 = vmatpush1.msra.mxu0 0.0
    %1645 = vmatprep.subr.mxu0 0.0
    %1646 = vmatpush1.msra.mxu0 0.0
    %1647 = vmatprep.subr.mxu0 0.0
    %1648 = vmatpush1.msra.mxu0 0.0
    %1649 = vmatprep.subr.mxu0 0.0
    %1650 = vmatpush1.msra.mxu0 0.0
    %1651 = vmatprep.subr.mxu0 0.0
    %1652 = vmatpush1.msra.mxu0 0.0
    %1653 = vmatprep.subr.mxu0 0.0
    %1654 = vmatpush1.msra.mxu0 0.0
    %1655 = vmatprep.subr.mxu0 0.0
    %1656 = vmatpush1.msra.mxu0 %v1559
    %1657 = vmatprep.subr.mxu0 0.0
    %1658 = vmatpush1.msra.mxu0 %v1554
    %1659 = vmatprep.subr.mxu0 0.0
    %1660 = vmatpush2.msra.mxu0 0.0
    %1661 = vmatprep.subr.mxu0 0.0
    %1662 = vmatpush2.msra.mxu0 0.0
    %1663 = vmatprep.subr.mxu0 0.0
    %1664 = vmatpush2.msra.mxu0 0.0
    %1665 = vmatprep.subr.mxu0 0.0
    %1666 = vmatpush2.msra.mxu0 0.0
    %1667 = vmatprep.subr.mxu0 0.0
    %1668 = vmatpush2.msra.mxu0 0.0
    %1669 = vmatprep.subr.mxu0 0.0
    %1670 = vmatpush2.msra.mxu0 0.0
    %1671 = vmatprep.subr.mxu0 0.0
    %1672 = vmatpush2.msra.mxu0 0.0
    %1673 = vmatprep.subr.mxu0 0.0
    %1674 = vmatpush2.msra.mxu0 0.0
    %1675 = vmatprep.subr.mxu0 0.0
    %1676 = vmatpush2.msra.mxu0 0.0
    %1677 = vmatprep.subr.mxu0 0.0
    %1678 = vmatpush2.msra.mxu0 0.0
    %1679 = vmatprep.subr.mxu0 0.0
    %1680 = vmatpush2.msra.mxu0 0.0
    %1681 = vmatprep.subr.mxu0 0.0
    %1682 = vmatpush2.msra.mxu0 0.0
    %1683 = vmatprep.subr.mxu0 0.0
    %1684 = vmatpush2.msra.mxu0 0.0
    %1685 = vmatprep.subr.mxu0 0.0
    %1686 = vmatpush2.msra.mxu0 0.0
    %1687 = vmatprep.subr.mxu0 0.0
    %1688 = vmatpush2.msra.mxu0 0.0
    %1689 = vmatprep.subr.mxu0 0.0
    %1690 = vmatpush2.msra.mxu0 0.0
    %1691 = vmatprep.mubr.f32.mxu0 0.0
    %1692 = vmatmul.mubr.f32.gmra.mxu0 %v1580
    %v1693 = vpop.f32.mrf.mxu0
    %v1694 = vadd.f32 0.0, %v1693
    %v1695 = vpop.f32.mrf.mxu0
    %1696 = vmatprep.mubr.f32.mxu0 0.0
    %1697 = vmatmul.mubr.f32.gmra.mxu0 %v1583
    %v1698 = vpop.f32.mrf.mxu0
    %v1699 = vadd.f32 0.0, %v1698
    %v1700 = vpop.f32.mrf.mxu0
    %1701 = vmatprep.mubr.f32.mxu0 0.0
    %1702 = vmatmul.mubr.f32.gmra.mxu0 %v1586
    %v1703 = vpop.f32.mrf.mxu0
    %v1704 = vadd.f32 0.0, %v1703
    %v1705 = vpop.f32.mrf.mxu0
    %1706 = vmatprep.mubr.f32.mxu0 0.0
    %1707 = vmatmul.mubr.f32.gmra.mxu0 %v1589
    %v1708 = vpop.f32.mrf.mxu0
    %v1709 = vadd.f32 0.0, %v1708
    %v1710 = vpop.f32.mrf.mxu0
    %1711 = vmatprep.mubr.f32.mxu0 0.0
    %1712 = vmatmul.mubr.f32.gmra.mxu0 %v1592
    %v1713 = vpop.f32.mrf.mxu0
    %v1714 = vadd.f32 0.0, %v1713
    %v1715 = vpop.f32.mrf.mxu0
    %1716 = vmatprep.mubr.f32.mxu0 0.0
    %1717 = vmatmul.mubr.f32.gmra.mxu0 %v1595
    %v1718 = vpop.f32.mrf.mxu0
    %v1719 = vadd.f32 0.0, %v1718
    %v1720 = vpop.f32.mrf.mxu0
    %1721 = vmatprep.mubr.f32.mxu0 0.0
    %1722 = vmatmul.mubr.f32.gmra.mxu0 %v1598
    %v1723 = vpop.f32.mrf.mxu0
    %v1724 = vadd.f32 0.0, %v1723
    %v1725 = vpop.f32.mrf.mxu0
    %1726 = vmatprep.mubr.f32.mxu0 0.0
    %1727 = vmatmul.mubr.f32.gmra.mxu0 %v1601
    %v1728 = vpop.f32.mrf.mxu0
    %v1729 = vadd.f32 0.0, %v1728
    %v1730 = vpop.f32.mrf.mxu0
    %1731 = vmatprep.mubr.f32.mxu0 0.0
    %1732 = vmatmul.mubr.f32.gmra.mxu0 %v1604
    %v1733 = vpop.f32.mrf.mxu0
    %v1734 = vadd.f32 0.0, %v1733
    %v1735 = vpop.f32.mrf.mxu0
    %1736 = vmatprep.mubr.f32.mxu0 0.0
    %1737 = vmatmul.mubr.f32.gmra.mxu0 %v1607
    %v1738 = vpop.f32.mrf.mxu0
    %v1739 = vadd.f32 0.0, %v1738
    %v1740 = vpop.f32.mrf.mxu0
    %1741 = vmatprep.mubr.f32.mxu0 0.0
    %1742 = vmatmul.mubr.f32.gmra.mxu0 %v1610
    %v1743 = vpop.f32.mrf.mxu0
    %v1744 = vadd.f32 0.0, %v1743
    %v1745 = vpop.f32.mrf.mxu0
    %1746 = vmatprep.mubr.f32.mxu0 0.0
    %1747 = vmatmul.mubr.f32.gmra.mxu0 %v1613
    %v1748 = vpop.f32.mrf.mxu0
    %v1749 = vadd.f32 0.0, %v1748
    %v1750 = vpop.f32.mrf.mxu0
    %1751 = vmatprep.mubr.f32.mxu0 0.0
    %1752 = vmatmul.mubr.f32.gmra.mxu0 %v1616
    %v1753 = vpop.f32.mrf.mxu0
    %v1754 = vadd.f32 0.0, %v1753
    %v1755 = vpop.f32.mrf.mxu0
    %1756 = vmatprep.mubr.f32.mxu0 0.0
    %1757 = vmatmul.mubr.f32.gmra.mxu0 %v1619
    %v1758 = vpop.f32.mrf.mxu0
    %v1759 = vadd.f32 0.0, %v1758
    %v1760 = vpop.f32.mrf.mxu0
    %1761 = vmatprep.mubr.f32.mxu0 0.0
    %1762 = vmatmul.mubr.f32.gmra.mxu0 %v1622
    %v1763 = vpop.f32.mrf.mxu0
    %v1764 = vadd.f32 0.0, %v1763
    %v1765 = vpop.f32.mrf.mxu0
    %1766 = vmatprep.mubr.f32.mxu0 0.0
    %1767 = vmatmul.mubr.f32.gmra.mxu0 %v1625
    %v1768 = vpop.f32.mrf.mxu0
    %v1769 = vadd.f32 0.0, %v1768
    %v1770 = vpop.f32.mrf.mxu0
    %1771 = vdwg.mxu0
    %v1772 = vadd.f32 %v1454, %v1694
    %v1773 = vadd.f32 %v1455, %v1699
    %v1774 = vadd.f32 %v1456, %v1704
    %v1775 = vadd.f32 %v1457, %v1709
    %v1776 = vadd.f32 %v1458, %v1714
    %v1777 = vadd.f32 %v1459, %v1719
    %v1778 = vadd.f32 %v1460, %v1724
    %v1779 = vadd.f32 %v1461, %v1729
    %v1780 = vadd.f32 %v1462, %v1734
    %v1781 = vadd.f32 %v1463, %v1739
    %v1782 = vadd.f32 %v1464, %v1744
    %v1783 = vadd.f32 %v1465, %v1749
    %v1784 = vadd.f32 %v1466, %v1754
    %v1785 = vadd.f32 %v1467, %v1759
    %v1786 = vadd.f32 %v1468, %v1764
    %v1787 = vadd.f32 %v1469, %v1769
    %s1788 = scalar_lea.vmem %s6, 320
    %v1789 = vld [vmem:[%s1788] sm:$0xff]
    %v1790 = vld [vmem:[%s1788 + $0x8] sm:$0xff]
    %v1791 = vld [vmem:[%s1788 + $0x10] sm:$0xff]
    %v1792 = vld [vmem:[%s1788 + $0x18] sm:$0xff]
    %v1793 = vld [vmem:[%s1788 + $0x20] sm:$0xff]
    %v1794 = vld [vmem:[%s1788 + $0x28] sm:$0xff]
    %v1795 = vld [vmem:[%s1788 + $0x30] sm:$0xff]
    %v1796 = vld [vmem:[%s1788 + $0x38] sm:$0xff]
    %s1797 = scalar_lea.vmem %s7, 5
    %v1798 = vld [vmem:[%s1797] sm:$0x1]
    %v1800 = vlaneseq
    %v1801 = vshrl.u32 %v1800, 7
    %v1802 = vsub.s32 0, %v1801
    %v1803 = vrot.slane %v1798, %v1802
    %1805 = vmatprep.subr.mxu0 0.0
    %1806 = vmatpush1.msra.mxu0 0.0
    %1807 = vmatprep.subr.mxu0 0.0
    %1808 = vmatpush1.msra.mxu0 0.0
    %1809 = vmatprep.subr.mxu0 0.0
    %1810 = vmatpush1.msra.mxu0 0.0
    %1811 = vmatprep.subr.mxu0 0.0
    %1812 = vmatpush1.msra.mxu0 0.0
    %1813 = vmatprep.subr.mxu0 0.0
    %1814 = vmatpush1.msra.mxu0 0.0
    %1815 = vmatprep.subr.mxu0 0.0
    %1816 = vmatpush1.msra.mxu0 0.0
    %1817 = vmatprep.subr.mxu0 0.0
    %1818 = vmatpush1.msra.mxu0 0.0
    %1819 = vmatprep.subr.mxu0 0.0
    %1820 = vmatpush1.msra.mxu0 0.0
    %1821 = vmatprep.subr.mxu0 0.0
    %1822 = vmatpush1.msra.mxu0 %v1796
    %1823 = vmatprep.subr.mxu0 0.0
    %1824 = vmatpush1.msra.mxu0 %v1795
    %1825 = vmatprep.subr.mxu0 0.0
    %1826 = vmatpush1.msra.mxu0 %v1794
    %1827 = vmatprep.subr.mxu0 0.0
    %1828 = vmatpush1.msra.mxu0 %v1793
    %1829 = vmatprep.subr.mxu0 0.0
    %1830 = vmatpush1.msra.mxu0 %v1792
    %1831 = vmatprep.subr.mxu0 0.0
    %1832 = vmatpush1.msra.mxu0 %v1791
    %1833 = vmatprep.subr.mxu0 0.0
    %1834 = vmatpush1.msra.mxu0 %v1790
    %1835 = vmatprep.subr.mxu0 0.0
    %1836 = vmatpush1.msra.mxu0 %v1789
    %1837 = vmatprep.subr.mxu0 0.0
    %1838 = vmatpush2.msra.mxu0 0.0
    %1839 = vmatprep.subr.mxu0 0.0
    %1840 = vmatpush2.msra.mxu0 0.0
    %1841 = vmatprep.subr.mxu0 0.0
    %1842 = vmatpush2.msra.mxu0 0.0
    %1843 = vmatprep.subr.mxu0 0.0
    %1844 = vmatpush2.msra.mxu0 0.0
    %1845 = vmatprep.subr.mxu0 0.0
    %1846 = vmatpush2.msra.mxu0 0.0
    %1847 = vmatprep.subr.mxu0 0.0
    %1848 = vmatpush2.msra.mxu0 0.0
    %1849 = vmatprep.subr.mxu0 0.0
    %1850 = vmatpush2.msra.mxu0 0.0
    %1851 = vmatprep.subr.mxu0 0.0
    %1852 = vmatpush2.msra.mxu0 0.0
    %1853 = vmatprep.subr.mxu0 0.0
    %1854 = vmatpush2.msra.mxu0 0.0
    %1855 = vmatprep.subr.mxu0 0.0
    %1856 = vmatpush2.msra.mxu0 0.0
    %1857 = vmatprep.subr.mxu0 0.0
    %1858 = vmatpush2.msra.mxu0 0.0
    %1859 = vmatprep.subr.mxu0 0.0
    %1860 = vmatpush2.msra.mxu0 0.0
    %1861 = vmatprep.subr.mxu0 0.0
    %1862 = vmatpush2.msra.mxu0 0.0
    %1863 = vmatprep.subr.mxu0 0.0
    %1864 = vmatpush2.msra.mxu0 0.0
    %1865 = vmatprep.subr.mxu0 0.0
    %1866 = vmatpush2.msra.mxu0 0.0
    %1867 = vmatprep.subr.mxu0 0.0
    %1868 = vmatpush2.msra.mxu0 0.0
    %1869 = vmatprep.mubr.f32.mxu0 0.0
    %1870 = vmatmul.mubr.f32.gmra.mxu0 %v242
    %v1871 = vpop.f32.mrf.mxu0
    %v1872 = vadd.f32 %v1803, %v1871
    %v1873 = vpop.f32.mrf.mxu0
    %1874 = vmatprep.mubr.f32.mxu0 0.0
    %1875 = vmatmul.mubr.f32.gmra.mxu0 %v245
    %v1876 = vpop.f32.mrf.mxu0
    %v1877 = vadd.f32 %v1803, %v1876
    %v1878 = vpop.f32.mrf.mxu0
    %1879 = vdwg.mxu0
    %s1880 = scalar_lea.vmem %s5, 640
    %v1881 = vld [vmem:[%s1880] sm:$0xff]
    %v1882 = vld [vmem:[%s1880 + $0x8] sm:$0xff]
    %v1883 = vld [vmem:[%s1880 + $0x10] sm:$0xff]
    %v1884 = vld [vmem:[%s1880 + $0x18] sm:$0xff]
    %v1885 = vld [vmem:[%s1880 + $0x20] sm:$0xff]
    %v1886 = vld [vmem:[%s1880 + $0x28] sm:$0xff]
    %v1887 = vld [vmem:[%s1880 + $0x30] sm:$0xff]
    %v1888 = vld [vmem:[%s1880 + $0x38] sm:$0xff]
    %v1889 = vld [vmem:[%s1880 + $0x40] sm:$0xff]
    %v1890 = vld [vmem:[%s1880 + $0x48] sm:$0xff]
    %v1891 = vld [vmem:[%s1880 + $0x50] sm:$0xff]
    %v1892 = vld [vmem:[%s1880 + $0x58] sm:$0xff]
    %v1893 = vld [vmem:[%s1880 + $0x60] sm:$0xff]
    %v1894 = vld [vmem:[%s1880 + $0x68] sm:$0xff]
    %v1895 = vld [vmem:[%s1880 + $0x70] sm:$0xff]
    %v1896 = vld [vmem:[%s1880 + $0x78] sm:$0xff]
    %v1898 = vsel %vm447, %v1881, 0
    %v1901 = vsel %vm447, %v1882, 0
    %v1904 = vsel %vm447, %v1883, 0
    %v1907 = vsel %vm447, %v1884, 0
    %v1910 = vsel %vm447, %v1885, 0
    %v1913 = vsel %vm447, %v1886, 0
    %v1916 = vsel %vm447, %v1887, 0
    %v1919 = vsel %vm447, %v1888, 0
    %v1922 = vsel %vm447, %v1889, 0
    %v1925 = vsel %vm447, %v1890, 0
    %v1928 = vsel %vm447, %v1891, 0
    %v1931 = vsel %vm447, %v1892, 0
    %v1934 = vsel %vm447, %v1893, 0
    %v1937 = vsel %vm447, %v1894, 0
    %v1940 = vsel %vm447, %v1895, 0
    %v1943 = vsel %vm447, %v1896, 0
    %1945 = vmatprep.subr.mxu0 0.0
    %1946 = vmatpush1.msra.mxu0 0.0
    %1947 = vmatprep.subr.mxu0 0.0
    %1948 = vmatpush1.msra.mxu0 0.0
    %1949 = vmatprep.subr.mxu0 0.0
    %1950 = vmatpush1.msra.mxu0 0.0
    %1951 = vmatprep.subr.mxu0 0.0
    %1952 = vmatpush1.msra.mxu0 0.0
    %1953 = vmatprep.subr.mxu0 0.0
    %1954 = vmatpush1.msra.mxu0 0.0
    %1955 = vmatprep.subr.mxu0 0.0
    %1956 = vmatpush1.msra.mxu0 0.0
    %1957 = vmatprep.subr.mxu0 0.0
    %1958 = vmatpush1.msra.mxu0 0.0
    %1959 = vmatprep.subr.mxu0 0.0
    %1960 = vmatpush1.msra.mxu0 0.0
    %1961 = vmatprep.subr.mxu0 0.0
    %1962 = vmatpush1.msra.mxu0 0.0
    %1963 = vmatprep.subr.mxu0 0.0
    %1964 = vmatpush1.msra.mxu0 0.0
    %1965 = vmatprep.subr.mxu0 0.0
    %1966 = vmatpush1.msra.mxu0 0.0
    %1967 = vmatprep.subr.mxu0 0.0
    %1968 = vmatpush1.msra.mxu0 0.0
    %1969 = vmatprep.subr.mxu0 0.0
    %1970 = vmatpush1.msra.mxu0 0.0
    %1971 = vmatprep.subr.mxu0 0.0
    %1972 = vmatpush1.msra.mxu0 0.0
    %1973 = vmatprep.subr.mxu0 0.0
    %1974 = vmatpush1.msra.mxu0 %v1877
    %1975 = vmatprep.subr.mxu0 0.0
    %1976 = vmatpush1.msra.mxu0 %v1872
    %1977 = vmatprep.subr.mxu0 0.0
    %1978 = vmatpush2.msra.mxu0 0.0
    %1979 = vmatprep.subr.mxu0 0.0
    %1980 = vmatpush2.msra.mxu0 0.0
    %1981 = vmatprep.subr.mxu0 0.0
    %1982 = vmatpush2.msra.mxu0 0.0
    %1983 = vmatprep.subr.mxu0 0.0
    %1984 = vmatpush2.msra.mxu0 0.0
    %1985 = vmatprep.subr.mxu0 0.0
    %1986 = vmatpush2.msra.mxu0 0.0
    %1987 = vmatprep.subr.mxu0 0.0
    %1988 = vmatpush2.msra.mxu0 0.0
    %1989 = vmatprep.subr.mxu0 0.0
    %1990 = vmatpush2.msra.mxu0 0.0
    %1991 = vmatprep.subr.mxu0 0.0
    %1992 = vmatpush2.msra.mxu0 0.0
    %1993 = vmatprep.subr.mxu0 0.0
    %1994 = vmatpush2.msra.mxu0 0.0
    %1995 = vmatprep.subr.mxu0 0.0
    %1996 = vmatpush2.msra.mxu0 0.0
    %1997 = vmatprep.subr.mxu0 0.0
    %1998 = vmatpush2.msra.mxu0 0.0
    %1999 = vmatprep.subr.mxu0 0.0
    %2000 = vmatpush2.msra.mxu0 0.0
    %2001 = vmatprep.subr.mxu0 0.0
    %2002 = vmatpush2.msra.mxu0 0.0
    %2003 = vmatprep.subr.mxu0 0.0
    %2004 = vmatpush2.msra.mxu0 0.0
    %2005 = vmatprep.subr.mxu0 0.0
    %2006 = vmatpush2.msra.mxu0 0.0
    %2007 = vmatprep.subr.mxu0 0.0
    %2008 = vmatpush2.msra.mxu0 0.0
    %2009 = vmatprep.mubr.f32.mxu0 0.0
    %2010 = vmatmul.mubr.f32.gmra.mxu0 %v1898
    %v2011 = vpop.f32.mrf.mxu0
    %v2012 = vadd.f32 0.0, %v2011
    %v2013 = vpop.f32.mrf.mxu0
    %2014 = vmatprep.mubr.f32.mxu0 0.0
    %2015 = vmatmul.mubr.f32.gmra.mxu0 %v1901
    %v2016 = vpop.f32.mrf.mxu0
    %v2017 = vadd.f32 0.0, %v2016
    %v2018 = vpop.f32.mrf.mxu0
    %2019 = vmatprep.mubr.f32.mxu0 0.0
    %2020 = vmatmul.mubr.f32.gmra.mxu0 %v1904
    %v2021 = vpop.f32.mrf.mxu0
    %v2022 = vadd.f32 0.0, %v2021
    %v2023 = vpop.f32.mrf.mxu0
    %2024 = vmatprep.mubr.f32.mxu0 0.0
    %2025 = vmatmul.mubr.f32.gmra.mxu0 %v1907
    %v2026 = vpop.f32.mrf.mxu0
    %v2027 = vadd.f32 0.0, %v2026
    %v2028 = vpop.f32.mrf.mxu0
    %2029 = vmatprep.mubr.f32.mxu0 0.0
    %2030 = vmatmul.mubr.f32.gmra.mxu0 %v1910
    %v2031 = vpop.f32.mrf.mxu0
    %v2032 = vadd.f32 0.0, %v2031
    %v2033 = vpop.f32.mrf.mxu0
    %2034 = vmatprep.mubr.f32.mxu0 0.0
    %2035 = vmatmul.mubr.f32.gmra.mxu0 %v1913
    %v2036 = vpop.f32.mrf.mxu0
    %v2037 = vadd.f32 0.0, %v2036
    %v2038 = vpop.f32.mrf.mxu0
    %2039 = vmatprep.mubr.f32.mxu0 0.0
    %2040 = vmatmul.mubr.f32.gmra.mxu0 %v1916
    %v2041 = vpop.f32.mrf.mxu0
    %v2042 = vadd.f32 0.0, %v2041
    %v2043 = vpop.f32.mrf.mxu0
    %2044 = vmatprep.mubr.f32.mxu0 0.0
    %2045 = vmatmul.mubr.f32.gmra.mxu0 %v1919
    %v2046 = vpop.f32.mrf.mxu0
    %v2047 = vadd.f32 0.0, %v2046
    %v2048 = vpop.f32.mrf.mxu0
    %2049 = vmatprep.mubr.f32.mxu0 0.0
    %2050 = vmatmul.mubr.f32.gmra.mxu0 %v1922
    %v2051 = vpop.f32.mrf.mxu0
    %v2052 = vadd.f32 0.0, %v2051
    %v2053 = vpop.f32.mrf.mxu0
    %2054 = vmatprep.mubr.f32.mxu0 0.0
    %2055 = vmatmul.mubr.f32.gmra.mxu0 %v1925
    %v2056 = vpop.f32.mrf.mxu0
    %v2057 = vadd.f32 0.0, %v2056
    %v2058 = vpop.f32.mrf.mxu0
    %2059 = vmatprep.mubr.f32.mxu0 0.0
    %2060 = vmatmul.mubr.f32.gmra.mxu0 %v1928
    %v2061 = vpop.f32.mrf.mxu0
    %v2062 = vadd.f32 0.0, %v2061
    %v2063 = vpop.f32.mrf.mxu0
    %2064 = vmatprep.mubr.f32.mxu0 0.0
    %2065 = vmatmul.mubr.f32.gmra.mxu0 %v1931
    %v2066 = vpop.f32.mrf.mxu0
    %v2067 = vadd.f32 0.0, %v2066
    %v2068 = vpop.f32.mrf.mxu0
    %2069 = vmatprep.mubr.f32.mxu0 0.0
    %2070 = vmatmul.mubr.f32.gmra.mxu0 %v1934
    %v2071 = vpop.f32.mrf.mxu0
    %v2072 = vadd.f32 0.0, %v2071
    %v2073 = vpop.f32.mrf.mxu0
    %2074 = vmatprep.mubr.f32.mxu0 0.0
    %2075 = vmatmul.mubr.f32.gmra.mxu0 %v1937
    %v2076 = vpop.f32.mrf.mxu0
    %v2077 = vadd.f32 0.0, %v2076
    %v2078 = vpop.f32.mrf.mxu0
    %2079 = vmatprep.mubr.f32.mxu0 0.0
    %2080 = vmatmul.mubr.f32.gmra.mxu0 %v1940
    %v2081 = vpop.f32.mrf.mxu0
    %v2082 = vadd.f32 0.0, %v2081
    %v2083 = vpop.f32.mrf.mxu0
    %2084 = vmatprep.mubr.f32.mxu0 0.0
    %2085 = vmatmul.mubr.f32.gmra.mxu0 %v1943
    %v2086 = vpop.f32.mrf.mxu0
    %v2087 = vadd.f32 0.0, %v2086
    %v2088 = vpop.f32.mrf.mxu0
    %2089 = vdwg.mxu0
    %v2090 = vadd.f32 %v1772, %v2012
    %v2091 = vadd.f32 %v1773, %v2017
    %v2092 = vadd.f32 %v1774, %v2022
    %v2093 = vadd.f32 %v1775, %v2027
    %v2094 = vadd.f32 %v1776, %v2032
    %v2095 = vadd.f32 %v1777, %v2037
    %v2096 = vadd.f32 %v1778, %v2042
    %v2097 = vadd.f32 %v1779, %v2047
    %v2098 = vadd.f32 %v1780, %v2052
    %v2099 = vadd.f32 %v1781, %v2057
    %v2100 = vadd.f32 %v1782, %v2062
    %v2101 = vadd.f32 %v1783, %v2067
    %v2102 = vadd.f32 %v1784, %v2072
    %v2103 = vadd.f32 %v1785, %v2077
    %v2104 = vadd.f32 %v1786, %v2082
    %v2105 = vadd.f32 %v1787, %v2087
    %s2106 = scalar_lea.vmem %s6, 384
    %v2107 = vld [vmem:[%s2106] sm:$0xff]
    %v2108 = vld [vmem:[%s2106 + $0x8] sm:$0xff]
    %v2109 = vld [vmem:[%s2106 + $0x10] sm:$0xff]
    %v2110 = vld [vmem:[%s2106 + $0x18] sm:$0xff]
    %v2111 = vld [vmem:[%s2106 + $0x20] sm:$0xff]
    %v2112 = vld [vmem:[%s2106 + $0x28] sm:$0xff]
    %v2113 = vld [vmem:[%s2106 + $0x30] sm:$0xff]
    %v2114 = vld [vmem:[%s2106 + $0x38] sm:$0xff]
    %s2115 = scalar_lea.vmem %s7, 6
    %v2116 = vld [vmem:[%s2115] sm:$0x1]
    %v2118 = vlaneseq
    %v2119 = vshrl.u32 %v2118, 7
    %v2120 = vsub.s32 0, %v2119
    %v2121 = vrot.slane %v2116, %v2120
    %2123 = vmatprep.subr.mxu0 0.0
    %2124 = vmatpush1.msra.mxu0 0.0
    %2125 = vmatprep.subr.mxu0 0.0
    %2126 = vmatpush1.msra.mxu0 0.0
    %2127 = vmatprep.subr.mxu0 0.0
    %2128 = vmatpush1.msra.mxu0 0.0
    %2129 = vmatprep.subr.mxu0 0.0
    %2130 = vmatpush1.msra.mxu0 0.0
    %2131 = vmatprep.subr.mxu0 0.0
    %2132 = vmatpush1.msra.mxu0 0.0
    %2133 = vmatprep.subr.mxu0 0.0
    %2134 = vmatpush1.msra.mxu0 0.0
    %2135 = vmatprep.subr.mxu0 0.0
    %2136 = vmatpush1.msra.mxu0 0.0
    %2137 = vmatprep.subr.mxu0 0.0
    %2138 = vmatpush1.msra.mxu0 0.0
    %2139 = vmatprep.subr.mxu0 0.0
    %2140 = vmatpush1.msra.mxu0 %v2114
    %2141 = vmatprep.subr.mxu0 0.0
    %2142 = vmatpush1.msra.mxu0 %v2113
    %2143 = vmatprep.subr.mxu0 0.0
    %2144 = vmatpush1.msra.mxu0 %v2112
    %2145 = vmatprep.subr.mxu0 0.0
    %2146 = vmatpush1.msra.mxu0 %v2111
    %2147 = vmatprep.subr.mxu0 0.0
    %2148 = vmatpush1.msra.mxu0 %v2110
    %2149 = vmatprep.subr.mxu0 0.0
    %2150 = vmatpush1.msra.mxu0 %v2109
    %2151 = vmatprep.subr.mxu0 0.0
    %2152 = vmatpush1.msra.mxu0 %v2108
    %2153 = vmatprep.subr.mxu0 0.0
    %2154 = vmatpush1.msra.mxu0 %v2107
    %2155 = vmatprep.subr.mxu0 0.0
    %2156 = vmatpush2.msra.mxu0 0.0
    %2157 = vmatprep.subr.mxu0 0.0
    %2158 = vmatpush2.msra.mxu0 0.0
    %2159 = vmatprep.subr.mxu0 0.0
    %2160 = vmatpush2.msra.mxu0 0.0
    %2161 = vmatprep.subr.mxu0 0.0
    %2162 = vmatpush2.msra.mxu0 0.0
    %2163 = vmatprep.subr.mxu0 0.0
    %2164 = vmatpush2.msra.mxu0 0.0
    %2165 = vmatprep.subr.mxu0 0.0
    %2166 = vmatpush2.msra.mxu0 0.0
    %2167 = vmatprep.subr.mxu0 0.0
    %2168 = vmatpush2.msra.mxu0 0.0
    %2169 = vmatprep.subr.mxu0 0.0
    %2170 = vmatpush2.msra.mxu0 0.0
    %2171 = vmatprep.subr.mxu0 0.0
    %2172 = vmatpush2.msra.mxu0 0.0
    %2173 = vmatprep.subr.mxu0 0.0
    %2174 = vmatpush2.msra.mxu0 0.0
    %2175 = vmatprep.subr.mxu0 0.0
    %2176 = vmatpush2.msra.mxu0 0.0
    %2177 = vmatprep.subr.mxu0 0.0
    %2178 = vmatpush2.msra.mxu0 0.0
    %2179 = vmatprep.subr.mxu0 0.0
    %2180 = vmatpush2.msra.mxu0 0.0
    %2181 = vmatprep.subr.mxu0 0.0
    %2182 = vmatpush2.msra.mxu0 0.0
    %2183 = vmatprep.subr.mxu0 0.0
    %2184 = vmatpush2.msra.mxu0 0.0
    %2185 = vmatprep.subr.mxu0 0.0
    %2186 = vmatpush2.msra.mxu0 0.0
    %2187 = vmatprep.mubr.f32.mxu0 0.0
    %2188 = vmatmul.mubr.f32.gmra.mxu0 %v242
    %v2189 = vpop.f32.mrf.mxu0
    %v2190 = vadd.f32 %v2121, %v2189
    %v2191 = vpop.f32.mrf.mxu0
    %2192 = vmatprep.mubr.f32.mxu0 0.0
    %2193 = vmatmul.mubr.f32.gmra.mxu0 %v245
    %v2194 = vpop.f32.mrf.mxu0
    %v2195 = vadd.f32 %v2121, %v2194
    %v2196 = vpop.f32.mrf.mxu0
    %2197 = vdwg.mxu0
    %s2198 = scalar_lea.vmem %s5, 768
    %v2199 = vld [vmem:[%s2198] sm:$0xff]
    %v2200 = vld [vmem:[%s2198 + $0x8] sm:$0xff]
    %v2201 = vld [vmem:[%s2198 + $0x10] sm:$0xff]
    %v2202 = vld [vmem:[%s2198 + $0x18] sm:$0xff]
    %v2203 = vld [vmem:[%s2198 + $0x20] sm:$0xff]
    %v2204 = vld [vmem:[%s2198 + $0x28] sm:$0xff]
    %v2205 = vld [vmem:[%s2198 + $0x30] sm:$0xff]
    %v2206 = vld [vmem:[%s2198 + $0x38] sm:$0xff]
    %v2207 = vld [vmem:[%s2198 + $0x40] sm:$0xff]
    %v2208 = vld [vmem:[%s2198 + $0x48] sm:$0xff]
    %v2209 = vld [vmem:[%s2198 + $0x50] sm:$0xff]
    %v2210 = vld [vmem:[%s2198 + $0x58] sm:$0xff]
    %v2211 = vld [vmem:[%s2198 + $0x60] sm:$0xff]
    %v2212 = vld [vmem:[%s2198 + $0x68] sm:$0xff]
    %v2213 = vld [vmem:[%s2198 + $0x70] sm:$0xff]
    %v2214 = vld [vmem:[%s2198 + $0x78] sm:$0xff]
    %v2216 = vsel %vm447, %v2199, 0
    %v2219 = vsel %vm447, %v2200, 0
    %v2222 = vsel %vm447, %v2201, 0
    %v2225 = vsel %vm447, %v2202, 0
    %v2228 = vsel %vm447, %v2203, 0
    %v2231 = vsel %vm447, %v2204, 0
    %v2234 = vsel %vm447, %v2205, 0
    %v2237 = vsel %vm447, %v2206, 0
    %v2240 = vsel %vm447, %v2207, 0
    %v2243 = vsel %vm447, %v2208, 0
    %v2246 = vsel %vm447, %v2209, 0
    %v2249 = vsel %vm447, %v2210, 0
    %v2252 = vsel %vm447, %v2211, 0
    %v2255 = vsel %vm447, %v2212, 0
    %v2258 = vsel %vm447, %v2213, 0
    %v2261 = vsel %vm447, %v2214, 0
    %2263 = vmatprep.subr.mxu0 0.0
    %2264 = vmatpush1.msra.mxu0 0.0
    %2265 = vmatprep.subr.mxu0 0.0
    %2266 = vmatpush1.msra.mxu0 0.0
    %2267 = vmatprep.subr.mxu0 0.0
    %2268 = vmatpush1.msra.mxu0 0.0
    %2269 = vmatprep.subr.mxu0 0.0
    %2270 = vmatpush1.msra.mxu0 0.0
    %2271 = vmatprep.subr.mxu0 0.0
    %2272 = vmatpush1.msra.mxu0 0.0
    %2273 = vmatprep.subr.mxu0 0.0
    %2274 = vmatpush1.msra.mxu0 0.0
    %2275 = vmatprep.subr.mxu0 0.0
    %2276 = vmatpush1.msra.mxu0 0.0
    %2277 = vmatprep.subr.mxu0 0.0
    %2278 = vmatpush1.msra.mxu0 0.0
    %2279 = vmatprep.subr.mxu0 0.0
    %2280 = vmatpush1.msra.mxu0 0.0
    %2281 = vmatprep.subr.mxu0 0.0
    %2282 = vmatpush1.msra.mxu0 0.0
    %2283 = vmatprep.subr.mxu0 0.0
    %2284 = vmatpush1.msra.mxu0 0.0
    %2285 = vmatprep.subr.mxu0 0.0
    %2286 = vmatpush1.msra.mxu0 0.0
    %2287 = vmatprep.subr.mxu0 0.0
    %2288 = vmatpush1.msra.mxu0 0.0
    %2289 = vmatprep.subr.mxu0 0.0
    %2290 = vmatpush1.msra.mxu0 0.0
    %2291 = vmatprep.subr.mxu0 0.0
    %2292 = vmatpush1.msra.mxu0 %v2195
    %2293 = vmatprep.subr.mxu0 0.0
    %2294 = vmatpush1.msra.mxu0 %v2190
    %2295 = vmatprep.subr.mxu0 0.0
    %2296 = vmatpush2.msra.mxu0 0.0
    %2297 = vmatprep.subr.mxu0 0.0
    %2298 = vmatpush2.msra.mxu0 0.0
    %2299 = vmatprep.subr.mxu0 0.0
    %2300 = vmatpush2.msra.mxu0 0.0
    %2301 = vmatprep.subr.mxu0 0.0
    %2302 = vmatpush2.msra.mxu0 0.0
    %2303 = vmatprep.subr.mxu0 0.0
    %2304 = vmatpush2.msra.mxu0 0.0
    %2305 = vmatprep.subr.mxu0 0.0
    %2306 = vmatpush2.msra.mxu0 0.0
    %2307 = vmatprep.subr.mxu0 0.0
    %2308 = vmatpush2.msra.mxu0 0.0
    %2309 = vmatprep.subr.mxu0 0.0
    %2310 = vmatpush2.msra.mxu0 0.0
    %2311 = vmatprep.subr.mxu0 0.0
    %2312 = vmatpush2.msra.mxu0 0.0
    %2313 = vmatprep.subr.mxu0 0.0
    %2314 = vmatpush2.msra.mxu0 0.0
    %2315 = vmatprep.subr.mxu0 0.0
    %2316 = vmatpush2.msra.mxu0 0.0
    %2317 = vmatprep.subr.mxu0 0.0
    %2318 = vmatpush2.msra.mxu0 0.0
    %2319 = vmatprep.subr.mxu0 0.0
    %2320 = vmatpush2.msra.mxu0 0.0
    %2321 = vmatprep.subr.mxu0 0.0
    %2322 = vmatpush2.msra.mxu0 0.0
    %2323 = vmatprep.subr.mxu0 0.0
    %2324 = vmatpush2.msra.mxu0 0.0
    %2325 = vmatprep.subr.mxu0 0.0
    %2326 = vmatpush2.msra.mxu0 0.0
    %2327 = vmatprep.mubr.f32.mxu0 0.0
    %2328 = vmatmul.mubr.f32.gmra.mxu0 %v2216
    %v2329 = vpop.f32.mrf.mxu0
    %v2330 = vadd.f32 0.0, %v2329
    %v2331 = vpop.f32.mrf.mxu0
    %2332 = vmatprep.mubr.f32.mxu0 0.0
    %2333 = vmatmul.mubr.f32.gmra.mxu0 %v2219
    %v2334 = vpop.f32.mrf.mxu0
    %v2335 = vadd.f32 0.0, %v2334
    %v2336 = vpop.f32.mrf.mxu0
    %2337 = vmatprep.mubr.f32.mxu0 0.0
    %2338 = vmatmul.mubr.f32.gmra.mxu0 %v2222
    %v2339 = vpop.f32.mrf.mxu0
    %v2340 = vadd.f32 0.0, %v2339
    %v2341 = vpop.f32.mrf.mxu0
    %2342 = vmatprep.mubr.f32.mxu0 0.0
    %2343 = vmatmul.mubr.f32.gmra.mxu0 %v2225
    %v2344 = vpop.f32.mrf.mxu0
    %v2345 = vadd.f32 0.0, %v2344
    %v2346 = vpop.f32.mrf.mxu0
    %2347 = vmatprep.mubr.f32.mxu0 0.0
    %2348 = vmatmul.mubr.f32.gmra.mxu0 %v2228
    %v2349 = vpop.f32.mrf.mxu0
    %v2350 = vadd.f32 0.0, %v2349
    %v2351 = vpop.f32.mrf.mxu0
    %2352 = vmatprep.mubr.f32.mxu0 0.0
    %2353 = vmatmul.mubr.f32.gmra.mxu0 %v2231
    %v2354 = vpop.f32.mrf.mxu0
    %v2355 = vadd.f32 0.0, %v2354
    %v2356 = vpop.f32.mrf.mxu0
    %2357 = vmatprep.mubr.f32.mxu0 0.0
    %2358 = vmatmul.mubr.f32.gmra.mxu0 %v2234
    %v2359 = vpop.f32.mrf.mxu0
    %v2360 = vadd.f32 0.0, %v2359
    %v2361 = vpop.f32.mrf.mxu0
    %2362 = vmatprep.mubr.f32.mxu0 0.0
    %2363 = vmatmul.mubr.f32.gmra.mxu0 %v2237
    %v2364 = vpop.f32.mrf.mxu0
    %v2365 = vadd.f32 0.0, %v2364
    %v2366 = vpop.f32.mrf.mxu0
    %2367 = vmatprep.mubr.f32.mxu0 0.0
    %2368 = vmatmul.mubr.f32.gmra.mxu0 %v2240
    %v2369 = vpop.f32.mrf.mxu0
    %v2370 = vadd.f32 0.0, %v2369
    %v2371 = vpop.f32.mrf.mxu0
    %2372 = vmatprep.mubr.f32.mxu0 0.0
    %2373 = vmatmul.mubr.f32.gmra.mxu0 %v2243
    %v2374 = vpop.f32.mrf.mxu0
    %v2375 = vadd.f32 0.0, %v2374
    %v2376 = vpop.f32.mrf.mxu0
    %2377 = vmatprep.mubr.f32.mxu0 0.0
    %2378 = vmatmul.mubr.f32.gmra.mxu0 %v2246
    %v2379 = vpop.f32.mrf.mxu0
    %v2380 = vadd.f32 0.0, %v2379
    %v2381 = vpop.f32.mrf.mxu0
    %2382 = vmatprep.mubr.f32.mxu0 0.0
    %2383 = vmatmul.mubr.f32.gmra.mxu0 %v2249
    %v2384 = vpop.f32.mrf.mxu0
    %v2385 = vadd.f32 0.0, %v2384
    %v2386 = vpop.f32.mrf.mxu0
    %2387 = vmatprep.mubr.f32.mxu0 0.0
    %2388 = vmatmul.mubr.f32.gmra.mxu0 %v2252
    %v2389 = vpop.f32.mrf.mxu0
    %v2390 = vadd.f32 0.0, %v2389
    %v2391 = vpop.f32.mrf.mxu0
    %2392 = vmatprep.mubr.f32.mxu0 0.0
    %2393 = vmatmul.mubr.f32.gmra.mxu0 %v2255
    %v2394 = vpop.f32.mrf.mxu0
    %v2395 = vadd.f32 0.0, %v2394
    %v2396 = vpop.f32.mrf.mxu0
    %2397 = vmatprep.mubr.f32.mxu0 0.0
    %2398 = vmatmul.mubr.f32.gmra.mxu0 %v2258
    %v2399 = vpop.f32.mrf.mxu0
    %v2400 = vadd.f32 0.0, %v2399
    %v2401 = vpop.f32.mrf.mxu0
    %2402 = vmatprep.mubr.f32.mxu0 0.0
    %2403 = vmatmul.mubr.f32.gmra.mxu0 %v2261
    %v2404 = vpop.f32.mrf.mxu0
    %v2405 = vadd.f32 0.0, %v2404
    %v2406 = vpop.f32.mrf.mxu0
    %2407 = vdwg.mxu0
    %v2408 = vadd.f32 %v2090, %v2330
    %v2409 = vadd.f32 %v2091, %v2335
    %v2410 = vadd.f32 %v2092, %v2340
    %v2411 = vadd.f32 %v2093, %v2345
    %v2412 = vadd.f32 %v2094, %v2350
    %v2413 = vadd.f32 %v2095, %v2355
    %v2414 = vadd.f32 %v2096, %v2360
    %v2415 = vadd.f32 %v2097, %v2365
    %v2416 = vadd.f32 %v2098, %v2370
    %v2417 = vadd.f32 %v2099, %v2375
    %v2418 = vadd.f32 %v2100, %v2380
    %v2419 = vadd.f32 %v2101, %v2385
    %v2420 = vadd.f32 %v2102, %v2390
    %v2421 = vadd.f32 %v2103, %v2395
    %v2422 = vadd.f32 %v2104, %v2400
    %v2423 = vadd.f32 %v2105, %v2405
    %s2424 = scalar_lea.vmem %s6, 448
    %v2425 = vld [vmem:[%s2424] sm:$0xff]
    %v2426 = vld [vmem:[%s2424 + $0x8] sm:$0xff]
    %v2427 = vld [vmem:[%s2424 + $0x10] sm:$0xff]
    %v2428 = vld [vmem:[%s2424 + $0x18] sm:$0xff]
    %v2429 = vld [vmem:[%s2424 + $0x20] sm:$0xff]
    %v2430 = vld [vmem:[%s2424 + $0x28] sm:$0xff]
    %v2431 = vld [vmem:[%s2424 + $0x30] sm:$0xff]
    %v2432 = vld [vmem:[%s2424 + $0x38] sm:$0xff]
    %s2433 = scalar_lea.vmem %s7, 7
    %v2434 = vld [vmem:[%s2433] sm:$0x1]
    %v2436 = vlaneseq
    %v2437 = vshrl.u32 %v2436, 7
    %v2438 = vsub.s32 0, %v2437
    %v2439 = vrot.slane %v2434, %v2438
    %2441 = vmatprep.subr.mxu0 0.0
    %2442 = vmatpush1.msra.mxu0 0.0
    %2443 = vmatprep.subr.mxu0 0.0
    %2444 = vmatpush1.msra.mxu0 0.0
    %2445 = vmatprep.subr.mxu0 0.0
    %2446 = vmatpush1.msra.mxu0 0.0
    %2447 = vmatprep.subr.mxu0 0.0
    %2448 = vmatpush1.msra.mxu0 0.0
    %2449 = vmatprep.subr.mxu0 0.0
    %2450 = vmatpush1.msra.mxu0 0.0
    %2451 = vmatprep.subr.mxu0 0.0
    %2452 = vmatpush1.msra.mxu0 0.0
    %2453 = vmatprep.subr.mxu0 0.0
    %2454 = vmatpush1.msra.mxu0 0.0
    %2455 = vmatprep.subr.mxu0 0.0
    %2456 = vmatpush1.msra.mxu0 0.0
    %2457 = vmatprep.subr.mxu0 0.0
    %2458 = vmatpush1.msra.mxu0 %v2432
    %2459 = vmatprep.subr.mxu0 0.0
    %2460 = vmatpush1.msra.mxu0 %v2431
    %2461 = vmatprep.subr.mxu0 0.0
    %2462 = vmatpush1.msra.mxu0 %v2430
    %2463 = vmatprep.subr.mxu0 0.0
    %2464 = vmatpush1.msra.mxu0 %v2429
    %2465 = vmatprep.subr.mxu0 0.0
    %2466 = vmatpush1.msra.mxu0 %v2428
    %2467 = vmatprep.subr.mxu0 0.0
    %2468 = vmatpush1.msra.mxu0 %v2427
    %2469 = vmatprep.subr.mxu0 0.0
    %2470 = vmatpush1.msra.mxu0 %v2426
    %2471 = vmatprep.subr.mxu0 0.0
    %2472 = vmatpush1.msra.mxu0 %v2425
    %2473 = vmatprep.subr.mxu0 0.0
    %2474 = vmatpush2.msra.mxu0 0.0
    %2475 = vmatprep.subr.mxu0 0.0
    %2476 = vmatpush2.msra.mxu0 0.0
    %2477 = vmatprep.subr.mxu0 0.0
    %2478 = vmatpush2.msra.mxu0 0.0
    %2479 = vmatprep.subr.mxu0 0.0
    %2480 = vmatpush2.msra.mxu0 0.0
    %2481 = vmatprep.subr.mxu0 0.0
    %2482 = vmatpush2.msra.mxu0 0.0
    %2483 = vmatprep.subr.mxu0 0.0
    %2484 = vmatpush2.msra.mxu0 0.0
    %2485 = vmatprep.subr.mxu0 0.0
    %2486 = vmatpush2.msra.mxu0 0.0
    %2487 = vmatprep.subr.mxu0 0.0
    %2488 = vmatpush2.msra.mxu0 0.0
    %2489 = vmatprep.subr.mxu0 0.0
    %2490 = vmatpush2.msra.mxu0 0.0
    %2491 = vmatprep.subr.mxu0 0.0
    %2492 = vmatpush2.msra.mxu0 0.0
    %2493 = vmatprep.subr.mxu0 0.0
    %2494 = vmatpush2.msra.mxu0 0.0
    %2495 = vmatprep.subr.mxu0 0.0
    %2496 = vmatpush2.msra.mxu0 0.0
    %2497 = vmatprep.subr.mxu0 0.0
    %2498 = vmatpush2.msra.mxu0 0.0
    %2499 = vmatprep.subr.mxu0 0.0
    %2500 = vmatpush2.msra.mxu0 0.0
    %2501 = vmatprep.subr.mxu0 0.0
    %2502 = vmatpush2.msra.mxu0 0.0
    %2503 = vmatprep.subr.mxu0 0.0
    %2504 = vmatpush2.msra.mxu0 0.0
    %2505 = vmatprep.mubr.f32.mxu0 0.0
    %2506 = vmatmul.mubr.f32.gmra.mxu0 %v242
    %v2507 = vpop.f32.mrf.mxu0
    %v2508 = vadd.f32 %v2439, %v2507
    %v2509 = vpop.f32.mrf.mxu0
    %2510 = vmatprep.mubr.f32.mxu0 0.0
    %2511 = vmatmul.mubr.f32.gmra.mxu0 %v245
    %v2512 = vpop.f32.mrf.mxu0
    %v2513 = vadd.f32 %v2439, %v2512
    %v2514 = vpop.f32.mrf.mxu0
    %2515 = vdwg.mxu0
    %s2516 = scalar_lea.vmem %s5, 896
    %v2517 = vld [vmem:[%s2516] sm:$0xff]
    %v2518 = vld [vmem:[%s2516 + $0x8] sm:$0xff]
    %v2519 = vld [vmem:[%s2516 + $0x10] sm:$0xff]
    %v2520 = vld [vmem:[%s2516 + $0x18] sm:$0xff]
    %v2521 = vld [vmem:[%s2516 + $0x20] sm:$0xff]
    %v2522 = vld [vmem:[%s2516 + $0x28] sm:$0xff]
    %v2523 = vld [vmem:[%s2516 + $0x30] sm:$0xff]
    %v2524 = vld [vmem:[%s2516 + $0x38] sm:$0xff]
    %v2525 = vld [vmem:[%s2516 + $0x40] sm:$0xff]
    %v2526 = vld [vmem:[%s2516 + $0x48] sm:$0xff]
    %v2527 = vld [vmem:[%s2516 + $0x50] sm:$0xff]
    %v2528 = vld [vmem:[%s2516 + $0x58] sm:$0xff]
    %v2529 = vld [vmem:[%s2516 + $0x60] sm:$0xff]
    %v2530 = vld [vmem:[%s2516 + $0x68] sm:$0xff]
    %v2531 = vld [vmem:[%s2516 + $0x70] sm:$0xff]
    %v2532 = vld [vmem:[%s2516 + $0x78] sm:$0xff]
    %v2534 = vsel %vm447, %v2517, 0
    %v2537 = vsel %vm447, %v2518, 0
    %v2540 = vsel %vm447, %v2519, 0
    %v2543 = vsel %vm447, %v2520, 0
    %v2546 = vsel %vm447, %v2521, 0
    %v2549 = vsel %vm447, %v2522, 0
    %v2552 = vsel %vm447, %v2523, 0
    %v2555 = vsel %vm447, %v2524, 0
    %v2558 = vsel %vm447, %v2525, 0
    %v2561 = vsel %vm447, %v2526, 0
    %v2564 = vsel %vm447, %v2527, 0
    %v2567 = vsel %vm447, %v2528, 0
    %v2570 = vsel %vm447, %v2529, 0
    %v2573 = vsel %vm447, %v2530, 0
    %v2576 = vsel %vm447, %v2531, 0
    %v2579 = vsel %vm447, %v2532, 0
    %2581 = vmatprep.subr.mxu0 0.0
    %2582 = vmatpush1.msra.mxu0 0.0
    %2583 = vmatprep.subr.mxu0 0.0
    %2584 = vmatpush1.msra.mxu0 0.0
    %2585 = vmatprep.subr.mxu0 0.0
    %2586 = vmatpush1.msra.mxu0 0.0
    %2587 = vmatprep.subr.mxu0 0.0
    %2588 = vmatpush1.msra.mxu0 0.0
    %2589 = vmatprep.subr.mxu0 0.0
    %2590 = vmatpush1.msra.mxu0 0.0
    %2591 = vmatprep.subr.mxu0 0.0
    %2592 = vmatpush1.msra.mxu0 0.0
    %2593 = vmatprep.subr.mxu0 0.0
    %2594 = vmatpush1.msra.mxu0 0.0
    %2595 = vmatprep.subr.mxu0 0.0
    %2596 = vmatpush1.msra.mxu0 0.0
    %2597 = vmatprep.subr.mxu0 0.0
    %2598 = vmatpush1.msra.mxu0 0.0
    %2599 = vmatprep.subr.mxu0 0.0
    %2600 = vmatpush1.msra.mxu0 0.0
    %2601 = vmatprep.subr.mxu0 0.0
    %2602 = vmatpush1.msra.mxu0 0.0
    %2603 = vmatprep.subr.mxu0 0.0
    %2604 = vmatpush1.msra.mxu0 0.0
    %2605 = vmatprep.subr.mxu0 0.0
    %2606 = vmatpush1.msra.mxu0 0.0
    %2607 = vmatprep.subr.mxu0 0.0
    %2608 = vmatpush1.msra.mxu0 0.0
    %2609 = vmatprep.subr.mxu0 0.0
    %2610 = vmatpush1.msra.mxu0 %v2513
    %2611 = vmatprep.subr.mxu0 0.0
    %2612 = vmatpush1.msra.mxu0 %v2508
    %2613 = vmatprep.subr.mxu0 0.0
    %2614 = vmatpush2.msra.mxu0 0.0
    %2615 = vmatprep.subr.mxu0 0.0
    %2616 = vmatpush2.msra.mxu0 0.0
    %2617 = vmatprep.subr.mxu0 0.0
    %2618 = vmatpush2.msra.mxu0 0.0
    %2619 = vmatprep.subr.mxu0 0.0
    %2620 = vmatpush2.msra.mxu0 0.0
    %2621 = vmatprep.subr.mxu0 0.0
    %2622 = vmatpush2.msra.mxu0 0.0
    %2623 = vmatprep.subr.mxu0 0.0
    %2624 = vmatpush2.msra.mxu0 0.0
    %2625 = vmatprep.subr.mxu0 0.0
    %2626 = vmatpush2.msra.mxu0 0.0
    %2627 = vmatprep.subr.mxu0 0.0
    %2628 = vmatpush2.msra.mxu0 0.0
    %2629 = vmatprep.subr.mxu0 0.0
    %2630 = vmatpush2.msra.mxu0 0.0
    %2631 = vmatprep.subr.mxu0 0.0
    %2632 = vmatpush2.msra.mxu0 0.0
    %2633 = vmatprep.subr.mxu0 0.0
    %2634 = vmatpush2.msra.mxu0 0.0
    %2635 = vmatprep.subr.mxu0 0.0
    %2636 = vmatpush2.msra.mxu0 0.0
    %2637 = vmatprep.subr.mxu0 0.0
    %2638 = vmatpush2.msra.mxu0 0.0
    %2639 = vmatprep.subr.mxu0 0.0
    %2640 = vmatpush2.msra.mxu0 0.0
    %2641 = vmatprep.subr.mxu0 0.0
    %2642 = vmatpush2.msra.mxu0 0.0
    %2643 = vmatprep.subr.mxu0 0.0
    %2644 = vmatpush2.msra.mxu0 0.0
    %2645 = vmatprep.mubr.f32.mxu0 0.0
    %2646 = vmatmul.mubr.f32.gmra.mxu0 %v2534
    %v2647 = vpop.f32.mrf.mxu0
    %v2648 = vadd.f32 0.0, %v2647
    %v2649 = vpop.f32.mrf.mxu0
    %2650 = vmatprep.mubr.f32.mxu0 0.0
    %2651 = vmatmul.mubr.f32.gmra.mxu0 %v2537
    %v2652 = vpop.f32.mrf.mxu0
    %v2653 = vadd.f32 0.0, %v2652
    %v2654 = vpop.f32.mrf.mxu0
    %2655 = vmatprep.mubr.f32.mxu0 0.0
    %2656 = vmatmul.mubr.f32.gmra.mxu0 %v2540
    %v2657 = vpop.f32.mrf.mxu0
    %v2658 = vadd.f32 0.0, %v2657
    %v2659 = vpop.f32.mrf.mxu0
    %2660 = vmatprep.mubr.f32.mxu0 0.0
    %2661 = vmatmul.mubr.f32.gmra.mxu0 %v2543
    %v2662 = vpop.f32.mrf.mxu0
    %v2663 = vadd.f32 0.0, %v2662
    %v2664 = vpop.f32.mrf.mxu0
    %2665 = vmatprep.mubr.f32.mxu0 0.0
    %2666 = vmatmul.mubr.f32.gmra.mxu0 %v2546
    %v2667 = vpop.f32.mrf.mxu0
    %v2668 = vadd.f32 0.0, %v2667
    %v2669 = vpop.f32.mrf.mxu0
    %2670 = vmatprep.mubr.f32.mxu0 0.0
    %2671 = vmatmul.mubr.f32.gmra.mxu0 %v2549
    %v2672 = vpop.f32.mrf.mxu0
    %v2673 = vadd.f32 0.0, %v2672
    %v2674 = vpop.f32.mrf.mxu0
    %2675 = vmatprep.mubr.f32.mxu0 0.0
    %2676 = vmatmul.mubr.f32.gmra.mxu0 %v2552
    %v2677 = vpop.f32.mrf.mxu0
    %v2678 = vadd.f32 0.0, %v2677
    %v2679 = vpop.f32.mrf.mxu0
    %2680 = vmatprep.mubr.f32.mxu0 0.0
    %2681 = vmatmul.mubr.f32.gmra.mxu0 %v2555
    %v2682 = vpop.f32.mrf.mxu0
    %v2683 = vadd.f32 0.0, %v2682
    %v2684 = vpop.f32.mrf.mxu0
    %2685 = vmatprep.mubr.f32.mxu0 0.0
    %2686 = vmatmul.mubr.f32.gmra.mxu0 %v2558
    %v2687 = vpop.f32.mrf.mxu0
    %v2688 = vadd.f32 0.0, %v2687
    %v2689 = vpop.f32.mrf.mxu0
    %2690 = vmatprep.mubr.f32.mxu0 0.0
    %2691 = vmatmul.mubr.f32.gmra.mxu0 %v2561
    %v2692 = vpop.f32.mrf.mxu0
    %v2693 = vadd.f32 0.0, %v2692
    %v2694 = vpop.f32.mrf.mxu0
    %2695 = vmatprep.mubr.f32.mxu0 0.0
    %2696 = vmatmul.mubr.f32.gmra.mxu0 %v2564
    %v2697 = vpop.f32.mrf.mxu0
    %v2698 = vadd.f32 0.0, %v2697
    %v2699 = vpop.f32.mrf.mxu0
    %2700 = vmatprep.mubr.f32.mxu0 0.0
    %2701 = vmatmul.mubr.f32.gmra.mxu0 %v2567
    %v2702 = vpop.f32.mrf.mxu0
    %v2703 = vadd.f32 0.0, %v2702
    %v2704 = vpop.f32.mrf.mxu0
    %2705 = vmatprep.mubr.f32.mxu0 0.0
    %2706 = vmatmul.mubr.f32.gmra.mxu0 %v2570
    %v2707 = vpop.f32.mrf.mxu0
    %v2708 = vadd.f32 0.0, %v2707
    %v2709 = vpop.f32.mrf.mxu0
    %2710 = vmatprep.mubr.f32.mxu0 0.0
    %2711 = vmatmul.mubr.f32.gmra.mxu0 %v2573
    %v2712 = vpop.f32.mrf.mxu0
    %v2713 = vadd.f32 0.0, %v2712
    %v2714 = vpop.f32.mrf.mxu0
    %2715 = vmatprep.mubr.f32.mxu0 0.0
    %2716 = vmatmul.mubr.f32.gmra.mxu0 %v2576
    %v2717 = vpop.f32.mrf.mxu0
    %v2718 = vadd.f32 0.0, %v2717
    %v2719 = vpop.f32.mrf.mxu0
    %2720 = vmatprep.mubr.f32.mxu0 0.0
    %2721 = vmatmul.mubr.f32.gmra.mxu0 %v2579
    %v2722 = vpop.f32.mrf.mxu0
    %v2723 = vadd.f32 0.0, %v2722
    %v2724 = vpop.f32.mrf.mxu0
    %2725 = vdwg.mxu0
    %v2726 = vadd.f32 %v2408, %v2648
    %v2727 = vadd.f32 %v2409, %v2653
    %v2728 = vadd.f32 %v2410, %v2658
    %v2729 = vadd.f32 %v2411, %v2663
    %v2730 = vadd.f32 %v2412, %v2668
    %v2731 = vadd.f32 %v2413, %v2673
    %v2732 = vadd.f32 %v2414, %v2678
    %v2733 = vadd.f32 %v2415, %v2683
    %v2734 = vadd.f32 %v2416, %v2688
    %v2735 = vadd.f32 %v2417, %v2693
    %v2736 = vadd.f32 %v2418, %v2698
    %v2737 = vadd.f32 %v2419, %v2703
    %v2738 = vadd.f32 %v2420, %v2708
    %v2739 = vadd.f32 %v2421, %v2713
    %v2740 = vadd.f32 %v2422, %v2718
    %v2741 = vadd.f32 %v2423, %v2723
    %2758 = vrot.lane.b32.xlu0 %v2726, 120
    %v2759 = vpop.permute.xlu0 %2758
    %2760 = vrot.lane.b32.xlu0 %v2727, 120
    %v2761 = vpop.permute.xlu0 %2760
    %2762 = vrot.lane.b32.xlu0 %v2728, 120
    %v2763 = vpop.permute.xlu0 %2762
    %2764 = vrot.lane.b32.xlu0 %v2729, 120
    %v2765 = vpop.permute.xlu0 %2764
    %2766 = vrot.lane.b32.xlu0 %v2730, 120
    %v2767 = vpop.permute.xlu0 %2766
    %2768 = vrot.lane.b32.xlu0 %v2731, 120
    %v2769 = vpop.permute.xlu0 %2768
    %2770 = vrot.lane.b32.xlu0 %v2732, 120
    %v2771 = vpop.permute.xlu0 %2770
    %2772 = vrot.lane.b32.xlu0 %v2733, 120
    %v2773 = vpop.permute.xlu0 %2772
    %2774 = vrot.lane.b32.xlu0 %v2734, 120
    %v2775 = vpop.permute.xlu0 %2774
    %2776 = vrot.lane.b32.xlu0 %v2735, 120
    %v2777 = vpop.permute.xlu0 %2776
    %2778 = vrot.lane.b32.xlu0 %v2736, 120
    %v2779 = vpop.permute.xlu0 %2778
    %2780 = vrot.lane.b32.xlu0 %v2737, 120
    %v2781 = vpop.permute.xlu0 %2780
    %2782 = vrot.lane.b32.xlu0 %v2738, 120
    %v2783 = vpop.permute.xlu0 %2782
    %2784 = vrot.lane.b32.xlu0 %v2739, 120
    %v2785 = vpop.permute.xlu0 %2784
    %2786 = vrot.lane.b32.xlu0 %v2740, 120
    %v2787 = vpop.permute.xlu0 %2786
    %2788 = vrot.lane.b32.xlu0 %v2741, 120
    %v2789 = vpop.permute.xlu0 %2788
    %vm2790 = vcmask 64512
    %v2791 = vsel %vm2790, %v2726, 0
    %v2793 = vsel %vm2790, %v2727, 0
    %v2795 = vsel %vm2790, %v2728, 0
    %v2797 = vsel %vm2790, %v2729, 0
    %v2799 = vsel %vm2790, %v2730, 0
    %v2801 = vsel %vm2790, %v2731, 0
    %v2803 = vsel %vm2790, %v2732, 0
    %v2805 = vsel %vm2790, %v2733, 0
    %v2807 = vsel %vm2790, %v2734, 0
    %v2809 = vsel %vm2790, %v2735, 0
    %v2811 = vsel %vm2790, %v2736, 0
    %v2813 = vsel %vm2790, %v2737, 0
    %v2815 = vsel %vm2790, %v2738, 0
    %v2817 = vsel %vm2790, %v2739, 0
    %v2819 = vsel %vm2790, %v2740, 0
    %v2821 = vsel %vm2790, %v2741, 0
    %v2823 = vsel %vm2790, %v2759, 0
    %v2825 = vsel %vm2790, %v2761, 0
    %v2827 = vsel %vm2790, %v2763, 0
    %v2829 = vsel %vm2790, %v2765, 0
    %v2831 = vsel %vm2790, %v2767, 0
    %v2833 = vsel %vm2790, %v2769, 0
    %v2835 = vsel %vm2790, %v2771, 0
    %v2837 = vsel %vm2790, %v2773, 0
    %v2839 = vsel %vm2790, %v2775, 0
    %v2841 = vsel %vm2790, %v2777, 0
    %v2843 = vsel %vm2790, %v2779, 0
    %v2845 = vsel %vm2790, %v2781, 0
    %v2847 = vsel %vm2790, %v2783, 0
    %v2849 = vsel %vm2790, %v2785, 0
    %v2851 = vsel %vm2790, %v2787, 0
    %v2853 = vsel %vm2790, %v2789, 0
    %2855 = vmatprep.subr.mxu0 0.0
    %2856 = vmatpush1.xpose.msra.mxu0 %v2853
    %2857 = vmatprep.subr.mxu0 0.0
    %2858 = vmatpush1.xpose.msra.mxu0 %v2851
    %2859 = vmatprep.subr.mxu0 0.0
    %2860 = vmatpush1.xpose.msra.mxu0 %v2849
    %2861 = vmatprep.subr.mxu0 0.0
    %2862 = vmatpush1.xpose.msra.mxu0 %v2847
    %2863 = vmatprep.subr.mxu0 0.0
    %2864 = vmatpush1.xpose.msra.mxu0 %v2845
    %2865 = vmatprep.subr.mxu0 0.0
    %2866 = vmatpush1.xpose.msra.mxu0 %v2843
    %2867 = vmatprep.subr.mxu0 0.0
    %2868 = vmatpush1.xpose.msra.mxu0 %v2841
    %2869 = vmatprep.subr.mxu0 0.0
    %2870 = vmatpush1.xpose.msra.mxu0 %v2839
    %2871 = vmatprep.subr.mxu0 0.0
    %2872 = vmatpush1.xpose.msra.mxu0 %v2837
    %2873 = vmatprep.subr.mxu0 0.0
    %2874 = vmatpush1.xpose.msra.mxu0 %v2835
    %2875 = vmatprep.subr.mxu0 0.0
    %2876 = vmatpush1.xpose.msra.mxu0 %v2833
    %2877 = vmatprep.subr.mxu0 0.0
    %2878 = vmatpush1.xpose.msra.mxu0 %v2831
    %2879 = vmatprep.subr.mxu0 0.0
    %2880 = vmatpush1.xpose.msra.mxu0 %v2829
    %2881 = vmatprep.subr.mxu0 0.0
    %2882 = vmatpush1.xpose.msra.mxu0 %v2827
    %2883 = vmatprep.subr.mxu0 0.0
    %2884 = vmatpush1.xpose.msra.mxu0 %v2825
    %2885 = vmatprep.subr.mxu0 0.0
    %2886 = vmatpush1.xpose.msra.mxu0 %v2823
    %2887 = vmatprep.subr.mxu0 0.0
    %2888 = vmatpush2.xpose.msra.mxu0 0.0
    %2889 = vmatprep.subr.mxu0 0.0
    %2890 = vmatpush2.xpose.msra.mxu0 0.0
    %2891 = vmatprep.subr.mxu0 0.0
    %2892 = vmatpush2.xpose.msra.mxu0 0.0
    %2893 = vmatprep.subr.mxu0 0.0
    %2894 = vmatpush2.xpose.msra.mxu0 0.0
    %2895 = vmatprep.subr.mxu0 0.0
    %2896 = vmatpush2.xpose.msra.mxu0 0.0
    %2897 = vmatprep.subr.mxu0 0.0
    %2898 = vmatpush2.xpose.msra.mxu0 0.0
    %2899 = vmatprep.subr.mxu0 0.0
    %2900 = vmatpush2.xpose.msra.mxu0 0.0
    %2901 = vmatprep.subr.mxu0 0.0
    %2902 = vmatpush2.xpose.msra.mxu0 0.0
    %2903 = vmatprep.subr.mxu0 0.0
    %2904 = vmatpush2.xpose.msra.mxu0 0.0
    %2905 = vmatprep.subr.mxu0 0.0
    %2906 = vmatpush2.xpose.msra.mxu0 0.0
    %2907 = vmatprep.subr.mxu0 0.0
    %2908 = vmatpush2.xpose.msra.mxu0 0.0
    %2909 = vmatprep.subr.mxu0 0.0
    %2910 = vmatpush2.xpose.msra.mxu0 0.0
    %2911 = vmatprep.subr.mxu0 0.0
    %2912 = vmatpush2.xpose.msra.mxu0 0.0
    %2913 = vmatprep.subr.mxu0 0.0
    %2914 = vmatpush2.xpose.msra.mxu0 0.0
    %2915 = vmatprep.subr.mxu0 0.0
    %2916 = vmatpush2.xpose.msra.mxu0 0.0
    %2917 = vmatprep.subr.mxu0 0.0
    %2918 = vmatpush2.xpose.msra.mxu0 0.0
    %2919 = vmatprep.mubr.f32.mxu0 0.0
    %2920 = vmatmul.mubr.f32.gmra.mxu0 %v2791
    %v2921 = vpop.f32.mrf.mxu0
    %v2922 = vadd.f32 %v207, %v2921
    %v2923 = vpop.f32.mrf.mxu0
    %2924 = vmatprep.mubr.f32.mxu0 0.0
    %2925 = vmatmul.mubr.f32.gmra.mxu0 %v2793
    %v2926 = vpop.f32.mrf.mxu0
    %v2927 = vadd.f32 %v208, %v2926
    %v2928 = vpop.f32.mrf.mxu0
    %2929 = vmatprep.mubr.f32.mxu0 0.0
    %2930 = vmatmul.mubr.f32.gmra.mxu0 %v2795
    %v2931 = vpop.f32.mrf.mxu0
    %v2932 = vadd.f32 %v209, %v2931
    %v2933 = vpop.f32.mrf.mxu0
    %2934 = vmatprep.mubr.f32.mxu0 0.0
    %2935 = vmatmul.mubr.f32.gmra.mxu0 %v2797
    %v2936 = vpop.f32.mrf.mxu0
    %v2937 = vadd.f32 %v210, %v2936
    %v2938 = vpop.f32.mrf.mxu0
    %2939 = vmatprep.mubr.f32.mxu0 0.0
    %2940 = vmatmul.mubr.f32.gmra.mxu0 %v2799
    %v2941 = vpop.f32.mrf.mxu0
    %v2942 = vadd.f32 %v211, %v2941
    %v2943 = vpop.f32.mrf.mxu0
    %2944 = vmatprep.mubr.f32.mxu0 0.0
    %2945 = vmatmul.mubr.f32.gmra.mxu0 %v2801
    %v2946 = vpop.f32.mrf.mxu0
    %v2947 = vadd.f32 %v212, %v2946
    %v2948 = vpop.f32.mrf.mxu0
    %2949 = vmatprep.mubr.f32.mxu0 0.0
    %2950 = vmatmul.mubr.f32.gmra.mxu0 %v2803
    %v2951 = vpop.f32.mrf.mxu0
    %v2952 = vadd.f32 %v213, %v2951
    %v2953 = vpop.f32.mrf.mxu0
    %2954 = vmatprep.mubr.f32.mxu0 0.0
    %2955 = vmatmul.mubr.f32.gmra.mxu0 %v2805
    %v2956 = vpop.f32.mrf.mxu0
    %v2957 = vadd.f32 %v214, %v2956
    %v2958 = vpop.f32.mrf.mxu0
    %2959 = vmatprep.mubr.f32.mxu0 0.0
    %2960 = vmatmul.mubr.f32.gmra.mxu0 %v2807
    %v2961 = vpop.f32.mrf.mxu0
    %v2962 = vadd.f32 %v215, %v2961
    %v2963 = vpop.f32.mrf.mxu0
    %2964 = vmatprep.mubr.f32.mxu0 0.0
    %2965 = vmatmul.mubr.f32.gmra.mxu0 %v2809
    %v2966 = vpop.f32.mrf.mxu0
    %v2967 = vadd.f32 %v216, %v2966
    %v2968 = vpop.f32.mrf.mxu0
    %2969 = vmatprep.mubr.f32.mxu0 0.0
    %2970 = vmatmul.mubr.f32.gmra.mxu0 %v2811
    %v2971 = vpop.f32.mrf.mxu0
    %v2972 = vadd.f32 %v217, %v2971
    %v2973 = vpop.f32.mrf.mxu0
    %2974 = vmatprep.mubr.f32.mxu0 0.0
    %2975 = vmatmul.mubr.f32.gmra.mxu0 %v2813
    %v2976 = vpop.f32.mrf.mxu0
    %v2977 = vadd.f32 %v218, %v2976
    %v2978 = vpop.f32.mrf.mxu0
    %2979 = vmatprep.mubr.f32.mxu0 0.0
    %2980 = vmatmul.mubr.f32.gmra.mxu0 %v2815
    %v2981 = vpop.f32.mrf.mxu0
    %v2982 = vadd.f32 %v219, %v2981
    %v2983 = vpop.f32.mrf.mxu0
    %2984 = vmatprep.mubr.f32.mxu0 0.0
    %2985 = vmatmul.mubr.f32.gmra.mxu0 %v2817
    %v2986 = vpop.f32.mrf.mxu0
    %v2987 = vadd.f32 %v220, %v2986
    %v2988 = vpop.f32.mrf.mxu0
    %2989 = vmatprep.mubr.f32.mxu0 0.0
    %2990 = vmatmul.mubr.f32.gmra.mxu0 %v2819
    %v2991 = vpop.f32.mrf.mxu0
    %v2992 = vadd.f32 %v221, %v2991
    %v2993 = vpop.f32.mrf.mxu0
    %2994 = vmatprep.mubr.f32.mxu0 0.0
    %2995 = vmatmul.mubr.f32.gmra.mxu0 %v2821
    %v2996 = vpop.f32.mrf.mxu0
    %v2997 = vadd.f32 %v222, %v2996
    %v2998 = vpop.f32.mrf.mxu0
    %2999 = vdwg.mxu0
    %3000 = vmax.xlane.f32.xlu0 %v2922
    %v3001 = vpop.xlane.xlu0 %3000
    %3002 = vmax.xlane.f32.xlu0 %v2927
    %v3003 = vpop.xlane.xlu0 %3002
    %3004 = vmax.xlane.f32.xlu0 %v2932
    %v3005 = vpop.xlane.xlu0 %3004
    %3006 = vmax.xlane.f32.xlu0 %v2937
    %v3007 = vpop.xlane.xlu0 %3006
    %3008 = vmax.xlane.f32.xlu0 %v2942
    %v3009 = vpop.xlane.xlu0 %3008
    %3010 = vmax.xlane.f32.xlu0 %v2947
    %v3011 = vpop.xlane.xlu0 %3010
    %3012 = vmax.xlane.f32.xlu0 %v2952
    %v3013 = vpop.xlane.xlu0 %3012
    %3014 = vmax.xlane.f32.xlu0 %v2957
    %v3015 = vpop.xlane.xlu0 %3014
    %3016 = vmax.xlane.f32.xlu0 %v2962
    %v3017 = vpop.xlane.xlu0 %3016
    %3018 = vmax.xlane.f32.xlu0 %v2967
    %v3019 = vpop.xlane.xlu0 %3018
    %3020 = vmax.xlane.f32.xlu0 %v2972
    %v3021 = vpop.xlane.xlu0 %3020
    %3022 = vmax.xlane.f32.xlu0 %v2977
    %v3023 = vpop.xlane.xlu0 %3022
    %3024 = vmax.xlane.f32.xlu0 %v2982
    %v3025 = vpop.xlane.xlu0 %3024
    %3026 = vmax.xlane.f32.xlu0 %v2987
    %v3027 = vpop.xlane.xlu0 %3026
    %3028 = vmax.xlane.f32.xlu0 %v2992
    %v3029 = vpop.xlane.xlu0 %3028
    %3030 = vmax.xlane.f32.xlu0 %v2997
    %v3031 = vpop.xlane.xlu0 %3030
    %v3032 = vsub.f32 %v2922, %v3001
    %v3033 = vsub.f32 %v2927, %v3003
    %v3034 = vsub.f32 %v2932, %v3005
    %v3035 = vsub.f32 %v2937, %v3007
    %v3036 = vsub.f32 %v2942, %v3009
    %v3037 = vsub.f32 %v2947, %v3011
    %v3038 = vsub.f32 %v2952, %v3013
    %v3039 = vsub.f32 %v2957, %v3015
    %v3040 = vsub.f32 %v2962, %v3017
    %v3041 = vsub.f32 %v2967, %v3019
    %v3042 = vsub.f32 %v2972, %v3021
    %v3043 = vsub.f32 %v2977, %v3023
    %v3044 = vsub.f32 %v2982, %v3025
    %v3045 = vsub.f32 %v2987, %v3027
    %v3046 = vsub.f32 %v2992, %v3029
    %v3047 = vsub.f32 %v2997, %v3031
    %v3048 = vmul.f32 %v3032, 1.442695
    %v3049 = vpow.pop %v3048
    %v3050 = vmul.f32 %v3033, 1.442695
    %v3051 = vpow.pop %v3050
    %v3052 = vmul.f32 %v3034, 1.442695
    %v3053 = vpow.pop %v3052
    %v3054 = vmul.f32 %v3035, 1.442695
    %v3055 = vpow.pop %v3054
    %v3056 = vmul.f32 %v3036, 1.442695
    %v3057 = vpow.pop %v3056
    %v3058 = vmul.f32 %v3037, 1.442695
    %v3059 = vpow.pop %v3058
    %v3060 = vmul.f32 %v3038, 1.442695
    %v3061 = vpow.pop %v3060
    %v3062 = vmul.f32 %v3039, 1.442695
    %v3063 = vpow.pop %v3062
    %v3064 = vmul.f32 %v3040, 1.442695
    %v3065 = vpow.pop %v3064
    %v3066 = vmul.f32 %v3041, 1.442695
    %v3067 = vpow.pop %v3066
    %v3068 = vmul.f32 %v3042, 1.442695
    %v3069 = vpow.pop %v3068
    %v3070 = vmul.f32 %v3043, 1.442695
    %v3071 = vpow.pop %v3070
    %v3072 = vmul.f32 %v3044, 1.442695
    %v3073 = vpow.pop %v3072
    %v3074 = vmul.f32 %v3045, 1.442695
    %v3075 = vpow.pop %v3074
    %v3076 = vmul.f32 %v3046, 1.442695
    %v3077 = vpow.pop %v3076
    %v3078 = vmul.f32 %v3047, 1.442695
    %v3079 = vpow.pop %v3078
    %3080 = vadd.xlane.f32.xlu0 %v3049
    %v3081 = vpop.xlane.xlu0 %3080
    %3082 = vadd.xlane.f32.xlu0 %v3051
    %v3083 = vpop.xlane.xlu0 %3082
    %3084 = vadd.xlane.f32.xlu0 %v3053
    %v3085 = vpop.xlane.xlu0 %3084
    %3086 = vadd.xlane.f32.xlu0 %v3055
    %v3087 = vpop.xlane.xlu0 %3086
    %3088 = vadd.xlane.f32.xlu0 %v3057
    %v3089 = vpop.xlane.xlu0 %3088
    %3090 = vadd.xlane.f32.xlu0 %v3059
    %v3091 = vpop.xlane.xlu0 %3090
    %3092 = vadd.xlane.f32.xlu0 %v3061
    %v3093 = vpop.xlane.xlu0 %3092
    %3094 = vadd.xlane.f32.xlu0 %v3063
    %v3095 = vpop.xlane.xlu0 %3094
    %3096 = vadd.xlane.f32.xlu0 %v3065
    %v3097 = vpop.xlane.xlu0 %3096
    %3098 = vadd.xlane.f32.xlu0 %v3067
    %v3099 = vpop.xlane.xlu0 %3098
    %3100 = vadd.xlane.f32.xlu0 %v3069
    %v3101 = vpop.xlane.xlu0 %3100
    %3102 = vadd.xlane.f32.xlu0 %v3071
    %v3103 = vpop.xlane.xlu0 %3102
    %3104 = vadd.xlane.f32.xlu0 %v3073
    %v3105 = vpop.xlane.xlu0 %3104
    %3106 = vadd.xlane.f32.xlu0 %v3075
    %v3107 = vpop.xlane.xlu0 %3106
    %3108 = vadd.xlane.f32.xlu0 %v3077
    %v3109 = vpop.xlane.xlu0 %3108
    %3110 = vadd.xlane.f32.xlu0 %v3079
    %v3111 = vpop.xlane.xlu0 %3110
    %v3112 = vrcp.pop %v3081
    %v3113 = vrcp.pop %v3083
    %v3114 = vrcp.pop %v3085
    %v3115 = vrcp.pop %v3087
    %v3116 = vrcp.pop %v3089
    %v3117 = vrcp.pop %v3091
    %v3118 = vrcp.pop %v3093
    %v3119 = vrcp.pop %v3095
    %v3120 = vrcp.pop %v3097
    %v3121 = vrcp.pop %v3099
    %v3122 = vrcp.pop %v3101
    %v3123 = vrcp.pop %v3103
    %v3124 = vrcp.pop %v3105
    %v3125 = vrcp.pop %v3107
    %v3126 = vrcp.pop %v3109
    %v3127 = vrcp.pop %v3111
    %v3128 = vmul.f32 %v3049, %v3112
    %v3129 = vmul.f32 %v3051, %v3113
    %v3130 = vmul.f32 %v3053, %v3114
    %v3131 = vmul.f32 %v3055, %v3115
    %v3132 = vmul.f32 %v3057, %v3116
    %v3133 = vmul.f32 %v3059, %v3117
    %v3134 = vmul.f32 %v3061, %v3118
    %v3135 = vmul.f32 %v3063, %v3119
    %v3136 = vmul.f32 %v3065, %v3120
    %v3137 = vmul.f32 %v3067, %v3121
    %v3138 = vmul.f32 %v3069, %v3122
    %v3139 = vmul.f32 %v3071, %v3123
    %v3140 = vmul.f32 %v3073, %v3124
    %v3141 = vmul.f32 %v3075, %v3125
    %v3142 = vmul.f32 %v3077, %v3126
    %v3143 = vmul.f32 %v3079, %v3127
    %3144 = vrot.lane.b32.xlu0 %v2726, 112
    %v3145 = vpop.permute.xlu0 %3144
    %3146 = vrot.lane.b32.xlu0 %v2727, 112
    %v3147 = vpop.permute.xlu0 %3146
    %3148 = vrot.lane.b32.xlu0 %v2728, 112
    %v3149 = vpop.permute.xlu0 %3148
    %3150 = vrot.lane.b32.xlu0 %v2729, 112
    %v3151 = vpop.permute.xlu0 %3150
    %3152 = vrot.lane.b32.xlu0 %v2730, 112
    %v3153 = vpop.permute.xlu0 %3152
    %3154 = vrot.lane.b32.xlu0 %v2731, 112
    %v3155 = vpop.permute.xlu0 %3154
    %3156 = vrot.lane.b32.xlu0 %v2732, 112
    %v3157 = vpop.permute.xlu0 %3156
    %3158 = vrot.lane.b32.xlu0 %v2733, 112
    %v3159 = vpop.permute.xlu0 %3158
    %3160 = vrot.lane.b32.xlu0 %v2734, 112
    %v3161 = vpop.permute.xlu0 %3160
    %3162 = vrot.lane.b32.xlu0 %v2735, 112
    %v3163 = vpop.permute.xlu0 %3162
    %3164 = vrot.lane.b32.xlu0 %v2736, 112
    %v3165 = vpop.permute.xlu0 %3164
    %3166 = vrot.lane.b32.xlu0 %v2737, 112
    %v3167 = vpop.permute.xlu0 %3166
    %3168 = vrot.lane.b32.xlu0 %v2738, 112
    %v3169 = vpop.permute.xlu0 %3168
    %3170 = vrot.lane.b32.xlu0 %v2739, 112
    %v3171 = vpop.permute.xlu0 %3170
    %3172 = vrot.lane.b32.xlu0 %v2740, 112
    %v3173 = vpop.permute.xlu0 %3172
    %3174 = vrot.lane.b32.xlu0 %v2741, 112
    %v3175 = vpop.permute.xlu0 %3174
    %3192 = vmatprep.subr.mxu0 0.0
    %3193 = vmatpush1.msra.mxu0 %v3175
    %3194 = vmatprep.subr.mxu0 0.0
    %3195 = vmatpush1.msra.mxu0 %v3173
    %3196 = vmatprep.subr.mxu0 0.0
    %3197 = vmatpush1.msra.mxu0 %v3171
    %3198 = vmatprep.subr.mxu0 0.0
    %3199 = vmatpush1.msra.mxu0 %v3169
    %3200 = vmatprep.subr.mxu0 0.0
    %3201 = vmatpush1.msra.mxu0 %v3167
    %3202 = vmatprep.subr.mxu0 0.0
    %3203 = vmatpush1.msra.mxu0 %v3165
    %3204 = vmatprep.subr.mxu0 0.0
    %3205 = vmatpush1.msra.mxu0 %v3163
    %3206 = vmatprep.subr.mxu0 0.0
    %3207 = vmatpush1.msra.mxu0 %v3161
    %3208 = vmatprep.subr.mxu0 0.0
    %3209 = vmatpush1.msra.mxu0 %v3159
    %3210 = vmatprep.subr.mxu0 0.0
    %3211 = vmatpush1.msra.mxu0 %v3157
    %3212 = vmatprep.subr.mxu0 0.0
    %3213 = vmatpush1.msra.mxu0 %v3155
    %3214 = vmatprep.subr.mxu0 0.0
    %3215 = vmatpush1.msra.mxu0 %v3153
    %3216 = vmatprep.subr.mxu0 0.0
    %3217 = vmatpush1.msra.mxu0 %v3151
    %3218 = vmatprep.subr.mxu0 0.0
    %3219 = vmatpush1.msra.mxu0 %v3149
    %3220 = vmatprep.subr.mxu0 0.0
    %3221 = vmatpush1.msra.mxu0 %v3147
    %3222 = vmatprep.subr.mxu0 0.0
    %3223 = vmatpush1.msra.mxu0 %v3145
    %3224 = vmatprep.subr.mxu0 0.0
    %3225 = vmatpush2.msra.mxu0 0.0
    %3226 = vmatprep.subr.mxu0 0.0
    %3227 = vmatpush2.msra.mxu0 0.0
    %3228 = vmatprep.subr.mxu0 0.0
    %3229 = vmatpush2.msra.mxu0 0.0
    %3230 = vmatprep.subr.mxu0 0.0
    %3231 = vmatpush2.msra.mxu0 0.0
    %3232 = vmatprep.subr.mxu0 0.0
    %3233 = vmatpush2.msra.mxu0 0.0
    %3234 = vmatprep.subr.mxu0 0.0
    %3235 = vmatpush2.msra.mxu0 0.0
    %3236 = vmatprep.subr.mxu0 0.0
    %3237 = vmatpush2.msra.mxu0 0.0
    %3238 = vmatprep.subr.mxu0 0.0
    %3239 = vmatpush2.msra.mxu0 0.0
    %3240 = vmatprep.subr.mxu0 0.0
    %3241 = vmatpush2.msra.mxu0 0.0
    %3242 = vmatprep.subr.mxu0 0.0
    %3243 = vmatpush2.msra.mxu0 0.0
    %3244 = vmatprep.subr.mxu0 0.0
    %3245 = vmatpush2.msra.mxu0 0.0
    %3246 = vmatprep.subr.mxu0 0.0
    %3247 = vmatpush2.msra.mxu0 0.0
    %3248 = vmatprep.subr.mxu0 0.0
    %3249 = vmatpush2.msra.mxu0 0.0
    %3250 = vmatprep.subr.mxu0 0.0
    %3251 = vmatpush2.msra.mxu0 0.0
    %3252 = vmatprep.subr.mxu0 0.0
    %3253 = vmatpush2.msra.mxu0 0.0
    %3254 = vmatprep.subr.mxu0 0.0
    %3255 = vmatpush2.msra.mxu0 0.0
    %3256 = vmatprep.mubr.f32.mxu0 0.0
    %3257 = vmatmul.mubr.f32.gmra.mxu0 %v3128
    %v3258 = vpop.f32.mrf.mxu0
    %v3259 = vadd.f32 0.0, %v3258
    %v3260 = vpop.f32.mrf.mxu0
    %3261 = vmatprep.mubr.f32.mxu0 0.0
    %3262 = vmatmul.mubr.f32.gmra.mxu0 %v3129
    %v3263 = vpop.f32.mrf.mxu0
    %v3264 = vadd.f32 0.0, %v3263
    %v3265 = vpop.f32.mrf.mxu0
    %3266 = vmatprep.mubr.f32.mxu0 0.0
    %3267 = vmatmul.mubr.f32.gmra.mxu0 %v3130
    %v3268 = vpop.f32.mrf.mxu0
    %v3269 = vadd.f32 0.0, %v3268
    %v3270 = vpop.f32.mrf.mxu0
    %3271 = vmatprep.mubr.f32.mxu0 0.0
    %3272 = vmatmul.mubr.f32.gmra.mxu0 %v3131
    %v3273 = vpop.f32.mrf.mxu0
    %v3274 = vadd.f32 0.0, %v3273
    %v3275 = vpop.f32.mrf.mxu0
    %3276 = vmatprep.mubr.f32.mxu0 0.0
    %3277 = vmatmul.mubr.f32.gmra.mxu0 %v3132
    %v3278 = vpop.f32.mrf.mxu0
    %v3279 = vadd.f32 0.0, %v3278
    %v3280 = vpop.f32.mrf.mxu0
    %3281 = vmatprep.mubr.f32.mxu0 0.0
    %3282 = vmatmul.mubr.f32.gmra.mxu0 %v3133
    %v3283 = vpop.f32.mrf.mxu0
    %v3284 = vadd.f32 0.0, %v3283
    %v3285 = vpop.f32.mrf.mxu0
    %3286 = vmatprep.mubr.f32.mxu0 0.0
    %3287 = vmatmul.mubr.f32.gmra.mxu0 %v3134
    %v3288 = vpop.f32.mrf.mxu0
    %v3289 = vadd.f32 0.0, %v3288
    %v3290 = vpop.f32.mrf.mxu0
    %3291 = vmatprep.mubr.f32.mxu0 0.0
    %3292 = vmatmul.mubr.f32.gmra.mxu0 %v3135
    %v3293 = vpop.f32.mrf.mxu0
    %v3294 = vadd.f32 0.0, %v3293
    %v3295 = vpop.f32.mrf.mxu0
    %3296 = vmatprep.mubr.f32.mxu0 0.0
    %3297 = vmatmul.mubr.f32.gmra.mxu0 %v3136
    %v3298 = vpop.f32.mrf.mxu0
    %v3299 = vadd.f32 0.0, %v3298
    %v3300 = vpop.f32.mrf.mxu0
    %3301 = vmatprep.mubr.f32.mxu0 0.0
    %3302 = vmatmul.mubr.f32.gmra.mxu0 %v3137
    %v3303 = vpop.f32.mrf.mxu0
    %v3304 = vadd.f32 0.0, %v3303
    %v3305 = vpop.f32.mrf.mxu0
    %3306 = vmatprep.mubr.f32.mxu0 0.0
    %3307 = vmatmul.mubr.f32.gmra.mxu0 %v3138
    %v3308 = vpop.f32.mrf.mxu0
    %v3309 = vadd.f32 0.0, %v3308
    %v3310 = vpop.f32.mrf.mxu0
    %3311 = vmatprep.mubr.f32.mxu0 0.0
    %3312 = vmatmul.mubr.f32.gmra.mxu0 %v3139
    %v3313 = vpop.f32.mrf.mxu0
    %v3314 = vadd.f32 0.0, %v3313
    %v3315 = vpop.f32.mrf.mxu0
    %3316 = vmatprep.mubr.f32.mxu0 0.0
    %3317 = vmatmul.mubr.f32.gmra.mxu0 %v3140
    %v3318 = vpop.f32.mrf.mxu0
    %v3319 = vadd.f32 0.0, %v3318
    %v3320 = vpop.f32.mrf.mxu0
    %3321 = vmatprep.mubr.f32.mxu0 0.0
    %3322 = vmatmul.mubr.f32.gmra.mxu0 %v3141
    %v3323 = vpop.f32.mrf.mxu0
    %v3324 = vadd.f32 0.0, %v3323
    %v3325 = vpop.f32.mrf.mxu0
    %3326 = vmatprep.mubr.f32.mxu0 0.0
    %3327 = vmatmul.mubr.f32.gmra.mxu0 %v3142
    %v3328 = vpop.f32.mrf.mxu0
    %v3329 = vadd.f32 0.0, %v3328
    %v3330 = vpop.f32.mrf.mxu0
    %3331 = vmatprep.mubr.f32.mxu0 0.0
    %3332 = vmatmul.mubr.f32.gmra.mxu0 %v3143
    %v3333 = vpop.f32.mrf.mxu0
    %v3334 = vadd.f32 0.0, %v3333
    %v3335 = vpop.f32.mrf.mxu0
    %3336 = vdwg.mxu0
    %v3337 = vld [vmem:[%s9] sm:$0x1]
    %3338 = vxpose.xlu0.b32.start [1/16] %v322, 128
    %3339 = vxpose.xlu0.b32.cont [2/16] %v323, 128
    %3340 = vxpose.xlu0.b32.cont [3/16] %v324, 128
    %3341 = vxpose.xlu0.b32.cont [4/16] %v325, 128
    %3342 = vxpose.xlu0.b32.cont [5/16] %v326, 128
    %3343 = vxpose.xlu0.b32.cont [6/16] %v327, 128
    %3344 = vxpose.xlu0.b32.cont [7/16] %v328, 128
    %3345 = vxpose.xlu0.b32.cont [8/16] %v329, 128
    %3346 = vxpose.xlu0.b32.cont [9/16] %v330, 128
    %3347 = vxpose.xlu0.b32.cont [10/16] %v331, 128
    %3348 = vxpose.xlu0.b32.cont [11/16] %v332, 128
    %3349 = vxpose.xlu0.b32.cont [12/16] %v333, 128
    %3350 = vxpose.xlu0.b32.cont [13/16] %v334, 128
    %3351 = vxpose.xlu0.b32.cont [14/16] %v335, 128
    %3352 = vxpose.xlu0.b32.cont [15/16] %v336, 128
    %3353 = vxpose.xlu0.b32.end [16/16] %v337, 128
    %v3354 = vpop.trf.xlu0
    %v3355 = vpop.trf.xlu0
    %v3356 = vpop.trf.xlu0
    %v3357 = vpop.trf.xlu0
    %v3358 = vpop.trf.xlu0
    %v3359 = vpop.trf.xlu0
    %v3360 = vpop.trf.xlu0
    %v3361 = vpop.trf.xlu0
    %v3362 = vpop.trf.xlu0
    %v3363 = vpop.trf.xlu0
    %v3364 = vpop.trf.xlu0
    %v3365 = vpop.trf.xlu0
    %v3366 = vpop.trf.xlu0
    %v3367 = vpop.trf.xlu0
    %v3368 = vpop.trf.xlu0
    %v3369 = vpop.trf.xlu0
    %3370 = vmatprep.subr.mxu0 0.0
    %3371 = vmatpush1.msra.mxu0 %v3334
    %3372 = vmatprep.subr.mxu0 0.0
    %3373 = vmatpush1.msra.mxu0 %v3329
    %3374 = vmatprep.subr.mxu0 0.0
    %3375 = vmatpush1.msra.mxu0 %v3324
    %3376 = vmatprep.subr.mxu0 0.0
    %3377 = vmatpush1.msra.mxu0 %v3319
    %3378 = vmatprep.subr.mxu0 0.0
    %3379 = vmatpush1.msra.mxu0 %v3314
    %3380 = vmatprep.subr.mxu0 0.0
    %3381 = vmatpush1.msra.mxu0 %v3309
    %3382 = vmatprep.subr.mxu0 0.0
    %3383 = vmatpush1.msra.mxu0 %v3304
    %3384 = vmatprep.subr.mxu0 0.0
    %3385 = vmatpush1.msra.mxu0 %v3299
    %3386 = vmatprep.subr.mxu0 0.0
    %3387 = vmatpush1.msra.mxu0 %v3294
    %3388 = vmatprep.subr.mxu0 0.0
    %3389 = vmatpush1.msra.mxu0 %v3289
    %3390 = vmatprep.subr.mxu0 0.0
    %3391 = vmatpush1.msra.mxu0 %v3284
    %3392 = vmatprep.subr.mxu0 0.0
    %3393 = vmatpush1.msra.mxu0 %v3279
    %3394 = vmatprep.subr.mxu0 0.0
    %3395 = vmatpush1.msra.mxu0 %v3274
    %3396 = vmatprep.subr.mxu0 0.0
    %3397 = vmatpush1.msra.mxu0 %v3269
    %3398 = vmatprep.subr.mxu0 0.0
    %3399 = vmatpush1.msra.mxu0 %v3264
    %3400 = vmatprep.subr.mxu0 0.0
    %3401 = vmatpush1.msra.mxu0 %v3259
    %3402 = vmatprep.subr.mxu0 0.0
    %3403 = vmatpush2.msra.mxu0 0.0
    %3404 = vmatprep.subr.mxu0 0.0
    %3405 = vmatpush2.msra.mxu0 0.0
    %3406 = vmatprep.subr.mxu0 0.0
    %3407 = vmatpush2.msra.mxu0 0.0
    %3408 = vmatprep.subr.mxu0 0.0
    %3409 = vmatpush2.msra.mxu0 0.0
    %3410 = vmatprep.subr.mxu0 0.0
    %3411 = vmatpush2.msra.mxu0 0.0
    %3412 = vmatprep.subr.mxu0 0.0
    %3413 = vmatpush2.msra.mxu0 0.0
    %3414 = vmatprep.subr.mxu0 0.0
    %3415 = vmatpush2.msra.mxu0 0.0
    %3416 = vmatprep.subr.mxu0 0.0
    %3417 = vmatpush2.msra.mxu0 0.0
    %3418 = vmatprep.subr.mxu0 0.0
    %3419 = vmatpush2.msra.mxu0 0.0
    %3420 = vmatprep.subr.mxu0 0.0
    %3421 = vmatpush2.msra.mxu0 0.0
    %3422 = vmatprep.subr.mxu0 0.0
    %3423 = vmatpush2.msra.mxu0 0.0
    %3424 = vmatprep.subr.mxu0 0.0
    %3425 = vmatpush2.msra.mxu0 0.0
    %3426 = vmatprep.subr.mxu0 0.0
    %3427 = vmatpush2.msra.mxu0 0.0
    %3428 = vmatprep.subr.mxu0 0.0
    %3429 = vmatpush2.msra.mxu0 0.0
    %3430 = vmatprep.subr.mxu0 0.0
    %3431 = vmatpush2.msra.mxu0 0.0
    %3432 = vmatprep.subr.mxu0 0.0
    %3433 = vmatpush2.msra.mxu0 0.0
    %3434 = vmatprep.mubr.f32.mxu0 0.0
    %3435 = vmatmul.mubr.f32.gmra.mxu0 %v3354
    %v3436 = vpop.f32.mrf.mxu0
    %v3437 = vadd.f32 0.0, %v3436
    %v3438 = vpop.f32.mrf.mxu0
    %3439 = vmatprep.mubr.f32.mxu0 0.0
    %3440 = vmatmul.mubr.f32.gmra.mxu0 %v3355
    %v3441 = vpop.f32.mrf.mxu0
    %v3442 = vadd.f32 0.0, %v3441
    %v3443 = vpop.f32.mrf.mxu0
    %3444 = vdwg.mxu0
    %v3445 = vld [vmem:[%s8] sm:$0xff]
    %v3447 = vsel %vm2790, %v3437, 0
    %v3450 = vsel %vm2790, %v3442, 0
    %3452 = vmatprep.subr.mxu0 0.0
    %3453 = vmatpush1.msra.mxu0 0.0
    %3454 = vmatprep.subr.mxu0 0.0
    %3455 = vmatpush1.msra.mxu0 0.0
    %3456 = vmatprep.subr.mxu0 0.0
    %3457 = vmatpush1.msra.mxu0 0.0
    %3458 = vmatprep.subr.mxu0 0.0
    %3459 = vmatpush1.msra.mxu0 0.0
    %3460 = vmatprep.subr.mxu0 0.0
    %3461 = vmatpush1.msra.mxu0 0.0
    %3462 = vmatprep.subr.mxu0 0.0
    %3463 = vmatpush1.msra.mxu0 0.0
    %3464 = vmatprep.subr.mxu0 0.0
    %3465 = vmatpush1.msra.mxu0 0.0
    %3466 = vmatprep.subr.mxu0 0.0
    %3467 = vmatpush1.msra.mxu0 0.0
    %3468 = vmatprep.subr.mxu0 0.0
    %3469 = vmatpush1.msra.mxu0 0.0
    %3470 = vmatprep.subr.mxu0 0.0
    %3471 = vmatpush1.msra.mxu0 0.0
    %3472 = vmatprep.subr.mxu0 0.0
    %3473 = vmatpush1.msra.mxu0 0.0
    %3474 = vmatprep.subr.mxu0 0.0
    %3475 = vmatpush1.msra.mxu0 0.0
    %3476 = vmatprep.subr.mxu0 0.0
    %3477 = vmatpush1.msra.mxu0 0.0
    %3478 = vmatprep.subr.mxu0 0.0
    %3479 = vmatpush1.msra.mxu0 0.0
    %3480 = vmatprep.subr.mxu0 0.0
    %3481 = vmatpush1.msra.mxu0 0.0
    %3482 = vmatprep.subr.mxu0 0.0
    %3483 = vmatpush1.msra.mxu0 %v3445
    %3484 = vmatprep.subr.mxu0 0.0
    %3485 = vmatpush2.msra.mxu0 0.0
    %3486 = vmatprep.subr.mxu0 0.0
    %3487 = vmatpush2.msra.mxu0 0.0
    %3488 = vmatprep.subr.mxu0 0.0
    %3489 = vmatpush2.msra.mxu0 0.0
    %3490 = vmatprep.subr.mxu0 0.0
    %3491 = vmatpush2.msra.mxu0 0.0
    %3492 = vmatprep.subr.mxu0 0.0
    %3493 = vmatpush2.msra.mxu0 0.0
    %3494 = vmatprep.subr.mxu0 0.0
    %3495 = vmatpush2.msra.mxu0 0.0
    %3496 = vmatprep.subr.mxu0 0.0
    %3497 = vmatpush2.msra.mxu0 0.0
    %3498 = vmatprep.subr.mxu0 0.0
    %3499 = vmatpush2.msra.mxu0 0.0
    %3500 = vmatprep.subr.mxu0 0.0
    %3501 = vmatpush2.msra.mxu0 0.0
    %3502 = vmatprep.subr.mxu0 0.0
    %3503 = vmatpush2.msra.mxu0 0.0
    %3504 = vmatprep.subr.mxu0 0.0
    %3505 = vmatpush2.msra.mxu0 0.0
    %3506 = vmatprep.subr.mxu0 0.0
    %3507 = vmatpush2.msra.mxu0 0.0
    %3508 = vmatprep.subr.mxu0 0.0
    %3509 = vmatpush2.msra.mxu0 0.0
    %3510 = vmatprep.subr.mxu0 0.0
    %3511 = vmatpush2.msra.mxu0 0.0
    %3512 = vmatprep.subr.mxu0 0.0
    %3513 = vmatpush2.msra.mxu0 0.0
    %3514 = vmatprep.subr.mxu0 0.0
    %3515 = vmatpush2.msra.mxu0 0.0
    %3516 = vmatprep.mubr.f32.mxu0 0.0
    %3517 = vmatmul.mubr.f32.gmra.mxu0 %v3447
    %v3518 = vpop.f32.mrf.mxu0
    %v3519 = vadd.f32 0.0, %v3518
    %v3520 = vpop.f32.mrf.mxu0
    %3521 = vmatprep.mubr.f32.mxu0 0.0
    %3522 = vmatmul.mubr.f32.gmra.mxu0 %v3450
    %v3523 = vpop.f32.mrf.mxu0
    %v3524 = vadd.f32 0.0, %v3523
    %v3525 = vpop.f32.mrf.mxu0
    %3526 = vdwg.mxu0
    %v3528 = vlaneseq
    %v3529 = vshrl.u32 %v3528, 7
    %v3530 = vsub.s32 0, %v3529
    %v3531 = vrot.slane %v3337, %v3530
    %v3533 = vadd.f32 %v3531, %v3519
    %v3534 = vadd.f32 %v3531, %v3524
    %3535 = vxpose.xlu0.b32.start [1/16] %v431, 128
    %3536 = vxpose.xlu0.b32.cont [2/16] %v432, 128
    %3537 = vxpose.xlu0.b32.cont [3/16] %v433, 128
    %3538 = vxpose.xlu0.b32.cont [4/16] %v434, 128
    %3539 = vxpose.xlu0.b32.cont [5/16] %v435, 128
    %3540 = vxpose.xlu0.b32.cont [6/16] %v436, 128
    %3541 = vxpose.xlu0.b32.cont [7/16] %v437, 128
    %3542 = vxpose.xlu0.b32.cont [8/16] %v438, 128
    %3543 = vxpose.xlu0.b32.cont [9/16] %v439, 128
    %3544 = vxpose.xlu0.b32.cont [10/16] %v440, 128
    %3545 = vxpose.xlu0.b32.cont [11/16] %v441, 128
    %3546 = vxpose.xlu0.b32.cont [12/16] %v442, 128
    %3547 = vxpose.xlu0.b32.cont [13/16] %v443, 128
    %3548 = vxpose.xlu0.b32.cont [14/16] %v444, 128
    %3549 = vxpose.xlu0.b32.cont [15/16] %v445, 128
    %3550 = vxpose.xlu0.b32.end [16/16] %v446, 128
    %v3551 = vpop.trf.xlu0
    %v3552 = vpop.trf.xlu0
    %v3553 = vpop.trf.xlu0
    %v3554 = vpop.trf.xlu0
    %v3555 = vpop.trf.xlu0
    %v3556 = vpop.trf.xlu0
    %v3557 = vpop.trf.xlu0
    %v3558 = vpop.trf.xlu0
    %v3559 = vpop.trf.xlu0
    %v3560 = vpop.trf.xlu0
    %v3561 = vpop.trf.xlu0
    %v3562 = vpop.trf.xlu0
    %v3563 = vpop.trf.xlu0
    %v3564 = vpop.trf.xlu0
    %v3565 = vpop.trf.xlu0
    %v3566 = vpop.trf.xlu0
    %3567 = vmatprep.subr.mxu0 0.0
    %3568 = vmatpush1.msra.mxu0 %v3334
    %3569 = vmatprep.subr.mxu0 0.0
    %3570 = vmatpush1.msra.mxu0 %v3329
    %3571 = vmatprep.subr.mxu0 0.0
    %3572 = vmatpush1.msra.mxu0 %v3324
    %3573 = vmatprep.subr.mxu0 0.0
    %3574 = vmatpush1.msra.mxu0 %v3319
    %3575 = vmatprep.subr.mxu0 0.0
    %3576 = vmatpush1.msra.mxu0 %v3314
    %3577 = vmatprep.subr.mxu0 0.0
    %3578 = vmatpush1.msra.mxu0 %v3309
    %3579 = vmatprep.subr.mxu0 0.0
    %3580 = vmatpush1.msra.mxu0 %v3304
    %3581 = vmatprep.subr.mxu0 0.0
    %3582 = vmatpush1.msra.mxu0 %v3299
    %3583 = vmatprep.subr.mxu0 0.0
    %3584 = vmatpush1.msra.mxu0 %v3294
    %3585 = vmatprep.subr.mxu0 0.0
    %3586 = vmatpush1.msra.mxu0 %v3289
    %3587 = vmatprep.subr.mxu0 0.0
    %3588 = vmatpush1.msra.mxu0 %v3284
    %3589 = vmatprep.subr.mxu0 0.0
    %3590 = vmatpush1.msra.mxu0 %v3279
    %3591 = vmatprep.subr.mxu0 0.0
    %3592 = vmatpush1.msra.mxu0 %v3274
    %3593 = vmatprep.subr.mxu0 0.0
    %3594 = vmatpush1.msra.mxu0 %v3269
    %3595 = vmatprep.subr.mxu0 0.0
    %3596 = vmatpush1.msra.mxu0 %v3264
    %3597 = vmatprep.subr.mxu0 0.0
    %3598 = vmatpush1.msra.mxu0 %v3259
    %3599 = vmatprep.subr.mxu0 0.0
    %3600 = vmatpush2.msra.mxu0 0.0
    %3601 = vmatprep.subr.mxu0 0.0
    %3602 = vmatpush2.msra.mxu0 0.0
    %3603 = vmatprep.subr.mxu0 0.0
    %3604 = vmatpush2.msra.mxu0 0.0
    %3605 = vmatprep.subr.mxu0 0.0
    %3606 = vmatpush2.msra.mxu0 0.0
    %3607 = vmatprep.subr.mxu0 0.0
    %3608 = vmatpush2.msra.mxu0 0.0
    %3609 = vmatprep.subr.mxu0 0.0
    %3610 = vmatpush2.msra.mxu0 0.0
    %3611 = vmatprep.subr.mxu0 0.0
    %3612 = vmatpush2.msra.mxu0 0.0
    %3613 = vmatprep.subr.mxu0 0.0
    %3614 = vmatpush2.msra.mxu0 0.0
    %3615 = vmatprep.subr.mxu0 0.0
    %3616 = vmatpush2.msra.mxu0 0.0
    %3617 = vmatprep.subr.mxu0 0.0
    %3618 = vmatpush2.msra.mxu0 0.0
    %3619 = vmatprep.subr.mxu0 0.0
    %3620 = vmatpush2.msra.mxu0 0.0
    %3621 = vmatprep.subr.mxu0 0.0
    %3622 = vmatpush2.msra.mxu0 0.0
    %3623 = vmatprep.subr.mxu0 0.0
    %3624 = vmatpush2.msra.mxu0 0.0
    %3625 = vmatprep.subr.mxu0 0.0
    %3626 = vmatpush2.msra.mxu0 0.0
    %3627 = vmatprep.subr.mxu0 0.0
    %3628 = vmatpush2.msra.mxu0 0.0
    %3629 = vmatprep.subr.mxu0 0.0
    %3630 = vmatpush2.msra.mxu0 0.0
    %3631 = vmatprep.mubr.f32.mxu0 0.0
    %3632 = vmatmul.mubr.f32.gmra.mxu0 %v3551
    %v3633 = vpop.f32.mrf.mxu0
    %v3634 = vadd.f32 0.0, %v3633
    %v3635 = vpop.f32.mrf.mxu0
    %3636 = vmatprep.mubr.f32.mxu0 0.0
    %3637 = vmatmul.mubr.f32.gmra.mxu0 %v3552
    %v3638 = vpop.f32.mrf.mxu0
    %v3639 = vadd.f32 0.0, %v3638
    %v3640 = vpop.f32.mrf.mxu0
    %3641 = vdwg.mxu0
    %s3642 = scalar_lea.vmem %s8, 8
    %v3643 = vld [vmem:[%s3642] sm:$0xff]
    %v3645 = vsel %vm2790, %v3634, 0
    %v3648 = vsel %vm2790, %v3639, 0
    %3650 = vmatprep.subr.mxu0 0.0
    %3651 = vmatpush1.msra.mxu0 0.0
    %3652 = vmatprep.subr.mxu0 0.0
    %3653 = vmatpush1.msra.mxu0 0.0
    %3654 = vmatprep.subr.mxu0 0.0
    %3655 = vmatpush1.msra.mxu0 0.0
    %3656 = vmatprep.subr.mxu0 0.0
    %3657 = vmatpush1.msra.mxu0 0.0
    %3658 = vmatprep.subr.mxu0 0.0
    %3659 = vmatpush1.msra.mxu0 0.0
    %3660 = vmatprep.subr.mxu0 0.0
    %3661 = vmatpush1.msra.mxu0 0.0
    %3662 = vmatprep.subr.mxu0 0.0
    %3663 = vmatpush1.msra.mxu0 0.0
    %3664 = vmatprep.subr.mxu0 0.0
    %3665 = vmatpush1.msra.mxu0 0.0
    %3666 = vmatprep.subr.mxu0 0.0
    %3667 = vmatpush1.msra.mxu0 0.0
    %3668 = vmatprep.subr.mxu0 0.0
    %3669 = vmatpush1.msra.mxu0 0.0
    %3670 = vmatprep.subr.mxu0 0.0
    %3671 = vmatpush1.msra.mxu0 0.0
    %3672 = vmatprep.subr.mxu0 0.0
    %3673 = vmatpush1.msra.mxu0 0.0
    %3674 = vmatprep.subr.mxu0 0.0
    %3675 = vmatpush1.msra.mxu0 0.0
    %3676 = vmatprep.subr.mxu0 0.0
    %3677 = vmatpush1.msra.mxu0 0.0
    %3678 = vmatprep.subr.mxu0 0.0
    %3679 = vmatpush1.msra.mxu0 0.0
    %3680 = vmatprep.subr.mxu0 0.0
    %3681 = vmatpush1.msra.mxu0 %v3643
    %3682 = vmatprep.subr.mxu0 0.0
    %3683 = vmatpush2.msra.mxu0 0.0
    %3684 = vmatprep.subr.mxu0 0.0
    %3685 = vmatpush2.msra.mxu0 0.0
    %3686 = vmatprep.subr.mxu0 0.0
    %3687 = vmatpush2.msra.mxu0 0.0
    %3688 = vmatprep.subr.mxu0 0.0
    %3689 = vmatpush2.msra.mxu0 0.0
    %3690 = vmatprep.subr.mxu0 0.0
    %3691 = vmatpush2.msra.mxu0 0.0
    %3692 = vmatprep.subr.mxu0 0.0
    %3693 = vmatpush2.msra.mxu0 0.0
    %3694 = vmatprep.subr.mxu0 0.0
    %3695 = vmatpush2.msra.mxu0 0.0
    %3696 = vmatprep.subr.mxu0 0.0
    %3697 = vmatpush2.msra.mxu0 0.0
    %3698 = vmatprep.subr.mxu0 0.0
    %3699 = vmatpush2.msra.mxu0 0.0
    %3700 = vmatprep.subr.mxu0 0.0
    %3701 = vmatpush2.msra.mxu0 0.0
    %3702 = vmatprep.subr.mxu0 0.0
    %3703 = vmatpush2.msra.mxu0 0.0
    %3704 = vmatprep.subr.mxu0 0.0
    %3705 = vmatpush2.msra.mxu0 0.0
    %3706 = vmatprep.subr.mxu0 0.0
    %3707 = vmatpush2.msra.mxu0 0.0
    %3708 = vmatprep.subr.mxu0 0.0
    %3709 = vmatpush2.msra.mxu0 0.0
    %3710 = vmatprep.subr.mxu0 0.0
    %3711 = vmatpush2.msra.mxu0 0.0
    %3712 = vmatprep.subr.mxu0 0.0
    %3713 = vmatpush2.msra.mxu0 0.0
    %3714 = vmatprep.mubr.f32.mxu0 0.0
    %3715 = vmatmul.mubr.f32.gmra.mxu0 %v3645
    %v3716 = vpop.f32.mrf.mxu0
    %v3717 = vadd.f32 0.0, %v3716
    %v3718 = vpop.f32.mrf.mxu0
    %3719 = vmatprep.mubr.f32.mxu0 0.0
    %3720 = vmatmul.mubr.f32.gmra.mxu0 %v3648
    %v3721 = vpop.f32.mrf.mxu0
    %v3722 = vadd.f32 0.0, %v3721
    %v3723 = vpop.f32.mrf.mxu0
    %3724 = vdwg.mxu0
    %v3725 = vadd.f32 %v3533, %v3717
    %v3726 = vadd.f32 %v3534, %v3722
    %3727 = vxpose.xlu0.b32.start [1/16] %v927, 128
    %3728 = vxpose.xlu0.b32.cont [2/16] %v928, 128
    %3729 = vxpose.xlu0.b32.cont [3/16] %v929, 128
    %3730 = vxpose.xlu0.b32.cont [4/16] %v930, 128
    %3731 = vxpose.xlu0.b32.cont [5/16] %v931, 128
    %3732 = vxpose.xlu0.b32.cont [6/16] %v932, 128
    %3733 = vxpose.xlu0.b32.cont [7/16] %v933, 128
    %3734 = vxpose.xlu0.b32.cont [8/16] %v934, 128
    %3735 = vxpose.xlu0.b32.cont [9/16] %v935, 128
    %3736 = vxpose.xlu0.b32.cont [10/16] %v936, 128
    %3737 = vxpose.xlu0.b32.cont [11/16] %v937, 128
    %3738 = vxpose.xlu0.b32.cont [12/16] %v938, 128
    %3739 = vxpose.xlu0.b32.cont [13/16] %v939, 128
    %3740 = vxpose.xlu0.b32.cont [14/16] %v940, 128
    %3741 = vxpose.xlu0.b32.cont [15/16] %v941, 128
    %3742 = vxpose.xlu0.b32.end [16/16] %v942, 128
    %v3743 = vpop.trf.xlu0
    %v3744 = vpop.trf.xlu0
    %v3745 = vpop.trf.xlu0
    %v3746 = vpop.trf.xlu0
    %v3747 = vpop.trf.xlu0
    %v3748 = vpop.trf.xlu0
    %v3749 = vpop.trf.xlu0
    %v3750 = vpop.trf.xlu0
    %v3751 = vpop.trf.xlu0
    %v3752 = vpop.trf.xlu0
    %v3753 = vpop.trf.xlu0
    %v3754 = vpop.trf.xlu0
    %v3755 = vpop.trf.xlu0
    %v3756 = vpop.trf.xlu0
    %v3757 = vpop.trf.xlu0
    %v3758 = vpop.trf.xlu0
    %3759 = vmatprep.subr.mxu0 0.0
    %3760 = vmatpush1.msra.mxu0 %v3334
    %3761 = vmatprep.subr.mxu0 0.0
    %3762 = vmatpush1.msra.mxu0 %v3329
    %3763 = vmatprep.subr.mxu0 0.0
    %3764 = vmatpush1.msra.mxu0 %v3324
    %3765 = vmatprep.subr.mxu0 0.0
    %3766 = vmatpush1.msra.mxu0 %v3319
    %3767 = vmatprep.subr.mxu0 0.0
    %3768 = vmatpush1.msra.mxu0 %v3314
    %3769 = vmatprep.subr.mxu0 0.0
    %3770 = vmatpush1.msra.mxu0 %v3309
    %3771 = vmatprep.subr.mxu0 0.0
    %3772 = vmatpush1.msra.mxu0 %v3304
    %3773 = vmatprep.subr.mxu0 0.0
    %3774 = vmatpush1.msra.mxu0 %v3299
    %3775 = vmatprep.subr.mxu0 0.0
    %3776 = vmatpush1.msra.mxu0 %v3294
    %3777 = vmatprep.subr.mxu0 0.0
    %3778 = vmatpush1.msra.mxu0 %v3289
    %3779 = vmatprep.subr.mxu0 0.0
    %3780 = vmatpush1.msra.mxu0 %v3284
    %3781 = vmatprep.subr.mxu0 0.0
    %3782 = vmatpush1.msra.mxu0 %v3279
    %3783 = vmatprep.subr.mxu0 0.0
    %3784 = vmatpush1.msra.mxu0 %v3274
    %3785 = vmatprep.subr.mxu0 0.0
    %3786 = vmatpush1.msra.mxu0 %v3269
    %3787 = vmatprep.subr.mxu0 0.0
    %3788 = vmatpush1.msra.mxu0 %v3264
    %3789 = vmatprep.subr.mxu0 0.0
    %3790 = vmatpush1.msra.mxu0 %v3259
    %3791 = vmatprep.subr.mxu0 0.0
    %3792 = vmatpush2.msra.mxu0 0.0
    %3793 = vmatprep.subr.mxu0 0.0
    %3794 = vmatpush2.msra.mxu0 0.0
    %3795 = vmatprep.subr.mxu0 0.0
    %3796 = vmatpush2.msra.mxu0 0.0
    %3797 = vmatprep.subr.mxu0 0.0
    %3798 = vmatpush2.msra.mxu0 0.0
    %3799 = vmatprep.subr.mxu0 0.0
    %3800 = vmatpush2.msra.mxu0 0.0
    %3801 = vmatprep.subr.mxu0 0.0
    %3802 = vmatpush2.msra.mxu0 0.0
    %3803 = vmatprep.subr.mxu0 0.0
    %3804 = vmatpush2.msra.mxu0 0.0
    %3805 = vmatprep.subr.mxu0 0.0
    %3806 = vmatpush2.msra.mxu0 0.0
    %3807 = vmatprep.subr.mxu0 0.0
    %3808 = vmatpush2.msra.mxu0 0.0
    %3809 = vmatprep.subr.mxu0 0.0
    %3810 = vmatpush2.msra.mxu0 0.0
    %3811 = vmatprep.subr.mxu0 0.0
    %3812 = vmatpush2.msra.mxu0 0.0
    %3813 = vmatprep.subr.mxu0 0.0
    %3814 = vmatpush2.msra.mxu0 0.0
    %3815 = vmatprep.subr.mxu0 0.0
    %3816 = vmatpush2.msra.mxu0 0.0
    %3817 = vmatprep.subr.mxu0 0.0
    %3818 = vmatpush2.msra.mxu0 0.0
    %3819 = vmatprep.subr.mxu0 0.0
    %3820 = vmatpush2.msra.mxu0 0.0
    %3821 = vmatprep.subr.mxu0 0.0
    %3822 = vmatpush2.msra.mxu0 0.0
    %3823 = vmatprep.mubr.f32.mxu0 0.0
    %3824 = vmatmul.mubr.f32.gmra.mxu0 %v3743
    %v3825 = vpop.f32.mrf.mxu0
    %v3826 = vadd.f32 0.0, %v3825
    %v3827 = vpop.f32.mrf.mxu0
    %3828 = vmatprep.mubr.f32.mxu0 0.0
    %3829 = vmatmul.mubr.f32.gmra.mxu0 %v3744
    %v3830 = vpop.f32.mrf.mxu0
    %v3831 = vadd.f32 0.0, %v3830
    %v3832 = vpop.f32.mrf.mxu0
    %3833 = vdwg.mxu0
    %s3834 = scalar_lea.vmem %s8, 16
    %v3835 = vld [vmem:[%s3834] sm:$0xff]
    %v3837 = vsel %vm2790, %v3826, 0
    %v3840 = vsel %vm2790, %v3831, 0
    %3842 = vmatprep.subr.mxu0 0.0
    %3843 = vmatpush1.msra.mxu0 0.0
    %3844 = vmatprep.subr.mxu0 0.0
    %3845 = vmatpush1.msra.mxu0 0.0
    %3846 = vmatprep.subr.mxu0 0.0
    %3847 = vmatpush1.msra.mxu0 0.0
    %3848 = vmatprep.subr.mxu0 0.0
    %3849 = vmatpush1.msra.mxu0 0.0
    %3850 = vmatprep.subr.mxu0 0.0
    %3851 = vmatpush1.msra.mxu0 0.0
    %3852 = vmatprep.subr.mxu0 0.0
    %3853 = vmatpush1.msra.mxu0 0.0
    %3854 = vmatprep.subr.mxu0 0.0
    %3855 = vmatpush1.msra.mxu0 0.0
    %3856 = vmatprep.subr.mxu0 0.0
    %3857 = vmatpush1.msra.mxu0 0.0
    %3858 = vmatprep.subr.mxu0 0.0
    %3859 = vmatpush1.msra.mxu0 0.0
    %3860 = vmatprep.subr.mxu0 0.0
    %3861 = vmatpush1.msra.mxu0 0.0
    %3862 = vmatprep.subr.mxu0 0.0
    %3863 = vmatpush1.msra.mxu0 0.0
    %3864 = vmatprep.subr.mxu0 0.0
    %3865 = vmatpush1.msra.mxu0 0.0
    %3866 = vmatprep.subr.mxu0 0.0
    %3867 = vmatpush1.msra.mxu0 0.0
    %3868 = vmatprep.subr.mxu0 0.0
    %3869 = vmatpush1.msra.mxu0 0.0
    %3870 = vmatprep.subr.mxu0 0.0
    %3871 = vmatpush1.msra.mxu0 0.0
    %3872 = vmatprep.subr.mxu0 0.0
    %3873 = vmatpush1.msra.mxu0 %v3835
    %3874 = vmatprep.subr.mxu0 0.0
    %3875 = vmatpush2.msra.mxu0 0.0
    %3876 = vmatprep.subr.mxu0 0.0
    %3877 = vmatpush2.msra.mxu0 0.0
    %3878 = vmatprep.subr.mxu0 0.0
    %3879 = vmatpush2.msra.mxu0 0.0
    %3880 = vmatprep.subr.mxu0 0.0
    %3881 = vmatpush2.msra.mxu0 0.0
    %3882 = vmatprep.subr.mxu0 0.0
    %3883 = vmatpush2.msra.mxu0 0.0
    %3884 = vmatprep.subr.mxu0 0.0
    %3885 = vmatpush2.msra.mxu0 0.0
    %3886 = vmatprep.subr.mxu0 0.0
    %3887 = vmatpush2.msra.mxu0 0.0
    %3888 = vmatprep.subr.mxu0 0.0
    %3889 = vmatpush2.msra.mxu0 0.0
    %3890 = vmatprep.subr.mxu0 0.0
    %3891 = vmatpush2.msra.mxu0 0.0
    %3892 = vmatprep.subr.mxu0 0.0
    %3893 = vmatpush2.msra.mxu0 0.0
    %3894 = vmatprep.subr.mxu0 0.0
    %3895 = vmatpush2.msra.mxu0 0.0
    %3896 = vmatprep.subr.mxu0 0.0
    %3897 = vmatpush2.msra.mxu0 0.0
    %3898 = vmatprep.subr.mxu0 0.0
    %3899 = vmatpush2.msra.mxu0 0.0
    %3900 = vmatprep.subr.mxu0 0.0
    %3901 = vmatpush2.msra.mxu0 0.0
    %3902 = vmatprep.subr.mxu0 0.0
    %3903 = vmatpush2.msra.mxu0 0.0
    %3904 = vmatprep.subr.mxu0 0.0
    %3905 = vmatpush2.msra.mxu0 0.0
    %3906 = vmatprep.mubr.f32.mxu0 0.0
    %3907 = vmatmul.mubr.f32.gmra.mxu0 %v3837
    %v3908 = vpop.f32.mrf.mxu0
    %v3909 = vadd.f32 0.0, %v3908
    %v3910 = vpop.f32.mrf.mxu0
    %3911 = vmatprep.mubr.f32.mxu0 0.0
    %3912 = vmatmul.mubr.f32.gmra.mxu0 %v3840
    %v3913 = vpop.f32.mrf.mxu0
    %v3914 = vadd.f32 0.0, %v3913
    %v3915 = vpop.f32.mrf.mxu0
    %3916 = vdwg.mxu0
    %v3917 = vadd.f32 %v3725, %v3909
    %v3918 = vadd.f32 %v3726, %v3914
    %3919 = vxpose.xlu0.b32.start [1/16] %v1245, 128
    %3920 = vxpose.xlu0.b32.cont [2/16] %v1246, 128
    %3921 = vxpose.xlu0.b32.cont [3/16] %v1247, 128
    %3922 = vxpose.xlu0.b32.cont [4/16] %v1248, 128
    %3923 = vxpose.xlu0.b32.cont [5/16] %v1249, 128
    %3924 = vxpose.xlu0.b32.cont [6/16] %v1250, 128
    %3925 = vxpose.xlu0.b32.cont [7/16] %v1251, 128
    %3926 = vxpose.xlu0.b32.cont [8/16] %v1252, 128
    %3927 = vxpose.xlu0.b32.cont [9/16] %v1253, 128
    %3928 = vxpose.xlu0.b32.cont [10/16] %v1254, 128
    %3929 = vxpose.xlu0.b32.cont [11/16] %v1255, 128
    %3930 = vxpose.xlu0.b32.cont [12/16] %v1256, 128
    %3931 = vxpose.xlu0.b32.cont [13/16] %v1257, 128
    %3932 = vxpose.xlu0.b32.cont [14/16] %v1258, 128
    %3933 = vxpose.xlu0.b32.cont [15/16] %v1259, 128
    %3934 = vxpose.xlu0.b32.end [16/16] %v1260, 128
    %v3935 = vpop.trf.xlu0
    %v3936 = vpop.trf.xlu0
    %v3937 = vpop.trf.xlu0
    %v3938 = vpop.trf.xlu0
    %v3939 = vpop.trf.xlu0
    %v3940 = vpop.trf.xlu0
    %v3941 = vpop.trf.xlu0
    %v3942 = vpop.trf.xlu0
    %v3943 = vpop.trf.xlu0
    %v3944 = vpop.trf.xlu0
    %v3945 = vpop.trf.xlu0
    %v3946 = vpop.trf.xlu0
    %v3947 = vpop.trf.xlu0
    %v3948 = vpop.trf.xlu0
    %v3949 = vpop.trf.xlu0
    %v3950 = vpop.trf.xlu0
    %3951 = vmatprep.subr.mxu0 0.0
    %3952 = vmatpush1.msra.mxu0 %v3334
    %3953 = vmatprep.subr.mxu0 0.0
    %3954 = vmatpush1.msra.mxu0 %v3329
    %3955 = vmatprep.subr.mxu0 0.0
    %3956 = vmatpush1.msra.mxu0 %v3324
    %3957 = vmatprep.subr.mxu0 0.0
    %3958 = vmatpush1.msra.mxu0 %v3319
    %3959 = vmatprep.subr.mxu0 0.0
    %3960 = vmatpush1.msra.mxu0 %v3314
    %3961 = vmatprep.subr.mxu0 0.0
    %3962 = vmatpush1.msra.mxu0 %v3309
    %3963 = vmatprep.subr.mxu0 0.0
    %3964 = vmatpush1.msra.mxu0 %v3304
    %3965 = vmatprep.subr.mxu0 0.0
    %3966 = vmatpush1.msra.mxu0 %v3299
    %3967 = vmatprep.subr.mxu0 0.0
    %3968 = vmatpush1.msra.mxu0 %v3294
    %3969 = vmatprep.subr.mxu0 0.0
    %3970 = vmatpush1.msra.mxu0 %v3289
    %3971 = vmatprep.subr.mxu0 0.0
    %3972 = vmatpush1.msra.mxu0 %v3284
    %3973 = vmatprep.subr.mxu0 0.0
    %3974 = vmatpush1.msra.mxu0 %v3279
    %3975 = vmatprep.subr.mxu0 0.0
    %3976 = vmatpush1.msra.mxu0 %v3274
    %3977 = vmatprep.subr.mxu0 0.0
    %3978 = vmatpush1.msra.mxu0 %v3269
    %3979 = vmatprep.subr.mxu0 0.0
    %3980 = vmatpush1.msra.mxu0 %v3264
    %3981 = vmatprep.subr.mxu0 0.0
    %3982 = vmatpush1.msra.mxu0 %v3259
    %3983 = vmatprep.subr.mxu0 0.0
    %3984 = vmatpush2.msra.mxu0 0.0
    %3985 = vmatprep.subr.mxu0 0.0
    %3986 = vmatpush2.msra.mxu0 0.0
    %3987 = vmatprep.subr.mxu0 0.0
    %3988 = vmatpush2.msra.mxu0 0.0
    %3989 = vmatprep.subr.mxu0 0.0
    %3990 = vmatpush2.msra.mxu0 0.0
    %3991 = vmatprep.subr.mxu0 0.0
    %3992 = vmatpush2.msra.mxu0 0.0
    %3993 = vmatprep.subr.mxu0 0.0
    %3994 = vmatpush2.msra.mxu0 0.0
    %3995 = vmatprep.subr.mxu0 0.0
    %3996 = vmatpush2.msra.mxu0 0.0
    %3997 = vmatprep.subr.mxu0 0.0
    %3998 = vmatpush2.msra.mxu0 0.0
    %3999 = vmatprep.subr.mxu0 0.0
    %4000 = vmatpush2.msra.mxu0 0.0
    %4001 = vmatprep.subr.mxu0 0.0
    %4002 = vmatpush2.msra.mxu0 0.0
    %4003 = vmatprep.subr.mxu0 0.0
    %4004 = vmatpush2.msra.mxu0 0.0
    %4005 = vmatprep.subr.mxu0 0.0
    %4006 = vmatpush2.msra.mxu0 0.0
    %4007 = vmatprep.subr.mxu0 0.0
    %4008 = vmatpush2.msra.mxu0 0.0
    %4009 = vmatprep.subr.mxu0 0.0
    %4010 = vmatpush2.msra.mxu0 0.0
    %4011 = vmatprep.subr.mxu0 0.0
    %4012 = vmatpush2.msra.mxu0 0.0
    %4013 = vmatprep.subr.mxu0 0.0
    %4014 = vmatpush2.msra.mxu0 0.0
    %4015 = vmatprep.mubr.f32.mxu0 0.0
    %4016 = vmatmul.mubr.f32.gmra.mxu0 %v3935
    %v4017 = vpop.f32.mrf.mxu0
    %v4018 = vadd.f32 0.0, %v4017
    %v4019 = vpop.f32.mrf.mxu0
    %4020 = vmatprep.mubr.f32.mxu0 0.0
    %4021 = vmatmul.mubr.f32.gmra.mxu0 %v3936
    %v4022 = vpop.f32.mrf.mxu0
    %v4023 = vadd.f32 0.0, %v4022
    %v4024 = vpop.f32.mrf.mxu0
    %4025 = vdwg.mxu0
    %s4026 = scalar_lea.vmem %s8, 24
    %v4027 = vld [vmem:[%s4026] sm:$0xff]
    %v4029 = vsel %vm2790, %v4018, 0
    %v4032 = vsel %vm2790, %v4023, 0
    %4034 = vmatprep.subr.mxu0 0.0
    %4035 = vmatpush1.msra.mxu0 0.0
    %4036 = vmatprep.subr.mxu0 0.0
    %4037 = vmatpush1.msra.mxu0 0.0
    %4038 = vmatprep.subr.mxu0 0.0
    %4039 = vmatpush1.msra.mxu0 0.0
    %4040 = vmatprep.subr.mxu0 0.0
    %4041 = vmatpush1.msra.mxu0 0.0
    %4042 = vmatprep.subr.mxu0 0.0
    %4043 = vmatpush1.msra.mxu0 0.0
    %4044 = vmatprep.subr.mxu0 0.0
    %4045 = vmatpush1.msra.mxu0 0.0
    %4046 = vmatprep.subr.mxu0 0.0
    %4047 = vmatpush1.msra.mxu0 0.0
    %4048 = vmatprep.subr.mxu0 0.0
    %4049 = vmatpush1.msra.mxu0 0.0
    %4050 = vmatprep.subr.mxu0 0.0
    %4051 = vmatpush1.msra.mxu0 0.0
    %4052 = vmatprep.subr.mxu0 0.0
    %4053 = vmatpush1.msra.mxu0 0.0
    %4054 = vmatprep.subr.mxu0 0.0
    %4055 = vmatpush1.msra.mxu0 0.0
    %4056 = vmatprep.subr.mxu0 0.0
    %4057 = vmatpush1.msra.mxu0 0.0
    %4058 = vmatprep.subr.mxu0 0.0
    %4059 = vmatpush1.msra.mxu0 0.0
    %4060 = vmatprep.subr.mxu0 0.0
    %4061 = vmatpush1.msra.mxu0 0.0
    %4062 = vmatprep.subr.mxu0 0.0
    %4063 = vmatpush1.msra.mxu0 0.0
    %4064 = vmatprep.subr.mxu0 0.0
    %4065 = vmatpush1.msra.mxu0 %v4027
    %4066 = vmatprep.subr.mxu0 0.0
    %4067 = vmatpush2.msra.mxu0 0.0
    %4068 = vmatprep.subr.mxu0 0.0
    %4069 = vmatpush2.msra.mxu0 0.0
    %4070 = vmatprep.subr.mxu0 0.0
    %4071 = vmatpush2.msra.mxu0 0.0
    %4072 = vmatprep.subr.mxu0 0.0
    %4073 = vmatpush2.msra.mxu0 0.0
    %4074 = vmatprep.subr.mxu0 0.0
    %4075 = vmatpush2.msra.mxu0 0.0
    %4076 = vmatprep.subr.mxu0 0.0
    %4077 = vmatpush2.msra.mxu0 0.0
    %4078 = vmatprep.subr.mxu0 0.0
    %4079 = vmatpush2.msra.mxu0 0.0
    %4080 = vmatprep.subr.mxu0 0.0
    %4081 = vmatpush2.msra.mxu0 0.0
    %4082 = vmatprep.subr.mxu0 0.0
    %4083 = vmatpush2.msra.mxu0 0.0
    %4084 = vmatprep.subr.mxu0 0.0
    %4085 = vmatpush2.msra.mxu0 0.0
    %4086 = vmatprep.subr.mxu0 0.0
    %4087 = vmatpush2.msra.mxu0 0.0
    %4088 = vmatprep.subr.mxu0 0.0
    %4089 = vmatpush2.msra.mxu0 0.0
    %4090 = vmatprep.subr.mxu0 0.0
    %4091 = vmatpush2.msra.mxu0 0.0
    %4092 = vmatprep.subr.mxu0 0.0
    %4093 = vmatpush2.msra.mxu0 0.0
    %4094 = vmatprep.subr.mxu0 0.0
    %4095 = vmatpush2.msra.mxu0 0.0
    %4096 = vmatprep.subr.mxu0 0.0
    %4097 = vmatpush2.msra.mxu0 0.0
    %4098 = vmatprep.mubr.f32.mxu0 0.0
    %4099 = vmatmul.mubr.f32.gmra.mxu0 %v4029
    %v4100 = vpop.f32.mrf.mxu0
    %v4101 = vadd.f32 0.0, %v4100
    %v4102 = vpop.f32.mrf.mxu0
    %4103 = vmatprep.mubr.f32.mxu0 0.0
    %4104 = vmatmul.mubr.f32.gmra.mxu0 %v4032
    %v4105 = vpop.f32.mrf.mxu0
    %v4106 = vadd.f32 0.0, %v4105
    %v4107 = vpop.f32.mrf.mxu0
    %4108 = vdwg.mxu0
    %v4109 = vadd.f32 %v3917, %v4101
    %v4110 = vadd.f32 %v3918, %v4106
    %4111 = vxpose.xlu0.b32.start [1/16] %v1563, 128
    %4112 = vxpose.xlu0.b32.cont [2/16] %v1564, 128
    %4113 = vxpose.xlu0.b32.cont [3/16] %v1565, 128
    %4114 = vxpose.xlu0.b32.cont [4/16] %v1566, 128
    %4115 = vxpose.xlu0.b32.cont [5/16] %v1567, 128
    %4116 = vxpose.xlu0.b32.cont [6/16] %v1568, 128
    %4117 = vxpose.xlu0.b32.cont [7/16] %v1569, 128
    %4118 = vxpose.xlu0.b32.cont [8/16] %v1570, 128
    %4119 = vxpose.xlu0.b32.cont [9/16] %v1571, 128
    %4120 = vxpose.xlu0.b32.cont [10/16] %v1572, 128
    %4121 = vxpose.xlu0.b32.cont [11/16] %v1573, 128
    %4122 = vxpose.xlu0.b32.cont [12/16] %v1574, 128
    %4123 = vxpose.xlu0.b32.cont [13/16] %v1575, 128
    %4124 = vxpose.xlu0.b32.cont [14/16] %v1576, 128
    %4125 = vxpose.xlu0.b32.cont [15/16] %v1577, 128
    %4126 = vxpose.xlu0.b32.end [16/16] %v1578, 128
    %v4127 = vpop.trf.xlu0
    %v4128 = vpop.trf.xlu0
    %v4129 = vpop.trf.xlu0
    %v4130 = vpop.trf.xlu0
    %v4131 = vpop.trf.xlu0
    %v4132 = vpop.trf.xlu0
    %v4133 = vpop.trf.xlu0
    %v4134 = vpop.trf.xlu0
    %v4135 = vpop.trf.xlu0
    %v4136 = vpop.trf.xlu0
    %v4137 = vpop.trf.xlu0
    %v4138 = vpop.trf.xlu0
    %v4139 = vpop.trf.xlu0
    %v4140 = vpop.trf.xlu0
    %v4141 = vpop.trf.xlu0
    %v4142 = vpop.trf.xlu0
    %4143 = vmatprep.subr.mxu0 0.0
    %4144 = vmatpush1.msra.mxu0 %v3334
    %4145 = vmatprep.subr.mxu0 0.0
    %4146 = vmatpush1.msra.mxu0 %v3329
    %4147 = vmatprep.subr.mxu0 0.0
    %4148 = vmatpush1.msra.mxu0 %v3324
    %4149 = vmatprep.subr.mxu0 0.0
    %4150 = vmatpush1.msra.mxu0 %v3319
    %4151 = vmatprep.subr.mxu0 0.0
    %4152 = vmatpush1.msra.mxu0 %v3314
    %4153 = vmatprep.subr.mxu0 0.0
    %4154 = vmatpush1.msra.mxu0 %v3309
    %4155 = vmatprep.subr.mxu0 0.0
    %4156 = vmatpush1.msra.mxu0 %v3304
    %4157 = vmatprep.subr.mxu0 0.0
    %4158 = vmatpush1.msra.mxu0 %v3299
    %4159 = vmatprep.subr.mxu0 0.0
    %4160 = vmatpush1.msra.mxu0 %v3294
    %4161 = vmatprep.subr.mxu0 0.0
    %4162 = vmatpush1.msra.mxu0 %v3289
    %4163 = vmatprep.subr.mxu0 0.0
    %4164 = vmatpush1.msra.mxu0 %v3284
    %4165 = vmatprep.subr.mxu0 0.0
    %4166 = vmatpush1.msra.mxu0 %v3279
    %4167 = vmatprep.subr.mxu0 0.0
    %4168 = vmatpush1.msra.mxu0 %v3274
    %4169 = vmatprep.subr.mxu0 0.0
    %4170 = vmatpush1.msra.mxu0 %v3269
    %4171 = vmatprep.subr.mxu0 0.0
    %4172 = vmatpush1.msra.mxu0 %v3264
    %4173 = vmatprep.subr.mxu0 0.0
    %4174 = vmatpush1.msra.mxu0 %v3259
    %4175 = vmatprep.subr.mxu0 0.0
    %4176 = vmatpush2.msra.mxu0 0.0
    %4177 = vmatprep.subr.mxu0 0.0
    %4178 = vmatpush2.msra.mxu0 0.0
    %4179 = vmatprep.subr.mxu0 0.0
    %4180 = vmatpush2.msra.mxu0 0.0
    %4181 = vmatprep.subr.mxu0 0.0
    %4182 = vmatpush2.msra.mxu0 0.0
    %4183 = vmatprep.subr.mxu0 0.0
    %4184 = vmatpush2.msra.mxu0 0.0
    %4185 = vmatprep.subr.mxu0 0.0
    %4186 = vmatpush2.msra.mxu0 0.0
    %4187 = vmatprep.subr.mxu0 0.0
    %4188 = vmatpush2.msra.mxu0 0.0
    %4189 = vmatprep.subr.mxu0 0.0
    %4190 = vmatpush2.msra.mxu0 0.0
    %4191 = vmatprep.subr.mxu0 0.0
    %4192 = vmatpush2.msra.mxu0 0.0
    %4193 = vmatprep.subr.mxu0 0.0
    %4194 = vmatpush2.msra.mxu0 0.0
    %4195 = vmatprep.subr.mxu0 0.0
    %4196 = vmatpush2.msra.mxu0 0.0
    %4197 = vmatprep.subr.mxu0 0.0
    %4198 = vmatpush2.msra.mxu0 0.0
    %4199 = vmatprep.subr.mxu0 0.0
    %4200 = vmatpush2.msra.mxu0 0.0
    %4201 = vmatprep.subr.mxu0 0.0
    %4202 = vmatpush2.msra.mxu0 0.0
    %4203 = vmatprep.subr.mxu0 0.0
    %4204 = vmatpush2.msra.mxu0 0.0
    %4205 = vmatprep.subr.mxu0 0.0
    %4206 = vmatpush2.msra.mxu0 0.0
    %4207 = vmatprep.mubr.f32.mxu0 0.0
    %4208 = vmatmul.mubr.f32.gmra.mxu0 %v4127
    %v4209 = vpop.f32.mrf.mxu0
    %v4210 = vadd.f32 0.0, %v4209
    %v4211 = vpop.f32.mrf.mxu0
    %4212 = vmatprep.mubr.f32.mxu0 0.0
    %4213 = vmatmul.mubr.f32.gmra.mxu0 %v4128
    %v4214 = vpop.f32.mrf.mxu0
    %v4215 = vadd.f32 0.0, %v4214
    %v4216 = vpop.f32.mrf.mxu0
    %4217 = vdwg.mxu0
    %s4218 = scalar_lea.vmem %s8, 32
    %v4219 = vld [vmem:[%s4218] sm:$0xff]
    %v4221 = vsel %vm2790, %v4210, 0
    %v4224 = vsel %vm2790, %v4215, 0
    %4226 = vmatprep.subr.mxu0 0.0
    %4227 = vmatpush1.msra.mxu0 0.0
    %4228 = vmatprep.subr.mxu0 0.0
    %4229 = vmatpush1.msra.mxu0 0.0
    %4230 = vmatprep.subr.mxu0 0.0
    %4231 = vmatpush1.msra.mxu0 0.0
    %4232 = vmatprep.subr.mxu0 0.0
    %4233 = vmatpush1.msra.mxu0 0.0
    %4234 = vmatprep.subr.mxu0 0.0
    %4235 = vmatpush1.msra.mxu0 0.0
    %4236 = vmatprep.subr.mxu0 0.0
    %4237 = vmatpush1.msra.mxu0 0.0
    %4238 = vmatprep.subr.mxu0 0.0
    %4239 = vmatpush1.msra.mxu0 0.0
    %4240 = vmatprep.subr.mxu0 0.0
    %4241 = vmatpush1.msra.mxu0 0.0
    %4242 = vmatprep.subr.mxu0 0.0
    %4243 = vmatpush1.msra.mxu0 0.0
    %4244 = vmatprep.subr.mxu0 0.0
    %4245 = vmatpush1.msra.mxu0 0.0
    %4246 = vmatprep.subr.mxu0 0.0
    %4247 = vmatpush1.msra.mxu0 0.0
    %4248 = vmatprep.subr.mxu0 0.0
    %4249 = vmatpush1.msra.mxu0 0.0
    %4250 = vmatprep.subr.mxu0 0.0
    %4251 = vmatpush1.msra.mxu0 0.0
    %4252 = vmatprep.subr.mxu0 0.0
    %4253 = vmatpush1.msra.mxu0 0.0
    %4254 = vmatprep.subr.mxu0 0.0
    %4255 = vmatpush1.msra.mxu0 0.0
    %4256 = vmatprep.subr.mxu0 0.0
    %4257 = vmatpush1.msra.mxu0 %v4219
    %4258 = vmatprep.subr.mxu0 0.0
    %4259 = vmatpush2.msra.mxu0 0.0
    %4260 = vmatprep.subr.mxu0 0.0
    %4261 = vmatpush2.msra.mxu0 0.0
    %4262 = vmatprep.subr.mxu0 0.0
    %4263 = vmatpush2.msra.mxu0 0.0
    %4264 = vmatprep.subr.mxu0 0.0
    %4265 = vmatpush2.msra.mxu0 0.0
    %4266 = vmatprep.subr.mxu0 0.0
    %4267 = vmatpush2.msra.mxu0 0.0
    %4268 = vmatprep.subr.mxu0 0.0
    %4269 = vmatpush2.msra.mxu0 0.0
    %4270 = vmatprep.subr.mxu0 0.0
    %4271 = vmatpush2.msra.mxu0 0.0
    %4272 = vmatprep.subr.mxu0 0.0
    %4273 = vmatpush2.msra.mxu0 0.0
    %4274 = vmatprep.subr.mxu0 0.0
    %4275 = vmatpush2.msra.mxu0 0.0
    %4276 = vmatprep.subr.mxu0 0.0
    %4277 = vmatpush2.msra.mxu0 0.0
    %4278 = vmatprep.subr.mxu0 0.0
    %4279 = vmatpush2.msra.mxu0 0.0
    %4280 = vmatprep.subr.mxu0 0.0
    %4281 = vmatpush2.msra.mxu0 0.0
    %4282 = vmatprep.subr.mxu0 0.0
    %4283 = vmatpush2.msra.mxu0 0.0
    %4284 = vmatprep.subr.mxu0 0.0
    %4285 = vmatpush2.msra.mxu0 0.0
    %4286 = vmatprep.subr.mxu0 0.0
    %4287 = vmatpush2.msra.mxu0 0.0
    %4288 = vmatprep.subr.mxu0 0.0
    %4289 = vmatpush2.msra.mxu0 0.0
    %4290 = vmatprep.mubr.f32.mxu0 0.0
    %4291 = vmatmul.mubr.f32.gmra.mxu0 %v4221
    %v4292 = vpop.f32.mrf.mxu0
    %v4293 = vadd.f32 0.0, %v4292
    %v4294 = vpop.f32.mrf.mxu0
    %4295 = vmatprep.mubr.f32.mxu0 0.0
    %4296 = vmatmul.mubr.f32.gmra.mxu0 %v4224
    %v4297 = vpop.f32.mrf.mxu0
    %v4298 = vadd.f32 0.0, %v4297
    %v4299 = vpop.f32.mrf.mxu0
    %4300 = vdwg.mxu0
    %v4301 = vadd.f32 %v4109, %v4293
    %v4302 = vadd.f32 %v4110, %v4298
    %4303 = vxpose.xlu0.b32.start [1/16] %v1881, 128
    %4304 = vxpose.xlu0.b32.cont [2/16] %v1882, 128
    %4305 = vxpose.xlu0.b32.cont [3/16] %v1883, 128
    %4306 = vxpose.xlu0.b32.cont [4/16] %v1884, 128
    %4307 = vxpose.xlu0.b32.cont [5/16] %v1885, 128
    %4308 = vxpose.xlu0.b32.cont [6/16] %v1886, 128
    %4309 = vxpose.xlu0.b32.cont [7/16] %v1887, 128
    %4310 = vxpose.xlu0.b32.cont [8/16] %v1888, 128
    %4311 = vxpose.xlu0.b32.cont [9/16] %v1889, 128
    %4312 = vxpose.xlu0.b32.cont [10/16] %v1890, 128
    %4313 = vxpose.xlu0.b32.cont [11/16] %v1891, 128
    %4314 = vxpose.xlu0.b32.cont [12/16] %v1892, 128
    %4315 = vxpose.xlu0.b32.cont [13/16] %v1893, 128
    %4316 = vxpose.xlu0.b32.cont [14/16] %v1894, 128
    %4317 = vxpose.xlu0.b32.cont [15/16] %v1895, 128
    %4318 = vxpose.xlu0.b32.end [16/16] %v1896, 128
    %v4319 = vpop.trf.xlu0
    %v4320 = vpop.trf.xlu0
    %v4321 = vpop.trf.xlu0
    %v4322 = vpop.trf.xlu0
    %v4323 = vpop.trf.xlu0
    %v4324 = vpop.trf.xlu0
    %v4325 = vpop.trf.xlu0
    %v4326 = vpop.trf.xlu0
    %v4327 = vpop.trf.xlu0
    %v4328 = vpop.trf.xlu0
    %v4329 = vpop.trf.xlu0
    %v4330 = vpop.trf.xlu0
    %v4331 = vpop.trf.xlu0
    %v4332 = vpop.trf.xlu0
    %v4333 = vpop.trf.xlu0
    %v4334 = vpop.trf.xlu0
    %4335 = vmatprep.subr.mxu0 0.0
    %4336 = vmatpush1.msra.mxu0 %v3334
    %4337 = vmatprep.subr.mxu0 0.0
    %4338 = vmatpush1.msra.mxu0 %v3329
    %4339 = vmatprep.subr.mxu0 0.0
    %4340 = vmatpush1.msra.mxu0 %v3324
    %4341 = vmatprep.subr.mxu0 0.0
    %4342 = vmatpush1.msra.mxu0 %v3319
    %4343 = vmatprep.subr.mxu0 0.0
    %4344 = vmatpush1.msra.mxu0 %v3314
    %4345 = vmatprep.subr.mxu0 0.0
    %4346 = vmatpush1.msra.mxu0 %v3309
    %4347 = vmatprep.subr.mxu0 0.0
    %4348 = vmatpush1.msra.mxu0 %v3304
    %4349 = vmatprep.subr.mxu0 0.0
    %4350 = vmatpush1.msra.mxu0 %v3299
    %4351 = vmatprep.subr.mxu0 0.0
    %4352 = vmatpush1.msra.mxu0 %v3294
    %4353 = vmatprep.subr.mxu0 0.0
    %4354 = vmatpush1.msra.mxu0 %v3289
    %4355 = vmatprep.subr.mxu0 0.0
    %4356 = vmatpush1.msra.mxu0 %v3284
    %4357 = vmatprep.subr.mxu0 0.0
    %4358 = vmatpush1.msra.mxu0 %v3279
    %4359 = vmatprep.subr.mxu0 0.0
    %4360 = vmatpush1.msra.mxu0 %v3274
    %4361 = vmatprep.subr.mxu0 0.0
    %4362 = vmatpush1.msra.mxu0 %v3269
    %4363 = vmatprep.subr.mxu0 0.0
    %4364 = vmatpush1.msra.mxu0 %v3264
    %4365 = vmatprep.subr.mxu0 0.0
    %4366 = vmatpush1.msra.mxu0 %v3259
    %4367 = vmatprep.subr.mxu0 0.0
    %4368 = vmatpush2.msra.mxu0 0.0
    %4369 = vmatprep.subr.mxu0 0.0
    %4370 = vmatpush2.msra.mxu0 0.0
    %4371 = vmatprep.subr.mxu0 0.0
    %4372 = vmatpush2.msra.mxu0 0.0
    %4373 = vmatprep.subr.mxu0 0.0
    %4374 = vmatpush2.msra.mxu0 0.0
    %4375 = vmatprep.subr.mxu0 0.0
    %4376 = vmatpush2.msra.mxu0 0.0
    %4377 = vmatprep.subr.mxu0 0.0
    %4378 = vmatpush2.msra.mxu0 0.0
    %4379 = vmatprep.subr.mxu0 0.0
    %4380 = vmatpush2.msra.mxu0 0.0
    %4381 = vmatprep.subr.mxu0 0.0
    %4382 = vmatpush2.msra.mxu0 0.0
    %4383 = vmatprep.subr.mxu0 0.0
    %4384 = vmatpush2.msra.mxu0 0.0
    %4385 = vmatprep.subr.mxu0 0.0
    %4386 = vmatpush2.msra.mxu0 0.0
    %4387 = vmatprep.subr.mxu0 0.0
    %4388 = vmatpush2.msra.mxu0 0.0
    %4389 = vmatprep.subr.mxu0 0.0
    %4390 = vmatpush2.msra.mxu0 0.0
    %4391 = vmatprep.subr.mxu0 0.0
    %4392 = vmatpush2.msra.mxu0 0.0
    %4393 = vmatprep.subr.mxu0 0.0
    %4394 = vmatpush2.msra.mxu0 0.0
    %4395 = vmatprep.subr.mxu0 0.0
    %4396 = vmatpush2.msra.mxu0 0.0
    %4397 = vmatprep.subr.mxu0 0.0
    %4398 = vmatpush2.msra.mxu0 0.0
    %4399 = vmatprep.mubr.f32.mxu0 0.0
    %4400 = vmatmul.mubr.f32.gmra.mxu0 %v4319
    %v4401 = vpop.f32.mrf.mxu0
    %v4402 = vadd.f32 0.0, %v4401
    %v4403 = vpop.f32.mrf.mxu0
    %4404 = vmatprep.mubr.f32.mxu0 0.0
    %4405 = vmatmul.mubr.f32.gmra.mxu0 %v4320
    %v4406 = vpop.f32.mrf.mxu0
    %v4407 = vadd.f32 0.0, %v4406
    %v4408 = vpop.f32.mrf.mxu0
    %4409 = vdwg.mxu0
    %s4410 = scalar_lea.vmem %s8, 40
    %v4411 = vld [vmem:[%s4410] sm:$0xff]
    %v4413 = vsel %vm2790, %v4402, 0
    %v4416 = vsel %vm2790, %v4407, 0
    %4418 = vmatprep.subr.mxu0 0.0
    %4419 = vmatpush1.msra.mxu0 0.0
    %4420 = vmatprep.subr.mxu0 0.0
    %4421 = vmatpush1.msra.mxu0 0.0
    %4422 = vmatprep.subr.mxu0 0.0
    %4423 = vmatpush1.msra.mxu0 0.0
    %4424 = vmatprep.subr.mxu0 0.0
    %4425 = vmatpush1.msra.mxu0 0.0
    %4426 = vmatprep.subr.mxu0 0.0
    %4427 = vmatpush1.msra.mxu0 0.0
    %4428 = vmatprep.subr.mxu0 0.0
    %4429 = vmatpush1.msra.mxu0 0.0
    %4430 = vmatprep.subr.mxu0 0.0
    %4431 = vmatpush1.msra.mxu0 0.0
    %4432 = vmatprep.subr.mxu0 0.0
    %4433 = vmatpush1.msra.mxu0 0.0
    %4434 = vmatprep.subr.mxu0 0.0
    %4435 = vmatpush1.msra.mxu0 0.0
    %4436 = vmatprep.subr.mxu0 0.0
    %4437 = vmatpush1.msra.mxu0 0.0
    %4438 = vmatprep.subr.mxu0 0.0
    %4439 = vmatpush1.msra.mxu0 0.0
    %4440 = vmatprep.subr.mxu0 0.0
    %4441 = vmatpush1.msra.mxu0 0.0
    %4442 = vmatprep.subr.mxu0 0.0
    %4443 = vmatpush1.msra.mxu0 0.0
    %4444 = vmatprep.subr.mxu0 0.0
    %4445 = vmatpush1.msra.mxu0 0.0
    %4446 = vmatprep.subr.mxu0 0.0
    %4447 = vmatpush1.msra.mxu0 0.0
    %4448 = vmatprep.subr.mxu0 0.0
    %4449 = vmatpush1.msra.mxu0 %v4411
    %4450 = vmatprep.subr.mxu0 0.0
    %4451 = vmatpush2.msra.mxu0 0.0
    %4452 = vmatprep.subr.mxu0 0.0
    %4453 = vmatpush2.msra.mxu0 0.0
    %4454 = vmatprep.subr.mxu0 0.0
    %4455 = vmatpush2.msra.mxu0 0.0
    %4456 = vmatprep.subr.mxu0 0.0
    %4457 = vmatpush2.msra.mxu0 0.0
    %4458 = vmatprep.subr.mxu0 0.0
    %4459 = vmatpush2.msra.mxu0 0.0
    %4460 = vmatprep.subr.mxu0 0.0
    %4461 = vmatpush2.msra.mxu0 0.0
    %4462 = vmatprep.subr.mxu0 0.0
    %4463 = vmatpush2.msra.mxu0 0.0
    %4464 = vmatprep.subr.mxu0 0.0
    %4465 = vmatpush2.msra.mxu0 0.0
    %4466 = vmatprep.subr.mxu0 0.0
    %4467 = vmatpush2.msra.mxu0 0.0
    %4468 = vmatprep.subr.mxu0 0.0
    %4469 = vmatpush2.msra.mxu0 0.0
    %4470 = vmatprep.subr.mxu0 0.0
    %4471 = vmatpush2.msra.mxu0 0.0
    %4472 = vmatprep.subr.mxu0 0.0
    %4473 = vmatpush2.msra.mxu0 0.0
    %4474 = vmatprep.subr.mxu0 0.0
    %4475 = vmatpush2.msra.mxu0 0.0
    %4476 = vmatprep.subr.mxu0 0.0
    %4477 = vmatpush2.msra.mxu0 0.0
    %4478 = vmatprep.subr.mxu0 0.0
    %4479 = vmatpush2.msra.mxu0 0.0
    %4480 = vmatprep.subr.mxu0 0.0
    %4481 = vmatpush2.msra.mxu0 0.0
    %4482 = vmatprep.mubr.f32.mxu0 0.0
    %4483 = vmatmul.mubr.f32.gmra.mxu0 %v4413
    %v4484 = vpop.f32.mrf.mxu0
    %v4485 = vadd.f32 0.0, %v4484
    %v4486 = vpop.f32.mrf.mxu0
    %4487 = vmatprep.mubr.f32.mxu0 0.0
    %4488 = vmatmul.mubr.f32.gmra.mxu0 %v4416
    %v4489 = vpop.f32.mrf.mxu0
    %v4490 = vadd.f32 0.0, %v4489
    %v4491 = vpop.f32.mrf.mxu0
    %4492 = vdwg.mxu0
    %v4493 = vadd.f32 %v4301, %v4485
    %v4494 = vadd.f32 %v4302, %v4490
    %4495 = vxpose.xlu0.b32.start [1/16] %v2199, 128
    %4496 = vxpose.xlu0.b32.cont [2/16] %v2200, 128
    %4497 = vxpose.xlu0.b32.cont [3/16] %v2201, 128
    %4498 = vxpose.xlu0.b32.cont [4/16] %v2202, 128
    %4499 = vxpose.xlu0.b32.cont [5/16] %v2203, 128
    %4500 = vxpose.xlu0.b32.cont [6/16] %v2204, 128
    %4501 = vxpose.xlu0.b32.cont [7/16] %v2205, 128
    %4502 = vxpose.xlu0.b32.cont [8/16] %v2206, 128
    %4503 = vxpose.xlu0.b32.cont [9/16] %v2207, 128
    %4504 = vxpose.xlu0.b32.cont [10/16] %v2208, 128
    %4505 = vxpose.xlu0.b32.cont [11/16] %v2209, 128
    %4506 = vxpose.xlu0.b32.cont [12/16] %v2210, 128
    %4507 = vxpose.xlu0.b32.cont [13/16] %v2211, 128
    %4508 = vxpose.xlu0.b32.cont [14/16] %v2212, 128
    %4509 = vxpose.xlu0.b32.cont [15/16] %v2213, 128
    %4510 = vxpose.xlu0.b32.end [16/16] %v2214, 128
    %v4511 = vpop.trf.xlu0
    %v4512 = vpop.trf.xlu0
    %v4513 = vpop.trf.xlu0
    %v4514 = vpop.trf.xlu0
    %v4515 = vpop.trf.xlu0
    %v4516 = vpop.trf.xlu0
    %v4517 = vpop.trf.xlu0
    %v4518 = vpop.trf.xlu0
    %v4519 = vpop.trf.xlu0
    %v4520 = vpop.trf.xlu0
    %v4521 = vpop.trf.xlu0
    %v4522 = vpop.trf.xlu0
    %v4523 = vpop.trf.xlu0
    %v4524 = vpop.trf.xlu0
    %v4525 = vpop.trf.xlu0
    %v4526 = vpop.trf.xlu0
    %4527 = vmatprep.subr.mxu0 0.0
    %4528 = vmatpush1.msra.mxu0 %v3334
    %4529 = vmatprep.subr.mxu0 0.0
    %4530 = vmatpush1.msra.mxu0 %v3329
    %4531 = vmatprep.subr.mxu0 0.0
    %4532 = vmatpush1.msra.mxu0 %v3324
    %4533 = vmatprep.subr.mxu0 0.0
    %4534 = vmatpush1.msra.mxu0 %v3319
    %4535 = vmatprep.subr.mxu0 0.0
    %4536 = vmatpush1.msra.mxu0 %v3314
    %4537 = vmatprep.subr.mxu0 0.0
    %4538 = vmatpush1.msra.mxu0 %v3309
    %4539 = vmatprep.subr.mxu0 0.0
    %4540 = vmatpush1.msra.mxu0 %v3304
    %4541 = vmatprep.subr.mxu0 0.0
    %4542 = vmatpush1.msra.mxu0 %v3299
    %4543 = vmatprep.subr.mxu0 0.0
    %4544 = vmatpush1.msra.mxu0 %v3294
    %4545 = vmatprep.subr.mxu0 0.0
    %4546 = vmatpush1.msra.mxu0 %v3289
    %4547 = vmatprep.subr.mxu0 0.0
    %4548 = vmatpush1.msra.mxu0 %v3284
    %4549 = vmatprep.subr.mxu0 0.0
    %4550 = vmatpush1.msra.mxu0 %v3279
    %4551 = vmatprep.subr.mxu0 0.0
    %4552 = vmatpush1.msra.mxu0 %v3274
    %4553 = vmatprep.subr.mxu0 0.0
    %4554 = vmatpush1.msra.mxu0 %v3269
    %4555 = vmatprep.subr.mxu0 0.0
    %4556 = vmatpush1.msra.mxu0 %v3264
    %4557 = vmatprep.subr.mxu0 0.0
    %4558 = vmatpush1.msra.mxu0 %v3259
    %4559 = vmatprep.subr.mxu0 0.0
    %4560 = vmatpush2.msra.mxu0 0.0
    %4561 = vmatprep.subr.mxu0 0.0
    %4562 = vmatpush2.msra.mxu0 0.0
    %4563 = vmatprep.subr.mxu0 0.0
    %4564 = vmatpush2.msra.mxu0 0.0
    %4565 = vmatprep.subr.mxu0 0.0
    %4566 = vmatpush2.msra.mxu0 0.0
    %4567 = vmatprep.subr.mxu0 0.0
    %4568 = vmatpush2.msra.mxu0 0.0
    %4569 = vmatprep.subr.mxu0 0.0
    %4570 = vmatpush2.msra.mxu0 0.0
    %4571 = vmatprep.subr.mxu0 0.0
    %4572 = vmatpush2.msra.mxu0 0.0
    %4573 = vmatprep.subr.mxu0 0.0
    %4574 = vmatpush2.msra.mxu0 0.0
    %4575 = vmatprep.subr.mxu0 0.0
    %4576 = vmatpush2.msra.mxu0 0.0
    %4577 = vmatprep.subr.mxu0 0.0
    %4578 = vmatpush2.msra.mxu0 0.0
    %4579 = vmatprep.subr.mxu0 0.0
    %4580 = vmatpush2.msra.mxu0 0.0
    %4581 = vmatprep.subr.mxu0 0.0
    %4582 = vmatpush2.msra.mxu0 0.0
    %4583 = vmatprep.subr.mxu0 0.0
    %4584 = vmatpush2.msra.mxu0 0.0
    %4585 = vmatprep.subr.mxu0 0.0
    %4586 = vmatpush2.msra.mxu0 0.0
    %4587 = vmatprep.subr.mxu0 0.0
    %4588 = vmatpush2.msra.mxu0 0.0
    %4589 = vmatprep.subr.mxu0 0.0
    %4590 = vmatpush2.msra.mxu0 0.0
    %4591 = vmatprep.mubr.f32.mxu0 0.0
    %4592 = vmatmul.mubr.f32.gmra.mxu0 %v4511
    %v4593 = vpop.f32.mrf.mxu0
    %v4594 = vadd.f32 0.0, %v4593
    %v4595 = vpop.f32.mrf.mxu0
    %4596 = vmatprep.mubr.f32.mxu0 0.0
    %4597 = vmatmul.mubr.f32.gmra.mxu0 %v4512
    %v4598 = vpop.f32.mrf.mxu0
    %v4599 = vadd.f32 0.0, %v4598
    %v4600 = vpop.f32.mrf.mxu0
    %4601 = vdwg.mxu0
    %s4602 = scalar_lea.vmem %s8, 48
    %v4603 = vld [vmem:[%s4602] sm:$0xff]
    %v4605 = vsel %vm2790, %v4594, 0
    %v4608 = vsel %vm2790, %v4599, 0
    %4610 = vmatprep.subr.mxu0 0.0
    %4611 = vmatpush1.msra.mxu0 0.0
    %4612 = vmatprep.subr.mxu0 0.0
    %4613 = vmatpush1.msra.mxu0 0.0
    %4614 = vmatprep.subr.mxu0 0.0
    %4615 = vmatpush1.msra.mxu0 0.0
    %4616 = vmatprep.subr.mxu0 0.0
    %4617 = vmatpush1.msra.mxu0 0.0
    %4618 = vmatprep.subr.mxu0 0.0
    %4619 = vmatpush1.msra.mxu0 0.0
    %4620 = vmatprep.subr.mxu0 0.0
    %4621 = vmatpush1.msra.mxu0 0.0
    %4622 = vmatprep.subr.mxu0 0.0
    %4623 = vmatpush1.msra.mxu0 0.0
    %4624 = vmatprep.subr.mxu0 0.0
    %4625 = vmatpush1.msra.mxu0 0.0
    %4626 = vmatprep.subr.mxu0 0.0
    %4627 = vmatpush1.msra.mxu0 0.0
    %4628 = vmatprep.subr.mxu0 0.0
    %4629 = vmatpush1.msra.mxu0 0.0
    %4630 = vmatprep.subr.mxu0 0.0
    %4631 = vmatpush1.msra.mxu0 0.0
    %4632 = vmatprep.subr.mxu0 0.0
    %4633 = vmatpush1.msra.mxu0 0.0
    %4634 = vmatprep.subr.mxu0 0.0
    %4635 = vmatpush1.msra.mxu0 0.0
    %4636 = vmatprep.subr.mxu0 0.0
    %4637 = vmatpush1.msra.mxu0 0.0
    %4638 = vmatprep.subr.mxu0 0.0
    %4639 = vmatpush1.msra.mxu0 0.0
    %4640 = vmatprep.subr.mxu0 0.0
    %4641 = vmatpush1.msra.mxu0 %v4603
    %4642 = vmatprep.subr.mxu0 0.0
    %4643 = vmatpush2.msra.mxu0 0.0
    %4644 = vmatprep.subr.mxu0 0.0
    %4645 = vmatpush2.msra.mxu0 0.0
    %4646 = vmatprep.subr.mxu0 0.0
    %4647 = vmatpush2.msra.mxu0 0.0
    %4648 = vmatprep.subr.mxu0 0.0
    %4649 = vmatpush2.msra.mxu0 0.0
    %4650 = vmatprep.subr.mxu0 0.0
    %4651 = vmatpush2.msra.mxu0 0.0
    %4652 = vmatprep.subr.mxu0 0.0
    %4653 = vmatpush2.msra.mxu0 0.0
    %4654 = vmatprep.subr.mxu0 0.0
    %4655 = vmatpush2.msra.mxu0 0.0
    %4656 = vmatprep.subr.mxu0 0.0
    %4657 = vmatpush2.msra.mxu0 0.0
    %4658 = vmatprep.subr.mxu0 0.0
    %4659 = vmatpush2.msra.mxu0 0.0
    %4660 = vmatprep.subr.mxu0 0.0
    %4661 = vmatpush2.msra.mxu0 0.0
    %4662 = vmatprep.subr.mxu0 0.0
    %4663 = vmatpush2.msra.mxu0 0.0
    %4664 = vmatprep.subr.mxu0 0.0
    %4665 = vmatpush2.msra.mxu0 0.0
    %4666 = vmatprep.subr.mxu0 0.0
    %4667 = vmatpush2.msra.mxu0 0.0
    %4668 = vmatprep.subr.mxu0 0.0
    %4669 = vmatpush2.msra.mxu0 0.0
    %4670 = vmatprep.subr.mxu0 0.0
    %4671 = vmatpush2.msra.mxu0 0.0
    %4672 = vmatprep.subr.mxu0 0.0
    %4673 = vmatpush2.msra.mxu0 0.0
    %4674 = vmatprep.mubr.f32.mxu0 0.0
    %4675 = vmatmul.mubr.f32.gmra.mxu0 %v4605
    %v4676 = vpop.f32.mrf.mxu0
    %v4677 = vadd.f32 0.0, %v4676
    %v4678 = vpop.f32.mrf.mxu0
    %4679 = vmatprep.mubr.f32.mxu0 0.0
    %4680 = vmatmul.mubr.f32.gmra.mxu0 %v4608
    %v4681 = vpop.f32.mrf.mxu0
    %v4682 = vadd.f32 0.0, %v4681
    %v4683 = vpop.f32.mrf.mxu0
    %4684 = vdwg.mxu0
    %v4685 = vadd.f32 %v4493, %v4677
    %v4686 = vadd.f32 %v4494, %v4682
    %4687 = vxpose.xlu0.b32.start [1/16] %v2517, 128
    %4688 = vxpose.xlu0.b32.cont [2/16] %v2518, 128
    %4689 = vxpose.xlu0.b32.cont [3/16] %v2519, 128
    %4690 = vxpose.xlu0.b32.cont [4/16] %v2520, 128
    %4691 = vxpose.xlu0.b32.cont [5/16] %v2521, 128
    %4692 = vxpose.xlu0.b32.cont [6/16] %v2522, 128
    %4693 = vxpose.xlu0.b32.cont [7/16] %v2523, 128
    %4694 = vxpose.xlu0.b32.cont [8/16] %v2524, 128
    %4695 = vxpose.xlu0.b32.cont [9/16] %v2525, 128
    %4696 = vxpose.xlu0.b32.cont [10/16] %v2526, 128
    %4697 = vxpose.xlu0.b32.cont [11/16] %v2527, 128
    %4698 = vxpose.xlu0.b32.cont [12/16] %v2528, 128
    %4699 = vxpose.xlu0.b32.cont [13/16] %v2529, 128
    %4700 = vxpose.xlu0.b32.cont [14/16] %v2530, 128
    %4701 = vxpose.xlu0.b32.cont [15/16] %v2531, 128
    %4702 = vxpose.xlu0.b32.end [16/16] %v2532, 128
    %v4703 = vpop.trf.xlu0
    %v4704 = vpop.trf.xlu0
    %v4705 = vpop.trf.xlu0
    %v4706 = vpop.trf.xlu0
    %v4707 = vpop.trf.xlu0
    %v4708 = vpop.trf.xlu0
    %v4709 = vpop.trf.xlu0
    %v4710 = vpop.trf.xlu0
    %v4711 = vpop.trf.xlu0
    %v4712 = vpop.trf.xlu0
    %v4713 = vpop.trf.xlu0
    %v4714 = vpop.trf.xlu0
    %v4715 = vpop.trf.xlu0
    %v4716 = vpop.trf.xlu0
    %v4717 = vpop.trf.xlu0
    %v4718 = vpop.trf.xlu0
    %4719 = vmatprep.subr.mxu0 0.0
    %4720 = vmatpush1.msra.mxu0 %v3334
    %4721 = vmatprep.subr.mxu0 0.0
    %4722 = vmatpush1.msra.mxu0 %v3329
    %4723 = vmatprep.subr.mxu0 0.0
    %4724 = vmatpush1.msra.mxu0 %v3324
    %4725 = vmatprep.subr.mxu0 0.0
    %4726 = vmatpush1.msra.mxu0 %v3319
    %4727 = vmatprep.subr.mxu0 0.0
    %4728 = vmatpush1.msra.mxu0 %v3314
    %4729 = vmatprep.subr.mxu0 0.0
    %4730 = vmatpush1.msra.mxu0 %v3309
    %4731 = vmatprep.subr.mxu0 0.0
    %4732 = vmatpush1.msra.mxu0 %v3304
    %4733 = vmatprep.subr.mxu0 0.0
    %4734 = vmatpush1.msra.mxu0 %v3299
    %4735 = vmatprep.subr.mxu0 0.0
    %4736 = vmatpush1.msra.mxu0 %v3294
    %4737 = vmatprep.subr.mxu0 0.0
    %4738 = vmatpush1.msra.mxu0 %v3289
    %4739 = vmatprep.subr.mxu0 0.0
    %4740 = vmatpush1.msra.mxu0 %v3284
    %4741 = vmatprep.subr.mxu0 0.0
    %4742 = vmatpush1.msra.mxu0 %v3279
    %4743 = vmatprep.subr.mxu0 0.0
    %4744 = vmatpush1.msra.mxu0 %v3274
    %4745 = vmatprep.subr.mxu0 0.0
    %4746 = vmatpush1.msra.mxu0 %v3269
    %4747 = vmatprep.subr.mxu0 0.0
    %4748 = vmatpush1.msra.mxu0 %v3264
    %4749 = vmatprep.subr.mxu0 0.0
    %4750 = vmatpush1.msra.mxu0 %v3259
    %4751 = vmatprep.subr.mxu0 0.0
    %4752 = vmatpush2.msra.mxu0 0.0
    %4753 = vmatprep.subr.mxu0 0.0
    %4754 = vmatpush2.msra.mxu0 0.0
    %4755 = vmatprep.subr.mxu0 0.0
    %4756 = vmatpush2.msra.mxu0 0.0
    %4757 = vmatprep.subr.mxu0 0.0
    %4758 = vmatpush2.msra.mxu0 0.0
    %4759 = vmatprep.subr.mxu0 0.0
    %4760 = vmatpush2.msra.mxu0 0.0
    %4761 = vmatprep.subr.mxu0 0.0
    %4762 = vmatpush2.msra.mxu0 0.0
    %4763 = vmatprep.subr.mxu0 0.0
    %4764 = vmatpush2.msra.mxu0 0.0
    %4765 = vmatprep.subr.mxu0 0.0
    %4766 = vmatpush2.msra.mxu0 0.0
    %4767 = vmatprep.subr.mxu0 0.0
    %4768 = vmatpush2.msra.mxu0 0.0
    %4769 = vmatprep.subr.mxu0 0.0
    %4770 = vmatpush2.msra.mxu0 0.0
    %4771 = vmatprep.subr.mxu0 0.0
    %4772 = vmatpush2.msra.mxu0 0.0
    %4773 = vmatprep.subr.mxu0 0.0
    %4774 = vmatpush2.msra.mxu0 0.0
    %4775 = vmatprep.subr.mxu0 0.0
    %4776 = vmatpush2.msra.mxu0 0.0
    %4777 = vmatprep.subr.mxu0 0.0
    %4778 = vmatpush2.msra.mxu0 0.0
    %4779 = vmatprep.subr.mxu0 0.0
    %4780 = vmatpush2.msra.mxu0 0.0
    %4781 = vmatprep.subr.mxu0 0.0
    %4782 = vmatpush2.msra.mxu0 0.0
    %4783 = vmatprep.mubr.f32.mxu0 0.0
    %4784 = vmatmul.mubr.f32.gmra.mxu0 %v4703
    %v4785 = vpop.f32.mrf.mxu0
    %v4786 = vadd.f32 0.0, %v4785
    %v4787 = vpop.f32.mrf.mxu0
    %4788 = vmatprep.mubr.f32.mxu0 0.0
    %4789 = vmatmul.mubr.f32.gmra.mxu0 %v4704
    %v4790 = vpop.f32.mrf.mxu0
    %v4791 = vadd.f32 0.0, %v4790
    %v4792 = vpop.f32.mrf.mxu0
    %4793 = vdwg.mxu0
    %s4794 = scalar_lea.vmem %s8, 56
    %v4795 = vld [vmem:[%s4794] sm:$0xff]
    %v4797 = vsel %vm2790, %v4786, 0
    %v4800 = vsel %vm2790, %v4791, 0
    %4802 = vmatprep.subr.mxu0 0.0
    %4803 = vmatpush1.msra.mxu0 0.0
    %4804 = vmatprep.subr.mxu0 0.0
    %4805 = vmatpush1.msra.mxu0 0.0
    %4806 = vmatprep.subr.mxu0 0.0
    %4807 = vmatpush1.msra.mxu0 0.0
    %4808 = vmatprep.subr.mxu0 0.0
    %4809 = vmatpush1.msra.mxu0 0.0
    %4810 = vmatprep.subr.mxu0 0.0
    %4811 = vmatpush1.msra.mxu0 0.0
    %4812 = vmatprep.subr.mxu0 0.0
    %4813 = vmatpush1.msra.mxu0 0.0
    %4814 = vmatprep.subr.mxu0 0.0
    %4815 = vmatpush1.msra.mxu0 0.0
    %4816 = vmatprep.subr.mxu0 0.0
    %4817 = vmatpush1.msra.mxu0 0.0
    %4818 = vmatprep.subr.mxu0 0.0
    %4819 = vmatpush1.msra.mxu0 0.0
    %4820 = vmatprep.subr.mxu0 0.0
    %4821 = vmatpush1.msra.mxu0 0.0
    %4822 = vmatprep.subr.mxu0 0.0
    %4823 = vmatpush1.msra.mxu0 0.0
    %4824 = vmatprep.subr.mxu0 0.0
    %4825 = vmatpush1.msra.mxu0 0.0
    %4826 = vmatprep.subr.mxu0 0.0
    %4827 = vmatpush1.msra.mxu0 0.0
    %4828 = vmatprep.subr.mxu0 0.0
    %4829 = vmatpush1.msra.mxu0 0.0
    %4830 = vmatprep.subr.mxu0 0.0
    %4831 = vmatpush1.msra.mxu0 0.0
    %4832 = vmatprep.subr.mxu0 0.0
    %4833 = vmatpush1.msra.mxu0 %v4795
    %4834 = vmatprep.subr.mxu0 0.0
    %4835 = vmatpush2.msra.mxu0 0.0
    %4836 = vmatprep.subr.mxu0 0.0
    %4837 = vmatpush2.msra.mxu0 0.0
    %4838 = vmatprep.subr.mxu0 0.0
    %4839 = vmatpush2.msra.mxu0 0.0
    %4840 = vmatprep.subr.mxu0 0.0
    %4841 = vmatpush2.msra.mxu0 0.0
    %4842 = vmatprep.subr.mxu0 0.0
    %4843 = vmatpush2.msra.mxu0 0.0
    %4844 = vmatprep.subr.mxu0 0.0
    %4845 = vmatpush2.msra.mxu0 0.0
    %4846 = vmatprep.subr.mxu0 0.0
    %4847 = vmatpush2.msra.mxu0 0.0
    %4848 = vmatprep.subr.mxu0 0.0
    %4849 = vmatpush2.msra.mxu0 0.0
    %4850 = vmatprep.subr.mxu0 0.0
    %4851 = vmatpush2.msra.mxu0 0.0
    %4852 = vmatprep.subr.mxu0 0.0
    %4853 = vmatpush2.msra.mxu0 0.0
    %4854 = vmatprep.subr.mxu0 0.0
    %4855 = vmatpush2.msra.mxu0 0.0
    %4856 = vmatprep.subr.mxu0 0.0
    %4857 = vmatpush2.msra.mxu0 0.0
    %4858 = vmatprep.subr.mxu0 0.0
    %4859 = vmatpush2.msra.mxu0 0.0
    %4860 = vmatprep.subr.mxu0 0.0
    %4861 = vmatpush2.msra.mxu0 0.0
    %4862 = vmatprep.subr.mxu0 0.0
    %4863 = vmatpush2.msra.mxu0 0.0
    %4864 = vmatprep.subr.mxu0 0.0
    %4865 = vmatpush2.msra.mxu0 0.0
    %4866 = vmatprep.mubr.f32.mxu0 0.0
    %4867 = vmatmul.mubr.f32.gmra.mxu0 %v4797
    %v4868 = vpop.f32.mrf.mxu0
    %v4869 = vadd.f32 0.0, %v4868
    %v4870 = vpop.f32.mrf.mxu0
    %4871 = vmatprep.mubr.f32.mxu0 0.0
    %4872 = vmatmul.mubr.f32.gmra.mxu0 %v4800
    %v4873 = vpop.f32.mrf.mxu0
    %v4874 = vadd.f32 0.0, %v4873
    %v4875 = vpop.f32.mrf.mxu0
    %4876 = vdwg.mxu0
    %v4877 = vadd.f32 %v4685, %v4869
    %v4878 = vadd.f32 %v4686, %v4874
    %v4879 = vadd.f32 %v205, %v4877
    %v4880 = vadd.f32 %v206, %v4878
    %v4881 = vsel %vm240, %v4879, 0.0
    %4882 = vadd.xlane.f32.xlu0 %v4881
    %v4883 = vpop.xlane.xlu0 %4882
    %v4884 = vsel %vm240, %v4880, 0.0
    %4885 = vadd.xlane.f32.xlu0 %v4884
    %v4886 = vpop.xlane.xlu0 %4885
    %v4887 = vrcp.pop 64.0
    %v4888 = vmul.f32 %v4883, %v4887
    %v4889 = vmul.f32 %v4886, %v4887
    %v4890 = vsub.f32 %v4879, %v4888
    %v4891 = vsub.f32 %v4880, %v4889
    %v4892 = vmul.f32 %v4890, %v4890
    %v4893 = vmul.f32 %v4891, %v4891
    %v4894 = vsel %vm240, %v4892, 0.0
    %4895 = vadd.xlane.f32.xlu0 %v4894
    %v4896 = vpop.xlane.xlu0 %4895
    %v4897 = vsel %vm240, %v4893, 0.0
    %4898 = vadd.xlane.f32.xlu0 %v4897
    %v4899 = vpop.xlane.xlu0 %4898
    %v4900 = vmul.f32 %v4896, %v4887
    %v4901 = vmul.f32 %v4899, %v4887
    %v4902 = vadd.f32 %v4900, 1e-05
    %v4903 = vadd.f32 %v4901, 1e-05
    %v4904 = vrsqrt.pop %v4902
    %v4905 = vrsqrt.pop %v4903
    %v4906 = vmul.f32 %v4890, %v4904
    %v4907 = vmul.f32 %v4891, %v4905
    %v4909 = vlaneseq
    %v4910 = vshrl.u32 %v4909, 7
    %v4911 = vsub.s32 0, %v4910
    %v4912 = vrot.slane %v223, %v4911
    %v4914 = vmul.f32 %v4906, %v4912
    %v4915 = vmul.f32 %v4907, %v4912
    %v4917 = vlaneseq
    %v4918 = vshrl.u32 %v4917, 7
    %v4919 = vsub.s32 0, %v4918
    %v4920 = vrot.slane %v224, %v4919
    %v4922 = vadd.f32 %v4914, %v4920
    %v4923 = vadd.f32 %v4915, %v4920
    %v4924 = vld [vmem:[%s12] sm:$0xff]
    %v4925 = vld [vmem:[%s12 + $0x8] sm:$0xff]
    %v4926 = vld [vmem:[%s12 + $0x10] sm:$0xff]
    %v4927 = vld [vmem:[%s12 + $0x18] sm:$0xff]
    %v4928 = vld [vmem:[%s12 + $0x20] sm:$0xff]
    %v4929 = vld [vmem:[%s12 + $0x28] sm:$0xff]
    %v4930 = vld [vmem:[%s12 + $0x30] sm:$0xff]
    %v4931 = vld [vmem:[%s12 + $0x38] sm:$0xff]
    %v4932 = vld [vmem:[%s13] sm:$0x1]
    %v4934 = vlaneseq
    %v4935 = vshrl.u32 %v4934, 7
    %v4936 = vsub.s32 0, %v4935
    %v4937 = vrot.slane %v4932, %v4936
    %v4940 = vsel %vm240, %v4922, 0
    %v4943 = vsel %vm240, %v4923, 0
    %4945 = vmatprep.subr.mxu0 0.0
    %4946 = vmatpush1.msra.mxu0 0.0
    %4947 = vmatprep.subr.mxu0 0.0
    %4948 = vmatpush1.msra.mxu0 0.0
    %4949 = vmatprep.subr.mxu0 0.0
    %4950 = vmatpush1.msra.mxu0 0.0
    %4951 = vmatprep.subr.mxu0 0.0
    %4952 = vmatpush1.msra.mxu0 0.0
    %4953 = vmatprep.subr.mxu0 0.0
    %4954 = vmatpush1.msra.mxu0 0.0
    %4955 = vmatprep.subr.mxu0 0.0
    %4956 = vmatpush1.msra.mxu0 0.0
    %4957 = vmatprep.subr.mxu0 0.0
    %4958 = vmatpush1.msra.mxu0 0.0
    %4959 = vmatprep.subr.mxu0 0.0
    %4960 = vmatpush1.msra.mxu0 0.0
    %4961 = vmatprep.subr.mxu0 0.0
    %4962 = vmatpush1.msra.mxu0 %v4931
    %4963 = vmatprep.subr.mxu0 0.0
    %4964 = vmatpush1.msra.mxu0 %v4930
    %4965 = vmatprep.subr.mxu0 0.0
    %4966 = vmatpush1.msra.mxu0 %v4929
    %4967 = vmatprep.subr.mxu0 0.0
    %4968 = vmatpush1.msra.mxu0 %v4928
    %4969 = vmatprep.subr.mxu0 0.0
    %4970 = vmatpush1.msra.mxu0 %v4927
    %4971 = vmatprep.subr.mxu0 0.0
    %4972 = vmatpush1.msra.mxu0 %v4926
    %4973 = vmatprep.subr.mxu0 0.0
    %4974 = vmatpush1.msra.mxu0 %v4925
    %4975 = vmatprep.subr.mxu0 0.0
    %4976 = vmatpush1.msra.mxu0 %v4924
    %4977 = vmatprep.subr.mxu0 0.0
    %4978 = vmatpush2.msra.mxu0 0.0
    %4979 = vmatprep.subr.mxu0 0.0
    %4980 = vmatpush2.msra.mxu0 0.0
    %4981 = vmatprep.subr.mxu0 0.0
    %4982 = vmatpush2.msra.mxu0 0.0
    %4983 = vmatprep.subr.mxu0 0.0
    %4984 = vmatpush2.msra.mxu0 0.0
    %4985 = vmatprep.subr.mxu0 0.0
    %4986 = vmatpush2.msra.mxu0 0.0
    %4987 = vmatprep.subr.mxu0 0.0
    %4988 = vmatpush2.msra.mxu0 0.0
    %4989 = vmatprep.subr.mxu0 0.0
    %4990 = vmatpush2.msra.mxu0 0.0
    %4991 = vmatprep.subr.mxu0 0.0
    %4992 = vmatpush2.msra.mxu0 0.0
    %4993 = vmatprep.subr.mxu0 0.0
    %4994 = vmatpush2.msra.mxu0 0.0
    %4995 = vmatprep.subr.mxu0 0.0
    %4996 = vmatpush2.msra.mxu0 0.0
    %4997 = vmatprep.subr.mxu0 0.0
    %4998 = vmatpush2.msra.mxu0 0.0
    %4999 = vmatprep.subr.mxu0 0.0
    %5000 = vmatpush2.msra.mxu0 0.0
    %5001 = vmatprep.subr.mxu0 0.0
    %5002 = vmatpush2.msra.mxu0 0.0
    %5003 = vmatprep.subr.mxu0 0.0
    %5004 = vmatpush2.msra.mxu0 0.0
    %5005 = vmatprep.subr.mxu0 0.0
    %5006 = vmatpush2.msra.mxu0 0.0
    %5007 = vmatprep.subr.mxu0 0.0
    %5008 = vmatpush2.msra.mxu0 0.0
    %5009 = vmatprep.mubr.f32.mxu0 0.0
    %5010 = vmatmul.mubr.f32.gmra.mxu0 %v4940
    %v5011 = vpop.f32.mrf.mxu0
    %v5012 = vadd.f32 %v4937, %v5011
    %v5013 = vpop.f32.mrf.mxu0
    %5014 = vmatprep.mubr.f32.mxu0 0.0
    %5015 = vmatmul.mubr.f32.gmra.mxu0 %v4943
    %v5016 = vpop.f32.mrf.mxu0
    %v5017 = vadd.f32 %v4937, %v5016
    %v5018 = vpop.f32.mrf.mxu0
    %5019 = vdwg.mxu0
    %v5020 = vmax.f32 %v5012, 0.0
    %v5021 = vmax.f32 %v5017, 0.0
    %v5022 = vld [vmem:[%s14] sm:$0xff]
    %v5023 = vld [vmem:[%s14 + $0x8] sm:$0xff]
    %v5024 = vld [vmem:[%s14 + $0x10] sm:$0xff]
    %v5025 = vld [vmem:[%s14 + $0x18] sm:$0xff]
    %v5026 = vld [vmem:[%s14 + $0x20] sm:$0xff]
    %v5027 = vld [vmem:[%s14 + $0x28] sm:$0xff]
    %v5028 = vld [vmem:[%s14 + $0x30] sm:$0xff]
    %v5029 = vld [vmem:[%s14 + $0x38] sm:$0xff]
    %v5030 = vld [vmem:[%s14 + $0x40] sm:$0xff]
    %v5031 = vld [vmem:[%s14 + $0x48] sm:$0xff]
    %v5032 = vld [vmem:[%s14 + $0x50] sm:$0xff]
    %v5033 = vld [vmem:[%s14 + $0x58] sm:$0xff]
    %v5034 = vld [vmem:[%s14 + $0x60] sm:$0xff]
    %v5035 = vld [vmem:[%s14 + $0x68] sm:$0xff]
    %v5036 = vld [vmem:[%s14 + $0x70] sm:$0xff]
    %v5037 = vld [vmem:[%s14 + $0x78] sm:$0xff]
    %v5038 = vld [vmem:[%s15] sm:$0x1]
    %v5040 = vlaneseq
    %v5041 = vshrl.u32 %v5040, 7
    %v5042 = vsub.s32 0, %v5041
    %v5043 = vrot.slane %v5038, %v5042
    %5045 = vmatprep.subr.mxu0 0.0
    %5046 = vmatpush1.msra.mxu0 %v5037
    %5047 = vmatprep.subr.mxu0 0.0
    %5048 = vmatpush1.msra.mxu0 %v5036
    %5049 = vmatprep.subr.mxu0 0.0
    %5050 = vmatpush1.msra.mxu0 %v5035
    %5051 = vmatprep.subr.mxu0 0.0
    %5052 = vmatpush1.msra.mxu0 %v5034
    %5053 = vmatprep.subr.mxu0 0.0
    %5054 = vmatpush1.msra.mxu0 %v5033
    %5055 = vmatprep.subr.mxu0 0.0
    %5056 = vmatpush1.msra.mxu0 %v5032
    %5057 = vmatprep.subr.mxu0 0.0
    %5058 = vmatpush1.msra.mxu0 %v5031
    %5059 = vmatprep.subr.mxu0 0.0
    %5060 = vmatpush1.msra.mxu0 %v5030
    %5061 = vmatprep.subr.mxu0 0.0
    %5062 = vmatpush1.msra.mxu0 %v5029
    %5063 = vmatprep.subr.mxu0 0.0
    %5064 = vmatpush1.msra.mxu0 %v5028
    %5065 = vmatprep.subr.mxu0 0.0
    %5066 = vmatpush1.msra.mxu0 %v5027
    %5067 = vmatprep.subr.mxu0 0.0
    %5068 = vmatpush1.msra.mxu0 %v5026
    %5069 = vmatprep.subr.mxu0 0.0
    %5070 = vmatpush1.msra.mxu0 %v5025
    %5071 = vmatprep.subr.mxu0 0.0
    %5072 = vmatpush1.msra.mxu0 %v5024
    %5073 = vmatprep.subr.mxu0 0.0
    %5074 = vmatpush1.msra.mxu0 %v5023
    %5075 = vmatprep.subr.mxu0 0.0
    %5076 = vmatpush1.msra.mxu0 %v5022
    %5077 = vmatprep.subr.mxu0 0.0
    %5078 = vmatpush2.msra.mxu0 0.0
    %5079 = vmatprep.subr.mxu0 0.0
    %5080 = vmatpush2.msra.mxu0 0.0
    %5081 = vmatprep.subr.mxu0 0.0
    %5082 = vmatpush2.msra.mxu0 0.0
    %5083 = vmatprep.subr.mxu0 0.0
    %5084 = vmatpush2.msra.mxu0 0.0
    %5085 = vmatprep.subr.mxu0 0.0
    %5086 = vmatpush2.msra.mxu0 0.0
    %5087 = vmatprep.subr.mxu0 0.0
    %5088 = vmatpush2.msra.mxu0 0.0
    %5089 = vmatprep.subr.mxu0 0.0
    %5090 = vmatpush2.msra.mxu0 0.0
    %5091 = vmatprep.subr.mxu0 0.0
    %5092 = vmatpush2.msra.mxu0 0.0
    %5093 = vmatprep.subr.mxu0 0.0
    %5094 = vmatpush2.msra.mxu0 0.0
    %5095 = vmatprep.subr.mxu0 0.0
    %5096 = vmatpush2.msra.mxu0 0.0
    %5097 = vmatprep.subr.mxu0 0.0
    %5098 = vmatpush2.msra.mxu0 0.0
    %5099 = vmatprep.subr.mxu0 0.0
    %5100 = vmatpush2.msra.mxu0 0.0
    %5101 = vmatprep.subr.mxu0 0.0
    %5102 = vmatpush2.msra.mxu0 0.0
    %5103 = vmatprep.subr.mxu0 0.0
    %5104 = vmatpush2.msra.mxu0 0.0
    %5105 = vmatprep.subr.mxu0 0.0
    %5106 = vmatpush2.msra.mxu0 0.0
    %5107 = vmatprep.subr.mxu0 0.0
    %5108 = vmatpush2.msra.mxu0 0.0
    %5109 = vmatprep.mubr.f32.mxu0 0.0
    %5110 = vmatmul.mubr.f32.gmra.mxu0 %v5020
    %v5111 = vpop.f32.mrf.mxu0
    %v5112 = vadd.f32 %v5043, %v5111
    %v5113 = vpop.f32.mrf.mxu0
    %5114 = vmatprep.mubr.f32.mxu0 0.0
    %5115 = vmatmul.mubr.f32.gmra.mxu0 %v5021
    %v5116 = vpop.f32.mrf.mxu0
    %v5117 = vadd.f32 %v5043, %v5116
    %v5118 = vpop.f32.mrf.mxu0
    %5119 = vdwg.mxu0
    %v5120 = vadd.f32 %v4922, %v5112
    %v5121 = vadd.f32 %v4923, %v5117
    %v5122 = vsel %vm240, %v5120, 0.0
    %5123 = vadd.xlane.f32.xlu0 %v5122
    %v5124 = vpop.xlane.xlu0 %5123
    %v5125 = vsel %vm240, %v5121, 0.0
    %5126 = vadd.xlane.f32.xlu0 %v5125
    %v5127 = vpop.xlane.xlu0 %5126
    %v5128 = vmul.f32 %v5124, %v4887
    %v5129 = vmul.f32 %v5127, %v4887
    %v5130 = vsub.f32 %v5120, %v5128
    %v5131 = vsub.f32 %v5121, %v5129
    %v5132 = vmul.f32 %v5130, %v5130
    %v5133 = vmul.f32 %v5131, %v5131
    %v5134 = vsel %vm240, %v5132, 0.0
    %5135 = vadd.xlane.f32.xlu0 %v5134
    %v5136 = vpop.xlane.xlu0 %5135
    %v5137 = vsel %vm240, %v5133, 0.0
    %5138 = vadd.xlane.f32.xlu0 %v5137
    %v5139 = vpop.xlane.xlu0 %5138
    %v5140 = vmul.f32 %v5136, %v4887
    %v5141 = vmul.f32 %v5139, %v4887
    %v5142 = vadd.f32 %v5140, 1e-05
    %v5143 = vadd.f32 %v5141, 1e-05
    %v5144 = vrsqrt.pop %v5142
    %v5145 = vrsqrt.pop %v5143
    %v5146 = vmul.f32 %v5130, %v5144
    %v5147 = vmul.f32 %v5131, %v5145
    %v5148 = vmul.f32 %v5146, %v4912
    %v5149 = vmul.f32 %v5147, %v4912
    %v5150 = vadd.f32 %v5148, %v4920
    %v5151 = vadd.f32 %v5149, %v4920
    %v5153 = vsel %vm240, %v5150, 0
    %v5156 = vsel %vm240, %v5151, 0
    %5158 = vmatprep.subr.mxu0 0.0
    %5159 = vmatpush1.msra.mxu0 0.0
    %5160 = vmatprep.subr.mxu0 0.0
    %5161 = vmatpush1.msra.mxu0 0.0
    %5162 = vmatprep.subr.mxu0 0.0
    %5163 = vmatpush1.msra.mxu0 0.0
    %5164 = vmatprep.subr.mxu0 0.0
    %5165 = vmatpush1.msra.mxu0 0.0
    %5166 = vmatprep.subr.mxu0 0.0
    %5167 = vmatpush1.msra.mxu0 0.0
    %5168 = vmatprep.subr.mxu0 0.0
    %5169 = vmatpush1.msra.mxu0 0.0
    %5170 = vmatprep.subr.mxu0 0.0
    %5171 = vmatpush1.msra.mxu0 0.0
    %5172 = vmatprep.subr.mxu0 0.0
    %5173 = vmatpush1.msra.mxu0 0.0
    %5174 = vmatprep.subr.mxu0 0.0
    %5175 = vmatpush1.msra.mxu0 %v232
    %5176 = vmatprep.subr.mxu0 0.0
    %5177 = vmatpush1.msra.mxu0 %v231
    %5178 = vmatprep.subr.mxu0 0.0
    %5179 = vmatpush1.msra.mxu0 %v230
    %5180 = vmatprep.subr.mxu0 0.0
    %5181 = vmatpush1.msra.mxu0 %v229
    %5182 = vmatprep.subr.mxu0 0.0
    %5183 = vmatpush1.msra.mxu0 %v228
    %5184 = vmatprep.subr.mxu0 0.0
    %5185 = vmatpush1.msra.mxu0 %v227
    %5186 = vmatprep.subr.mxu0 0.0
    %5187 = vmatpush1.msra.mxu0 %v226
    %5188 = vmatprep.subr.mxu0 0.0
    %5189 = vmatpush1.msra.mxu0 %v225
    %5190 = vmatprep.subr.mxu0 0.0
    %5191 = vmatpush2.msra.mxu0 0.0
    %5192 = vmatprep.subr.mxu0 0.0
    %5193 = vmatpush2.msra.mxu0 0.0
    %5194 = vmatprep.subr.mxu0 0.0
    %5195 = vmatpush2.msra.mxu0 0.0
    %5196 = vmatprep.subr.mxu0 0.0
    %5197 = vmatpush2.msra.mxu0 0.0
    %5198 = vmatprep.subr.mxu0 0.0
    %5199 = vmatpush2.msra.mxu0 0.0
    %5200 = vmatprep.subr.mxu0 0.0
    %5201 = vmatpush2.msra.mxu0 0.0
    %5202 = vmatprep.subr.mxu0 0.0
    %5203 = vmatpush2.msra.mxu0 0.0
    %5204 = vmatprep.subr.mxu0 0.0
    %5205 = vmatpush2.msra.mxu0 0.0
    %5206 = vmatprep.subr.mxu0 0.0
    %5207 = vmatpush2.msra.mxu0 0.0
    %5208 = vmatprep.subr.mxu0 0.0
    %5209 = vmatpush2.msra.mxu0 0.0
    %5210 = vmatprep.subr.mxu0 0.0
    %5211 = vmatpush2.msra.mxu0 0.0
    %5212 = vmatprep.subr.mxu0 0.0
    %5213 = vmatpush2.msra.mxu0 0.0
    %5214 = vmatprep.subr.mxu0 0.0
    %5215 = vmatpush2.msra.mxu0 0.0
    %5216 = vmatprep.subr.mxu0 0.0
    %5217 = vmatpush2.msra.mxu0 0.0
    %5218 = vmatprep.subr.mxu0 0.0
    %5219 = vmatpush2.msra.mxu0 0.0
    %5220 = vmatprep.subr.mxu0 0.0
    %5221 = vmatpush2.msra.mxu0 0.0
    %5222 = vmatprep.mubr.f32.mxu0 0.0
    %5223 = vmatmul.mubr.f32.gmra.mxu0 %v5153
    %v5224 = vpop.f32.mrf.mxu0
    %v5225 = vadd.f32 %v238, %v5224
    %v5226 = vpop.f32.mrf.mxu0
    %5227 = vmatprep.mubr.f32.mxu0 0.0
    %5228 = vmatmul.mubr.f32.gmra.mxu0 %v5156
    %v5229 = vpop.f32.mrf.mxu0
    %v5230 = vadd.f32 %v238, %v5229
    %v5231 = vpop.f32.mrf.mxu0
    %5232 = vdwg.mxu0
    %5233 = vmatprep.subr.mxu0 0.0
    %5234 = vmatpush1.msra.mxu0 0.0
    %5235 = vmatprep.subr.mxu0 0.0
    %5236 = vmatpush1.msra.mxu0 0.0
    %5237 = vmatprep.subr.mxu0 0.0
    %5238 = vmatpush1.msra.mxu0 0.0
    %5239 = vmatprep.subr.mxu0 0.0
    %5240 = vmatpush1.msra.mxu0 0.0
    %5241 = vmatprep.subr.mxu0 0.0
    %5242 = vmatpush1.msra.mxu0 0.0
    %5243 = vmatprep.subr.mxu0 0.0
    %5244 = vmatpush1.msra.mxu0 0.0
    %5245 = vmatprep.subr.mxu0 0.0
    %5246 = vmatpush1.msra.mxu0 0.0
    %5247 = vmatprep.subr.mxu0 0.0
    %5248 = vmatpush1.msra.mxu0 0.0
    %5249 = vmatprep.subr.mxu0 0.0
    %5250 = vmatpush1.msra.mxu0 %v346
    %5251 = vmatprep.subr.mxu0 0.0
    %5252 = vmatpush1.msra.mxu0 %v345
    %5253 = vmatprep.subr.mxu0 0.0
    %5254 = vmatpush1.msra.mxu0 %v344
    %5255 = vmatprep.subr.mxu0 0.0
    %5256 = vmatpush1.msra.mxu0 %v343
    %5257 = vmatprep.subr.mxu0 0.0
    %5258 = vmatpush1.msra.mxu0 %v342
    %5259 = vmatprep.subr.mxu0 0.0
    %5260 = vmatpush1.msra.mxu0 %v341
    %5261 = vmatprep.subr.mxu0 0.0
    %5262 = vmatpush1.msra.mxu0 %v340
    %5263 = vmatprep.subr.mxu0 0.0
    %5264 = vmatpush1.msra.mxu0 %v339
    %5265 = vmatprep.subr.mxu0 0.0
    %5266 = vmatpush2.msra.mxu0 0.0
    %5267 = vmatprep.subr.mxu0 0.0
    %5268 = vmatpush2.msra.mxu0 0.0
    %5269 = vmatprep.subr.mxu0 0.0
    %5270 = vmatpush2.msra.mxu0 0.0
    %5271 = vmatprep.subr.mxu0 0.0
    %5272 = vmatpush2.msra.mxu0 0.0
    %5273 = vmatprep.subr.mxu0 0.0
    %5274 = vmatpush2.msra.mxu0 0.0
    %5275 = vmatprep.subr.mxu0 0.0
    %5276 = vmatpush2.msra.mxu0 0.0
    %5277 = vmatprep.subr.mxu0 0.0
    %5278 = vmatpush2.msra.mxu0 0.0
    %5279 = vmatprep.subr.mxu0 0.0
    %5280 = vmatpush2.msra.mxu0 0.0
    %5281 = vmatprep.subr.mxu0 0.0
    %5282 = vmatpush2.msra.mxu0 0.0
    %5283 = vmatprep.subr.mxu0 0.0
    %5284 = vmatpush2.msra.mxu0 0.0
    %5285 = vmatprep.subr.mxu0 0.0
    %5286 = vmatpush2.msra.mxu0 0.0
    %5287 = vmatprep.subr.mxu0 0.0
    %5288 = vmatpush2.msra.mxu0 0.0
    %5289 = vmatprep.subr.mxu0 0.0
    %5290 = vmatpush2.msra.mxu0 0.0
    %5291 = vmatprep.subr.mxu0 0.0
    %5292 = vmatpush2.msra.mxu0 0.0
    %5293 = vmatprep.subr.mxu0 0.0
    %5294 = vmatpush2.msra.mxu0 0.0
    %5295 = vmatprep.subr.mxu0 0.0
    %5296 = vmatpush2.msra.mxu0 0.0
    %5297 = vmatprep.mubr.f32.mxu0 0.0
    %5298 = vmatmul.mubr.f32.gmra.mxu0 %v5153
    %v5299 = vpop.f32.mrf.mxu0
    %v5300 = vadd.f32 %v353, %v5299
    %v5301 = vpop.f32.mrf.mxu0
    %5302 = vmatprep.mubr.f32.mxu0 0.0
    %5303 = vmatmul.mubr.f32.gmra.mxu0 %v5156
    %v5304 = vpop.f32.mrf.mxu0
    %v5305 = vadd.f32 %v353, %v5304
    %v5306 = vpop.f32.mrf.mxu0
    %5307 = vdwg.mxu0
    %5308 = vmatprep.subr.mxu0 0.0
    %5309 = vmatpush1.msra.mxu0 0.0
    %5310 = vmatprep.subr.mxu0 0.0
    %5311 = vmatpush1.msra.mxu0 0.0
    %5312 = vmatprep.subr.mxu0 0.0
    %5313 = vmatpush1.msra.mxu0 0.0
    %5314 = vmatprep.subr.mxu0 0.0
    %5315 = vmatpush1.msra.mxu0 0.0
    %5316 = vmatprep.subr.mxu0 0.0
    %5317 = vmatpush1.msra.mxu0 0.0
    %5318 = vmatprep.subr.mxu0 0.0
    %5319 = vmatpush1.msra.mxu0 0.0
    %5320 = vmatprep.subr.mxu0 0.0
    %5321 = vmatpush1.msra.mxu0 0.0
    %5322 = vmatprep.subr.mxu0 0.0
    %5323 = vmatpush1.msra.mxu0 0.0
    %5324 = vmatprep.subr.mxu0 0.0
    %5325 = vmatpush1.msra.mxu0 0.0
    %5326 = vmatprep.subr.mxu0 0.0
    %5327 = vmatpush1.msra.mxu0 0.0
    %5328 = vmatprep.subr.mxu0 0.0
    %5329 = vmatpush1.msra.mxu0 0.0
    %5330 = vmatprep.subr.mxu0 0.0
    %5331 = vmatpush1.msra.mxu0 0.0
    %5332 = vmatprep.subr.mxu0 0.0
    %5333 = vmatpush1.msra.mxu0 0.0
    %5334 = vmatprep.subr.mxu0 0.0
    %5335 = vmatpush1.msra.mxu0 0.0
    %5336 = vmatprep.subr.mxu0 0.0
    %5337 = vmatpush1.msra.mxu0 %v5305
    %5338 = vmatprep.subr.mxu0 0.0
    %5339 = vmatpush1.msra.mxu0 %v5300
    %5340 = vmatprep.subr.mxu0 0.0
    %5341 = vmatpush2.msra.mxu0 0.0
    %5342 = vmatprep.subr.mxu0 0.0
    %5343 = vmatpush2.msra.mxu0 0.0
    %5344 = vmatprep.subr.mxu0 0.0
    %5345 = vmatpush2.msra.mxu0 0.0
    %5346 = vmatprep.subr.mxu0 0.0
    %5347 = vmatpush2.msra.mxu0 0.0
    %5348 = vmatprep.subr.mxu0 0.0
    %5349 = vmatpush2.msra.mxu0 0.0
    %5350 = vmatprep.subr.mxu0 0.0
    %5351 = vmatpush2.msra.mxu0 0.0
    %5352 = vmatprep.subr.mxu0 0.0
    %5353 = vmatpush2.msra.mxu0 0.0
    %5354 = vmatprep.subr.mxu0 0.0
    %5355 = vmatpush2.msra.mxu0 0.0
    %5356 = vmatprep.subr.mxu0 0.0
    %5357 = vmatpush2.msra.mxu0 0.0
    %5358 = vmatprep.subr.mxu0 0.0
    %5359 = vmatpush2.msra.mxu0 0.0
    %5360 = vmatprep.subr.mxu0 0.0
    %5361 = vmatpush2.msra.mxu0 0.0
    %5362 = vmatprep.subr.mxu0 0.0
    %5363 = vmatpush2.msra.mxu0 0.0
    %5364 = vmatprep.subr.mxu0 0.0
    %5365 = vmatpush2.msra.mxu0 0.0
    %5366 = vmatprep.subr.mxu0 0.0
    %5367 = vmatpush2.msra.mxu0 0.0
    %5368 = vmatprep.subr.mxu0 0.0
    %5369 = vmatpush2.msra.mxu0 0.0
    %5370 = vmatprep.subr.mxu0 0.0
    %5371 = vmatpush2.msra.mxu0 0.0
    %5372 = vmatprep.mubr.f32.mxu0 0.0
    %5373 = vmatmul.mubr.f32.gmra.mxu0 %v449
    %v5374 = vpop.f32.mrf.mxu0
    %v5375 = vadd.f32 0.0, %v5374
    %v5376 = vpop.f32.mrf.mxu0
    %5377 = vmatprep.mubr.f32.mxu0 0.0
    %5378 = vmatmul.mubr.f32.gmra.mxu0 %v452
    %v5379 = vpop.f32.mrf.mxu0
    %v5380 = vadd.f32 0.0, %v5379
    %v5381 = vpop.f32.mrf.mxu0
    %5382 = vmatprep.mubr.f32.mxu0 0.0
    %5383 = vmatmul.mubr.f32.gmra.mxu0 %v455
    %v5384 = vpop.f32.mrf.mxu0
    %v5385 = vadd.f32 0.0, %v5384
    %v5386 = vpop.f32.mrf.mxu0
    %5387 = vmatprep.mubr.f32.mxu0 0.0
    %5388 = vmatmul.mubr.f32.gmra.mxu0 %v458
    %v5389 = vpop.f32.mrf.mxu0
    %v5390 = vadd.f32 0.0, %v5389
    %v5391 = vpop.f32.mrf.mxu0
    %5392 = vmatprep.mubr.f32.mxu0 0.0
    %5393 = vmatmul.mubr.f32.gmra.mxu0 %v461
    %v5394 = vpop.f32.mrf.mxu0
    %v5395 = vadd.f32 0.0, %v5394
    %v5396 = vpop.f32.mrf.mxu0
    %5397 = vmatprep.mubr.f32.mxu0 0.0
    %5398 = vmatmul.mubr.f32.gmra.mxu0 %v464
    %v5399 = vpop.f32.mrf.mxu0
    %v5400 = vadd.f32 0.0, %v5399
    %v5401 = vpop.f32.mrf.mxu0
    %5402 = vmatprep.mubr.f32.mxu0 0.0
    %5403 = vmatmul.mubr.f32.gmra.mxu0 %v467
    %v5404 = vpop.f32.mrf.mxu0
    %v5405 = vadd.f32 0.0, %v5404
    %v5406 = vpop.f32.mrf.mxu0
    %5407 = vmatprep.mubr.f32.mxu0 0.0
    %5408 = vmatmul.mubr.f32.gmra.mxu0 %v470
    %v5409 = vpop.f32.mrf.mxu0
    %v5410 = vadd.f32 0.0, %v5409
    %v5411 = vpop.f32.mrf.mxu0
    %5412 = vmatprep.mubr.f32.mxu0 0.0
    %5413 = vmatmul.mubr.f32.gmra.mxu0 %v473
    %v5414 = vpop.f32.mrf.mxu0
    %v5415 = vadd.f32 0.0, %v5414
    %v5416 = vpop.f32.mrf.mxu0
    %5417 = vmatprep.mubr.f32.mxu0 0.0
    %5418 = vmatmul.mubr.f32.gmra.mxu0 %v476
    %v5419 = vpop.f32.mrf.mxu0
    %v5420 = vadd.f32 0.0, %v5419
    %v5421 = vpop.f32.mrf.mxu0
    %5422 = vmatprep.mubr.f32.mxu0 0.0
    %5423 = vmatmul.mubr.f32.gmra.mxu0 %v479
    %v5424 = vpop.f32.mrf.mxu0
    %v5425 = vadd.f32 0.0, %v5424
    %v5426 = vpop.f32.mrf.mxu0
    %5427 = vmatprep.mubr.f32.mxu0 0.0
    %5428 = vmatmul.mubr.f32.gmra.mxu0 %v482
    %v5429 = vpop.f32.mrf.mxu0
    %v5430 = vadd.f32 0.0, %v5429
    %v5431 = vpop.f32.mrf.mxu0
    %5432 = vmatprep.mubr.f32.mxu0 0.0
    %5433 = vmatmul.mubr.f32.gmra.mxu0 %v485
    %v5434 = vpop.f32.mrf.mxu0
    %v5435 = vadd.f32 0.0, %v5434
    %v5436 = vpop.f32.mrf.mxu0
    %5437 = vmatprep.mubr.f32.mxu0 0.0
    %5438 = vmatmul.mubr.f32.gmra.mxu0 %v488
    %v5439 = vpop.f32.mrf.mxu0
    %v5440 = vadd.f32 0.0, %v5439
    %v5441 = vpop.f32.mrf.mxu0
    %5442 = vmatprep.mubr.f32.mxu0 0.0
    %5443 = vmatmul.mubr.f32.gmra.mxu0 %v491
    %v5444 = vpop.f32.mrf.mxu0
    %v5445 = vadd.f32 0.0, %v5444
    %v5446 = vpop.f32.mrf.mxu0
    %5447 = vmatprep.mubr.f32.mxu0 0.0
    %5448 = vmatmul.mubr.f32.gmra.mxu0 %v494
    %v5449 = vpop.f32.mrf.mxu0
    %v5450 = vadd.f32 0.0, %v5449
    %v5451 = vpop.f32.mrf.mxu0
    %5452 = vdwg.mxu0
    %5453 = vmatprep.subr.mxu0 0.0
    %5454 = vmatpush1.msra.mxu0 0.0
    %5455 = vmatprep.subr.mxu0 0.0
    %5456 = vmatpush1.msra.mxu0 0.0
    %5457 = vmatprep.subr.mxu0 0.0
    %5458 = vmatpush1.msra.mxu0 0.0
    %5459 = vmatprep.subr.mxu0 0.0
    %5460 = vmatpush1.msra.mxu0 0.0
    %5461 = vmatprep.subr.mxu0 0.0
    %5462 = vmatpush1.msra.mxu0 0.0
    %5463 = vmatprep.subr.mxu0 0.0
    %5464 = vmatpush1.msra.mxu0 0.0
    %5465 = vmatprep.subr.mxu0 0.0
    %5466 = vmatpush1.msra.mxu0 0.0
    %5467 = vmatprep.subr.mxu0 0.0
    %5468 = vmatpush1.msra.mxu0 0.0
    %5469 = vmatprep.subr.mxu0 0.0
    %5470 = vmatpush1.msra.mxu0 0.0
    %5471 = vmatprep.subr.mxu0 0.0
    %5472 = vmatpush1.msra.mxu0 0.0
    %5473 = vmatprep.subr.mxu0 0.0
    %5474 = vmatpush1.msra.mxu0 0.0
    %5475 = vmatprep.subr.mxu0 0.0
    %5476 = vmatpush1.msra.mxu0 0.0
    %5477 = vmatprep.subr.mxu0 0.0
    %5478 = vmatpush1.msra.mxu0 0.0
    %5479 = vmatprep.subr.mxu0 0.0
    %5480 = vmatpush1.msra.mxu0 0.0
    %5481 = vmatprep.subr.mxu0 0.0
    %5482 = vmatpush1.msra.mxu0 %v5230
    %5483 = vmatprep.subr.mxu0 0.0
    %5484 = vmatpush1.msra.mxu0 %v5225
    %5485 = vmatprep.subr.mxu0 0.0
    %5486 = vmatpush2.msra.mxu0 0.0
    %5487 = vmatprep.subr.mxu0 0.0
    %5488 = vmatpush2.msra.mxu0 0.0
    %5489 = vmatprep.subr.mxu0 0.0
    %5490 = vmatpush2.msra.mxu0 0.0
    %5491 = vmatprep.subr.mxu0 0.0
    %5492 = vmatpush2.msra.mxu0 0.0
    %5493 = vmatprep.subr.mxu0 0.0
    %5494 = vmatpush2.msra.mxu0 0.0
    %5495 = vmatprep.subr.mxu0 0.0
    %5496 = vmatpush2.msra.mxu0 0.0
    %5497 = vmatprep.subr.mxu0 0.0
    %5498 = vmatpush2.msra.mxu0 0.0
    %5499 = vmatprep.subr.mxu0 0.0
    %5500 = vmatpush2.msra.mxu0 0.0
    %5501 = vmatprep.subr.mxu0 0.0
    %5502 = vmatpush2.msra.mxu0 0.0
    %5503 = vmatprep.subr.mxu0 0.0
    %5504 = vmatpush2.msra.mxu0 0.0
    %5505 = vmatprep.subr.mxu0 0.0
    %5506 = vmatpush2.msra.mxu0 0.0
    %5507 = vmatprep.subr.mxu0 0.0
    %5508 = vmatpush2.msra.mxu0 0.0
    %5509 = vmatprep.subr.mxu0 0.0
    %5510 = vmatpush2.msra.mxu0 0.0
    %5511 = vmatprep.subr.mxu0 0.0
    %5512 = vmatpush2.msra.mxu0 0.0
    %5513 = vmatprep.subr.mxu0 0.0
    %5514 = vmatpush2.msra.mxu0 0.0
    %5515 = vmatprep.subr.mxu0 0.0
    %5516 = vmatpush2.msra.mxu0 0.0
    %5517 = vmatprep.mubr.f32.mxu0 0.0
    %5518 = vmatmul.mubr.f32.gmra.mxu0 %v642
    %v5519 = vpop.f32.mrf.mxu0
    %v5520 = vadd.f32 %v5375, %v5519
    %v5521 = vpop.f32.mrf.mxu0
    %5522 = vmatprep.mubr.f32.mxu0 0.0
    %5523 = vmatmul.mubr.f32.gmra.mxu0 %v645
    %v5524 = vpop.f32.mrf.mxu0
    %v5525 = vadd.f32 %v5380, %v5524
    %v5526 = vpop.f32.mrf.mxu0
    %5527 = vmatprep.mubr.f32.mxu0 0.0
    %5528 = vmatmul.mubr.f32.gmra.mxu0 %v648
    %v5529 = vpop.f32.mrf.mxu0
    %v5530 = vadd.f32 %v5385, %v5529
    %v5531 = vpop.f32.mrf.mxu0
    %5532 = vmatprep.mubr.f32.mxu0 0.0
    %5533 = vmatmul.mubr.f32.gmra.mxu0 %v651
    %v5534 = vpop.f32.mrf.mxu0
    %v5535 = vadd.f32 %v5390, %v5534
    %v5536 = vpop.f32.mrf.mxu0
    %5537 = vmatprep.mubr.f32.mxu0 0.0
    %5538 = vmatmul.mubr.f32.gmra.mxu0 %v654
    %v5539 = vpop.f32.mrf.mxu0
    %v5540 = vadd.f32 %v5395, %v5539
    %v5541 = vpop.f32.mrf.mxu0
    %5542 = vmatprep.mubr.f32.mxu0 0.0
    %5543 = vmatmul.mubr.f32.gmra.mxu0 %v657
    %v5544 = vpop.f32.mrf.mxu0
    %v5545 = vadd.f32 %v5400, %v5544
    %v5546 = vpop.f32.mrf.mxu0
    %5547 = vmatprep.mubr.f32.mxu0 0.0
    %5548 = vmatmul.mubr.f32.gmra.mxu0 %v660
    %v5549 = vpop.f32.mrf.mxu0
    %v5550 = vadd.f32 %v5405, %v5549
    %v5551 = vpop.f32.mrf.mxu0
    %5552 = vmatprep.mubr.f32.mxu0 0.0
    %5553 = vmatmul.mubr.f32.gmra.mxu0 %v663
    %v5554 = vpop.f32.mrf.mxu0
    %v5555 = vadd.f32 %v5410, %v5554
    %v5556 = vpop.f32.mrf.mxu0
    %5557 = vmatprep.mubr.f32.mxu0 0.0
    %5558 = vmatmul.mubr.f32.gmra.mxu0 %v666
    %v5559 = vpop.f32.mrf.mxu0
    %v5560 = vadd.f32 %v5415, %v5559
    %v5561 = vpop.f32.mrf.mxu0
    %5562 = vmatprep.mubr.f32.mxu0 0.0
    %5563 = vmatmul.mubr.f32.gmra.mxu0 %v669
    %v5564 = vpop.f32.mrf.mxu0
    %v5565 = vadd.f32 %v5420, %v5564
    %v5566 = vpop.f32.mrf.mxu0
    %5567 = vmatprep.mubr.f32.mxu0 0.0
    %5568 = vmatmul.mubr.f32.gmra.mxu0 %v672
    %v5569 = vpop.f32.mrf.mxu0
    %v5570 = vadd.f32 %v5425, %v5569
    %v5571 = vpop.f32.mrf.mxu0
    %5572 = vmatprep.mubr.f32.mxu0 0.0
    %5573 = vmatmul.mubr.f32.gmra.mxu0 %v675
    %v5574 = vpop.f32.mrf.mxu0
    %v5575 = vadd.f32 %v5430, %v5574
    %v5576 = vpop.f32.mrf.mxu0
    %5577 = vmatprep.mubr.f32.mxu0 0.0
    %5578 = vmatmul.mubr.f32.gmra.mxu0 %v678
    %v5579 = vpop.f32.mrf.mxu0
    %v5580 = vadd.f32 %v5435, %v5579
    %v5581 = vpop.f32.mrf.mxu0
    %5582 = vmatprep.mubr.f32.mxu0 0.0
    %5583 = vmatmul.mubr.f32.gmra.mxu0 %v681
    %v5584 = vpop.f32.mrf.mxu0
    %v5585 = vadd.f32 %v5440, %v5584
    %v5586 = vpop.f32.mrf.mxu0
    %5587 = vmatprep.mubr.f32.mxu0 0.0
    %5588 = vmatmul.mubr.f32.gmra.mxu0 %v684
    %v5589 = vpop.f32.mrf.mxu0
    %v5590 = vadd.f32 %v5445, %v5589
    %v5591 = vpop.f32.mrf.mxu0
    %5592 = vmatprep.mubr.f32.mxu0 0.0
    %5593 = vmatmul.mubr.f32.gmra.mxu0 %v687
    %v5594 = vpop.f32.mrf.mxu0
    %v5595 = vadd.f32 %v5450, %v5594
    %v5596 = vpop.f32.mrf.mxu0
    %5597 = vdwg.mxu0
    %5598 = vmatprep.subr.mxu0 0.0
    %5599 = vmatpush1.msra.mxu0 0.0
    %5600 = vmatprep.subr.mxu0 0.0
    %5601 = vmatpush1.msra.mxu0 0.0
    %5602 = vmatprep.subr.mxu0 0.0
    %5603 = vmatpush1.msra.mxu0 0.0
    %5604 = vmatprep.subr.mxu0 0.0
    %5605 = vmatpush1.msra.mxu0 0.0
    %5606 = vmatprep.subr.mxu0 0.0
    %5607 = vmatpush1.msra.mxu0 0.0
    %5608 = vmatprep.subr.mxu0 0.0
    %5609 = vmatpush1.msra.mxu0 0.0
    %5610 = vmatprep.subr.mxu0 0.0
    %5611 = vmatpush1.msra.mxu0 0.0
    %5612 = vmatprep.subr.mxu0 0.0
    %5613 = vmatpush1.msra.mxu0 0.0
    %5614 = vmatprep.subr.mxu0 0.0
    %5615 = vmatpush1.msra.mxu0 %v842
    %5616 = vmatprep.subr.mxu0 0.0
    %5617 = vmatpush1.msra.mxu0 %v841
    %5618 = vmatprep.subr.mxu0 0.0
    %5619 = vmatpush1.msra.mxu0 %v840
    %5620 = vmatprep.subr.mxu0 0.0
    %5621 = vmatpush1.msra.mxu0 %v839
    %5622 = vmatprep.subr.mxu0 0.0
    %5623 = vmatpush1.msra.mxu0 %v838
    %5624 = vmatprep.subr.mxu0 0.0
    %5625 = vmatpush1.msra.mxu0 %v837
    %5626 = vmatprep.subr.mxu0 0.0
    %5627 = vmatpush1.msra.mxu0 %v836
    %5628 = vmatprep.subr.mxu0 0.0
    %5629 = vmatpush1.msra.mxu0 %v835
    %5630 = vmatprep.subr.mxu0 0.0
    %5631 = vmatpush2.msra.mxu0 0.0
    %5632 = vmatprep.subr.mxu0 0.0
    %5633 = vmatpush2.msra.mxu0 0.0
    %5634 = vmatprep.subr.mxu0 0.0
    %5635 = vmatpush2.msra.mxu0 0.0
    %5636 = vmatprep.subr.mxu0 0.0
    %5637 = vmatpush2.msra.mxu0 0.0
    %5638 = vmatprep.subr.mxu0 0.0
    %5639 = vmatpush2.msra.mxu0 0.0
    %5640 = vmatprep.subr.mxu0 0.0
    %5641 = vmatpush2.msra.mxu0 0.0
    %5642 = vmatprep.subr.mxu0 0.0
    %5643 = vmatpush2.msra.mxu0 0.0
    %5644 = vmatprep.subr.mxu0 0.0
    %5645 = vmatpush2.msra.mxu0 0.0
    %5646 = vmatprep.subr.mxu0 0.0
    %5647 = vmatpush2.msra.mxu0 0.0
    %5648 = vmatprep.subr.mxu0 0.0
    %5649 = vmatpush2.msra.mxu0 0.0
    %5650 = vmatprep.subr.mxu0 0.0
    %5651 = vmatpush2.msra.mxu0 0.0
    %5652 = vmatprep.subr.mxu0 0.0
    %5653 = vmatpush2.msra.mxu0 0.0
    %5654 = vmatprep.subr.mxu0 0.0
    %5655 = vmatpush2.msra.mxu0 0.0
    %5656 = vmatprep.subr.mxu0 0.0
    %5657 = vmatpush2.msra.mxu0 0.0
    %5658 = vmatprep.subr.mxu0 0.0
    %5659 = vmatpush2.msra.mxu0 0.0
    %5660 = vmatprep.subr.mxu0 0.0
    %5661 = vmatpush2.msra.mxu0 0.0
    %5662 = vmatprep.mubr.f32.mxu0 0.0
    %5663 = vmatmul.mubr.f32.gmra.mxu0 %v5153
    %v5664 = vpop.f32.mrf.mxu0
    %v5665 = vadd.f32 %v849, %v5664
    %v5666 = vpop.f32.mrf.mxu0
    %5667 = vmatprep.mubr.f32.mxu0 0.0
    %5668 = vmatmul.mubr.f32.gmra.mxu0 %v5156
    %v5669 = vpop.f32.mrf.mxu0
    %v5670 = vadd.f32 %v849, %v5669
    %v5671 = vpop.f32.mrf.mxu0
    %5672 = vdwg.mxu0
    %5673 = vmatprep.subr.mxu0 0.0
    %5674 = vmatpush1.msra.mxu0 0.0
    %5675 = vmatprep.subr.mxu0 0.0
    %5676 = vmatpush1.msra.mxu0 0.0
    %5677 = vmatprep.subr.mxu0 0.0
    %5678 = vmatpush1.msra.mxu0 0.0
    %5679 = vmatprep.subr.mxu0 0.0
    %5680 = vmatpush1.msra.mxu0 0.0
    %5681 = vmatprep.subr.mxu0 0.0
    %5682 = vmatpush1.msra.mxu0 0.0
    %5683 = vmatprep.subr.mxu0 0.0
    %5684 = vmatpush1.msra.mxu0 0.0
    %5685 = vmatprep.subr.mxu0 0.0
    %5686 = vmatpush1.msra.mxu0 0.0
    %5687 = vmatprep.subr.mxu0 0.0
    %5688 = vmatpush1.msra.mxu0 0.0
    %5689 = vmatprep.subr.mxu0 0.0
    %5690 = vmatpush1.msra.mxu0 0.0
    %5691 = vmatprep.subr.mxu0 0.0
    %5692 = vmatpush1.msra.mxu0 0.0
    %5693 = vmatprep.subr.mxu0 0.0
    %5694 = vmatpush1.msra.mxu0 0.0
    %5695 = vmatprep.subr.mxu0 0.0
    %5696 = vmatpush1.msra.mxu0 0.0
    %5697 = vmatprep.subr.mxu0 0.0
    %5698 = vmatpush1.msra.mxu0 0.0
    %5699 = vmatprep.subr.mxu0 0.0
    %5700 = vmatpush1.msra.mxu0 0.0
    %5701 = vmatprep.subr.mxu0 0.0
    %5702 = vmatpush1.msra.mxu0 %v5670
    %5703 = vmatprep.subr.mxu0 0.0
    %5704 = vmatpush1.msra.mxu0 %v5665
    %5705 = vmatprep.subr.mxu0 0.0
    %5706 = vmatpush2.msra.mxu0 0.0
    %5707 = vmatprep.subr.mxu0 0.0
    %5708 = vmatpush2.msra.mxu0 0.0
    %5709 = vmatprep.subr.mxu0 0.0
    %5710 = vmatpush2.msra.mxu0 0.0
    %5711 = vmatprep.subr.mxu0 0.0
    %5712 = vmatpush2.msra.mxu0 0.0
    %5713 = vmatprep.subr.mxu0 0.0
    %5714 = vmatpush2.msra.mxu0 0.0
    %5715 = vmatprep.subr.mxu0 0.0
    %5716 = vmatpush2.msra.mxu0 0.0
    %5717 = vmatprep.subr.mxu0 0.0
    %5718 = vmatpush2.msra.mxu0 0.0
    %5719 = vmatprep.subr.mxu0 0.0
    %5720 = vmatpush2.msra.mxu0 0.0
    %5721 = vmatprep.subr.mxu0 0.0
    %5722 = vmatpush2.msra.mxu0 0.0
    %5723 = vmatprep.subr.mxu0 0.0
    %5724 = vmatpush2.msra.mxu0 0.0
    %5725 = vmatprep.subr.mxu0 0.0
    %5726 = vmatpush2.msra.mxu0 0.0
    %5727 = vmatprep.subr.mxu0 0.0
    %5728 = vmatpush2.msra.mxu0 0.0
    %5729 = vmatprep.subr.mxu0 0.0
    %5730 = vmatpush2.msra.mxu0 0.0
    %5731 = vmatprep.subr.mxu0 0.0
    %5732 = vmatpush2.msra.mxu0 0.0
    %5733 = vmatprep.subr.mxu0 0.0
    %5734 = vmatpush2.msra.mxu0 0.0
    %5735 = vmatprep.subr.mxu0 0.0
    %5736 = vmatpush2.msra.mxu0 0.0
    %5737 = vmatprep.mubr.f32.mxu0 0.0
    %5738 = vmatmul.mubr.f32.gmra.mxu0 %v944
    %v5739 = vpop.f32.mrf.mxu0
    %v5740 = vadd.f32 0.0, %v5739
    %v5741 = vpop.f32.mrf.mxu0
    %5742 = vmatprep.mubr.f32.mxu0 0.0
    %5743 = vmatmul.mubr.f32.gmra.mxu0 %v947
    %v5744 = vpop.f32.mrf.mxu0
    %v5745 = vadd.f32 0.0, %v5744
    %v5746 = vpop.f32.mrf.mxu0
    %5747 = vmatprep.mubr.f32.mxu0 0.0
    %5748 = vmatmul.mubr.f32.gmra.mxu0 %v950
    %v5749 = vpop.f32.mrf.mxu0
    %v5750 = vadd.f32 0.0, %v5749
    %v5751 = vpop.f32.mrf.mxu0
    %5752 = vmatprep.mubr.f32.mxu0 0.0
    %5753 = vmatmul.mubr.f32.gmra.mxu0 %v953
    %v5754 = vpop.f32.mrf.mxu0
    %v5755 = vadd.f32 0.0, %v5754
    %v5756 = vpop.f32.mrf.mxu0
    %5757 = vmatprep.mubr.f32.mxu0 0.0
    %5758 = vmatmul.mubr.f32.gmra.mxu0 %v956
    %v5759 = vpop.f32.mrf.mxu0
    %v5760 = vadd.f32 0.0, %v5759
    %v5761 = vpop.f32.mrf.mxu0
    %5762 = vmatprep.mubr.f32.mxu0 0.0
    %5763 = vmatmul.mubr.f32.gmra.mxu0 %v959
    %v5764 = vpop.f32.mrf.mxu0
    %v5765 = vadd.f32 0.0, %v5764
    %v5766 = vpop.f32.mrf.mxu0
    %5767 = vmatprep.mubr.f32.mxu0 0.0
    %5768 = vmatmul.mubr.f32.gmra.mxu0 %v962
    %v5769 = vpop.f32.mrf.mxu0
    %v5770 = vadd.f32 0.0, %v5769
    %v5771 = vpop.f32.mrf.mxu0
    %5772 = vmatprep.mubr.f32.mxu0 0.0
    %5773 = vmatmul.mubr.f32.gmra.mxu0 %v965
    %v5774 = vpop.f32.mrf.mxu0
    %v5775 = vadd.f32 0.0, %v5774
    %v5776 = vpop.f32.mrf.mxu0
    %5777 = vmatprep.mubr.f32.mxu0 0.0
    %5778 = vmatmul.mubr.f32.gmra.mxu0 %v968
    %v5779 = vpop.f32.mrf.mxu0
    %v5780 = vadd.f32 0.0, %v5779
    %v5781 = vpop.f32.mrf.mxu0
    %5782 = vmatprep.mubr.f32.mxu0 0.0
    %5783 = vmatmul.mubr.f32.gmra.mxu0 %v971
    %v5784 = vpop.f32.mrf.mxu0
    %v5785 = vadd.f32 0.0, %v5784
    %v5786 = vpop.f32.mrf.mxu0
    %5787 = vmatprep.mubr.f32.mxu0 0.0
    %5788 = vmatmul.mubr.f32.gmra.mxu0 %v974
    %v5789 = vpop.f32.mrf.mxu0
    %v5790 = vadd.f32 0.0, %v5789
    %v5791 = vpop.f32.mrf.mxu0
    %5792 = vmatprep.mubr.f32.mxu0 0.0
    %5793 = vmatmul.mubr.f32.gmra.mxu0 %v977
    %v5794 = vpop.f32.mrf.mxu0
    %v5795 = vadd.f32 0.0, %v5794
    %v5796 = vpop.f32.mrf.mxu0
    %5797 = vmatprep.mubr.f32.mxu0 0.0
    %5798 = vmatmul.mubr.f32.gmra.mxu0 %v980
    %v5799 = vpop.f32.mrf.mxu0
    %v5800 = vadd.f32 0.0, %v5799
    %v5801 = vpop.f32.mrf.mxu0
    %5802 = vmatprep.mubr.f32.mxu0 0.0
    %5803 = vmatmul.mubr.f32.gmra.mxu0 %v983
    %v5804 = vpop.f32.mrf.mxu0
    %v5805 = vadd.f32 0.0, %v5804
    %v5806 = vpop.f32.mrf.mxu0
    %5807 = vmatprep.mubr.f32.mxu0 0.0
    %5808 = vmatmul.mubr.f32.gmra.mxu0 %v986
    %v5809 = vpop.f32.mrf.mxu0
    %v5810 = vadd.f32 0.0, %v5809
    %v5811 = vpop.f32.mrf.mxu0
    %5812 = vmatprep.mubr.f32.mxu0 0.0
    %5813 = vmatmul.mubr.f32.gmra.mxu0 %v989
    %v5814 = vpop.f32.mrf.mxu0
    %v5815 = vadd.f32 0.0, %v5814
    %v5816 = vpop.f32.mrf.mxu0
    %5817 = vdwg.mxu0
    %v5818 = vadd.f32 %v5520, %v5740
    %v5819 = vadd.f32 %v5525, %v5745
    %v5820 = vadd.f32 %v5530, %v5750
    %v5821 = vadd.f32 %v5535, %v5755
    %v5822 = vadd.f32 %v5540, %v5760
    %v5823 = vadd.f32 %v5545, %v5765
    %v5824 = vadd.f32 %v5550, %v5770
    %v5825 = vadd.f32 %v5555, %v5775
    %v5826 = vadd.f32 %v5560, %v5780
    %v5827 = vadd.f32 %v5565, %v5785
    %v5828 = vadd.f32 %v5570, %v5790
    %v5829 = vadd.f32 %v5575, %v5795
    %v5830 = vadd.f32 %v5580, %v5800
    %v5831 = vadd.f32 %v5585, %v5805
    %v5832 = vadd.f32 %v5590, %v5810
    %v5833 = vadd.f32 %v5595, %v5815
    %5834 = vmatprep.subr.mxu0 0.0
    %5835 = vmatpush1.msra.mxu0 0.0
    %5836 = vmatprep.subr.mxu0 0.0
    %5837 = vmatpush1.msra.mxu0 0.0
    %5838 = vmatprep.subr.mxu0 0.0
    %5839 = vmatpush1.msra.mxu0 0.0
    %5840 = vmatprep.subr.mxu0 0.0
    %5841 = vmatpush1.msra.mxu0 0.0
    %5842 = vmatprep.subr.mxu0 0.0
    %5843 = vmatpush1.msra.mxu0 0.0
    %5844 = vmatprep.subr.mxu0 0.0
    %5845 = vmatpush1.msra.mxu0 0.0
    %5846 = vmatprep.subr.mxu0 0.0
    %5847 = vmatpush1.msra.mxu0 0.0
    %5848 = vmatprep.subr.mxu0 0.0
    %5849 = vmatpush1.msra.mxu0 0.0
    %5850 = vmatprep.subr.mxu0 0.0
    %5851 = vmatpush1.msra.mxu0 %v1160
    %5852 = vmatprep.subr.mxu0 0.0
    %5853 = vmatpush1.msra.mxu0 %v1159
    %5854 = vmatprep.subr.mxu0 0.0
    %5855 = vmatpush1.msra.mxu0 %v1158
    %5856 = vmatprep.subr.mxu0 0.0
    %5857 = vmatpush1.msra.mxu0 %v1157
    %5858 = vmatprep.subr.mxu0 0.0
    %5859 = vmatpush1.msra.mxu0 %v1156
    %5860 = vmatprep.subr.mxu0 0.0
    %5861 = vmatpush1.msra.mxu0 %v1155
    %5862 = vmatprep.subr.mxu0 0.0
    %5863 = vmatpush1.msra.mxu0 %v1154
    %5864 = vmatprep.subr.mxu0 0.0
    %5865 = vmatpush1.msra.mxu0 %v1153
    %5866 = vmatprep.subr.mxu0 0.0
    %5867 = vmatpush2.msra.mxu0 0.0
    %5868 = vmatprep.subr.mxu0 0.0
    %5869 = vmatpush2.msra.mxu0 0.0
    %5870 = vmatprep.subr.mxu0 0.0
    %5871 = vmatpush2.msra.mxu0 0.0
    %5872 = vmatprep.subr.mxu0 0.0
    %5873 = vmatpush2.msra.mxu0 0.0
    %5874 = vmatprep.subr.mxu0 0.0
    %5875 = vmatpush2.msra.mxu0 0.0
    %5876 = vmatprep.subr.mxu0 0.0
    %5877 = vmatpush2.msra.mxu0 0.0
    %5878 = vmatprep.subr.mxu0 0.0
    %5879 = vmatpush2.msra.mxu0 0.0
    %5880 = vmatprep.subr.mxu0 0.0
    %5881 = vmatpush2.msra.mxu0 0.0
    %5882 = vmatprep.subr.mxu0 0.0
    %5883 = vmatpush2.msra.mxu0 0.0
    %5884 = vmatprep.subr.mxu0 0.0
    %5885 = vmatpush2.msra.mxu0 0.0
    %5886 = vmatprep.subr.mxu0 0.0
    %5887 = vmatpush2.msra.mxu0 0.0
    %5888 = vmatprep.subr.mxu0 0.0
    %5889 = vmatpush2.msra.mxu0 0.0
    %5890 = vmatprep.subr.mxu0 0.0
    %5891 = vmatpush2.msra.mxu0 0.0
    %5892 = vmatprep.subr.mxu0 0.0
    %5893 = vmatpush2.msra.mxu0 0.0
    %5894 = vmatprep.subr.mxu0 0.0
    %5895 = vmatpush2.msra.mxu0 0.0
    %5896 = vmatprep.subr.mxu0 0.0
    %5897 = vmatpush2.msra.mxu0 0.0
    %5898 = vmatprep.mubr.f32.mxu0 0.0
    %5899 = vmatmul.mubr.f32.gmra.mxu0 %v5153
    %v5900 = vpop.f32.mrf.mxu0
    %v5901 = vadd.f32 %v1167, %v5900
    %v5902 = vpop.f32.mrf.mxu0
    %5903 = vmatprep.mubr.f32.mxu0 0.0
    %5904 = vmatmul.mubr.f32.gmra.mxu0 %v5156
    %v5905 = vpop.f32.mrf.mxu0
    %v5906 = vadd.f32 %v1167, %v5905
    %v5907 = vpop.f32.mrf.mxu0
    %5908 = vdwg.mxu0
    %5909 = vmatprep.subr.mxu0 0.0
    %5910 = vmatpush1.msra.mxu0 0.0
    %5911 = vmatprep.subr.mxu0 0.0
    %5912 = vmatpush1.msra.mxu0 0.0
    %5913 = vmatprep.subr.mxu0 0.0
    %5914 = vmatpush1.msra.mxu0 0.0
    %5915 = vmatprep.subr.mxu0 0.0
    %5916 = vmatpush1.msra.mxu0 0.0
    %5917 = vmatprep.subr.mxu0 0.0
    %5918 = vmatpush1.msra.mxu0 0.0
    %5919 = vmatprep.subr.mxu0 0.0
    %5920 = vmatpush1.msra.mxu0 0.0
    %5921 = vmatprep.subr.mxu0 0.0
    %5922 = vmatpush1.msra.mxu0 0.0
    %5923 = vmatprep.subr.mxu0 0.0
    %5924 = vmatpush1.msra.mxu0 0.0
    %5925 = vmatprep.subr.mxu0 0.0
    %5926 = vmatpush1.msra.mxu0 0.0
    %5927 = vmatprep.subr.mxu0 0.0
    %5928 = vmatpush1.msra.mxu0 0.0
    %5929 = vmatprep.subr.mxu0 0.0
    %5930 = vmatpush1.msra.mxu0 0.0
    %5931 = vmatprep.subr.mxu0 0.0
    %5932 = vmatpush1.msra.mxu0 0.0
    %5933 = vmatprep.subr.mxu0 0.0
    %5934 = vmatpush1.msra.mxu0 0.0
    %5935 = vmatprep.subr.mxu0 0.0
    %5936 = vmatpush1.msra.mxu0 0.0
    %5937 = vmatprep.subr.mxu0 0.0
    %5938 = vmatpush1.msra.mxu0 %v5906
    %5939 = vmatprep.subr.mxu0 0.0
    %5940 = vmatpush1.msra.mxu0 %v5901
    %5941 = vmatprep.subr.mxu0 0.0
    %5942 = vmatpush2.msra.mxu0 0.0
    %5943 = vmatprep.subr.mxu0 0.0
    %5944 = vmatpush2.msra.mxu0 0.0
    %5945 = vmatprep.subr.mxu0 0.0
    %5946 = vmatpush2.msra.mxu0 0.0
    %5947 = vmatprep.subr.mxu0 0.0
    %5948 = vmatpush2.msra.mxu0 0.0
    %5949 = vmatprep.subr.mxu0 0.0
    %5950 = vmatpush2.msra.mxu0 0.0
    %5951 = vmatprep.subr.mxu0 0.0
    %5952 = vmatpush2.msra.mxu0 0.0
    %5953 = vmatprep.subr.mxu0 0.0
    %5954 = vmatpush2.msra.mxu0 0.0
    %5955 = vmatprep.subr.mxu0 0.0
    %5956 = vmatpush2.msra.mxu0 0.0
    %5957 = vmatprep.subr.mxu0 0.0
    %5958 = vmatpush2.msra.mxu0 0.0
    %5959 = vmatprep.subr.mxu0 0.0
    %5960 = vmatpush2.msra.mxu0 0.0
    %5961 = vmatprep.subr.mxu0 0.0
    %5962 = vmatpush2.msra.mxu0 0.0
    %5963 = vmatprep.subr.mxu0 0.0
    %5964 = vmatpush2.msra.mxu0 0.0
    %5965 = vmatprep.subr.mxu0 0.0
    %5966 = vmatpush2.msra.mxu0 0.0
    %5967 = vmatprep.subr.mxu0 0.0
    %5968 = vmatpush2.msra.mxu0 0.0
    %5969 = vmatprep.subr.mxu0 0.0
    %5970 = vmatpush2.msra.mxu0 0.0
    %5971 = vmatprep.subr.mxu0 0.0
    %5972 = vmatpush2.msra.mxu0 0.0
    %5973 = vmatprep.mubr.f32.mxu0 0.0
    %5974 = vmatmul.mubr.f32.gmra.mxu0 %v1262
    %v5975 = vpop.f32.mrf.mxu0
    %v5976 = vadd.f32 0.0, %v5975
    %v5977 = vpop.f32.mrf.mxu0
    %5978 = vmatprep.mubr.f32.mxu0 0.0
    %5979 = vmatmul.mubr.f32.gmra.mxu0 %v1265
    %v5980 = vpop.f32.mrf.mxu0
    %v5981 = vadd.f32 0.0, %v5980
    %v5982 = vpop.f32.mrf.mxu0
    %5983 = vmatprep.mubr.f32.mxu0 0.0
    %5984 = vmatmul.mubr.f32.gmra.mxu0 %v1268
    %v5985 = vpop.f32.mrf.mxu0
    %v5986 = vadd.f32 0.0, %v5985
    %v5987 = vpop.f32.mrf.mxu0
    %5988 = vmatprep.mubr.f32.mxu0 0.0
    %5989 = vmatmul.mubr.f32.gmra.mxu0 %v1271
    %v5990 = vpop.f32.mrf.mxu0
    %v5991 = vadd.f32 0.0, %v5990
    %v5992 = vpop.f32.mrf.mxu0
    %5993 = vmatprep.mubr.f32.mxu0 0.0
    %5994 = vmatmul.mubr.f32.gmra.mxu0 %v1274
    %v5995 = vpop.f32.mrf.mxu0
    %v5996 = vadd.f32 0.0, %v5995
    %v5997 = vpop.f32.mrf.mxu0
    %5998 = vmatprep.mubr.f32.mxu0 0.0
    %5999 = vmatmul.mubr.f32.gmra.mxu0 %v1277
    %v6000 = vpop.f32.mrf.mxu0
    %v6001 = vadd.f32 0.0, %v6000
    %v6002 = vpop.f32.mrf.mxu0
    %6003 = vmatprep.mubr.f32.mxu0 0.0
    %6004 = vmatmul.mubr.f32.gmra.mxu0 %v1280
    %v6005 = vpop.f32.mrf.mxu0
    %v6006 = vadd.f32 0.0, %v6005
    %v6007 = vpop.f32.mrf.mxu0
    %6008 = vmatprep.mubr.f32.mxu0 0.0
    %6009 = vmatmul.mubr.f32.gmra.mxu0 %v1283
    %v6010 = vpop.f32.mrf.mxu0
    %v6011 = vadd.f32 0.0, %v6010
    %v6012 = vpop.f32.mrf.mxu0
    %6013 = vmatprep.mubr.f32.mxu0 0.0
    %6014 = vmatmul.mubr.f32.gmra.mxu0 %v1286
    %v6015 = vpop.f32.mrf.mxu0
    %v6016 = vadd.f32 0.0, %v6015
    %v6017 = vpop.f32.mrf.mxu0
    %6018 = vmatprep.mubr.f32.mxu0 0.0
    %6019 = vmatmul.mubr.f32.gmra.mxu0 %v1289
    %v6020 = vpop.f32.mrf.mxu0
    %v6021 = vadd.f32 0.0, %v6020
    %v6022 = vpop.f32.mrf.mxu0
    %6023 = vmatprep.mubr.f32.mxu0 0.0
    %6024 = vmatmul.mubr.f32.gmra.mxu0 %v1292
    %v6025 = vpop.f32.mrf.mxu0
    %v6026 = vadd.f32 0.0, %v6025
    %v6027 = vpop.f32.mrf.mxu0
    %6028 = vmatprep.mubr.f32.mxu0 0.0
    %6029 = vmatmul.mubr.f32.gmra.mxu0 %v1295
    %v6030 = vpop.f32.mrf.mxu0
    %v6031 = vadd.f32 0.0, %v6030
    %v6032 = vpop.f32.mrf.mxu0
    %6033 = vmatprep.mubr.f32.mxu0 0.0
    %6034 = vmatmul.mubr.f32.gmra.mxu0 %v1298
    %v6035 = vpop.f32.mrf.mxu0
    %v6036 = vadd.f32 0.0, %v6035
    %v6037 = vpop.f32.mrf.mxu0
    %6038 = vmatprep.mubr.f32.mxu0 0.0
    %6039 = vmatmul.mubr.f32.gmra.mxu0 %v1301
    %v6040 = vpop.f32.mrf.mxu0
    %v6041 = vadd.f32 0.0, %v6040
    %v6042 = vpop.f32.mrf.mxu0
    %6043 = vmatprep.mubr.f32.mxu0 0.0
    %6044 = vmatmul.mubr.f32.gmra.mxu0 %v1304
    %v6045 = vpop.f32.mrf.mxu0
    %v6046 = vadd.f32 0.0, %v6045
    %v6047 = vpop.f32.mrf.mxu0
    %6048 = vmatprep.mubr.f32.mxu0 0.0
    %6049 = vmatmul.mubr.f32.gmra.mxu0 %v1307
    %v6050 = vpop.f32.mrf.mxu0
    %v6051 = vadd.f32 0.0, %v6050
    %v6052 = vpop.f32.mrf.mxu0
    %6053 = vdwg.mxu0
    %v6054 = vadd.f32 %v5818, %v5976
    %v6055 = vadd.f32 %v5819, %v5981
    %v6056 = vadd.f32 %v5820, %v5986
    %v6057 = vadd.f32 %v5821, %v5991
    %v6058 = vadd.f32 %v5822, %v5996
    %v6059 = vadd.f32 %v5823, %v6001
    %v6060 = vadd.f32 %v5824, %v6006
    %v6061 = vadd.f32 %v5825, %v6011
    %v6062 = vadd.f32 %v5826, %v6016
    %v6063 = vadd.f32 %v5827, %v6021
    %v6064 = vadd.f32 %v5828, %v6026
    %v6065 = vadd.f32 %v5829, %v6031
    %v6066 = vadd.f32 %v5830, %v6036
    %v6067 = vadd.f32 %v5831, %v6041
    %v6068 = vadd.f32 %v5832, %v6046
    %v6069 = vadd.f32 %v5833, %v6051
    %6070 = vmatprep.subr.mxu0 0.0
    %6071 = vmatpush1.msra.mxu0 0.0
    %6072 = vmatprep.subr.mxu0 0.0
    %6073 = vmatpush1.msra.mxu0 0.0
    %6074 = vmatprep.subr.mxu0 0.0
    %6075 = vmatpush1.msra.mxu0 0.0
    %6076 = vmatprep.subr.mxu0 0.0
    %6077 = vmatpush1.msra.mxu0 0.0
    %6078 = vmatprep.subr.mxu0 0.0
    %6079 = vmatpush1.msra.mxu0 0.0
    %6080 = vmatprep.subr.mxu0 0.0
    %6081 = vmatpush1.msra.mxu0 0.0
    %6082 = vmatprep.subr.mxu0 0.0
    %6083 = vmatpush1.msra.mxu0 0.0
    %6084 = vmatprep.subr.mxu0 0.0
    %6085 = vmatpush1.msra.mxu0 0.0
    %6086 = vmatprep.subr.mxu0 0.0
    %6087 = vmatpush1.msra.mxu0 %v1478
    %6088 = vmatprep.subr.mxu0 0.0
    %6089 = vmatpush1.msra.mxu0 %v1477
    %6090 = vmatprep.subr.mxu0 0.0
    %6091 = vmatpush1.msra.mxu0 %v1476
    %6092 = vmatprep.subr.mxu0 0.0
    %6093 = vmatpush1.msra.mxu0 %v1475
    %6094 = vmatprep.subr.mxu0 0.0
    %6095 = vmatpush1.msra.mxu0 %v1474
    %6096 = vmatprep.subr.mxu0 0.0
    %6097 = vmatpush1.msra.mxu0 %v1473
    %6098 = vmatprep.subr.mxu0 0.0
    %6099 = vmatpush1.msra.mxu0 %v1472
    %6100 = vmatprep.subr.mxu0 0.0
    %6101 = vmatpush1.msra.mxu0 %v1471
    %6102 = vmatprep.subr.mxu0 0.0
    %6103 = vmatpush2.msra.mxu0 0.0
    %6104 = vmatprep.subr.mxu0 0.0
    %6105 = vmatpush2.msra.mxu0 0.0
    %6106 = vmatprep.subr.mxu0 0.0
    %6107 = vmatpush2.msra.mxu0 0.0
    %6108 = vmatprep.subr.mxu0 0.0
    %6109 = vmatpush2.msra.mxu0 0.0
    %6110 = vmatprep.subr.mxu0 0.0
    %6111 = vmatpush2.msra.mxu0 0.0
    %6112 = vmatprep.subr.mxu0 0.0
    %6113 = vmatpush2.msra.mxu0 0.0
    %6114 = vmatprep.subr.mxu0 0.0
    %6115 = vmatpush2.msra.mxu0 0.0
    %6116 = vmatprep.subr.mxu0 0.0
    %6117 = vmatpush2.msra.mxu0 0.0
    %6118 = vmatprep.subr.mxu0 0.0
    %6119 = vmatpush2.msra.mxu0 0.0
    %6120 = vmatprep.subr.mxu0 0.0
    %6121 = vmatpush2.msra.mxu0 0.0
    %6122 = vmatprep.subr.mxu0 0.0
    %6123 = vmatpush2.msra.mxu0 0.0
    %6124 = vmatprep.subr.mxu0 0.0
    %6125 = vmatpush2.msra.mxu0 0.0
    %6126 = vmatprep.subr.mxu0 0.0
    %6127 = vmatpush2.msra.mxu0 0.0
    %6128 = vmatprep.subr.mxu0 0.0
    %6129 = vmatpush2.msra.mxu0 0.0
    %6130 = vmatprep.subr.mxu0 0.0
    %6131 = vmatpush2.msra.mxu0 0.0
    %6132 = vmatprep.subr.mxu0 0.0
    %6133 = vmatpush2.msra.mxu0 0.0
    %6134 = vmatprep.mubr.f32.mxu0 0.0
    %6135 = vmatmul.mubr.f32.gmra.mxu0 %v5153
    %v6136 = vpop.f32.mrf.mxu0
    %v6137 = vadd.f32 %v1485, %v6136
    %v6138 = vpop.f32.mrf.mxu0
    %6139 = vmatprep.mubr.f32.mxu0 0.0
    %6140 = vmatmul.mubr.f32.gmra.mxu0 %v5156
    %v6141 = vpop.f32.mrf.mxu0
    %v6142 = vadd.f32 %v1485, %v6141
    %v6143 = vpop.f32.mrf.mxu0
    %6144 = vdwg.mxu0
    %6145 = vmatprep.subr.mxu0 0.0
    %6146 = vmatpush1.msra.mxu0 0.0
    %6147 = vmatprep.subr.mxu0 0.0
    %6148 = vmatpush1.msra.mxu0 0.0
    %6149 = vmatprep.subr.mxu0 0.0
    %6150 = vmatpush1.msra.mxu0 0.0
    %6151 = vmatprep.subr.mxu0 0.0
    %6152 = vmatpush1.msra.mxu0 0.0
    %6153 = vmatprep.subr.mxu0 0.0
    %6154 = vmatpush1.msra.mxu0 0.0
    %6155 = vmatprep.subr.mxu0 0.0
    %6156 = vmatpush1.msra.mxu0 0.0
    %6157 = vmatprep.subr.mxu0 0.0
    %6158 = vmatpush1.msra.mxu0 0.0
    %6159 = vmatprep.subr.mxu0 0.0
    %6160 = vmatpush1.msra.mxu0 0.0
    %6161 = vmatprep.subr.mxu0 0.0
    %6162 = vmatpush1.msra.mxu0 0.0
    %6163 = vmatprep.subr.mxu0 0.0
    %6164 = vmatpush1.msra.mxu0 0.0
    %6165 = vmatprep.subr.mxu0 0.0
    %6166 = vmatpush1.msra.mxu0 0.0
    %6167 = vmatprep.subr.mxu0 0.0
    %6168 = vmatpush1.msra.mxu0 0.0
    %6169 = vmatprep.subr.mxu0 0.0
    %6170 = vmatpush1.msra.mxu0 0.0
    %6171 = vmatprep.subr.mxu0 0.0
    %6172 = vmatpush1.msra.mxu0 0.0
    %6173 = vmatprep.subr.mxu0 0.0
    %6174 = vmatpush1.msra.mxu0 %v6142
    %6175 = vmatprep.subr.mxu0 0.0
    %6176 = vmatpush1.msra.mxu0 %v6137
    %6177 = vmatprep.subr.mxu0 0.0
    %6178 = vmatpush2.msra.mxu0 0.0
    %6179 = vmatprep.subr.mxu0 0.0
    %6180 = vmatpush2.msra.mxu0 0.0
    %6181 = vmatprep.subr.mxu0 0.0
    %6182 = vmatpush2.msra.mxu0 0.0
    %6183 = vmatprep.subr.mxu0 0.0
    %6184 = vmatpush2.msra.mxu0 0.0
    %6185 = vmatprep.subr.mxu0 0.0
    %6186 = vmatpush2.msra.mxu0 0.0
    %6187 = vmatprep.subr.mxu0 0.0
    %6188 = vmatpush2.msra.mxu0 0.0
    %6189 = vmatprep.subr.mxu0 0.0
    %6190 = vmatpush2.msra.mxu0 0.0
    %6191 = vmatprep.subr.mxu0 0.0
    %6192 = vmatpush2.msra.mxu0 0.0
    %6193 = vmatprep.subr.mxu0 0.0
    %6194 = vmatpush2.msra.mxu0 0.0
    %6195 = vmatprep.subr.mxu0 0.0
    %6196 = vmatpush2.msra.mxu0 0.0
    %6197 = vmatprep.subr.mxu0 0.0
    %6198 = vmatpush2.msra.mxu0 0.0
    %6199 = vmatprep.subr.mxu0 0.0
    %6200 = vmatpush2.msra.mxu0 0.0
    %6201 = vmatprep.subr.mxu0 0.0
    %6202 = vmatpush2.msra.mxu0 0.0
    %6203 = vmatprep.subr.mxu0 0.0
    %6204 = vmatpush2.msra.mxu0 0.0
    %6205 = vmatprep.subr.mxu0 0.0
    %6206 = vmatpush2.msra.mxu0 0.0
    %6207 = vmatprep.subr.mxu0 0.0
    %6208 = vmatpush2.msra.mxu0 0.0
    %6209 = vmatprep.mubr.f32.mxu0 0.0
    %6210 = vmatmul.mubr.f32.gmra.mxu0 %v1580
    %v6211 = vpop.f32.mrf.mxu0
    %v6212 = vadd.f32 0.0, %v6211
    %v6213 = vpop.f32.mrf.mxu0
    %6214 = vmatprep.mubr.f32.mxu0 0.0
    %6215 = vmatmul.mubr.f32.gmra.mxu0 %v1583
    %v6216 = vpop.f32.mrf.mxu0
    %v6217 = vadd.f32 0.0, %v6216
    %v6218 = vpop.f32.mrf.mxu0
    %6219 = vmatprep.mubr.f32.mxu0 0.0
    %6220 = vmatmul.mubr.f32.gmra.mxu0 %v1586
    %v6221 = vpop.f32.mrf.mxu0
    %v6222 = vadd.f32 0.0, %v6221
    %v6223 = vpop.f32.mrf.mxu0
    %6224 = vmatprep.mubr.f32.mxu0 0.0
    %6225 = vmatmul.mubr.f32.gmra.mxu0 %v1589
    %v6226 = vpop.f32.mrf.mxu0
    %v6227 = vadd.f32 0.0, %v6226
    %v6228 = vpop.f32.mrf.mxu0
    %6229 = vmatprep.mubr.f32.mxu0 0.0
    %6230 = vmatmul.mubr.f32.gmra.mxu0 %v1592
    %v6231 = vpop.f32.mrf.mxu0
    %v6232 = vadd.f32 0.0, %v6231
    %v6233 = vpop.f32.mrf.mxu0
    %6234 = vmatprep.mubr.f32.mxu0 0.0
    %6235 = vmatmul.mubr.f32.gmra.mxu0 %v1595
    %v6236 = vpop.f32.mrf.mxu0
    %v6237 = vadd.f32 0.0, %v6236
    %v6238 = vpop.f32.mrf.mxu0
    %6239 = vmatprep.mubr.f32.mxu0 0.0
    %6240 = vmatmul.mubr.f32.gmra.mxu0 %v1598
    %v6241 = vpop.f32.mrf.mxu0
    %v6242 = vadd.f32 0.0, %v6241
    %v6243 = vpop.f32.mrf.mxu0
    %6244 = vmatprep.mubr.f32.mxu0 0.0
    %6245 = vmatmul.mubr.f32.gmra.mxu0 %v1601
    %v6246 = vpop.f32.mrf.mxu0
    %v6247 = vadd.f32 0.0, %v6246
    %v6248 = vpop.f32.mrf.mxu0
    %6249 = vmatprep.mubr.f32.mxu0 0.0
    %6250 = vmatmul.mubr.f32.gmra.mxu0 %v1604
    %v6251 = vpop.f32.mrf.mxu0
    %v6252 = vadd.f32 0.0, %v6251
    %v6253 = vpop.f32.mrf.mxu0
    %6254 = vmatprep.mubr.f32.mxu0 0.0
    %6255 = vmatmul.mubr.f32.gmra.mxu0 %v1607
    %v6256 = vpop.f32.mrf.mxu0
    %v6257 = vadd.f32 0.0, %v6256
    %v6258 = vpop.f32.mrf.mxu0
    %6259 = vmatprep.mubr.f32.mxu0 0.0
    %6260 = vmatmul.mubr.f32.gmra.mxu0 %v1610
    %v6261 = vpop.f32.mrf.mxu0
    %v6262 = vadd.f32 0.0, %v6261
    %v6263 = vpop.f32.mrf.mxu0
    %6264 = vmatprep.mubr.f32.mxu0 0.0
    %6265 = vmatmul.mubr.f32.gmra.mxu0 %v1613
    %v6266 = vpop.f32.mrf.mxu0
    %v6267 = vadd.f32 0.0, %v6266
    %v6268 = vpop.f32.mrf.mxu0
    %6269 = vmatprep.mubr.f32.mxu0 0.0
    %6270 = vmatmul.mubr.f32.gmra.mxu0 %v1616
    %v6271 = vpop.f32.mrf.mxu0
    %v6272 = vadd.f32 0.0, %v6271
    %v6273 = vpop.f32.mrf.mxu0
    %6274 = vmatprep.mubr.f32.mxu0 0.0
    %6275 = vmatmul.mubr.f32.gmra.mxu0 %v1619
    %v6276 = vpop.f32.mrf.mxu0
    %v6277 = vadd.f32 0.0, %v6276
    %v6278 = vpop.f32.mrf.mxu0
    %6279 = vmatprep.mubr.f32.mxu0 0.0
    %6280 = vmatmul.mubr.f32.gmra.mxu0 %v1622
    %v6281 = vpop.f32.mrf.mxu0
    %v6282 = vadd.f32 0.0, %v6281
    %v6283 = vpop.f32.mrf.mxu0
    %6284 = vmatprep.mubr.f32.mxu0 0.0
    %6285 = vmatmul.mubr.f32.gmra.mxu0 %v1625
    %v6286 = vpop.f32.mrf.mxu0
    %v6287 = vadd.f32 0.0, %v6286
    %v6288 = vpop.f32.mrf.mxu0
    %6289 = vdwg.mxu0
    %v6290 = vadd.f32 %v6054, %v6212
    %v6291 = vadd.f32 %v6055, %v6217
    %v6292 = vadd.f32 %v6056, %v6222
    %v6293 = vadd.f32 %v6057, %v6227
    %v6294 = vadd.f32 %v6058, %v6232
    %v6295 = vadd.f32 %v6059, %v6237
    %v6296 = vadd.f32 %v6060, %v6242
    %v6297 = vadd.f32 %v6061, %v6247
    %v6298 = vadd.f32 %v6062, %v6252
    %v6299 = vadd.f32 %v6063, %v6257
    %v6300 = vadd.f32 %v6064, %v6262
    %v6301 = vadd.f32 %v6065, %v6267
    %v6302 = vadd.f32 %v6066, %v6272
    %v6303 = vadd.f32 %v6067, %v6277
    %v6304 = vadd.f32 %v6068, %v6282
    %v6305 = vadd.f32 %v6069, %v6287
    %6306 = vmatprep.subr.mxu0 0.0
    %6307 = vmatpush1.msra.mxu0 0.0
    %6308 = vmatprep.subr.mxu0 0.0
    %6309 = vmatpush1.msra.mxu0 0.0
    %6310 = vmatprep.subr.mxu0 0.0
    %6311 = vmatpush1.msra.mxu0 0.0
    %6312 = vmatprep.subr.mxu0 0.0
    %6313 = vmatpush1.msra.mxu0 0.0
    %6314 = vmatprep.subr.mxu0 0.0
    %6315 = vmatpush1.msra.mxu0 0.0
    %6316 = vmatprep.subr.mxu0 0.0
    %6317 = vmatpush1.msra.mxu0 0.0
    %6318 = vmatprep.subr.mxu0 0.0
    %6319 = vmatpush1.msra.mxu0 0.0
    %6320 = vmatprep.subr.mxu0 0.0
    %6321 = vmatpush1.msra.mxu0 0.0
    %6322 = vmatprep.subr.mxu0 0.0
    %6323 = vmatpush1.msra.mxu0 %v1796
    %6324 = vmatprep.subr.mxu0 0.0
    %6325 = vmatpush1.msra.mxu0 %v1795
    %6326 = vmatprep.subr.mxu0 0.0
    %6327 = vmatpush1.msra.mxu0 %v1794
    %6328 = vmatprep.subr.mxu0 0.0
    %6329 = vmatpush1.msra.mxu0 %v1793
    %6330 = vmatprep.subr.mxu0 0.0
    %6331 = vmatpush1.msra.mxu0 %v1792
    %6332 = vmatprep.subr.mxu0 0.0
    %6333 = vmatpush1.msra.mxu0 %v1791
    %6334 = vmatprep.subr.mxu0 0.0
    %6335 = vmatpush1.msra.mxu0 %v1790
    %6336 = vmatprep.subr.mxu0 0.0
    %6337 = vmatpush1.msra.mxu0 %v1789
    %6338 = vmatprep.subr.mxu0 0.0
    %6339 = vmatpush2.msra.mxu0 0.0
    %6340 = vmatprep.subr.mxu0 0.0
    %6341 = vmatpush2.msra.mxu0 0.0
    %6342 = vmatprep.subr.mxu0 0.0
    %6343 = vmatpush2.msra.mxu0 0.0
    %6344 = vmatprep.subr.mxu0 0.0
    %6345 = vmatpush2.msra.mxu0 0.0
    %6346 = vmatprep.subr.mxu0 0.0
    %6347 = vmatpush2.msra.mxu0 0.0
    %6348 = vmatprep.subr.mxu0 0.0
    %6349 = vmatpush2.msra.mxu0 0.0
    %6350 = vmatprep.subr.mxu0 0.0
    %6351 = vmatpush2.msra.mxu0 0.0
    %6352 = vmatprep.subr.mxu0 0.0
    %6353 = vmatpush2.msra.mxu0 0.0
    %6354 = vmatprep.subr.mxu0 0.0
    %6355 = vmatpush2.msra.mxu0 0.0
    %6356 = vmatprep.subr.mxu0 0.0
    %6357 = vmatpush2.msra.mxu0 0.0
    %6358 = vmatprep.subr.mxu0 0.0
    %6359 = vmatpush2.msra.mxu0 0.0
    %6360 = vmatprep.subr.mxu0 0.0
    %6361 = vmatpush2.msra.mxu0 0.0
    %6362 = vmatprep.subr.mxu0 0.0
    %6363 = vmatpush2.msra.mxu0 0.0
    %6364 = vmatprep.subr.mxu0 0.0
    %6365 = vmatpush2.msra.mxu0 0.0
    %6366 = vmatprep.subr.mxu0 0.0
    %6367 = vmatpush2.msra.mxu0 0.0
    %6368 = vmatprep.subr.mxu0 0.0
    %6369 = vmatpush2.msra.mxu0 0.0
    %6370 = vmatprep.mubr.f32.mxu0 0.0
    %6371 = vmatmul.mubr.f32.gmra.mxu0 %v5153
    %v6372 = vpop.f32.mrf.mxu0
    %v6373 = vadd.f32 %v1803, %v6372
    %v6374 = vpop.f32.mrf.mxu0
    %6375 = vmatprep.mubr.f32.mxu0 0.0
    %6376 = vmatmul.mubr.f32.gmra.mxu0 %v5156
    %v6377 = vpop.f32.mrf.mxu0
    %v6378 = vadd.f32 %v1803, %v6377
    %v6379 = vpop.f32.mrf.mxu0
    %6380 = vdwg.mxu0
    %6381 = vmatprep.subr.mxu0 0.0
    %6382 = vmatpush1.msra.mxu0 0.0
    %6383 = vmatprep.subr.mxu0 0.0
    %6384 = vmatpush1.msra.mxu0 0.0
    %6385 = vmatprep.subr.mxu0 0.0
    %6386 = vmatpush1.msra.mxu0 0.0
    %6387 = vmatprep.subr.mxu0 0.0
    %6388 = vmatpush1.msra.mxu0 0.0
    %6389 = vmatprep.subr.mxu0 0.0
    %6390 = vmatpush1.msra.mxu0 0.0
    %6391 = vmatprep.subr.mxu0 0.0
    %6392 = vmatpush1.msra.mxu0 0.0
    %6393 = vmatprep.subr.mxu0 0.0
    %6394 = vmatpush1.msra.mxu0 0.0
    %6395 = vmatprep.subr.mxu0 0.0
    %6396 = vmatpush1.msra.mxu0 0.0
    %6397 = vmatprep.subr.mxu0 0.0
    %6398 = vmatpush1.msra.mxu0 0.0
    %6399 = vmatprep.subr.mxu0 0.0
    %6400 = vmatpush1.msra.mxu0 0.0
    %6401 = vmatprep.subr.mxu0 0.0
    %6402 = vmatpush1.msra.mxu0 0.0
    %6403 = vmatprep.subr.mxu0 0.0
    %6404 = vmatpush1.msra.mxu0 0.0
    %6405 = vmatprep.subr.mxu0 0.0
    %6406 = vmatpush1.msra.mxu0 0.0
    %6407 = vmatprep.subr.mxu0 0.0
    %6408 = vmatpush1.msra.mxu0 0.0
    %6409 = vmatprep.subr.mxu0 0.0
    %6410 = vmatpush1.msra.mxu0 %v6378
    %6411 = vmatprep.subr.mxu0 0.0
    %6412 = vmatpush1.msra.mxu0 %v6373
    %6413 = vmatprep.subr.mxu0 0.0
    %6414 = vmatpush2.msra.mxu0 0.0
    %6415 = vmatprep.subr.mxu0 0.0
    %6416 = vmatpush2.msra.mxu0 0.0
    %6417 = vmatprep.subr.mxu0 0.0
    %6418 = vmatpush2.msra.mxu0 0.0
    %6419 = vmatprep.subr.mxu0 0.0
    %6420 = vmatpush2.msra.mxu0 0.0
    %6421 = vmatprep.subr.mxu0 0.0
    %6422 = vmatpush2.msra.mxu0 0.0
    %6423 = vmatprep.subr.mxu0 0.0
    %6424 = vmatpush2.msra.mxu0 0.0
    %6425 = vmatprep.subr.mxu0 0.0
    %6426 = vmatpush2.msra.mxu0 0.0
    %6427 = vmatprep.subr.mxu0 0.0
    %6428 = vmatpush2.msra.mxu0 0.0
    %6429 = vmatprep.subr.mxu0 0.0
    %6430 = vmatpush2.msra.mxu0 0.0
    %6431 = vmatprep.subr.mxu0 0.0
    %6432 = vmatpush2.msra.mxu0 0.0
    %6433 = vmatprep.subr.mxu0 0.0
    %6434 = vmatpush2.msra.mxu0 0.0
    %6435 = vmatprep.subr.mxu0 0.0
    %6436 = vmatpush2.msra.mxu0 0.0
    %6437 = vmatprep.subr.mxu0 0.0
    %6438 = vmatpush2.msra.mxu0 0.0
    %6439 = vmatprep.subr.mxu0 0.0
    %6440 = vmatpush2.msra.mxu0 0.0
    %6441 = vmatprep.subr.mxu0 0.0
    %6442 = vmatpush2.msra.mxu0 0.0
    %6443 = vmatprep.subr.mxu0 0.0
    %6444 = vmatpush2.msra.mxu0 0.0
    %6445 = vmatprep.mubr.f32.mxu0 0.0
    %6446 = vmatmul.mubr.f32.gmra.mxu0 %v1898
    %v6447 = vpop.f32.mrf.mxu0
    %v6448 = vadd.f32 0.0, %v6447
    %v6449 = vpop.f32.mrf.mxu0
    %6450 = vmatprep.mubr.f32.mxu0 0.0
    %6451 = vmatmul.mubr.f32.gmra.mxu0 %v1901
    %v6452 = vpop.f32.mrf.mxu0
    %v6453 = vadd.f32 0.0, %v6452
    %v6454 = vpop.f32.mrf.mxu0
    %6455 = vmatprep.mubr.f32.mxu0 0.0
    %6456 = vmatmul.mubr.f32.gmra.mxu0 %v1904
    %v6457 = vpop.f32.mrf.mxu0
    %v6458 = vadd.f32 0.0, %v6457
    %v6459 = vpop.f32.mrf.mxu0
    %6460 = vmatprep.mubr.f32.mxu0 0.0
    %6461 = vmatmul.mubr.f32.gmra.mxu0 %v1907
    %v6462 = vpop.f32.mrf.mxu0
    %v6463 = vadd.f32 0.0, %v6462
    %v6464 = vpop.f32.mrf.mxu0
    %6465 = vmatprep.mubr.f32.mxu0 0.0
    %6466 = vmatmul.mubr.f32.gmra.mxu0 %v1910
    %v6467 = vpop.f32.mrf.mxu0
    %v6468 = vadd.f32 0.0, %v6467
    %v6469 = vpop.f32.mrf.mxu0
    %6470 = vmatprep.mubr.f32.mxu0 0.0
    %6471 = vmatmul.mubr.f32.gmra.mxu0 %v1913
    %v6472 = vpop.f32.mrf.mxu0
    %v6473 = vadd.f32 0.0, %v6472
    %v6474 = vpop.f32.mrf.mxu0
    %6475 = vmatprep.mubr.f32.mxu0 0.0
    %6476 = vmatmul.mubr.f32.gmra.mxu0 %v1916
    %v6477 = vpop.f32.mrf.mxu0
    %v6478 = vadd.f32 0.0, %v6477
    %v6479 = vpop.f32.mrf.mxu0
    %6480 = vmatprep.mubr.f32.mxu0 0.0
    %6481 = vmatmul.mubr.f32.gmra.mxu0 %v1919
    %v6482 = vpop.f32.mrf.mxu0
    %v6483 = vadd.f32 0.0, %v6482
    %v6484 = vpop.f32.mrf.mxu0
    %6485 = vmatprep.mubr.f32.mxu0 0.0
    %6486 = vmatmul.mubr.f32.gmra.mxu0 %v1922
    %v6487 = vpop.f32.mrf.mxu0
    %v6488 = vadd.f32 0.0, %v6487
    %v6489 = vpop.f32.mrf.mxu0
    %6490 = vmatprep.mubr.f32.mxu0 0.0
    %6491 = vmatmul.mubr.f32.gmra.mxu0 %v1925
    %v6492 = vpop.f32.mrf.mxu0
    %v6493 = vadd.f32 0.0, %v6492
    %v6494 = vpop.f32.mrf.mxu0
    %6495 = vmatprep.mubr.f32.mxu0 0.0
    %6496 = vmatmul.mubr.f32.gmra.mxu0 %v1928
    %v6497 = vpop.f32.mrf.mxu0
    %v6498 = vadd.f32 0.0, %v6497
    %v6499 = vpop.f32.mrf.mxu0
    %6500 = vmatprep.mubr.f32.mxu0 0.0
    %6501 = vmatmul.mubr.f32.gmra.mxu0 %v1931
    %v6502 = vpop.f32.mrf.mxu0
    %v6503 = vadd.f32 0.0, %v6502
    %v6504 = vpop.f32.mrf.mxu0
    %6505 = vmatprep.mubr.f32.mxu0 0.0
    %6506 = vmatmul.mubr.f32.gmra.mxu0 %v1934
    %v6507 = vpop.f32.mrf.mxu0
    %v6508 = vadd.f32 0.0, %v6507
    %v6509 = vpop.f32.mrf.mxu0
    %6510 = vmatprep.mubr.f32.mxu0 0.0
    %6511 = vmatmul.mubr.f32.gmra.mxu0 %v1937
    %v6512 = vpop.f32.mrf.mxu0
    %v6513 = vadd.f32 0.0, %v6512
    %v6514 = vpop.f32.mrf.mxu0
    %6515 = vmatprep.mubr.f32.mxu0 0.0
    %6516 = vmatmul.mubr.f32.gmra.mxu0 %v1940
    %v6517 = vpop.f32.mrf.mxu0
    %v6518 = vadd.f32 0.0, %v6517
    %v6519 = vpop.f32.mrf.mxu0
    %6520 = vmatprep.mubr.f32.mxu0 0.0
    %6521 = vmatmul.mubr.f32.gmra.mxu0 %v1943
    %v6522 = vpop.f32.mrf.mxu0
    %v6523 = vadd.f32 0.0, %v6522
    %v6524 = vpop.f32.mrf.mxu0
    %6525 = vdwg.mxu0
    %v6526 = vadd.f32 %v6290, %v6448
    %v6527 = vadd.f32 %v6291, %v6453
    %v6528 = vadd.f32 %v6292, %v6458
    %v6529 = vadd.f32 %v6293, %v6463
    %v6530 = vadd.f32 %v6294, %v6468
    %v6531 = vadd.f32 %v6295, %v6473
    %v6532 = vadd.f32 %v6296, %v6478
    %v6533 = vadd.f32 %v6297, %v6483
    %v6534 = vadd.f32 %v6298, %v6488
    %v6535 = vadd.f32 %v6299, %v6493
    %v6536 = vadd.f32 %v6300, %v6498
    %v6537 = vadd.f32 %v6301, %v6503
    %v6538 = vadd.f32 %v6302, %v6508
    %v6539 = vadd.f32 %v6303, %v6513
    %v6540 = vadd.f32 %v6304, %v6518
    %v6541 = vadd.f32 %v6305, %v6523
    %6542 = vmatprep.subr.mxu0 0.0
    %6543 = vmatpush1.msra.mxu0 0.0
    %6544 = vmatprep.subr.mxu0 0.0
    %6545 = vmatpush1.msra.mxu0 0.0
    %6546 = vmatprep.subr.mxu0 0.0
    %6547 = vmatpush1.msra.mxu0 0.0
    %6548 = vmatprep.subr.mxu0 0.0
    %6549 = vmatpush1.msra.mxu0 0.0
    %6550 = vmatprep.subr.mxu0 0.0
    %6551 = vmatpush1.msra.mxu0 0.0
    %6552 = vmatprep.subr.mxu0 0.0
    %6553 = vmatpush1.msra.mxu0 0.0
    %6554 = vmatprep.subr.mxu0 0.0
    %6555 = vmatpush1.msra.mxu0 0.0
    %6556 = vmatprep.subr.mxu0 0.0
    %6557 = vmatpush1.msra.mxu0 0.0
    %6558 = vmatprep.subr.mxu0 0.0
    %6559 = vmatpush1.msra.mxu0 %v2114
    %6560 = vmatprep.subr.mxu0 0.0
    %6561 = vmatpush1.msra.mxu0 %v2113
    %6562 = vmatprep.subr.mxu0 0.0
    %6563 = vmatpush1.msra.mxu0 %v2112
    %6564 = vmatprep.subr.mxu0 0.0
    %6565 = vmatpush1.msra.mxu0 %v2111
    %6566 = vmatprep.subr.mxu0 0.0
    %6567 = vmatpush1.msra.mxu0 %v2110
    %6568 = vmatprep.subr.mxu0 0.0
    %6569 = vmatpush1.msra.mxu0 %v2109
    %6570 = vmatprep.subr.mxu0 0.0
    %6571 = vmatpush1.msra.mxu0 %v2108
    %6572 = vmatprep.subr.mxu0 0.0
    %6573 = vmatpush1.msra.mxu0 %v2107
    %6574 = vmatprep.subr.mxu0 0.0
    %6575 = vmatpush2.msra.mxu0 0.0
    %6576 = vmatprep.subr.mxu0 0.0
    %6577 = vmatpush2.msra.mxu0 0.0
    %6578 = vmatprep.subr.mxu0 0.0
    %6579 = vmatpush2.msra.mxu0 0.0
    %6580 = vmatprep.subr.mxu0 0.0
    %6581 = vmatpush2.msra.mxu0 0.0
    %6582 = vmatprep.subr.mxu0 0.0
    %6583 = vmatpush2.msra.mxu0 0.0
    %6584 = vmatprep.subr.mxu0 0.0
    %6585 = vmatpush2.msra.mxu0 0.0
    %6586 = vmatprep.subr.mxu0 0.0
    %6587 = vmatpush2.msra.mxu0 0.0
    %6588 = vmatprep.subr.mxu0 0.0
    %6589 = vmatpush2.msra.mxu0 0.0
    %6590 = vmatprep.subr.mxu0 0.0
    %6591 = vmatpush2.msra.mxu0 0.0
    %6592 = vmatprep.subr.mxu0 0.0
    %6593 = vmatpush2.msra.mxu0 0.0
    %6594 = vmatprep.subr.mxu0 0.0
    %6595 = vmatpush2.msra.mxu0 0.0
    %6596 = vmatprep.subr.mxu0 0.0
    %6597 = vmatpush2.msra.mxu0 0.0
    %6598 = vmatprep.subr.mxu0 0.0
    %6599 = vmatpush2.msra.mxu0 0.0
    %6600 = vmatprep.subr.mxu0 0.0
    %6601 = vmatpush2.msra.mxu0 0.0
    %6602 = vmatprep.subr.mxu0 0.0
    %6603 = vmatpush2.msra.mxu0 0.0
    %6604 = vmatprep.subr.mxu0 0.0
    %6605 = vmatpush2.msra.mxu0 0.0
    %6606 = vmatprep.mubr.f32.mxu0 0.0
    %6607 = vmatmul.mubr.f32.gmra.mxu0 %v5153
    %v6608 = vpop.f32.mrf.mxu0
    %v6609 = vadd.f32 %v2121, %v6608
    %v6610 = vpop.f32.mrf.mxu0
    %6611 = vmatprep.mubr.f32.mxu0 0.0
    %6612 = vmatmul.mubr.f32.gmra.mxu0 %v5156
    %v6613 = vpop.f32.mrf.mxu0
    %v6614 = vadd.f32 %v2121, %v6613
    %v6615 = vpop.f32.mrf.mxu0
    %6616 = vdwg.mxu0
    %6617 = vmatprep.subr.mxu0 0.0
    %6618 = vmatpush1.msra.mxu0 0.0
    %6619 = vmatprep.subr.mxu0 0.0
    %6620 = vmatpush1.msra.mxu0 0.0
    %6621 = vmatprep.subr.mxu0 0.0
    %6622 = vmatpush1.msra.mxu0 0.0
    %6623 = vmatprep.subr.mxu0 0.0
    %6624 = vmatpush1.msra.mxu0 0.0
    %6625 = vmatprep.subr.mxu0 0.0
    %6626 = vmatpush1.msra.mxu0 0.0
    %6627 = vmatprep.subr.mxu0 0.0
    %6628 = vmatpush1.msra.mxu0 0.0
    %6629 = vmatprep.subr.mxu0 0.0
    %6630 = vmatpush1.msra.mxu0 0.0
    %6631 = vmatprep.subr.mxu0 0.0
    %6632 = vmatpush1.msra.mxu0 0.0
    %6633 = vmatprep.subr.mxu0 0.0
    %6634 = vmatpush1.msra.mxu0 0.0
    %6635 = vmatprep.subr.mxu0 0.0
    %6636 = vmatpush1.msra.mxu0 0.0
    %6637 = vmatprep.subr.mxu0 0.0
    %6638 = vmatpush1.msra.mxu0 0.0
    %6639 = vmatprep.subr.mxu0 0.0
    %6640 = vmatpush1.msra.mxu0 0.0
    %6641 = vmatprep.subr.mxu0 0.0
    %6642 = vmatpush1.msra.mxu0 0.0
    %6643 = vmatprep.subr.mxu0 0.0
    %6644 = vmatpush1.msra.mxu0 0.0
    %6645 = vmatprep.subr.mxu0 0.0
    %6646 = vmatpush1.msra.mxu0 %v6614
    %6647 = vmatprep.subr.mxu0 0.0
    %6648 = vmatpush1.msra.mxu0 %v6609
    %6649 = vmatprep.subr.mxu0 0.0
    %6650 = vmatpush2.msra.mxu0 0.0
    %6651 = vmatprep.subr.mxu0 0.0
    %6652 = vmatpush2.msra.mxu0 0.0
    %6653 = vmatprep.subr.mxu0 0.0
    %6654 = vmatpush2.msra.mxu0 0.0
    %6655 = vmatprep.subr.mxu0 0.0
    %6656 = vmatpush2.msra.mxu0 0.0
    %6657 = vmatprep.subr.mxu0 0.0
    %6658 = vmatpush2.msra.mxu0 0.0
    %6659 = vmatprep.subr.mxu0 0.0
    %6660 = vmatpush2.msra.mxu0 0.0
    %6661 = vmatprep.subr.mxu0 0.0
    %6662 = vmatpush2.msra.mxu0 0.0
    %6663 = vmatprep.subr.mxu0 0.0
    %6664 = vmatpush2.msra.mxu0 0.0
    %6665 = vmatprep.subr.mxu0 0.0
    %6666 = vmatpush2.msra.mxu0 0.0
    %6667 = vmatprep.subr.mxu0 0.0
    %6668 = vmatpush2.msra.mxu0 0.0
    %6669 = vmatprep.subr.mxu0 0.0
    %6670 = vmatpush2.msra.mxu0 0.0
    %6671 = vmatprep.subr.mxu0 0.0
    %6672 = vmatpush2.msra.mxu0 0.0
    %6673 = vmatprep.subr.mxu0 0.0
    %6674 = vmatpush2.msra.mxu0 0.0
    %6675 = vmatprep.subr.mxu0 0.0
    %6676 = vmatpush2.msra.mxu0 0.0
    %6677 = vmatprep.subr.mxu0 0.0
    %6678 = vmatpush2.msra.mxu0 0.0
    %6679 = vmatprep.subr.mxu0 0.0
    %6680 = vmatpush2.msra.mxu0 0.0
    %6681 = vmatprep.mubr.f32.mxu0 0.0
    %6682 = vmatmul.mubr.f32.gmra.mxu0 %v2216
    %v6683 = vpop.f32.mrf.mxu0
    %v6684 = vadd.f32 0.0, %v6683
    %v6685 = vpop.f32.mrf.mxu0
    %6686 = vmatprep.mubr.f32.mxu0 0.0
    %6687 = vmatmul.mubr.f32.gmra.mxu0 %v2219
    %v6688 = vpop.f32.mrf.mxu0
    %v6689 = vadd.f32 0.0, %v6688
    %v6690 = vpop.f32.mrf.mxu0
    %6691 = vmatprep.mubr.f32.mxu0 0.0
    %6692 = vmatmul.mubr.f32.gmra.mxu0 %v2222
    %v6693 = vpop.f32.mrf.mxu0
    %v6694 = vadd.f32 0.0, %v6693
    %v6695 = vpop.f32.mrf.mxu0
    %6696 = vmatprep.mubr.f32.mxu0 0.0
    %6697 = vmatmul.mubr.f32.gmra.mxu0 %v2225
    %v6698 = vpop.f32.mrf.mxu0
    %v6699 = vadd.f32 0.0, %v6698
    %v6700 = vpop.f32.mrf.mxu0
    %6701 = vmatprep.mubr.f32.mxu0 0.0
    %6702 = vmatmul.mubr.f32.gmra.mxu0 %v2228
    %v6703 = vpop.f32.mrf.mxu0
    %v6704 = vadd.f32 0.0, %v6703
    %v6705 = vpop.f32.mrf.mxu0
    %6706 = vmatprep.mubr.f32.mxu0 0.0
    %6707 = vmatmul.mubr.f32.gmra.mxu0 %v2231
    %v6708 = vpop.f32.mrf.mxu0
    %v6709 = vadd.f32 0.0, %v6708
    %v6710 = vpop.f32.mrf.mxu0
    %6711 = vmatprep.mubr.f32.mxu0 0.0
    %6712 = vmatmul.mubr.f32.gmra.mxu0 %v2234
    %v6713 = vpop.f32.mrf.mxu0
    %v6714 = vadd.f32 0.0, %v6713
    %v6715 = vpop.f32.mrf.mxu0
    %6716 = vmatprep.mubr.f32.mxu0 0.0
    %6717 = vmatmul.mubr.f32.gmra.mxu0 %v2237
    %v6718 = vpop.f32.mrf.mxu0
    %v6719 = vadd.f32 0.0, %v6718
    %v6720 = vpop.f32.mrf.mxu0
    %6721 = vmatprep.mubr.f32.mxu0 0.0
    %6722 = vmatmul.mubr.f32.gmra.mxu0 %v2240
    %v6723 = vpop.f32.mrf.mxu0
    %v6724 = vadd.f32 0.0, %v6723
    %v6725 = vpop.f32.mrf.mxu0
    %6726 = vmatprep.mubr.f32.mxu0 0.0
    %6727 = vmatmul.mubr.f32.gmra.mxu0 %v2243
    %v6728 = vpop.f32.mrf.mxu0
    %v6729 = vadd.f32 0.0, %v6728
    %v6730 = vpop.f32.mrf.mxu0
    %6731 = vmatprep.mubr.f32.mxu0 0.0
    %6732 = vmatmul.mubr.f32.gmra.mxu0 %v2246
    %v6733 = vpop.f32.mrf.mxu0
    %v6734 = vadd.f32 0.0, %v6733
    %v6735 = vpop.f32.mrf.mxu0
    %6736 = vmatprep.mubr.f32.mxu0 0.0
    %6737 = vmatmul.mubr.f32.gmra.mxu0 %v2249
    %v6738 = vpop.f32.mrf.mxu0
    %v6739 = vadd.f32 0.0, %v6738
    %v6740 = vpop.f32.mrf.mxu0
    %6741 = vmatprep.mubr.f32.mxu0 0.0
    %6742 = vmatmul.mubr.f32.gmra.mxu0 %v2252
    %v6743 = vpop.f32.mrf.mxu0
    %v6744 = vadd.f32 0.0, %v6743
    %v6745 = vpop.f32.mrf.mxu0
    %6746 = vmatprep.mubr.f32.mxu0 0.0
    %6747 = vmatmul.mubr.f32.gmra.mxu0 %v2255
    %v6748 = vpop.f32.mrf.mxu0
    %v6749 = vadd.f32 0.0, %v6748
    %v6750 = vpop.f32.mrf.mxu0
    %6751 = vmatprep.mubr.f32.mxu0 0.0
    %6752 = vmatmul.mubr.f32.gmra.mxu0 %v2258
    %v6753 = vpop.f32.mrf.mxu0
    %v6754 = vadd.f32 0.0, %v6753
    %v6755 = vpop.f32.mrf.mxu0
    %6756 = vmatprep.mubr.f32.mxu0 0.0
    %6757 = vmatmul.mubr.f32.gmra.mxu0 %v2261
    %v6758 = vpop.f32.mrf.mxu0
    %v6759 = vadd.f32 0.0, %v6758
    %v6760 = vpop.f32.mrf.mxu0
    %6761 = vdwg.mxu0
    %v6762 = vadd.f32 %v6526, %v6684
    %v6763 = vadd.f32 %v6527, %v6689
    %v6764 = vadd.f32 %v6528, %v6694
    %v6765 = vadd.f32 %v6529, %v6699
    %v6766 = vadd.f32 %v6530, %v6704
    %v6767 = vadd.f32 %v6531, %v6709
    %v6768 = vadd.f32 %v6532, %v6714
    %v6769 = vadd.f32 %v6533, %v6719
    %v6770 = vadd.f32 %v6534, %v6724
    %v6771 = vadd.f32 %v6535, %v6729
    %v6772 = vadd.f32 %v6536, %v6734
    %v6773 = vadd.f32 %v6537, %v6739
    %v6774 = vadd.f32 %v6538, %v6744
    %v6775 = vadd.f32 %v6539, %v6749
    %v6776 = vadd.f32 %v6540, %v6754
    %v6777 = vadd.f32 %v6541, %v6759
    %6778 = vmatprep.subr.mxu0 0.0
    %6779 = vmatpush1.msra.mxu0 0.0
    %6780 = vmatprep.subr.mxu0 0.0
    %6781 = vmatpush1.msra.mxu0 0.0
    %6782 = vmatprep.subr.mxu0 0.0
    %6783 = vmatpush1.msra.mxu0 0.0
    %6784 = vmatprep.subr.mxu0 0.0
    %6785 = vmatpush1.msra.mxu0 0.0
    %6786 = vmatprep.subr.mxu0 0.0
    %6787 = vmatpush1.msra.mxu0 0.0
    %6788 = vmatprep.subr.mxu0 0.0
    %6789 = vmatpush1.msra.mxu0 0.0
    %6790 = vmatprep.subr.mxu0 0.0
    %6791 = vmatpush1.msra.mxu0 0.0
    %6792 = vmatprep.subr.mxu0 0.0
    %6793 = vmatpush1.msra.mxu0 0.0
    %6794 = vmatprep.subr.mxu0 0.0
    %6795 = vmatpush1.msra.mxu0 %v2432
    %6796 = vmatprep.subr.mxu0 0.0
    %6797 = vmatpush1.msra.mxu0 %v2431
    %6798 = vmatprep.subr.mxu0 0.0
    %6799 = vmatpush1.msra.mxu0 %v2430
    %6800 = vmatprep.subr.mxu0 0.0
    %6801 = vmatpush1.msra.mxu0 %v2429
    %6802 = vmatprep.subr.mxu0 0.0
    %6803 = vmatpush1.msra.mxu0 %v2428
    %6804 = vmatprep.subr.mxu0 0.0
    %6805 = vmatpush1.msra.mxu0 %v2427
    %6806 = vmatprep.subr.mxu0 0.0
    %6807 = vmatpush1.msra.mxu0 %v2426
    %6808 = vmatprep.subr.mxu0 0.0
    %6809 = vmatpush1.msra.mxu0 %v2425
    %6810 = vmatprep.subr.mxu0 0.0
    %6811 = vmatpush2.msra.mxu0 0.0
    %6812 = vmatprep.subr.mxu0 0.0
    %6813 = vmatpush2.msra.mxu0 0.0
    %6814 = vmatprep.subr.mxu0 0.0
    %6815 = vmatpush2.msra.mxu0 0.0
    %6816 = vmatprep.subr.mxu0 0.0
    %6817 = vmatpush2.msra.mxu0 0.0
    %6818 = vmatprep.subr.mxu0 0.0
    %6819 = vmatpush2.msra.mxu0 0.0
    %6820 = vmatprep.subr.mxu0 0.0
    %6821 = vmatpush2.msra.mxu0 0.0
    %6822 = vmatprep.subr.mxu0 0.0
    %6823 = vmatpush2.msra.mxu0 0.0
    %6824 = vmatprep.subr.mxu0 0.0
    %6825 = vmatpush2.msra.mxu0 0.0
    %6826 = vmatprep.subr.mxu0 0.0
    %6827 = vmatpush2.msra.mxu0 0.0
    %6828 = vmatprep.subr.mxu0 0.0
    %6829 = vmatpush2.msra.mxu0 0.0
    %6830 = vmatprep.subr.mxu0 0.0
    %6831 = vmatpush2.msra.mxu0 0.0
    %6832 = vmatprep.subr.mxu0 0.0
    %6833 = vmatpush2.msra.mxu0 0.0
    %6834 = vmatprep.subr.mxu0 0.0
    %6835 = vmatpush2.msra.mxu0 0.0
    %6836 = vmatprep.subr.mxu0 0.0
    %6837 = vmatpush2.msra.mxu0 0.0
    %6838 = vmatprep.subr.mxu0 0.0
    %6839 = vmatpush2.msra.mxu0 0.0
    %6840 = vmatprep.subr.mxu0 0.0
    %6841 = vmatpush2.msra.mxu0 0.0
    %6842 = vmatprep.mubr.f32.mxu0 0.0
    %6843 = vmatmul.mubr.f32.gmra.mxu0 %v5153
    %v6844 = vpop.f32.mrf.mxu0
    %v6845 = vadd.f32 %v2439, %v6844
    %v6846 = vpop.f32.mrf.mxu0
    %6847 = vmatprep.mubr.f32.mxu0 0.0
    %6848 = vmatmul.mubr.f32.gmra.mxu0 %v5156
    %v6849 = vpop.f32.mrf.mxu0
    %v6850 = vadd.f32 %v2439, %v6849
    %v6851 = vpop.f32.mrf.mxu0
    %6852 = vdwg.mxu0
    %6853 = vmatprep.subr.mxu0 0.0
    %6854 = vmatpush1.msra.mxu0 0.0
    %6855 = vmatprep.subr.mxu0 0.0
    %6856 = vmatpush1.msra.mxu0 0.0
    %6857 = vmatprep.subr.mxu0 0.0
    %6858 = vmatpush1.msra.mxu0 0.0
    %6859 = vmatprep.subr.mxu0 0.0
    %6860 = vmatpush1.msra.mxu0 0.0
    %6861 = vmatprep.subr.mxu0 0.0
    %6862 = vmatpush1.msra.mxu0 0.0
    %6863 = vmatprep.subr.mxu0 0.0
    %6864 = vmatpush1.msra.mxu0 0.0
    %6865 = vmatprep.subr.mxu0 0.0
    %6866 = vmatpush1.msra.mxu0 0.0
    %6867 = vmatprep.subr.mxu0 0.0
    %6868 = vmatpush1.msra.mxu0 0.0
    %6869 = vmatprep.subr.mxu0 0.0
    %6870 = vmatpush1.msra.mxu0 0.0
    %6871 = vmatprep.subr.mxu0 0.0
    %6872 = vmatpush1.msra.mxu0 0.0
    %6873 = vmatprep.subr.mxu0 0.0
    %6874 = vmatpush1.msra.mxu0 0.0
    %6875 = vmatprep.subr.mxu0 0.0
    %6876 = vmatpush1.msra.mxu0 0.0
    %6877 = vmatprep.subr.mxu0 0.0
    %6878 = vmatpush1.msra.mxu0 0.0
    %6879 = vmatprep.subr.mxu0 0.0
    %6880 = vmatpush1.msra.mxu0 0.0
    %6881 = vmatprep.subr.mxu0 0.0
    %6882 = vmatpush1.msra.mxu0 %v6850
    %6883 = vmatprep.subr.mxu0 0.0
    %6884 = vmatpush1.msra.mxu0 %v6845
    %6885 = vmatprep.subr.mxu0 0.0
    %6886 = vmatpush2.msra.mxu0 0.0
    %6887 = vmatprep.subr.mxu0 0.0
    %6888 = vmatpush2.msra.mxu0 0.0
    %6889 = vmatprep.subr.mxu0 0.0
    %6890 = vmatpush2.msra.mxu0 0.0
    %6891 = vmatprep.subr.mxu0 0.0
    %6892 = vmatpush2.msra.mxu0 0.0
    %6893 = vmatprep.subr.mxu0 0.0
    %6894 = vmatpush2.msra.mxu0 0.0
    %6895 = vmatprep.subr.mxu0 0.0
    %6896 = vmatpush2.msra.mxu0 0.0
    %6897 = vmatprep.subr.mxu0 0.0
    %6898 = vmatpush2.msra.mxu0 0.0
    %6899 = vmatprep.subr.mxu0 0.0
    %6900 = vmatpush2.msra.mxu0 0.0
    %6901 = vmatprep.subr.mxu0 0.0
    %6902 = vmatpush2.msra.mxu0 0.0
    %6903 = vmatprep.subr.mxu0 0.0
    %6904 = vmatpush2.msra.mxu0 0.0
    %6905 = vmatprep.subr.mxu0 0.0
    %6906 = vmatpush2.msra.mxu0 0.0
    %6907 = vmatprep.subr.mxu0 0.0
    %6908 = vmatpush2.msra.mxu0 0.0
    %6909 = vmatprep.subr.mxu0 0.0
    %6910 = vmatpush2.msra.mxu0 0.0
    %6911 = vmatprep.subr.mxu0 0.0
    %6912 = vmatpush2.msra.mxu0 0.0
    %6913 = vmatprep.subr.mxu0 0.0
    %6914 = vmatpush2.msra.mxu0 0.0
    %6915 = vmatprep.subr.mxu0 0.0
    %6916 = vmatpush2.msra.mxu0 0.0
    %6917 = vmatprep.mubr.f32.mxu0 0.0
    %6918 = vmatmul.mubr.f32.gmra.mxu0 %v2534
    %v6919 = vpop.f32.mrf.mxu0
    %v6920 = vadd.f32 0.0, %v6919
    %v6921 = vpop.f32.mrf.mxu0
    %6922 = vmatprep.mubr.f32.mxu0 0.0
    %6923 = vmatmul.mubr.f32.gmra.mxu0 %v2537
    %v6924 = vpop.f32.mrf.mxu0
    %v6925 = vadd.f32 0.0, %v6924
    %v6926 = vpop.f32.mrf.mxu0
    %6927 = vmatprep.mubr.f32.mxu0 0.0
    %6928 = vmatmul.mubr.f32.gmra.mxu0 %v2540
    %v6929 = vpop.f32.mrf.mxu0
    %v6930 = vadd.f32 0.0, %v6929
    %v6931 = vpop.f32.mrf.mxu0
    %6932 = vmatprep.mubr.f32.mxu0 0.0
    %6933 = vmatmul.mubr.f32.gmra.mxu0 %v2543
    %v6934 = vpop.f32.mrf.mxu0
    %v6935 = vadd.f32 0.0, %v6934
    %v6936 = vpop.f32.mrf.mxu0
    %6937 = vmatprep.mubr.f32.mxu0 0.0
    %6938 = vmatmul.mubr.f32.gmra.mxu0 %v2546
    %v6939 = vpop.f32.mrf.mxu0
    %v6940 = vadd.f32 0.0, %v6939
    %v6941 = vpop.f32.mrf.mxu0
    %6942 = vmatprep.mubr.f32.mxu0 0.0
    %6943 = vmatmul.mubr.f32.gmra.mxu0 %v2549
    %v6944 = vpop.f32.mrf.mxu0
    %v6945 = vadd.f32 0.0, %v6944
    %v6946 = vpop.f32.mrf.mxu0
    %6947 = vmatprep.mubr.f32.mxu0 0.0
    %6948 = vmatmul.mubr.f32.gmra.mxu0 %v2552
    %v6949 = vpop.f32.mrf.mxu0
    %v6950 = vadd.f32 0.0, %v6949
    %v6951 = vpop.f32.mrf.mxu0
    %6952 = vmatprep.mubr.f32.mxu0 0.0
    %6953 = vmatmul.mubr.f32.gmra.mxu0 %v2555
    %v6954 = vpop.f32.mrf.mxu0
    %v6955 = vadd.f32 0.0, %v6954
    %v6956 = vpop.f32.mrf.mxu0
    %6957 = vmatprep.mubr.f32.mxu0 0.0
    %6958 = vmatmul.mubr.f32.gmra.mxu0 %v2558
    %v6959 = vpop.f32.mrf.mxu0
    %v6960 = vadd.f32 0.0, %v6959
    %v6961 = vpop.f32.mrf.mxu0
    %6962 = vmatprep.mubr.f32.mxu0 0.0
    %6963 = vmatmul.mubr.f32.gmra.mxu0 %v2561
    %v6964 = vpop.f32.mrf.mxu0
    %v6965 = vadd.f32 0.0, %v6964
    %v6966 = vpop.f32.mrf.mxu0
    %6967 = vmatprep.mubr.f32.mxu0 0.0
    %6968 = vmatmul.mubr.f32.gmra.mxu0 %v2564
    %v6969 = vpop.f32.mrf.mxu0
    %v6970 = vadd.f32 0.0, %v6969
    %v6971 = vpop.f32.mrf.mxu0
    %6972 = vmatprep.mubr.f32.mxu0 0.0
    %6973 = vmatmul.mubr.f32.gmra.mxu0 %v2567
    %v6974 = vpop.f32.mrf.mxu0
    %v6975 = vadd.f32 0.0, %v6974
    %v6976 = vpop.f32.mrf.mxu0
    %6977 = vmatprep.mubr.f32.mxu0 0.0
    %6978 = vmatmul.mubr.f32.gmra.mxu0 %v2570
    %v6979 = vpop.f32.mrf.mxu0
    %v6980 = vadd.f32 0.0, %v6979
    %v6981 = vpop.f32.mrf.mxu0
    %6982 = vmatprep.mubr.f32.mxu0 0.0
    %6983 = vmatmul.mubr.f32.gmra.mxu0 %v2573
    %v6984 = vpop.f32.mrf.mxu0
    %v6985 = vadd.f32 0.0, %v6984
    %v6986 = vpop.f32.mrf.mxu0
    %6987 = vmatprep.mubr.f32.mxu0 0.0
    %6988 = vmatmul.mubr.f32.gmra.mxu0 %v2576
    %v6989 = vpop.f32.mrf.mxu0
    %v6990 = vadd.f32 0.0, %v6989
    %v6991 = vpop.f32.mrf.mxu0
    %6992 = vmatprep.mubr.f32.mxu0 0.0
    %6993 = vmatmul.mubr.f32.gmra.mxu0 %v2579
    %v6994 = vpop.f32.mrf.mxu0
    %v6995 = vadd.f32 0.0, %v6994
    %v6996 = vpop.f32.mrf.mxu0
    %6997 = vdwg.mxu0
    %v6998 = vadd.f32 %v6762, %v6920
    %v6999 = vadd.f32 %v6763, %v6925
    %v7000 = vadd.f32 %v6764, %v6930
    %v7001 = vadd.f32 %v6765, %v6935
    %v7002 = vadd.f32 %v6766, %v6940
    %v7003 = vadd.f32 %v6767, %v6945
    %v7004 = vadd.f32 %v6768, %v6950
    %v7005 = vadd.f32 %v6769, %v6955
    %v7006 = vadd.f32 %v6770, %v6960
    %v7007 = vadd.f32 %v6771, %v6965
    %v7008 = vadd.f32 %v6772, %v6970
    %v7009 = vadd.f32 %v6773, %v6975
    %v7010 = vadd.f32 %v6774, %v6980
    %v7011 = vadd.f32 %v6775, %v6985
    %v7012 = vadd.f32 %v6776, %v6990
    %v7013 = vadd.f32 %v6777, %v6995
    %7030 = vrot.lane.b32.xlu0 %v6998, 120
    %v7031 = vpop.permute.xlu0 %7030
    %7032 = vrot.lane.b32.xlu0 %v6999, 120
    %v7033 = vpop.permute.xlu0 %7032
    %7034 = vrot.lane.b32.xlu0 %v7000, 120
    %v7035 = vpop.permute.xlu0 %7034
    %7036 = vrot.lane.b32.xlu0 %v7001, 120
    %v7037 = vpop.permute.xlu0 %7036
    %7038 = vrot.lane.b32.xlu0 %v7002, 120
    %v7039 = vpop.permute.xlu0 %7038
    %7040 = vrot.lane.b32.xlu0 %v7003, 120
    %v7041 = vpop.permute.xlu0 %7040
    %7042 = vrot.lane.b32.xlu0 %v7004, 120
    %v7043 = vpop.permute.xlu0 %7042
    %7044 = vrot.lane.b32.xlu0 %v7005, 120
    %v7045 = vpop.permute.xlu0 %7044
    %7046 = vrot.lane.b32.xlu0 %v7006, 120
    %v7047 = vpop.permute.xlu0 %7046
    %7048 = vrot.lane.b32.xlu0 %v7007, 120
    %v7049 = vpop.permute.xlu0 %7048
    %7050 = vrot.lane.b32.xlu0 %v7008, 120
    %v7051 = vpop.permute.xlu0 %7050
    %7052 = vrot.lane.b32.xlu0 %v7009, 120
    %v7053 = vpop.permute.xlu0 %7052
    %7054 = vrot.lane.b32.xlu0 %v7010, 120
    %v7055 = vpop.permute.xlu0 %7054
    %7056 = vrot.lane.b32.xlu0 %v7011, 120
    %v7057 = vpop.permute.xlu0 %7056
    %7058 = vrot.lane.b32.xlu0 %v7012, 120
    %v7059 = vpop.permute.xlu0 %7058
    %7060 = vrot.lane.b32.xlu0 %v7013, 120
    %v7061 = vpop.permute.xlu0 %7060
    %v7062 = vsel %vm2790, %v6998, 0
    %v7064 = vsel %vm2790, %v6999, 0
    %v7066 = vsel %vm2790, %v7000, 0
    %v7068 = vsel %vm2790, %v7001, 0
    %v7070 = vsel %vm2790, %v7002, 0
    %v7072 = vsel %vm2790, %v7003, 0
    %v7074 = vsel %vm2790, %v7004, 0
    %v7076 = vsel %vm2790, %v7005, 0
    %v7078 = vsel %vm2790, %v7006, 0
    %v7080 = vsel %vm2790, %v7007, 0
    %v7082 = vsel %vm2790, %v7008, 0
    %v7084 = vsel %vm2790, %v7009, 0
    %v7086 = vsel %vm2790, %v7010, 0
    %v7088 = vsel %vm2790, %v7011, 0
    %v7090 = vsel %vm2790, %v7012, 0
    %v7092 = vsel %vm2790, %v7013, 0
    %v7094 = vsel %vm2790, %v7031, 0
    %v7096 = vsel %vm2790, %v7033, 0
    %v7098 = vsel %vm2790, %v7035, 0
    %v7100 = vsel %vm2790, %v7037, 0
    %v7102 = vsel %vm2790, %v7039, 0
    %v7104 = vsel %vm2790, %v7041, 0
    %v7106 = vsel %vm2790, %v7043, 0
    %v7108 = vsel %vm2790, %v7045, 0
    %v7110 = vsel %vm2790, %v7047, 0
    %v7112 = vsel %vm2790, %v7049, 0
    %v7114 = vsel %vm2790, %v7051, 0
    %v7116 = vsel %vm2790, %v7053, 0
    %v7118 = vsel %vm2790, %v7055, 0
    %v7120 = vsel %vm2790, %v7057, 0
    %v7122 = vsel %vm2790, %v7059, 0
    %v7124 = vsel %vm2790, %v7061, 0
    %7126 = vmatprep.subr.mxu0 0.0
    %7127 = vmatpush1.xpose.msra.mxu0 %v7124
    %7128 = vmatprep.subr.mxu0 0.0
    %7129 = vmatpush1.xpose.msra.mxu0 %v7122
    %7130 = vmatprep.subr.mxu0 0.0
    %7131 = vmatpush1.xpose.msra.mxu0 %v7120
    %7132 = vmatprep.subr.mxu0 0.0
    %7133 = vmatpush1.xpose.msra.mxu0 %v7118
    %7134 = vmatprep.subr.mxu0 0.0
    %7135 = vmatpush1.xpose.msra.mxu0 %v7116
    %7136 = vmatprep.subr.mxu0 0.0
    %7137 = vmatpush1.xpose.msra.mxu0 %v7114
    %7138 = vmatprep.subr.mxu0 0.0
    %7139 = vmatpush1.xpose.msra.mxu0 %v7112
    %7140 = vmatprep.subr.mxu0 0.0
    %7141 = vmatpush1.xpose.msra.mxu0 %v7110
    %7142 = vmatprep.subr.mxu0 0.0
    %7143 = vmatpush1.xpose.msra.mxu0 %v7108
    %7144 = vmatprep.subr.mxu0 0.0
    %7145 = vmatpush1.xpose.msra.mxu0 %v7106
    %7146 = vmatprep.subr.mxu0 0.0
    %7147 = vmatpush1.xpose.msra.mxu0 %v7104
    %7148 = vmatprep.subr.mxu0 0.0
    %7149 = vmatpush1.xpose.msra.mxu0 %v7102
    %7150 = vmatprep.subr.mxu0 0.0
    %7151 = vmatpush1.xpose.msra.mxu0 %v7100
    %7152 = vmatprep.subr.mxu0 0.0
    %7153 = vmatpush1.xpose.msra.mxu0 %v7098
    %7154 = vmatprep.subr.mxu0 0.0
    %7155 = vmatpush1.xpose.msra.mxu0 %v7096
    %7156 = vmatprep.subr.mxu0 0.0
    %7157 = vmatpush1.xpose.msra.mxu0 %v7094
    %7158 = vmatprep.subr.mxu0 0.0
    %7159 = vmatpush2.xpose.msra.mxu0 0.0
    %7160 = vmatprep.subr.mxu0 0.0
    %7161 = vmatpush2.xpose.msra.mxu0 0.0
    %7162 = vmatprep.subr.mxu0 0.0
    %7163 = vmatpush2.xpose.msra.mxu0 0.0
    %7164 = vmatprep.subr.mxu0 0.0
    %7165 = vmatpush2.xpose.msra.mxu0 0.0
    %7166 = vmatprep.subr.mxu0 0.0
    %7167 = vmatpush2.xpose.msra.mxu0 0.0
    %7168 = vmatprep.subr.mxu0 0.0
    %7169 = vmatpush2.xpose.msra.mxu0 0.0
    %7170 = vmatprep.subr.mxu0 0.0
    %7171 = vmatpush2.xpose.msra.mxu0 0.0
    %7172 = vmatprep.subr.mxu0 0.0
    %7173 = vmatpush2.xpose.msra.mxu0 0.0
    %7174 = vmatprep.subr.mxu0 0.0
    %7175 = vmatpush2.xpose.msra.mxu0 0.0
    %7176 = vmatprep.subr.mxu0 0.0
    %7177 = vmatpush2.xpose.msra.mxu0 0.0
    %7178 = vmatprep.subr.mxu0 0.0
    %7179 = vmatpush2.xpose.msra.mxu0 0.0
    %7180 = vmatprep.subr.mxu0 0.0
    %7181 = vmatpush2.xpose.msra.mxu0 0.0
    %7182 = vmatprep.subr.mxu0 0.0
    %7183 = vmatpush2.xpose.msra.mxu0 0.0
    %7184 = vmatprep.subr.mxu0 0.0
    %7185 = vmatpush2.xpose.msra.mxu0 0.0
    %7186 = vmatprep.subr.mxu0 0.0
    %7187 = vmatpush2.xpose.msra.mxu0 0.0
    %7188 = vmatprep.subr.mxu0 0.0
    %7189 = vmatpush2.xpose.msra.mxu0 0.0
    %7190 = vmatprep.mubr.f32.mxu0 0.0
    %7191 = vmatmul.mubr.f32.gmra.mxu0 %v7062
    %v7192 = vpop.f32.mrf.mxu0
    %v7193 = vadd.f32 %v207, %v7192
    %v7194 = vpop.f32.mrf.mxu0
    %7195 = vmatprep.mubr.f32.mxu0 0.0
    %7196 = vmatmul.mubr.f32.gmra.mxu0 %v7064
    %v7197 = vpop.f32.mrf.mxu0
    %v7198 = vadd.f32 %v208, %v7197
    %v7199 = vpop.f32.mrf.mxu0
    %7200 = vmatprep.mubr.f32.mxu0 0.0
    %7201 = vmatmul.mubr.f32.gmra.mxu0 %v7066
    %v7202 = vpop.f32.mrf.mxu0
    %v7203 = vadd.f32 %v209, %v7202
    %v7204 = vpop.f32.mrf.mxu0
    %7205 = vmatprep.mubr.f32.mxu0 0.0
    %7206 = vmatmul.mubr.f32.gmra.mxu0 %v7068
    %v7207 = vpop.f32.mrf.mxu0
    %v7208 = vadd.f32 %v210, %v7207
    %v7209 = vpop.f32.mrf.mxu0
    %7210 = vmatprep.mubr.f32.mxu0 0.0
    %7211 = vmatmul.mubr.f32.gmra.mxu0 %v7070
    %v7212 = vpop.f32.mrf.mxu0
    %v7213 = vadd.f32 %v211, %v7212
    %v7214 = vpop.f32.mrf.mxu0
    %7215 = vmatprep.mubr.f32.mxu0 0.0
    %7216 = vmatmul.mubr.f32.gmra.mxu0 %v7072
    %v7217 = vpop.f32.mrf.mxu0
    %v7218 = vadd.f32 %v212, %v7217
    %v7219 = vpop.f32.mrf.mxu0
    %7220 = vmatprep.mubr.f32.mxu0 0.0
    %7221 = vmatmul.mubr.f32.gmra.mxu0 %v7074
    %v7222 = vpop.f32.mrf.mxu0
    %v7223 = vadd.f32 %v213, %v7222
    %v7224 = vpop.f32.mrf.mxu0
    %7225 = vmatprep.mubr.f32.mxu0 0.0
    %7226 = vmatmul.mubr.f32.gmra.mxu0 %v7076
    %v7227 = vpop.f32.mrf.mxu0
    %v7228 = vadd.f32 %v214, %v7227
    %v7229 = vpop.f32.mrf.mxu0
    %7230 = vmatprep.mubr.f32.mxu0 0.0
    %7231 = vmatmul.mubr.f32.gmra.mxu0 %v7078
    %v7232 = vpop.f32.mrf.mxu0
    %v7233 = vadd.f32 %v215, %v7232
    %v7234 = vpop.f32.mrf.mxu0
    %7235 = vmatprep.mubr.f32.mxu0 0.0
    %7236 = vmatmul.mubr.f32.gmra.mxu0 %v7080
    %v7237 = vpop.f32.mrf.mxu0
    %v7238 = vadd.f32 %v216, %v7237
    %v7239 = vpop.f32.mrf.mxu0
    %7240 = vmatprep.mubr.f32.mxu0 0.0
    %7241 = vmatmul.mubr.f32.gmra.mxu0 %v7082
    %v7242 = vpop.f32.mrf.mxu0
    %v7243 = vadd.f32 %v217, %v7242
    %v7244 = vpop.f32.mrf.mxu0
    %7245 = vmatprep.mubr.f32.mxu0 0.0
    %7246 = vmatmul.mubr.f32.gmra.mxu0 %v7084
    %v7247 = vpop.f32.mrf.mxu0
    %v7248 = vadd.f32 %v218, %v7247
    %v7249 = vpop.f32.mrf.mxu0
    %7250 = vmatprep.mubr.f32.mxu0 0.0
    %7251 = vmatmul.mubr.f32.gmra.mxu0 %v7086
    %v7252 = vpop.f32.mrf.mxu0
    %v7253 = vadd.f32 %v219, %v7252
    %v7254 = vpop.f32.mrf.mxu0
    %7255 = vmatprep.mubr.f32.mxu0 0.0
    %7256 = vmatmul.mubr.f32.gmra.mxu0 %v7088
    %v7257 = vpop.f32.mrf.mxu0
    %v7258 = vadd.f32 %v220, %v7257
    %v7259 = vpop.f32.mrf.mxu0
    %7260 = vmatprep.mubr.f32.mxu0 0.0
    %7261 = vmatmul.mubr.f32.gmra.mxu0 %v7090
    %v7262 = vpop.f32.mrf.mxu0
    %v7263 = vadd.f32 %v221, %v7262
    %v7264 = vpop.f32.mrf.mxu0
    %7265 = vmatprep.mubr.f32.mxu0 0.0
    %7266 = vmatmul.mubr.f32.gmra.mxu0 %v7092
    %v7267 = vpop.f32.mrf.mxu0
    %v7268 = vadd.f32 %v222, %v7267
    %v7269 = vpop.f32.mrf.mxu0
    %7270 = vdwg.mxu0
    %7271 = vmax.xlane.f32.xlu0 %v7193
    %v7272 = vpop.xlane.xlu0 %7271
    %7273 = vmax.xlane.f32.xlu0 %v7198
    %v7274 = vpop.xlane.xlu0 %7273
    %7275 = vmax.xlane.f32.xlu0 %v7203
    %v7276 = vpop.xlane.xlu0 %7275
    %7277 = vmax.xlane.f32.xlu0 %v7208
    %v7278 = vpop.xlane.xlu0 %7277
    %7279 = vmax.xlane.f32.xlu0 %v7213
    %v7280 = vpop.xlane.xlu0 %7279
    %7281 = vmax.xlane.f32.xlu0 %v7218
    %v7282 = vpop.xlane.xlu0 %7281
    %7283 = vmax.xlane.f32.xlu0 %v7223
    %v7284 = vpop.xlane.xlu0 %7283
    %7285 = vmax.xlane.f32.xlu0 %v7228
    %v7286 = vpop.xlane.xlu0 %7285
    %7287 = vmax.xlane.f32.xlu0 %v7233
    %v7288 = vpop.xlane.xlu0 %7287
    %7289 = vmax.xlane.f32.xlu0 %v7238
    %v7290 = vpop.xlane.xlu0 %7289
    %7291 = vmax.xlane.f32.xlu0 %v7243
    %v7292 = vpop.xlane.xlu0 %7291
    %7293 = vmax.xlane.f32.xlu0 %v7248
    %v7294 = vpop.xlane.xlu0 %7293
    %7295 = vmax.xlane.f32.xlu0 %v7253
    %v7296 = vpop.xlane.xlu0 %7295
    %7297 = vmax.xlane.f32.xlu0 %v7258
    %v7298 = vpop.xlane.xlu0 %7297
    %7299 = vmax.xlane.f32.xlu0 %v7263
    %v7300 = vpop.xlane.xlu0 %7299
    %7301 = vmax.xlane.f32.xlu0 %v7268
    %v7302 = vpop.xlane.xlu0 %7301
    %v7303 = vsub.f32 %v7193, %v7272
    %v7304 = vsub.f32 %v7198, %v7274
    %v7305 = vsub.f32 %v7203, %v7276
    %v7306 = vsub.f32 %v7208, %v7278
    %v7307 = vsub.f32 %v7213, %v7280
    %v7308 = vsub.f32 %v7218, %v7282
    %v7309 = vsub.f32 %v7223, %v7284
    %v7310 = vsub.f32 %v7228, %v7286
    %v7311 = vsub.f32 %v7233, %v7288
    %v7312 = vsub.f32 %v7238, %v7290
    %v7313 = vsub.f32 %v7243, %v7292
    %v7314 = vsub.f32 %v7248, %v7294
    %v7315 = vsub.f32 %v7253, %v7296
    %v7316 = vsub.f32 %v7258, %v7298
    %v7317 = vsub.f32 %v7263, %v7300
    %v7318 = vsub.f32 %v7268, %v7302
    %v7319 = vmul.f32 %v7303, 1.442695
    %v7320 = vpow.pop %v7319
    %v7321 = vmul.f32 %v7304, 1.442695
    %v7322 = vpow.pop %v7321
    %v7323 = vmul.f32 %v7305, 1.442695
    %v7324 = vpow.pop %v7323
    %v7325 = vmul.f32 %v7306, 1.442695
    %v7326 = vpow.pop %v7325
    %v7327 = vmul.f32 %v7307, 1.442695
    %v7328 = vpow.pop %v7327
    %v7329 = vmul.f32 %v7308, 1.442695
    %v7330 = vpow.pop %v7329
    %v7331 = vmul.f32 %v7309, 1.442695
    %v7332 = vpow.pop %v7331
    %v7333 = vmul.f32 %v7310, 1.442695
    %v7334 = vpow.pop %v7333
    %v7335 = vmul.f32 %v7311, 1.442695
    %v7336 = vpow.pop %v7335
    %v7337 = vmul.f32 %v7312, 1.442695
    %v7338 = vpow.pop %v7337
    %v7339 = vmul.f32 %v7313, 1.442695
    %v7340 = vpow.pop %v7339
    %v7341 = vmul.f32 %v7314, 1.442695
    %v7342 = vpow.pop %v7341
    %v7343 = vmul.f32 %v7315, 1.442695
    %v7344 = vpow.pop %v7343
    %v7345 = vmul.f32 %v7316, 1.442695
    %v7346 = vpow.pop %v7345
    %v7347 = vmul.f32 %v7317, 1.442695
    %v7348 = vpow.pop %v7347
    %v7349 = vmul.f32 %v7318, 1.442695
    %v7350 = vpow.pop %v7349
    %7351 = vadd.xlane.f32.xlu0 %v7320
    %v7352 = vpop.xlane.xlu0 %7351
    %7353 = vadd.xlane.f32.xlu0 %v7322
    %v7354 = vpop.xlane.xlu0 %7353
    %7355 = vadd.xlane.f32.xlu0 %v7324
    %v7356 = vpop.xlane.xlu0 %7355
    %7357 = vadd.xlane.f32.xlu0 %v7326
    %v7358 = vpop.xlane.xlu0 %7357
    %7359 = vadd.xlane.f32.xlu0 %v7328
    %v7360 = vpop.xlane.xlu0 %7359
    %7361 = vadd.xlane.f32.xlu0 %v7330
    %v7362 = vpop.xlane.xlu0 %7361
    %7363 = vadd.xlane.f32.xlu0 %v7332
    %v7364 = vpop.xlane.xlu0 %7363
    %7365 = vadd.xlane.f32.xlu0 %v7334
    %v7366 = vpop.xlane.xlu0 %7365
    %7367 = vadd.xlane.f32.xlu0 %v7336
    %v7368 = vpop.xlane.xlu0 %7367
    %7369 = vadd.xlane.f32.xlu0 %v7338
    %v7370 = vpop.xlane.xlu0 %7369
    %7371 = vadd.xlane.f32.xlu0 %v7340
    %v7372 = vpop.xlane.xlu0 %7371
    %7373 = vadd.xlane.f32.xlu0 %v7342
    %v7374 = vpop.xlane.xlu0 %7373
    %7375 = vadd.xlane.f32.xlu0 %v7344
    %v7376 = vpop.xlane.xlu0 %7375
    %7377 = vadd.xlane.f32.xlu0 %v7346
    %v7378 = vpop.xlane.xlu0 %7377
    %7379 = vadd.xlane.f32.xlu0 %v7348
    %v7380 = vpop.xlane.xlu0 %7379
    %7381 = vadd.xlane.f32.xlu0 %v7350
    %v7382 = vpop.xlane.xlu0 %7381
    %v7383 = vrcp.pop %v7352
    %v7384 = vrcp.pop %v7354
    %v7385 = vrcp.pop %v7356
    %v7386 = vrcp.pop %v7358
    %v7387 = vrcp.pop %v7360
    %v7388 = vrcp.pop %v7362
    %v7389 = vrcp.pop %v7364
    %v7390 = vrcp.pop %v7366
    %v7391 = vrcp.pop %v7368
    %v7392 = vrcp.pop %v7370
    %v7393 = vrcp.pop %v7372
    %v7394 = vrcp.pop %v7374
    %v7395 = vrcp.pop %v7376
    %v7396 = vrcp.pop %v7378
    %v7397 = vrcp.pop %v7380
    %v7398 = vrcp.pop %v7382
    %v7399 = vmul.f32 %v7320, %v7383
    %v7400 = vmul.f32 %v7322, %v7384
    %v7401 = vmul.f32 %v7324, %v7385
    %v7402 = vmul.f32 %v7326, %v7386
    %v7403 = vmul.f32 %v7328, %v7387
    %v7404 = vmul.f32 %v7330, %v7388
    %v7405 = vmul.f32 %v7332, %v7389
    %v7406 = vmul.f32 %v7334, %v7390
    %v7407 = vmul.f32 %v7336, %v7391
    %v7408 = vmul.f32 %v7338, %v7392
    %v7409 = vmul.f32 %v7340, %v7393
    %v7410 = vmul.f32 %v7342, %v7394
    %v7411 = vmul.f32 %v7344, %v7395
    %v7412 = vmul.f32 %v7346, %v7396
    %v7413 = vmul.f32 %v7348, %v7397
    %v7414 = vmul.f32 %v7350, %v7398
    %7415 = vrot.lane.b32.xlu0 %v6998, 112
    %v7416 = vpop.permute.xlu0 %7415
    %7417 = vrot.lane.b32.xlu0 %v6999, 112
    %v7418 = vpop.permute.xlu0 %7417
    %7419 = vrot.lane.b32.xlu0 %v7000, 112
    %v7420 = vpop.permute.xlu0 %7419
    %7421 = vrot.lane.b32.xlu0 %v7001, 112
    %v7422 = vpop.permute.xlu0 %7421
    %7423 = vrot.lane.b32.xlu0 %v7002, 112
    %v7424 = vpop.permute.xlu0 %7423
    %7425 = vrot.lane.b32.xlu0 %v7003, 112
    %v7426 = vpop.permute.xlu0 %7425
    %7427 = vrot.lane.b32.xlu0 %v7004, 112
    %v7428 = vpop.permute.xlu0 %7427
    %7429 = vrot.lane.b32.xlu0 %v7005, 112
    %v7430 = vpop.permute.xlu0 %7429
    %7431 = vrot.lane.b32.xlu0 %v7006, 112
    %v7432 = vpop.permute.xlu0 %7431
    %7433 = vrot.lane.b32.xlu0 %v7007, 112
    %v7434 = vpop.permute.xlu0 %7433
    %7435 = vrot.lane.b32.xlu0 %v7008, 112
    %v7436 = vpop.permute.xlu0 %7435
    %7437 = vrot.lane.b32.xlu0 %v7009, 112
    %v7438 = vpop.permute.xlu0 %7437
    %7439 = vrot.lane.b32.xlu0 %v7010, 112
    %v7440 = vpop.permute.xlu0 %7439
    %7441 = vrot.lane.b32.xlu0 %v7011, 112
    %v7442 = vpop.permute.xlu0 %7441
    %7443 = vrot.lane.b32.xlu0 %v7012, 112
    %v7444 = vpop.permute.xlu0 %7443
    %7445 = vrot.lane.b32.xlu0 %v7013, 112
    %v7446 = vpop.permute.xlu0 %7445
    %7463 = vmatprep.subr.mxu0 0.0
    %7464 = vmatpush1.msra.mxu0 %v7446
    %7465 = vmatprep.subr.mxu0 0.0
    %7466 = vmatpush1.msra.mxu0 %v7444
    %7467 = vmatprep.subr.mxu0 0.0
    %7468 = vmatpush1.msra.mxu0 %v7442
    %7469 = vmatprep.subr.mxu0 0.0
    %7470 = vmatpush1.msra.mxu0 %v7440
    %7471 = vmatprep.subr.mxu0 0.0
    %7472 = vmatpush1.msra.mxu0 %v7438
    %7473 = vmatprep.subr.mxu0 0.0
    %7474 = vmatpush1.msra.mxu0 %v7436
    %7475 = vmatprep.subr.mxu0 0.0
    %7476 = vmatpush1.msra.mxu0 %v7434
    %7477 = vmatprep.subr.mxu0 0.0
    %7478 = vmatpush1.msra.mxu0 %v7432
    %7479 = vmatprep.subr.mxu0 0.0
    %7480 = vmatpush1.msra.mxu0 %v7430
    %7481 = vmatprep.subr.mxu0 0.0
    %7482 = vmatpush1.msra.mxu0 %v7428
    %7483 = vmatprep.subr.mxu0 0.0
    %7484 = vmatpush1.msra.mxu0 %v7426
    %7485 = vmatprep.subr.mxu0 0.0
    %7486 = vmatpush1.msra.mxu0 %v7424
    %7487 = vmatprep.subr.mxu0 0.0
    %7488 = vmatpush1.msra.mxu0 %v7422
    %7489 = vmatprep.subr.mxu0 0.0
    %7490 = vmatpush1.msra.mxu0 %v7420
    %7491 = vmatprep.subr.mxu0 0.0
    %7492 = vmatpush1.msra.mxu0 %v7418
    %7493 = vmatprep.subr.mxu0 0.0
    %7494 = vmatpush1.msra.mxu0 %v7416
    %7495 = vmatprep.subr.mxu0 0.0
    %7496 = vmatpush2.msra.mxu0 0.0
    %7497 = vmatprep.subr.mxu0 0.0
    %7498 = vmatpush2.msra.mxu0 0.0
    %7499 = vmatprep.subr.mxu0 0.0
    %7500 = vmatpush2.msra.mxu0 0.0
    %7501 = vmatprep.subr.mxu0 0.0
    %7502 = vmatpush2.msra.mxu0 0.0
    %7503 = vmatprep.subr.mxu0 0.0
    %7504 = vmatpush2.msra.mxu0 0.0
    %7505 = vmatprep.subr.mxu0 0.0
    %7506 = vmatpush2.msra.mxu0 0.0
    %7507 = vmatprep.subr.mxu0 0.0
    %7508 = vmatpush2.msra.mxu0 0.0
    %7509 = vmatprep.subr.mxu0 0.0
    %7510 = vmatpush2.msra.mxu0 0.0
    %7511 = vmatprep.subr.mxu0 0.0
    %7512 = vmatpush2.msra.mxu0 0.0
    %7513 = vmatprep.subr.mxu0 0.0
    %7514 = vmatpush2.msra.mxu0 0.0
    %7515 = vmatprep.subr.mxu0 0.0
    %7516 = vmatpush2.msra.mxu0 0.0
    %7517 = vmatprep.subr.mxu0 0.0
    %7518 = vmatpush2.msra.mxu0 0.0
    %7519 = vmatprep.subr.mxu0 0.0
    %7520 = vmatpush2.msra.mxu0 0.0
    %7521 = vmatprep.subr.mxu0 0.0
    %7522 = vmatpush2.msra.mxu0 0.0
    %7523 = vmatprep.subr.mxu0 0.0
    %7524 = vmatpush2.msra.mxu0 0.0
    %7525 = vmatprep.subr.mxu0 0.0
    %7526 = vmatpush2.msra.mxu0 0.0
    %7527 = vmatprep.mubr.f32.mxu0 0.0
    %7528 = vmatmul.mubr.f32.gmra.mxu0 %v7399
    %v7529 = vpop.f32.mrf.mxu0
    %v7530 = vadd.f32 0.0, %v7529
    %v7531 = vpop.f32.mrf.mxu0
    %7532 = vmatprep.mubr.f32.mxu0 0.0
    %7533 = vmatmul.mubr.f32.gmra.mxu0 %v7400
    %v7534 = vpop.f32.mrf.mxu0
    %v7535 = vadd.f32 0.0, %v7534
    %v7536 = vpop.f32.mrf.mxu0
    %7537 = vmatprep.mubr.f32.mxu0 0.0
    %7538 = vmatmul.mubr.f32.gmra.mxu0 %v7401
    %v7539 = vpop.f32.mrf.mxu0
    %v7540 = vadd.f32 0.0, %v7539
    %v7541 = vpop.f32.mrf.mxu0
    %7542 = vmatprep.mubr.f32.mxu0 0.0
    %7543 = vmatmul.mubr.f32.gmra.mxu0 %v7402
    %v7544 = vpop.f32.mrf.mxu0
    %v7545 = vadd.f32 0.0, %v7544
    %v7546 = vpop.f32.mrf.mxu0
    %7547 = vmatprep.mubr.f32.mxu0 0.0
    %7548 = vmatmul.mubr.f32.gmra.mxu0 %v7403
    %v7549 = vpop.f32.mrf.mxu0
    %v7550 = vadd.f32 0.0, %v7549
    %v7551 = vpop.f32.mrf.mxu0
    %7552 = vmatprep.mubr.f32.mxu0 0.0
    %7553 = vmatmul.mubr.f32.gmra.mxu0 %v7404
    %v7554 = vpop.f32.mrf.mxu0
    %v7555 = vadd.f32 0.0, %v7554
    %v7556 = vpop.f32.mrf.mxu0
    %7557 = vmatprep.mubr.f32.mxu0 0.0
    %7558 = vmatmul.mubr.f32.gmra.mxu0 %v7405
    %v7559 = vpop.f32.mrf.mxu0
    %v7560 = vadd.f32 0.0, %v7559
    %v7561 = vpop.f32.mrf.mxu0
    %7562 = vmatprep.mubr.f32.mxu0 0.0
    %7563 = vmatmul.mubr.f32.gmra.mxu0 %v7406
    %v7564 = vpop.f32.mrf.mxu0
    %v7565 = vadd.f32 0.0, %v7564
    %v7566 = vpop.f32.mrf.mxu0
    %7567 = vmatprep.mubr.f32.mxu0 0.0
    %7568 = vmatmul.mubr.f32.gmra.mxu0 %v7407
    %v7569 = vpop.f32.mrf.mxu0
    %v7570 = vadd.f32 0.0, %v7569
    %v7571 = vpop.f32.mrf.mxu0
    %7572 = vmatprep.mubr.f32.mxu0 0.0
    %7573 = vmatmul.mubr.f32.gmra.mxu0 %v7408
    %v7574 = vpop.f32.mrf.mxu0
    %v7575 = vadd.f32 0.0, %v7574
    %v7576 = vpop.f32.mrf.mxu0
    %7577 = vmatprep.mubr.f32.mxu0 0.0
    %7578 = vmatmul.mubr.f32.gmra.mxu0 %v7409
    %v7579 = vpop.f32.mrf.mxu0
    %v7580 = vadd.f32 0.0, %v7579
    %v7581 = vpop.f32.mrf.mxu0
    %7582 = vmatprep.mubr.f32.mxu0 0.0
    %7583 = vmatmul.mubr.f32.gmra.mxu0 %v7410
    %v7584 = vpop.f32.mrf.mxu0
    %v7585 = vadd.f32 0.0, %v7584
    %v7586 = vpop.f32.mrf.mxu0
    %7587 = vmatprep.mubr.f32.mxu0 0.0
    %7588 = vmatmul.mubr.f32.gmra.mxu0 %v7411
    %v7589 = vpop.f32.mrf.mxu0
    %v7590 = vadd.f32 0.0, %v7589
    %v7591 = vpop.f32.mrf.mxu0
    %7592 = vmatprep.mubr.f32.mxu0 0.0
    %7593 = vmatmul.mubr.f32.gmra.mxu0 %v7412
    %v7594 = vpop.f32.mrf.mxu0
    %v7595 = vadd.f32 0.0, %v7594
    %v7596 = vpop.f32.mrf.mxu0
    %7597 = vmatprep.mubr.f32.mxu0 0.0
    %7598 = vmatmul.mubr.f32.gmra.mxu0 %v7413
    %v7599 = vpop.f32.mrf.mxu0
    %v7600 = vadd.f32 0.0, %v7599
    %v7601 = vpop.f32.mrf.mxu0
    %7602 = vmatprep.mubr.f32.mxu0 0.0
    %7603 = vmatmul.mubr.f32.gmra.mxu0 %v7414
    %v7604 = vpop.f32.mrf.mxu0
    %v7605 = vadd.f32 0.0, %v7604
    %v7606 = vpop.f32.mrf.mxu0
    %7607 = vdwg.mxu0
    %7608 = vmatprep.subr.mxu0 0.0
    %7609 = vmatpush1.msra.mxu0 %v7605
    %7610 = vmatprep.subr.mxu0 0.0
    %7611 = vmatpush1.msra.mxu0 %v7600
    %7612 = vmatprep.subr.mxu0 0.0
    %7613 = vmatpush1.msra.mxu0 %v7595
    %7614 = vmatprep.subr.mxu0 0.0
    %7615 = vmatpush1.msra.mxu0 %v7590
    %7616 = vmatprep.subr.mxu0 0.0
    %7617 = vmatpush1.msra.mxu0 %v7585
    %7618 = vmatprep.subr.mxu0 0.0
    %7619 = vmatpush1.msra.mxu0 %v7580
    %7620 = vmatprep.subr.mxu0 0.0
    %7621 = vmatpush1.msra.mxu0 %v7575
    %7622 = vmatprep.subr.mxu0 0.0
    %7623 = vmatpush1.msra.mxu0 %v7570
    %7624 = vmatprep.subr.mxu0 0.0
    %7625 = vmatpush1.msra.mxu0 %v7565
    %7626 = vmatprep.subr.mxu0 0.0
    %7627 = vmatpush1.msra.mxu0 %v7560
    %7628 = vmatprep.subr.mxu0 0.0
    %7629 = vmatpush1.msra.mxu0 %v7555
    %7630 = vmatprep.subr.mxu0 0.0
    %7631 = vmatpush1.msra.mxu0 %v7550
    %7632 = vmatprep.subr.mxu0 0.0
    %7633 = vmatpush1.msra.mxu0 %v7545
    %7634 = vmatprep.subr.mxu0 0.0
    %7635 = vmatpush1.msra.mxu0 %v7540
    %7636 = vmatprep.subr.mxu0 0.0
    %7637 = vmatpush1.msra.mxu0 %v7535
    %7638 = vmatprep.subr.mxu0 0.0
    %7639 = vmatpush1.msra.mxu0 %v7530
    %7640 = vmatprep.subr.mxu0 0.0
    %7641 = vmatpush2.msra.mxu0 0.0
    %7642 = vmatprep.subr.mxu0 0.0
    %7643 = vmatpush2.msra.mxu0 0.0
    %7644 = vmatprep.subr.mxu0 0.0
    %7645 = vmatpush2.msra.mxu0 0.0
    %7646 = vmatprep.subr.mxu0 0.0
    %7647 = vmatpush2.msra.mxu0 0.0
    %7648 = vmatprep.subr.mxu0 0.0
    %7649 = vmatpush2.msra.mxu0 0.0
    %7650 = vmatprep.subr.mxu0 0.0
    %7651 = vmatpush2.msra.mxu0 0.0
    %7652 = vmatprep.subr.mxu0 0.0
    %7653 = vmatpush2.msra.mxu0 0.0
    %7654 = vmatprep.subr.mxu0 0.0
    %7655 = vmatpush2.msra.mxu0 0.0
    %7656 = vmatprep.subr.mxu0 0.0
    %7657 = vmatpush2.msra.mxu0 0.0
    %7658 = vmatprep.subr.mxu0 0.0
    %7659 = vmatpush2.msra.mxu0 0.0
    %7660 = vmatprep.subr.mxu0 0.0
    %7661 = vmatpush2.msra.mxu0 0.0
    %7662 = vmatprep.subr.mxu0 0.0
    %7663 = vmatpush2.msra.mxu0 0.0
    %7664 = vmatprep.subr.mxu0 0.0
    %7665 = vmatpush2.msra.mxu0 0.0
    %7666 = vmatprep.subr.mxu0 0.0
    %7667 = vmatpush2.msra.mxu0 0.0
    %7668 = vmatprep.subr.mxu0 0.0
    %7669 = vmatpush2.msra.mxu0 0.0
    %7670 = vmatprep.subr.mxu0 0.0
    %7671 = vmatpush2.msra.mxu0 0.0
    %7672 = vmatprep.mubr.f32.mxu0 0.0
    %7673 = vmatmul.mubr.f32.gmra.mxu0 %v3354
    %v7674 = vpop.f32.mrf.mxu0
    %v7675 = vadd.f32 0.0, %v7674
    %v7676 = vpop.f32.mrf.mxu0
    %7677 = vmatprep.mubr.f32.mxu0 0.0
    %7678 = vmatmul.mubr.f32.gmra.mxu0 %v3355
    %v7679 = vpop.f32.mrf.mxu0
    %v7680 = vadd.f32 0.0, %v7679
    %v7681 = vpop.f32.mrf.mxu0
    %7682 = vdwg.mxu0
    %v7684 = vsel %vm2790, %v7675, 0
    %v7687 = vsel %vm2790, %v7680, 0
    %7689 = vmatprep.subr.mxu0 0.0
    %7690 = vmatpush1.msra.mxu0 0.0
    %7691 = vmatprep.subr.mxu0 0.0
    %7692 = vmatpush1.msra.mxu0 0.0
    %7693 = vmatprep.subr.mxu0 0.0
    %7694 = vmatpush1.msra.mxu0 0.0
    %7695 = vmatprep.subr.mxu0 0.0
    %7696 = vmatpush1.msra.mxu0 0.0
    %7697 = vmatprep.subr.mxu0 0.0
    %7698 = vmatpush1.msra.mxu0 0.0
    %7699 = vmatprep.subr.mxu0 0.0
    %7700 = vmatpush1.msra.mxu0 0.0
    %7701 = vmatprep.subr.mxu0 0.0
    %7702 = vmatpush1.msra.mxu0 0.0
    %7703 = vmatprep.subr.mxu0 0.0
    %7704 = vmatpush1.msra.mxu0 0.0
    %7705 = vmatprep.subr.mxu0 0.0
    %7706 = vmatpush1.msra.mxu0 0.0
    %7707 = vmatprep.subr.mxu0 0.0
    %7708 = vmatpush1.msra.mxu0 0.0
    %7709 = vmatprep.subr.mxu0 0.0
    %7710 = vmatpush1.msra.mxu0 0.0
    %7711 = vmatprep.subr.mxu0 0.0
    %7712 = vmatpush1.msra.mxu0 0.0
    %7713 = vmatprep.subr.mxu0 0.0
    %7714 = vmatpush1.msra.mxu0 0.0
    %7715 = vmatprep.subr.mxu0 0.0
    %7716 = vmatpush1.msra.mxu0 0.0
    %7717 = vmatprep.subr.mxu0 0.0
    %7718 = vmatpush1.msra.mxu0 0.0
    %7719 = vmatprep.subr.mxu0 0.0
    %7720 = vmatpush1.msra.mxu0 %v3445
    %7721 = vmatprep.subr.mxu0 0.0
    %7722 = vmatpush2.msra.mxu0 0.0
    %7723 = vmatprep.subr.mxu0 0.0
    %7724 = vmatpush2.msra.mxu0 0.0
    %7725 = vmatprep.subr.mxu0 0.0
    %7726 = vmatpush2.msra.mxu0 0.0
    %7727 = vmatprep.subr.mxu0 0.0
    %7728 = vmatpush2.msra.mxu0 0.0
    %7729 = vmatprep.subr.mxu0 0.0
    %7730 = vmatpush2.msra.mxu0 0.0
    %7731 = vmatprep.subr.mxu0 0.0
    %7732 = vmatpush2.msra.mxu0 0.0
    %7733 = vmatprep.subr.mxu0 0.0
    %7734 = vmatpush2.msra.mxu0 0.0
    %7735 = vmatprep.subr.mxu0 0.0
    %7736 = vmatpush2.msra.mxu0 0.0
    %7737 = vmatprep.subr.mxu0 0.0
    %7738 = vmatpush2.msra.mxu0 0.0
    %7739 = vmatprep.subr.mxu0 0.0
    %7740 = vmatpush2.msra.mxu0 0.0
    %7741 = vmatprep.subr.mxu0 0.0
    %7742 = vmatpush2.msra.mxu0 0.0
    %7743 = vmatprep.subr.mxu0 0.0
    %7744 = vmatpush2.msra.mxu0 0.0
    %7745 = vmatprep.subr.mxu0 0.0
    %7746 = vmatpush2.msra.mxu0 0.0
    %7747 = vmatprep.subr.mxu0 0.0
    %7748 = vmatpush2.msra.mxu0 0.0
    %7749 = vmatprep.subr.mxu0 0.0
    %7750 = vmatpush2.msra.mxu0 0.0
    %7751 = vmatprep.subr.mxu0 0.0
    %7752 = vmatpush2.msra.mxu0 0.0
    %7753 = vmatprep.mubr.f32.mxu0 0.0
    %7754 = vmatmul.mubr.f32.gmra.mxu0 %v7684
    %v7755 = vpop.f32.mrf.mxu0
    %v7756 = vadd.f32 0.0, %v7755
    %v7757 = vpop.f32.mrf.mxu0
    %7758 = vmatprep.mubr.f32.mxu0 0.0
    %7759 = vmatmul.mubr.f32.gmra.mxu0 %v7687
    %v7760 = vpop.f32.mrf.mxu0
    %v7761 = vadd.f32 0.0, %v7760
    %v7762 = vpop.f32.mrf.mxu0
    %7763 = vdwg.mxu0
    %v7764 = vadd.f32 %v3531, %v7756
    %v7765 = vadd.f32 %v3531, %v7761
    %7766 = vmatprep.subr.mxu0 0.0
    %7767 = vmatpush1.msra.mxu0 %v7605
    %7768 = vmatprep.subr.mxu0 0.0
    %7769 = vmatpush1.msra.mxu0 %v7600
    %7770 = vmatprep.subr.mxu0 0.0
    %7771 = vmatpush1.msra.mxu0 %v7595
    %7772 = vmatprep.subr.mxu0 0.0
    %7773 = vmatpush1.msra.mxu0 %v7590
    %7774 = vmatprep.subr.mxu0 0.0
    %7775 = vmatpush1.msra.mxu0 %v7585
    %7776 = vmatprep.subr.mxu0 0.0
    %7777 = vmatpush1.msra.mxu0 %v7580
    %7778 = vmatprep.subr.mxu0 0.0
    %7779 = vmatpush1.msra.mxu0 %v7575
    %7780 = vmatprep.subr.mxu0 0.0
    %7781 = vmatpush1.msra.mxu0 %v7570
    %7782 = vmatprep.subr.mxu0 0.0
    %7783 = vmatpush1.msra.mxu0 %v7565
    %7784 = vmatprep.subr.mxu0 0.0
    %7785 = vmatpush1.msra.mxu0 %v7560
    %7786 = vmatprep.subr.mxu0 0.0
    %7787 = vmatpush1.msra.mxu0 %v7555
    %7788 = vmatprep.subr.mxu0 0.0
    %7789 = vmatpush1.msra.mxu0 %v7550
    %7790 = vmatprep.subr.mxu0 0.0
    %7791 = vmatpush1.msra.mxu0 %v7545
    %7792 = vmatprep.subr.mxu0 0.0
    %7793 = vmatpush1.msra.mxu0 %v7540
    %7794 = vmatprep.subr.mxu0 0.0
    %7795 = vmatpush1.msra.mxu0 %v7535
    %7796 = vmatprep.subr.mxu0 0.0
    %7797 = vmatpush1.msra.mxu0 %v7530
    %7798 = vmatprep.subr.mxu0 0.0
    %7799 = vmatpush2.msra.mxu0 0.0
    %7800 = vmatprep.subr.mxu0 0.0
    %7801 = vmatpush2.msra.mxu0 0.0
    %7802 = vmatprep.subr.mxu0 0.0
    %7803 = vmatpush2.msra.mxu0 0.0
    %7804 = vmatprep.subr.mxu0 0.0
    %7805 = vmatpush2.msra.mxu0 0.0
    %7806 = vmatprep.subr.mxu0 0.0
    %7807 = vmatpush2.msra.mxu0 0.0
    %7808 = vmatprep.subr.mxu0 0.0
    %7809 = vmatpush2.msra.mxu0 0.0
    %7810 = vmatprep.subr.mxu0 0.0
    %7811 = vmatpush2.msra.mxu0 0.0
    %7812 = vmatprep.subr.mxu0 0.0
    %7813 = vmatpush2.msra.mxu0 0.0
    %7814 = vmatprep.subr.mxu0 0.0
    %7815 = vmatpush2.msra.mxu0 0.0
    %7816 = vmatprep.subr.mxu0 0.0
    %7817 = vmatpush2.msra.mxu0 0.0
    %7818 = vmatprep.subr.mxu0 0.0
    %7819 = vmatpush2.msra.mxu0 0.0
    %7820 = vmatprep.subr.mxu0 0.0
    %7821 = vmatpush2.msra.mxu0 0.0
    %7822 = vmatprep.subr.mxu0 0.0
    %7823 = vmatpush2.msra.mxu0 0.0
    %7824 = vmatprep.subr.mxu0 0.0
    %7825 = vmatpush2.msra.mxu0 0.0
    %7826 = vmatprep.subr.mxu0 0.0
    %7827 = vmatpush2.msra.mxu0 0.0
    %7828 = vmatprep.subr.mxu0 0.0
    %7829 = vmatpush2.msra.mxu0 0.0
    %7830 = vmatprep.mubr.f32.mxu0 0.0
    %7831 = vmatmul.mubr.f32.gmra.mxu0 %v3551
    %v7832 = vpop.f32.mrf.mxu0
    %v7833 = vadd.f32 0.0, %v7832
    %v7834 = vpop.f32.mrf.mxu0
    %7835 = vmatprep.mubr.f32.mxu0 0.0
    %7836 = vmatmul.mubr.f32.gmra.mxu0 %v3552
    %v7837 = vpop.f32.mrf.mxu0
    %v7838 = vadd.f32 0.0, %v7837
    %v7839 = vpop.f32.mrf.mxu0
    %7840 = vdwg.mxu0
    %v7842 = vsel %vm2790, %v7833, 0
    %v7845 = vsel %vm2790, %v7838, 0
    %7847 = vmatprep.subr.mxu0 0.0
    %7848 = vmatpush1.msra.mxu0 0.0
    %7849 = vmatprep.subr.mxu0 0.0
    %7850 = vmatpush1.msra.mxu0 0.0
    %7851 = vmatprep.subr.mxu0 0.0
    %7852 = vmatpush1.msra.mxu0 0.0
    %7853 = vmatprep.subr.mxu0 0.0
    %7854 = vmatpush1.msra.mxu0 0.0
    %7855 = vmatprep.subr.mxu0 0.0
    %7856 = vmatpush1.msra.mxu0 0.0
    %7857 = vmatprep.subr.mxu0 0.0
    %7858 = vmatpush1.msra.mxu0 0.0
    %7859 = vmatprep.subr.mxu0 0.0
    %7860 = vmatpush1.msra.mxu0 0.0
    %7861 = vmatprep.subr.mxu0 0.0
    %7862 = vmatpush1.msra.mxu0 0.0
    %7863 = vmatprep.subr.mxu0 0.0
    %7864 = vmatpush1.msra.mxu0 0.0
    %7865 = vmatprep.subr.mxu0 0.0
    %7866 = vmatpush1.msra.mxu0 0.0
    %7867 = vmatprep.subr.mxu0 0.0
    %7868 = vmatpush1.msra.mxu0 0.0
    %7869 = vmatprep.subr.mxu0 0.0
    %7870 = vmatpush1.msra.mxu0 0.0
    %7871 = vmatprep.subr.mxu0 0.0
    %7872 = vmatpush1.msra.mxu0 0.0
    %7873 = vmatprep.subr.mxu0 0.0
    %7874 = vmatpush1.msra.mxu0 0.0
    %7875 = vmatprep.subr.mxu0 0.0
    %7876 = vmatpush1.msra.mxu0 0.0
    %7877 = vmatprep.subr.mxu0 0.0
    %7878 = vmatpush1.msra.mxu0 %v3643
    %7879 = vmatprep.subr.mxu0 0.0
    %7880 = vmatpush2.msra.mxu0 0.0
    %7881 = vmatprep.subr.mxu0 0.0
    %7882 = vmatpush2.msra.mxu0 0.0
    %7883 = vmatprep.subr.mxu0 0.0
    %7884 = vmatpush2.msra.mxu0 0.0
    %7885 = vmatprep.subr.mxu0 0.0
    %7886 = vmatpush2.msra.mxu0 0.0
    %7887 = vmatprep.subr.mxu0 0.0
    %7888 = vmatpush2.msra.mxu0 0.0
    %7889 = vmatprep.subr.mxu0 0.0
    %7890 = vmatpush2.msra.mxu0 0.0
    %7891 = vmatprep.subr.mxu0 0.0
    %7892 = vmatpush2.msra.mxu0 0.0
    %7893 = vmatprep.subr.mxu0 0.0
    %7894 = vmatpush2.msra.mxu0 0.0
    %7895 = vmatprep.subr.mxu0 0.0
    %7896 = vmatpush2.msra.mxu0 0.0
    %7897 = vmatprep.subr.mxu0 0.0
    %7898 = vmatpush2.msra.mxu0 0.0
    %7899 = vmatprep.subr.mxu0 0.0
    %7900 = vmatpush2.msra.mxu0 0.0
    %7901 = vmatprep.subr.mxu0 0.0
    %7902 = vmatpush2.msra.mxu0 0.0
    %7903 = vmatprep.subr.mxu0 0.0
    %7904 = vmatpush2.msra.mxu0 0.0
    %7905 = vmatprep.subr.mxu0 0.0
    %7906 = vmatpush2.msra.mxu0 0.0
    %7907 = vmatprep.subr.mxu0 0.0
    %7908 = vmatpush2.msra.mxu0 0.0
    %7909 = vmatprep.subr.mxu0 0.0
    %7910 = vmatpush2.msra.mxu0 0.0
    %7911 = vmatprep.mubr.f32.mxu0 0.0
    %7912 = vmatmul.mubr.f32.gmra.mxu0 %v7842
    %v7913 = vpop.f32.mrf.mxu0
    %v7914 = vadd.f32 0.0, %v7913
    %v7915 = vpop.f32.mrf.mxu0
    %7916 = vmatprep.mubr.f32.mxu0 0.0
    %7917 = vmatmul.mubr.f32.gmra.mxu0 %v7845
    %v7918 = vpop.f32.mrf.mxu0
    %v7919 = vadd.f32 0.0, %v7918
    %v7920 = vpop.f32.mrf.mxu0
    %7921 = vdwg.mxu0
    %v7922 = vadd.f32 %v7764, %v7914
    %v7923 = vadd.f32 %v7765, %v7919
    %7924 = vmatprep.subr.mxu0 0.0
    %7925 = vmatpush1.msra.mxu0 %v7605
    %7926 = vmatprep.subr.mxu0 0.0
    %7927 = vmatpush1.msra.mxu0 %v7600
    %7928 = vmatprep.subr.mxu0 0.0
    %7929 = vmatpush1.msra.mxu0 %v7595
    %7930 = vmatprep.subr.mxu0 0.0
    %7931 = vmatpush1.msra.mxu0 %v7590
    %7932 = vmatprep.subr.mxu0 0.0
    %7933 = vmatpush1.msra.mxu0 %v7585
    %7934 = vmatprep.subr.mxu0 0.0
    %7935 = vmatpush1.msra.mxu0 %v7580
    %7936 = vmatprep.subr.mxu0 0.0
    %7937 = vmatpush1.msra.mxu0 %v7575
    %7938 = vmatprep.subr.mxu0 0.0
    %7939 = vmatpush1.msra.mxu0 %v7570
    %7940 = vmatprep.subr.mxu0 0.0
    %7941 = vmatpush1.msra.mxu0 %v7565
    %7942 = vmatprep.subr.mxu0 0.0
    %7943 = vmatpush1.msra.mxu0 %v7560
    %7944 = vmatprep.subr.mxu0 0.0
    %7945 = vmatpush1.msra.mxu0 %v7555
    %7946 = vmatprep.subr.mxu0 0.0
    %7947 = vmatpush1.msra.mxu0 %v7550
    %7948 = vmatprep.subr.mxu0 0.0
    %7949 = vmatpush1.msra.mxu0 %v7545
    %7950 = vmatprep.subr.mxu0 0.0
    %7951 = vmatpush1.msra.mxu0 %v7540
    %7952 = vmatprep.subr.mxu0 0.0
    %7953 = vmatpush1.msra.mxu0 %v7535
    %7954 = vmatprep.subr.mxu0 0.0
    %7955 = vmatpush1.msra.mxu0 %v7530
    %7956 = vmatprep.subr.mxu0 0.0
    %7957 = vmatpush2.msra.mxu0 0.0
    %7958 = vmatprep.subr.mxu0 0.0
    %7959 = vmatpush2.msra.mxu0 0.0
    %7960 = vmatprep.subr.mxu0 0.0
    %7961 = vmatpush2.msra.mxu0 0.0
    %7962 = vmatprep.subr.mxu0 0.0
    %7963 = vmatpush2.msra.mxu0 0.0
    %7964 = vmatprep.subr.mxu0 0.0
    %7965 = vmatpush2.msra.mxu0 0.0
    %7966 = vmatprep.subr.mxu0 0.0
    %7967 = vmatpush2.msra.mxu0 0.0
    %7968 = vmatprep.subr.mxu0 0.0
    %7969 = vmatpush2.msra.mxu0 0.0
    %7970 = vmatprep.subr.mxu0 0.0
    %7971 = vmatpush2.msra.mxu0 0.0
    %7972 = vmatprep.subr.mxu0 0.0
    %7973 = vmatpush2.msra.mxu0 0.0
    %7974 = vmatprep.subr.mxu0 0.0
    %7975 = vmatpush2.msra.mxu0 0.0
    %7976 = vmatprep.subr.mxu0 0.0
    %7977 = vmatpush2.msra.mxu0 0.0
    %7978 = vmatprep.subr.mxu0 0.0
    %7979 = vmatpush2.msra.mxu0 0.0
    %7980 = vmatprep.subr.mxu0 0.0
    %7981 = vmatpush2.msra.mxu0 0.0
    %7982 = vmatprep.subr.mxu0 0.0
    %7983 = vmatpush2.msra.mxu0 0.0
    %7984 = vmatprep.subr.mxu0 0.0
    %7985 = vmatpush2.msra.mxu0 0.0
    %7986 = vmatprep.subr.mxu0 0.0
    %7987 = vmatpush2.msra.mxu0 0.0
    %7988 = vmatprep.mubr.f32.mxu0 0.0
    %7989 = vmatmul.mubr.f32.gmra.mxu0 %v3743
    %v7990 = vpop.f32.mrf.mxu0
    %v7991 = vadd.f32 0.0, %v7990
    %v7992 = vpop.f32.mrf.mxu0
    %7993 = vmatprep.mubr.f32.mxu0 0.0
    %7994 = vmatmul.mubr.f32.gmra.mxu0 %v3744
    %v7995 = vpop.f32.mrf.mxu0
    %v7996 = vadd.f32 0.0, %v7995
    %v7997 = vpop.f32.mrf.mxu0
    %7998 = vdwg.mxu0
    %v8000 = vsel %vm2790, %v7991, 0
    %v8003 = vsel %vm2790, %v7996, 0
    %8005 = vmatprep.subr.mxu0 0.0
    %8006 = vmatpush1.msra.mxu0 0.0
    %8007 = vmatprep.subr.mxu0 0.0
    %8008 = vmatpush1.msra.mxu0 0.0
    %8009 = vmatprep.subr.mxu0 0.0
    %8010 = vmatpush1.msra.mxu0 0.0
    %8011 = vmatprep.subr.mxu0 0.0
    %8012 = vmatpush1.msra.mxu0 0.0
    %8013 = vmatprep.subr.mxu0 0.0
    %8014 = vmatpush1.msra.mxu0 0.0
    %8015 = vmatprep.subr.mxu0 0.0
    %8016 = vmatpush1.msra.mxu0 0.0
    %8017 = vmatprep.subr.mxu0 0.0
    %8018 = vmatpush1.msra.mxu0 0.0
    %8019 = vmatprep.subr.mxu0 0.0
    %8020 = vmatpush1.msra.mxu0 0.0
    %8021 = vmatprep.subr.mxu0 0.0
    %8022 = vmatpush1.msra.mxu0 0.0
    %8023 = vmatprep.subr.mxu0 0.0
    %8024 = vmatpush1.msra.mxu0 0.0
    %8025 = vmatprep.subr.mxu0 0.0
    %8026 = vmatpush1.msra.mxu0 0.0
    %8027 = vmatprep.subr.mxu0 0.0
    %8028 = vmatpush1.msra.mxu0 0.0
    %8029 = vmatprep.subr.mxu0 0.0
    %8030 = vmatpush1.msra.mxu0 0.0
    %8031 = vmatprep.subr.mxu0 0.0
    %8032 = vmatpush1.msra.mxu0 0.0
    %8033 = vmatprep.subr.mxu0 0.0
    %8034 = vmatpush1.msra.mxu0 0.0
    %8035 = vmatprep.subr.mxu0 0.0
    %8036 = vmatpush1.msra.mxu0 %v3835
    %8037 = vmatprep.subr.mxu0 0.0
    %8038 = vmatpush2.msra.mxu0 0.0
    %8039 = vmatprep.subr.mxu0 0.0
    %8040 = vmatpush2.msra.mxu0 0.0
    %8041 = vmatprep.subr.mxu0 0.0
    %8042 = vmatpush2.msra.mxu0 0.0
    %8043 = vmatprep.subr.mxu0 0.0
    %8044 = vmatpush2.msra.mxu0 0.0
    %8045 = vmatprep.subr.mxu0 0.0
    %8046 = vmatpush2.msra.mxu0 0.0
    %8047 = vmatprep.subr.mxu0 0.0
    %8048 = vmatpush2.msra.mxu0 0.0
    %8049 = vmatprep.subr.mxu0 0.0
    %8050 = vmatpush2.msra.mxu0 0.0
    %8051 = vmatprep.subr.mxu0 0.0
    %8052 = vmatpush2.msra.mxu0 0.0
    %8053 = vmatprep.subr.mxu0 0.0
    %8054 = vmatpush2.msra.mxu0 0.0
    %8055 = vmatprep.subr.mxu0 0.0
    %8056 = vmatpush2.msra.mxu0 0.0
    %8057 = vmatprep.subr.mxu0 0.0
    %8058 = vmatpush2.msra.mxu0 0.0
    %8059 = vmatprep.subr.mxu0 0.0
    %8060 = vmatpush2.msra.mxu0 0.0
    %8061 = vmatprep.subr.mxu0 0.0
    %8062 = vmatpush2.msra.mxu0 0.0
    %8063 = vmatprep.subr.mxu0 0.0
    %8064 = vmatpush2.msra.mxu0 0.0
    %8065 = vmatprep.subr.mxu0 0.0
    %8066 = vmatpush2.msra.mxu0 0.0
    %8067 = vmatprep.subr.mxu0 0.0
    %8068 = vmatpush2.msra.mxu0 0.0
    %8069 = vmatprep.mubr.f32.mxu0 0.0
    %8070 = vmatmul.mubr.f32.gmra.mxu0 %v8000
    %v8071 = vpop.f32.mrf.mxu0
    %v8072 = vadd.f32 0.0, %v8071
    %v8073 = vpop.f32.mrf.mxu0
    %8074 = vmatprep.mubr.f32.mxu0 0.0
    %8075 = vmatmul.mubr.f32.gmra.mxu0 %v8003
    %v8076 = vpop.f32.mrf.mxu0
    %v8077 = vadd.f32 0.0, %v8076
    %v8078 = vpop.f32.mrf.mxu0
    %8079 = vdwg.mxu0
    %v8080 = vadd.f32 %v7922, %v8072
    %v8081 = vadd.f32 %v7923, %v8077
    %8082 = vmatprep.subr.mxu0 0.0
    %8083 = vmatpush1.msra.mxu0 %v7605
    %8084 = vmatprep.subr.mxu0 0.0
    %8085 = vmatpush1.msra.mxu0 %v7600
    %8086 = vmatprep.subr.mxu0 0.0
    %8087 = vmatpush1.msra.mxu0 %v7595
    %8088 = vmatprep.subr.mxu0 0.0
    %8089 = vmatpush1.msra.mxu0 %v7590
    %8090 = vmatprep.subr.mxu0 0.0
    %8091 = vmatpush1.msra.mxu0 %v7585
    %8092 = vmatprep.subr.mxu0 0.0
    %8093 = vmatpush1.msra.mxu0 %v7580
    %8094 = vmatprep.subr.mxu0 0.0
    %8095 = vmatpush1.msra.mxu0 %v7575
    %8096 = vmatprep.subr.mxu0 0.0
    %8097 = vmatpush1.msra.mxu0 %v7570
    %8098 = vmatprep.subr.mxu0 0.0
    %8099 = vmatpush1.msra.mxu0 %v7565
    %8100 = vmatprep.subr.mxu0 0.0
    %8101 = vmatpush1.msra.mxu0 %v7560
    %8102 = vmatprep.subr.mxu0 0.0
    %8103 = vmatpush1.msra.mxu0 %v7555
    %8104 = vmatprep.subr.mxu0 0.0
    %8105 = vmatpush1.msra.mxu0 %v7550
    %8106 = vmatprep.subr.mxu0 0.0
    %8107 = vmatpush1.msra.mxu0 %v7545
    %8108 = vmatprep.subr.mxu0 0.0
    %8109 = vmatpush1.msra.mxu0 %v7540
    %8110 = vmatprep.subr.mxu0 0.0
    %8111 = vmatpush1.msra.mxu0 %v7535
    %8112 = vmatprep.subr.mxu0 0.0
    %8113 = vmatpush1.msra.mxu0 %v7530
    %8114 = vmatprep.subr.mxu0 0.0
    %8115 = vmatpush2.msra.mxu0 0.0
    %8116 = vmatprep.subr.mxu0 0.0
    %8117 = vmatpush2.msra.mxu0 0.0
    %8118 = vmatprep.subr.mxu0 0.0
    %8119 = vmatpush2.msra.mxu0 0.0
    %8120 = vmatprep.subr.mxu0 0.0
    %8121 = vmatpush2.msra.mxu0 0.0
    %8122 = vmatprep.subr.mxu0 0.0
    %8123 = vmatpush2.msra.mxu0 0.0
    %8124 = vmatprep.subr.mxu0 0.0
    %8125 = vmatpush2.msra.mxu0 0.0
    %8126 = vmatprep.subr.mxu0 0.0
    %8127 = vmatpush2.msra.mxu0 0.0
    %8128 = vmatprep.subr.mxu0 0.0
    %8129 = vmatpush2.msra.mxu0 0.0
    %8130 = vmatprep.subr.mxu0 0.0
    %8131 = vmatpush2.msra.mxu0 0.0
    %8132 = vmatprep.subr.mxu0 0.0
    %8133 = vmatpush2.msra.mxu0 0.0
    %8134 = vmatprep.subr.mxu0 0.0
    %8135 = vmatpush2.msra.mxu0 0.0
    %8136 = vmatprep.subr.mxu0 0.0
    %8137 = vmatpush2.msra.mxu0 0.0
    %8138 = vmatprep.subr.mxu0 0.0
    %8139 = vmatpush2.msra.mxu0 0.0
    %8140 = vmatprep.subr.mxu0 0.0
    %8141 = vmatpush2.msra.mxu0 0.0
    %8142 = vmatprep.subr.mxu0 0.0
    %8143 = vmatpush2.msra.mxu0 0.0
    %8144 = vmatprep.subr.mxu0 0.0
    %8145 = vmatpush2.msra.mxu0 0.0
    %8146 = vmatprep.mubr.f32.mxu0 0.0
    %8147 = vmatmul.mubr.f32.gmra.mxu0 %v3935
    %v8148 = vpop.f32.mrf.mxu0
    %v8149 = vadd.f32 0.0, %v8148
    %v8150 = vpop.f32.mrf.mxu0
    %8151 = vmatprep.mubr.f32.mxu0 0.0
    %8152 = vmatmul.mubr.f32.gmra.mxu0 %v3936
    %v8153 = vpop.f32.mrf.mxu0
    %v8154 = vadd.f32 0.0, %v8153
    %v8155 = vpop.f32.mrf.mxu0
    %8156 = vdwg.mxu0
    %v8158 = vsel %vm2790, %v8149, 0
    %v8161 = vsel %vm2790, %v8154, 0
    %8163 = vmatprep.subr.mxu0 0.0
    %8164 = vmatpush1.msra.mxu0 0.0
    %8165 = vmatprep.subr.mxu0 0.0
    %8166 = vmatpush1.msra.mxu0 0.0
    %8167 = vmatprep.subr.mxu0 0.0
    %8168 = vmatpush1.msra.mxu0 0.0
    %8169 = vmatprep.subr.mxu0 0.0
    %8170 = vmatpush1.msra.mxu0 0.0
    %8171 = vmatprep.subr.mxu0 0.0
    %8172 = vmatpush1.msra.mxu0 0.0
    %8173 = vmatprep.subr.mxu0 0.0
    %8174 = vmatpush1.msra.mxu0 0.0
    %8175 = vmatprep.subr.mxu0 0.0
    %8176 = vmatpush1.msra.mxu0 0.0
    %8177 = vmatprep.subr.mxu0 0.0
    %8178 = vmatpush1.msra.mxu0 0.0
    %8179 = vmatprep.subr.mxu0 0.0
    %8180 = vmatpush1.msra.mxu0 0.0
    %8181 = vmatprep.subr.mxu0 0.0
    %8182 = vmatpush1.msra.mxu0 0.0
    %8183 = vmatprep.subr.mxu0 0.0
    %8184 = vmatpush1.msra.mxu0 0.0
    %8185 = vmatprep.subr.mxu0 0.0
    %8186 = vmatpush1.msra.mxu0 0.0
    %8187 = vmatprep.subr.mxu0 0.0
    %8188 = vmatpush1.msra.mxu0 0.0
    %8189 = vmatprep.subr.mxu0 0.0
    %8190 = vmatpush1.msra.mxu0 0.0
    %8191 = vmatprep.subr.mxu0 0.0
    %8192 = vmatpush1.msra.mxu0 0.0
    %8193 = vmatprep.subr.mxu0 0.0
    %8194 = vmatpush1.msra.mxu0 %v4027
    %8195 = vmatprep.subr.mxu0 0.0
    %8196 = vmatpush2.msra.mxu0 0.0
    %8197 = vmatprep.subr.mxu0 0.0
    %8198 = vmatpush2.msra.mxu0 0.0
    %8199 = vmatprep.subr.mxu0 0.0
    %8200 = vmatpush2.msra.mxu0 0.0
    %8201 = vmatprep.subr.mxu0 0.0
    %8202 = vmatpush2.msra.mxu0 0.0
    %8203 = vmatprep.subr.mxu0 0.0
    %8204 = vmatpush2.msra.mxu0 0.0
    %8205 = vmatprep.subr.mxu0 0.0
    %8206 = vmatpush2.msra.mxu0 0.0
    %8207 = vmatprep.subr.mxu0 0.0
    %8208 = vmatpush2.msra.mxu0 0.0
    %8209 = vmatprep.subr.mxu0 0.0
    %8210 = vmatpush2.msra.mxu0 0.0
    %8211 = vmatprep.subr.mxu0 0.0
    %8212 = vmatpush2.msra.mxu0 0.0
    %8213 = vmatprep.subr.mxu0 0.0
    %8214 = vmatpush2.msra.mxu0 0.0
    %8215 = vmatprep.subr.mxu0 0.0
    %8216 = vmatpush2.msra.mxu0 0.0
    %8217 = vmatprep.subr.mxu0 0.0
    %8218 = vmatpush2.msra.mxu0 0.0
    %8219 = vmatprep.subr.mxu0 0.0
    %8220 = vmatpush2.msra.mxu0 0.0
    %8221 = vmatprep.subr.mxu0 0.0
    %8222 = vmatpush2.msra.mxu0 0.0
    %8223 = vmatprep.subr.mxu0 0.0
    %8224 = vmatpush2.msra.mxu0 0.0
    %8225 = vmatprep.subr.mxu0 0.0
    %8226 = vmatpush2.msra.mxu0 0.0
    %8227 = vmatprep.mubr.f32.mxu0 0.0
    %8228 = vmatmul.mubr.f32.gmra.mxu0 %v8158
    %v8229 = vpop.f32.mrf.mxu0
    %v8230 = vadd.f32 0.0, %v8229
    %v8231 = vpop.f32.mrf.mxu0
    %8232 = vmatprep.mubr.f32.mxu0 0.0
    %8233 = vmatmul.mubr.f32.gmra.mxu0 %v8161
    %v8234 = vpop.f32.mrf.mxu0
    %v8235 = vadd.f32 0.0, %v8234
    %v8236 = vpop.f32.mrf.mxu0
    %8237 = vdwg.mxu0
    %v8238 = vadd.f32 %v8080, %v8230
    %v8239 = vadd.f32 %v8081, %v8235
    %8240 = vmatprep.subr.mxu0 0.0
    %8241 = vmatpush1.msra.mxu0 %v7605
    %8242 = vmatprep.subr.mxu0 0.0
    %8243 = vmatpush1.msra.mxu0 %v7600
    %8244 = vmatprep.subr.mxu0 0.0
    %8245 = vmatpush1.msra.mxu0 %v7595
    %8246 = vmatprep.subr.mxu0 0.0
    %8247 = vmatpush1.msra.mxu0 %v7590
    %8248 = vmatprep.subr.mxu0 0.0
    %8249 = vmatpush1.msra.mxu0 %v7585
    %8250 = vmatprep.subr.mxu0 0.0
    %8251 = vmatpush1.msra.mxu0 %v7580
    %8252 = vmatprep.subr.mxu0 0.0
    %8253 = vmatpush1.msra.mxu0 %v7575
    %8254 = vmatprep.subr.mxu0 0.0
    %8255 = vmatpush1.msra.mxu0 %v7570
    %8256 = vmatprep.subr.mxu0 0.0
    %8257 = vmatpush1.msra.mxu0 %v7565
    %8258 = vmatprep.subr.mxu0 0.0
    %8259 = vmatpush1.msra.mxu0 %v7560
    %8260 = vmatprep.subr.mxu0 0.0
    %8261 = vmatpush1.msra.mxu0 %v7555
    %8262 = vmatprep.subr.mxu0 0.0
    %8263 = vmatpush1.msra.mxu0 %v7550
    %8264 = vmatprep.subr.mxu0 0.0
    %8265 = vmatpush1.msra.mxu0 %v7545
    %8266 = vmatprep.subr.mxu0 0.0
    %8267 = vmatpush1.msra.mxu0 %v7540
    %8268 = vmatprep.subr.mxu0 0.0
    %8269 = vmatpush1.msra.mxu0 %v7535
    %8270 = vmatprep.subr.mxu0 0.0
    %8271 = vmatpush1.msra.mxu0 %v7530
    %8272 = vmatprep.subr.mxu0 0.0
    %8273 = vmatpush2.msra.mxu0 0.0
    %8274 = vmatprep.subr.mxu0 0.0
    %8275 = vmatpush2.msra.mxu0 0.0
    %8276 = vmatprep.subr.mxu0 0.0
    %8277 = vmatpush2.msra.mxu0 0.0
    %8278 = vmatprep.subr.mxu0 0.0
    %8279 = vmatpush2.msra.mxu0 0.0
    %8280 = vmatprep.subr.mxu0 0.0
    %8281 = vmatpush2.msra.mxu0 0.0
    %8282 = vmatprep.subr.mxu0 0.0
    %8283 = vmatpush2.msra.mxu0 0.0
    %8284 = vmatprep.subr.mxu0 0.0
    %8285 = vmatpush2.msra.mxu0 0.0
    %8286 = vmatprep.subr.mxu0 0.0
    %8287 = vmatpush2.msra.mxu0 0.0
    %8288 = vmatprep.subr.mxu0 0.0
    %8289 = vmatpush2.msra.mxu0 0.0
    %8290 = vmatprep.subr.mxu0 0.0
    %8291 = vmatpush2.msra.mxu0 0.0
    %8292 = vmatprep.subr.mxu0 0.0
    %8293 = vmatpush2.msra.mxu0 0.0
    %8294 = vmatprep.subr.mxu0 0.0
    %8295 = vmatpush2.msra.mxu0 0.0
    %8296 = vmatprep.subr.mxu0 0.0
    %8297 = vmatpush2.msra.mxu0 0.0
    %8298 = vmatprep.subr.mxu0 0.0
    %8299 = vmatpush2.msra.mxu0 0.0
    %8300 = vmatprep.subr.mxu0 0.0
    %8301 = vmatpush2.msra.mxu0 0.0
    %8302 = vmatprep.subr.mxu0 0.0
    %8303 = vmatpush2.msra.mxu0 0.0
    %8304 = vmatprep.mubr.f32.mxu0 0.0
    %8305 = vmatmul.mubr.f32.gmra.mxu0 %v4127
    %v8306 = vpop.f32.mrf.mxu0
    %v8307 = vadd.f32 0.0, %v8306
    %v8308 = vpop.f32.mrf.mxu0
    %8309 = vmatprep.mubr.f32.mxu0 0.0
    %8310 = vmatmul.mubr.f32.gmra.mxu0 %v4128
    %v8311 = vpop.f32.mrf.mxu0
    %v8312 = vadd.f32 0.0, %v8311
    %v8313 = vpop.f32.mrf.mxu0
    %8314 = vdwg.mxu0
    %v8316 = vsel %vm2790, %v8307, 0
    %v8319 = vsel %vm2790, %v8312, 0
    %8321 = vmatprep.subr.mxu0 0.0
    %8322 = vmatpush1.msra.mxu0 0.0
    %8323 = vmatprep.subr.mxu0 0.0
    %8324 = vmatpush1.msra.mxu0 0.0
    %8325 = vmatprep.subr.mxu0 0.0
    %8326 = vmatpush1.msra.mxu0 0.0
    %8327 = vmatprep.subr.mxu0 0.0
    %8328 = vmatpush1.msra.mxu0 0.0
    %8329 = vmatprep.subr.mxu0 0.0
    %8330 = vmatpush1.msra.mxu0 0.0
    %8331 = vmatprep.subr.mxu0 0.0
    %8332 = vmatpush1.msra.mxu0 0.0
    %8333 = vmatprep.subr.mxu0 0.0
    %8334 = vmatpush1.msra.mxu0 0.0
    %8335 = vmatprep.subr.mxu0 0.0
    %8336 = vmatpush1.msra.mxu0 0.0
    %8337 = vmatprep.subr.mxu0 0.0
    %8338 = vmatpush1.msra.mxu0 0.0
    %8339 = vmatprep.subr.mxu0 0.0
    %8340 = vmatpush1.msra.mxu0 0.0
    %8341 = vmatprep.subr.mxu0 0.0
    %8342 = vmatpush1.msra.mxu0 0.0
    %8343 = vmatprep.subr.mxu0 0.0
    %8344 = vmatpush1.msra.mxu0 0.0
    %8345 = vmatprep.subr.mxu0 0.0
    %8346 = vmatpush1.msra.mxu0 0.0
    %8347 = vmatprep.subr.mxu0 0.0
    %8348 = vmatpush1.msra.mxu0 0.0
    %8349 = vmatprep.subr.mxu0 0.0
    %8350 = vmatpush1.msra.mxu0 0.0
    %8351 = vmatprep.subr.mxu0 0.0
    %8352 = vmatpush1.msra.mxu0 %v4219
    %8353 = vmatprep.subr.mxu0 0.0
    %8354 = vmatpush2.msra.mxu0 0.0
    %8355 = vmatprep.subr.mxu0 0.0
    %8356 = vmatpush2.msra.mxu0 0.0
    %8357 = vmatprep.subr.mxu0 0.0
    %8358 = vmatpush2.msra.mxu0 0.0
    %8359 = vmatprep.subr.mxu0 0.0
    %8360 = vmatpush2.msra.mxu0 0.0
    %8361 = vmatprep.subr.mxu0 0.0
    %8362 = vmatpush2.msra.mxu0 0.0
    %8363 = vmatprep.subr.mxu0 0.0
    %8364 = vmatpush2.msra.mxu0 0.0
    %8365 = vmatprep.subr.mxu0 0.0
    %8366 = vmatpush2.msra.mxu0 0.0
    %8367 = vmatprep.subr.mxu0 0.0
    %8368 = vmatpush2.msra.mxu0 0.0
    %8369 = vmatprep.subr.mxu0 0.0
    %8370 = vmatpush2.msra.mxu0 0.0
    %8371 = vmatprep.subr.mxu0 0.0
    %8372 = vmatpush2.msra.mxu0 0.0
    %8373 = vmatprep.subr.mxu0 0.0
    %8374 = vmatpush2.msra.mxu0 0.0
    %8375 = vmatprep.subr.mxu0 0.0
    %8376 = vmatpush2.msra.mxu0 0.0
    %8377 = vmatprep.subr.mxu0 0.0
    %8378 = vmatpush2.msra.mxu0 0.0
    %8379 = vmatprep.subr.mxu0 0.0
    %8380 = vmatpush2.msra.mxu0 0.0
    %8381 = vmatprep.subr.mxu0 0.0
    %8382 = vmatpush2.msra.mxu0 0.0
    %8383 = vmatprep.subr.mxu0 0.0
    %8384 = vmatpush2.msra.mxu0 0.0
    %8385 = vmatprep.mubr.f32.mxu0 0.0
    %8386 = vmatmul.mubr.f32.gmra.mxu0 %v8316
    %v8387 = vpop.f32.mrf.mxu0
    %v8388 = vadd.f32 0.0, %v8387
    %v8389 = vpop.f32.mrf.mxu0
    %8390 = vmatprep.mubr.f32.mxu0 0.0
    %8391 = vmatmul.mubr.f32.gmra.mxu0 %v8319
    %v8392 = vpop.f32.mrf.mxu0
    %v8393 = vadd.f32 0.0, %v8392
    %v8394 = vpop.f32.mrf.mxu0
    %8395 = vdwg.mxu0
    %v8396 = vadd.f32 %v8238, %v8388
    %v8397 = vadd.f32 %v8239, %v8393
    %8398 = vmatprep.subr.mxu0 0.0
    %8399 = vmatpush1.msra.mxu0 %v7605
    %8400 = vmatprep.subr.mxu0 0.0
    %8401 = vmatpush1.msra.mxu0 %v7600
    %8402 = vmatprep.subr.mxu0 0.0
    %8403 = vmatpush1.msra.mxu0 %v7595
    %8404 = vmatprep.subr.mxu0 0.0
    %8405 = vmatpush1.msra.mxu0 %v7590
    %8406 = vmatprep.subr.mxu0 0.0
    %8407 = vmatpush1.msra.mxu0 %v7585
    %8408 = vmatprep.subr.mxu0 0.0
    %8409 = vmatpush1.msra.mxu0 %v7580
    %8410 = vmatprep.subr.mxu0 0.0
    %8411 = vmatpush1.msra.mxu0 %v7575
    %8412 = vmatprep.subr.mxu0 0.0
    %8413 = vmatpush1.msra.mxu0 %v7570
    %8414 = vmatprep.subr.mxu0 0.0
    %8415 = vmatpush1.msra.mxu0 %v7565
    %8416 = vmatprep.subr.mxu0 0.0
    %8417 = vmatpush1.msra.mxu0 %v7560
    %8418 = vmatprep.subr.mxu0 0.0
    %8419 = vmatpush1.msra.mxu0 %v7555
    %8420 = vmatprep.subr.mxu0 0.0
    %8421 = vmatpush1.msra.mxu0 %v7550
    %8422 = vmatprep.subr.mxu0 0.0
    %8423 = vmatpush1.msra.mxu0 %v7545
    %8424 = vmatprep.subr.mxu0 0.0
    %8425 = vmatpush1.msra.mxu0 %v7540
    %8426 = vmatprep.subr.mxu0 0.0
    %8427 = vmatpush1.msra.mxu0 %v7535
    %8428 = vmatprep.subr.mxu0 0.0
    %8429 = vmatpush1.msra.mxu0 %v7530
    %8430 = vmatprep.subr.mxu0 0.0
    %8431 = vmatpush2.msra.mxu0 0.0
    %8432 = vmatprep.subr.mxu0 0.0
    %8433 = vmatpush2.msra.mxu0 0.0
    %8434 = vmatprep.subr.mxu0 0.0
    %8435 = vmatpush2.msra.mxu0 0.0
    %8436 = vmatprep.subr.mxu0 0.0
    %8437 = vmatpush2.msra.mxu0 0.0
    %8438 = vmatprep.subr.mxu0 0.0
    %8439 = vmatpush2.msra.mxu0 0.0
    %8440 = vmatprep.subr.mxu0 0.0
    %8441 = vmatpush2.msra.mxu0 0.0
    %8442 = vmatprep.subr.mxu0 0.0
    %8443 = vmatpush2.msra.mxu0 0.0
    %8444 = vmatprep.subr.mxu0 0.0
    %8445 = vmatpush2.msra.mxu0 0.0
    %8446 = vmatprep.subr.mxu0 0.0
    %8447 = vmatpush2.msra.mxu0 0.0
    %8448 = vmatprep.subr.mxu0 0.0
    %8449 = vmatpush2.msra.mxu0 0.0
    %8450 = vmatprep.subr.mxu0 0.0
    %8451 = vmatpush2.msra.mxu0 0.0
    %8452 = vmatprep.subr.mxu0 0.0
    %8453 = vmatpush2.msra.mxu0 0.0
    %8454 = vmatprep.subr.mxu0 0.0
    %8455 = vmatpush2.msra.mxu0 0.0
    %8456 = vmatprep.subr.mxu0 0.0
    %8457 = vmatpush2.msra.mxu0 0.0
    %8458 = vmatprep.subr.mxu0 0.0
    %8459 = vmatpush2.msra.mxu0 0.0
    %8460 = vmatprep.subr.mxu0 0.0
    %8461 = vmatpush2.msra.mxu0 0.0
    %8462 = vmatprep.mubr.f32.mxu0 0.0
    %8463 = vmatmul.mubr.f32.gmra.mxu0 %v4319
    %v8464 = vpop.f32.mrf.mxu0
    %v8465 = vadd.f32 0.0, %v8464
    %v8466 = vpop.f32.mrf.mxu0
    %8467 = vmatprep.mubr.f32.mxu0 0.0
    %8468 = vmatmul.mubr.f32.gmra.mxu0 %v4320
    %v8469 = vpop.f32.mrf.mxu0
    %v8470 = vadd.f32 0.0, %v8469
    %v8471 = vpop.f32.mrf.mxu0
    %8472 = vdwg.mxu0
    %v8474 = vsel %vm2790, %v8465, 0
    %v8477 = vsel %vm2790, %v8470, 0
    %8479 = vmatprep.subr.mxu0 0.0
    %8480 = vmatpush1.msra.mxu0 0.0
    %8481 = vmatprep.subr.mxu0 0.0
    %8482 = vmatpush1.msra.mxu0 0.0
    %8483 = vmatprep.subr.mxu0 0.0
    %8484 = vmatpush1.msra.mxu0 0.0
    %8485 = vmatprep.subr.mxu0 0.0
    %8486 = vmatpush1.msra.mxu0 0.0
    %8487 = vmatprep.subr.mxu0 0.0
    %8488 = vmatpush1.msra.mxu0 0.0
    %8489 = vmatprep.subr.mxu0 0.0
    %8490 = vmatpush1.msra.mxu0 0.0
    %8491 = vmatprep.subr.mxu0 0.0
    %8492 = vmatpush1.msra.mxu0 0.0
    %8493 = vmatprep.subr.mxu0 0.0
    %8494 = vmatpush1.msra.mxu0 0.0
    %8495 = vmatprep.subr.mxu0 0.0
    %8496 = vmatpush1.msra.mxu0 0.0
    %8497 = vmatprep.subr.mxu0 0.0
    %8498 = vmatpush1.msra.mxu0 0.0
    %8499 = vmatprep.subr.mxu0 0.0
    %8500 = vmatpush1.msra.mxu0 0.0
    %8501 = vmatprep.subr.mxu0 0.0
    %8502 = vmatpush1.msra.mxu0 0.0
    %8503 = vmatprep.subr.mxu0 0.0
    %8504 = vmatpush1.msra.mxu0 0.0
    %8505 = vmatprep.subr.mxu0 0.0
    %8506 = vmatpush1.msra.mxu0 0.0
    %8507 = vmatprep.subr.mxu0 0.0
    %8508 = vmatpush1.msra.mxu0 0.0
    %8509 = vmatprep.subr.mxu0 0.0
    %8510 = vmatpush1.msra.mxu0 %v4411
    %8511 = vmatprep.subr.mxu0 0.0
    %8512 = vmatpush2.msra.mxu0 0.0
    %8513 = vmatprep.subr.mxu0 0.0
    %8514 = vmatpush2.msra.mxu0 0.0
    %8515 = vmatprep.subr.mxu0 0.0
    %8516 = vmatpush2.msra.mxu0 0.0
    %8517 = vmatprep.subr.mxu0 0.0
    %8518 = vmatpush2.msra.mxu0 0.0
    %8519 = vmatprep.subr.mxu0 0.0
    %8520 = vmatpush2.msra.mxu0 0.0
    %8521 = vmatprep.subr.mxu0 0.0
    %8522 = vmatpush2.msra.mxu0 0.0
    %8523 = vmatprep.subr.mxu0 0.0
    %8524 = vmatpush2.msra.mxu0 0.0
    %8525 = vmatprep.subr.mxu0 0.0
    %8526 = vmatpush2.msra.mxu0 0.0
    %8527 = vmatprep.subr.mxu0 0.0
    %8528 = vmatpush2.msra.mxu0 0.0
    %8529 = vmatprep.subr.mxu0 0.0
    %8530 = vmatpush2.msra.mxu0 0.0
    %8531 = vmatprep.subr.mxu0 0.0
    %8532 = vmatpush2.msra.mxu0 0.0
    %8533 = vmatprep.subr.mxu0 0.0
    %8534 = vmatpush2.msra.mxu0 0.0
    %8535 = vmatprep.subr.mxu0 0.0
    %8536 = vmatpush2.msra.mxu0 0.0
    %8537 = vmatprep.subr.mxu0 0.0
    %8538 = vmatpush2.msra.mxu0 0.0
    %8539 = vmatprep.subr.mxu0 0.0
    %8540 = vmatpush2.msra.mxu0 0.0
    %8541 = vmatprep.subr.mxu0 0.0
    %8542 = vmatpush2.msra.mxu0 0.0
    %8543 = vmatprep.mubr.f32.mxu0 0.0
    %8544 = vmatmul.mubr.f32.gmra.mxu0 %v8474
    %v8545 = vpop.f32.mrf.mxu0
    %v8546 = vadd.f32 0.0, %v8545
    %v8547 = vpop.f32.mrf.mxu0
    %8548 = vmatprep.mubr.f32.mxu0 0.0
    %8549 = vmatmul.mubr.f32.gmra.mxu0 %v8477
    %v8550 = vpop.f32.mrf.mxu0
    %v8551 = vadd.f32 0.0, %v8550
    %v8552 = vpop.f32.mrf.mxu0
    %8553 = vdwg.mxu0
    %v8554 = vadd.f32 %v8396, %v8546
    %v8555 = vadd.f32 %v8397, %v8551
    %8556 = vmatprep.subr.mxu0 0.0
    %8557 = vmatpush1.msra.mxu0 %v7605
    %8558 = vmatprep.subr.mxu0 0.0
    %8559 = vmatpush1.msra.mxu0 %v7600
    %8560 = vmatprep.subr.mxu0 0.0
    %8561 = vmatpush1.msra.mxu0 %v7595
    %8562 = vmatprep.subr.mxu0 0.0
    %8563 = vmatpush1.msra.mxu0 %v7590
    %8564 = vmatprep.subr.mxu0 0.0
    %8565 = vmatpush1.msra.mxu0 %v7585
    %8566 = vmatprep.subr.mxu0 0.0
    %8567 = vmatpush1.msra.mxu0 %v7580
    %8568 = vmatprep.subr.mxu0 0.0
    %8569 = vmatpush1.msra.mxu0 %v7575
    %8570 = vmatprep.subr.mxu0 0.0
    %8571 = vmatpush1.msra.mxu0 %v7570
    %8572 = vmatprep.subr.mxu0 0.0
    %8573 = vmatpush1.msra.mxu0 %v7565
    %8574 = vmatprep.subr.mxu0 0.0
    %8575 = vmatpush1.msra.mxu0 %v7560
    %8576 = vmatprep.subr.mxu0 0.0
    %8577 = vmatpush1.msra.mxu0 %v7555
    %8578 = vmatprep.subr.mxu0 0.0
    %8579 = vmatpush1.msra.mxu0 %v7550
    %8580 = vmatprep.subr.mxu0 0.0
    %8581 = vmatpush1.msra.mxu0 %v7545
    %8582 = vmatprep.subr.mxu0 0.0
    %8583 = vmatpush1.msra.mxu0 %v7540
    %8584 = vmatprep.subr.mxu0 0.0
    %8585 = vmatpush1.msra.mxu0 %v7535
    %8586 = vmatprep.subr.mxu0 0.0
    %8587 = vmatpush1.msra.mxu0 %v7530
    %8588 = vmatprep.subr.mxu0 0.0
    %8589 = vmatpush2.msra.mxu0 0.0
    %8590 = vmatprep.subr.mxu0 0.0
    %8591 = vmatpush2.msra.mxu0 0.0
    %8592 = vmatprep.subr.mxu0 0.0
    %8593 = vmatpush2.msra.mxu0 0.0
    %8594 = vmatprep.subr.mxu0 0.0
    %8595 = vmatpush2.msra.mxu0 0.0
    %8596 = vmatprep.subr.mxu0 0.0
    %8597 = vmatpush2.msra.mxu0 0.0
    %8598 = vmatprep.subr.mxu0 0.0
    %8599 = vmatpush2.msra.mxu0 0.0
    %8600 = vmatprep.subr.mxu0 0.0
    %8601 = vmatpush2.msra.mxu0 0.0
    %8602 = vmatprep.subr.mxu0 0.0
    %8603 = vmatpush2.msra.mxu0 0.0
    %8604 = vmatprep.subr.mxu0 0.0
    %8605 = vmatpush2.msra.mxu0 0.0
    %8606 = vmatprep.subr.mxu0 0.0
    %8607 = vmatpush2.msra.mxu0 0.0
    %8608 = vmatprep.subr.mxu0 0.0
    %8609 = vmatpush2.msra.mxu0 0.0
    %8610 = vmatprep.subr.mxu0 0.0
    %8611 = vmatpush2.msra.mxu0 0.0
    %8612 = vmatprep.subr.mxu0 0.0
    %8613 = vmatpush2.msra.mxu0 0.0
    %8614 = vmatprep.subr.mxu0 0.0
    %8615 = vmatpush2.msra.mxu0 0.0
    %8616 = vmatprep.subr.mxu0 0.0
    %8617 = vmatpush2.msra.mxu0 0.0
    %8618 = vmatprep.subr.mxu0 0.0
    %8619 = vmatpush2.msra.mxu0 0.0
    %8620 = vmatprep.mubr.f32.mxu0 0.0
    %8621 = vmatmul.mubr.f32.gmra.mxu0 %v4511
    %v8622 = vpop.f32.mrf.mxu0
    %v8623 = vadd.f32 0.0, %v8622
    %v8624 = vpop.f32.mrf.mxu0
    %8625 = vmatprep.mubr.f32.mxu0 0.0
    %8626 = vmatmul.mubr.f32.gmra.mxu0 %v4512
    %v8627 = vpop.f32.mrf.mxu0
    %v8628 = vadd.f32 0.0, %v8627
    %v8629 = vpop.f32.mrf.mxu0
    %8630 = vdwg.mxu0
    %v8632 = vsel %vm2790, %v8623, 0
    %v8635 = vsel %vm2790, %v8628, 0
    %8637 = vmatprep.subr.mxu0 0.0
    %8638 = vmatpush1.msra.mxu0 0.0
    %8639 = vmatprep.subr.mxu0 0.0
    %8640 = vmatpush1.msra.mxu0 0.0
    %8641 = vmatprep.subr.mxu0 0.0
    %8642 = vmatpush1.msra.mxu0 0.0
    %8643 = vmatprep.subr.mxu0 0.0
    %8644 = vmatpush1.msra.mxu0 0.0
    %8645 = vmatprep.subr.mxu0 0.0
    %8646 = vmatpush1.msra.mxu0 0.0
    %8647 = vmatprep.subr.mxu0 0.0
    %8648 = vmatpush1.msra.mxu0 0.0
    %8649 = vmatprep.subr.mxu0 0.0
    %8650 = vmatpush1.msra.mxu0 0.0
    %8651 = vmatprep.subr.mxu0 0.0
    %8652 = vmatpush1.msra.mxu0 0.0
    %8653 = vmatprep.subr.mxu0 0.0
    %8654 = vmatpush1.msra.mxu0 0.0
    %8655 = vmatprep.subr.mxu0 0.0
    %8656 = vmatpush1.msra.mxu0 0.0
    %8657 = vmatprep.subr.mxu0 0.0
    %8658 = vmatpush1.msra.mxu0 0.0
    %8659 = vmatprep.subr.mxu0 0.0
    %8660 = vmatpush1.msra.mxu0 0.0
    %8661 = vmatprep.subr.mxu0 0.0
    %8662 = vmatpush1.msra.mxu0 0.0
    %8663 = vmatprep.subr.mxu0 0.0
    %8664 = vmatpush1.msra.mxu0 0.0
    %8665 = vmatprep.subr.mxu0 0.0
    %8666 = vmatpush1.msra.mxu0 0.0
    %8667 = vmatprep.subr.mxu0 0.0
    %8668 = vmatpush1.msra.mxu0 %v4603
    %8669 = vmatprep.subr.mxu0 0.0
    %8670 = vmatpush2.msra.mxu0 0.0
    %8671 = vmatprep.subr.mxu0 0.0
    %8672 = vmatpush2.msra.mxu0 0.0
    %8673 = vmatprep.subr.mxu0 0.0
    %8674 = vmatpush2.msra.mxu0 0.0
    %8675 = vmatprep.subr.mxu0 0.0
    %8676 = vmatpush2.msra.mxu0 0.0
    %8677 = vmatprep.subr.mxu0 0.0
    %8678 = vmatpush2.msra.mxu0 0.0
    %8679 = vmatprep.subr.mxu0 0.0
    %8680 = vmatpush2.msra.mxu0 0.0
    %8681 = vmatprep.subr.mxu0 0.0
    %8682 = vmatpush2.msra.mxu0 0.0
    %8683 = vmatprep.subr.mxu0 0.0
    %8684 = vmatpush2.msra.mxu0 0.0
    %8685 = vmatprep.subr.mxu0 0.0
    %8686 = vmatpush2.msra.mxu0 0.0
    %8687 = vmatprep.subr.mxu0 0.0
    %8688 = vmatpush2.msra.mxu0 0.0
    %8689 = vmatprep.subr.mxu0 0.0
    %8690 = vmatpush2.msra.mxu0 0.0
    %8691 = vmatprep.subr.mxu0 0.0
    %8692 = vmatpush2.msra.mxu0 0.0
    %8693 = vmatprep.subr.mxu0 0.0
    %8694 = vmatpush2.msra.mxu0 0.0
    %8695 = vmatprep.subr.mxu0 0.0
    %8696 = vmatpush2.msra.mxu0 0.0
    %8697 = vmatprep.subr.mxu0 0.0
    %8698 = vmatpush2.msra.mxu0 0.0
    %8699 = vmatprep.subr.mxu0 0.0
    %8700 = vmatpush2.msra.mxu0 0.0
    %8701 = vmatprep.mubr.f32.mxu0 0.0
    %8702 = vmatmul.mubr.f32.gmra.mxu0 %v8632
    %v8703 = vpop.f32.mrf.mxu0
    %v8704 = vadd.f32 0.0, %v8703
    %v8705 = vpop.f32.mrf.mxu0
    %8706 = vmatprep.mubr.f32.mxu0 0.0
    %8707 = vmatmul.mubr.f32.gmra.mxu0 %v8635
    %v8708 = vpop.f32.mrf.mxu0
    %v8709 = vadd.f32 0.0, %v8708
    %v8710 = vpop.f32.mrf.mxu0
    %8711 = vdwg.mxu0
    %v8712 = vadd.f32 %v8554, %v8704
    %v8713 = vadd.f32 %v8555, %v8709
    %8714 = vmatprep.subr.mxu0 0.0
    %8715 = vmatpush1.msra.mxu0 %v7605
    %8716 = vmatprep.subr.mxu0 0.0
    %8717 = vmatpush1.msra.mxu0 %v7600
    %8718 = vmatprep.subr.mxu0 0.0
    %8719 = vmatpush1.msra.mxu0 %v7595
    %8720 = vmatprep.subr.mxu0 0.0
    %8721 = vmatpush1.msra.mxu0 %v7590
    %8722 = vmatprep.subr.mxu0 0.0
    %8723 = vmatpush1.msra.mxu0 %v7585
    %8724 = vmatprep.subr.mxu0 0.0
    %8725 = vmatpush1.msra.mxu0 %v7580
    %8726 = vmatprep.subr.mxu0 0.0
    %8727 = vmatpush1.msra.mxu0 %v7575
    %8728 = vmatprep.subr.mxu0 0.0
    %8729 = vmatpush1.msra.mxu0 %v7570
    %8730 = vmatprep.subr.mxu0 0.0
    %8731 = vmatpush1.msra.mxu0 %v7565
    %8732 = vmatprep.subr.mxu0 0.0
    %8733 = vmatpush1.msra.mxu0 %v7560
    %8734 = vmatprep.subr.mxu0 0.0
    %8735 = vmatpush1.msra.mxu0 %v7555
    %8736 = vmatprep.subr.mxu0 0.0
    %8737 = vmatpush1.msra.mxu0 %v7550
    %8738 = vmatprep.subr.mxu0 0.0
    %8739 = vmatpush1.msra.mxu0 %v7545
    %8740 = vmatprep.subr.mxu0 0.0
    %8741 = vmatpush1.msra.mxu0 %v7540
    %8742 = vmatprep.subr.mxu0 0.0
    %8743 = vmatpush1.msra.mxu0 %v7535
    %8744 = vmatprep.subr.mxu0 0.0
    %8745 = vmatpush1.msra.mxu0 %v7530
    %8746 = vmatprep.subr.mxu0 0.0
    %8747 = vmatpush2.msra.mxu0 0.0
    %8748 = vmatprep.subr.mxu0 0.0
    %8749 = vmatpush2.msra.mxu0 0.0
    %8750 = vmatprep.subr.mxu0 0.0
    %8751 = vmatpush2.msra.mxu0 0.0
    %8752 = vmatprep.subr.mxu0 0.0
    %8753 = vmatpush2.msra.mxu0 0.0
    %8754 = vmatprep.subr.mxu0 0.0
    %8755 = vmatpush2.msra.mxu0 0.0
    %8756 = vmatprep.subr.mxu0 0.0
    %8757 = vmatpush2.msra.mxu0 0.0
    %8758 = vmatprep.subr.mxu0 0.0
    %8759 = vmatpush2.msra.mxu0 0.0
    %8760 = vmatprep.subr.mxu0 0.0
    %8761 = vmatpush2.msra.mxu0 0.0
    %8762 = vmatprep.subr.mxu0 0.0
    %8763 = vmatpush2.msra.mxu0 0.0
    %8764 = vmatprep.subr.mxu0 0.0
    %8765 = vmatpush2.msra.mxu0 0.0
    %8766 = vmatprep.subr.mxu0 0.0
    %8767 = vmatpush2.msra.mxu0 0.0
    %8768 = vmatprep.subr.mxu0 0.0
    %8769 = vmatpush2.msra.mxu0 0.0
    %8770 = vmatprep.subr.mxu0 0.0
    %8771 = vmatpush2.msra.mxu0 0.0
    %8772 = vmatprep.subr.mxu0 0.0
    %8773 = vmatpush2.msra.mxu0 0.0
    %8774 = vmatprep.subr.mxu0 0.0
    %8775 = vmatpush2.msra.mxu0 0.0
    %8776 = vmatprep.subr.mxu0 0.0
    %8777 = vmatpush2.msra.mxu0 0.0
    %8778 = vmatprep.mubr.f32.mxu0 0.0
    %8779 = vmatmul.mubr.f32.gmra.mxu0 %v4703
    %v8780 = vpop.f32.mrf.mxu0
    %v8781 = vadd.f32 0.0, %v8780
    %v8782 = vpop.f32.mrf.mxu0
    %8783 = vmatprep.mubr.f32.mxu0 0.0
    %8784 = vmatmul.mubr.f32.gmra.mxu0 %v4704
    %v8785 = vpop.f32.mrf.mxu0
    %v8786 = vadd.f32 0.0, %v8785
    %v8787 = vpop.f32.mrf.mxu0
    %8788 = vdwg.mxu0
    %v8790 = vsel %vm2790, %v8781, 0
    %v8793 = vsel %vm2790, %v8786, 0
    %8795 = vmatprep.subr.mxu0 0.0
    %8796 = vmatpush1.msra.mxu0 0.0
    %8797 = vmatprep.subr.mxu0 0.0
    %8798 = vmatpush1.msra.mxu0 0.0
    %8799 = vmatprep.subr.mxu0 0.0
    %8800 = vmatpush1.msra.mxu0 0.0
    %8801 = vmatprep.subr.mxu0 0.0
    %8802 = vmatpush1.msra.mxu0 0.0
    %8803 = vmatprep.subr.mxu0 0.0
    %8804 = vmatpush1.msra.mxu0 0.0
    %8805 = vmatprep.subr.mxu0 0.0
    %8806 = vmatpush1.msra.mxu0 0.0
    %8807 = vmatprep.subr.mxu0 0.0
    %8808 = vmatpush1.msra.mxu0 0.0
    %8809 = vmatprep.subr.mxu0 0.0
    %8810 = vmatpush1.msra.mxu0 0.0
    %8811 = vmatprep.subr.mxu0 0.0
    %8812 = vmatpush1.msra.mxu0 0.0
    %8813 = vmatprep.subr.mxu0 0.0
    %8814 = vmatpush1.msra.mxu0 0.0
    %8815 = vmatprep.subr.mxu0 0.0
    %8816 = vmatpush1.msra.mxu0 0.0
    %8817 = vmatprep.subr.mxu0 0.0
    %8818 = vmatpush1.msra.mxu0 0.0
    %8819 = vmatprep.subr.mxu0 0.0
    %8820 = vmatpush1.msra.mxu0 0.0
    %8821 = vmatprep.subr.mxu0 0.0
    %8822 = vmatpush1.msra.mxu0 0.0
    %8823 = vmatprep.subr.mxu0 0.0
    %8824 = vmatpush1.msra.mxu0 0.0
    %8825 = vmatprep.subr.mxu0 0.0
    %8826 = vmatpush1.msra.mxu0 %v4795
    %8827 = vmatprep.subr.mxu0 0.0
    %8828 = vmatpush2.msra.mxu0 0.0
    %8829 = vmatprep.subr.mxu0 0.0
    %8830 = vmatpush2.msra.mxu0 0.0
    %8831 = vmatprep.subr.mxu0 0.0
    %8832 = vmatpush2.msra.mxu0 0.0
    %8833 = vmatprep.subr.mxu0 0.0
    %8834 = vmatpush2.msra.mxu0 0.0
    %8835 = vmatprep.subr.mxu0 0.0
    %8836 = vmatpush2.msra.mxu0 0.0
    %8837 = vmatprep.subr.mxu0 0.0
    %8838 = vmatpush2.msra.mxu0 0.0
    %8839 = vmatprep.subr.mxu0 0.0
    %8840 = vmatpush2.msra.mxu0 0.0
    %8841 = vmatprep.subr.mxu0 0.0
    %8842 = vmatpush2.msra.mxu0 0.0
    %8843 = vmatprep.subr.mxu0 0.0
    %8844 = vmatpush2.msra.mxu0 0.0
    %8845 = vmatprep.subr.mxu0 0.0
    %8846 = vmatpush2.msra.mxu0 0.0
    %8847 = vmatprep.subr.mxu0 0.0
    %8848 = vmatpush2.msra.mxu0 0.0
    %8849 = vmatprep.subr.mxu0 0.0
    %8850 = vmatpush2.msra.mxu0 0.0
    %8851 = vmatprep.subr.mxu0 0.0
    %8852 = vmatpush2.msra.mxu0 0.0
    %8853 = vmatprep.subr.mxu0 0.0
    %8854 = vmatpush2.msra.mxu0 0.0
    %8855 = vmatprep.subr.mxu0 0.0
    %8856 = vmatpush2.msra.mxu0 0.0
    %8857 = vmatprep.subr.mxu0 0.0
    %8858 = vmatpush2.msra.mxu0 0.0
    %8859 = vmatprep.mubr.f32.mxu0 0.0
    %8860 = vmatmul.mubr.f32.gmra.mxu0 %v8790
    %v8861 = vpop.f32.mrf.mxu0
    %v8862 = vadd.f32 0.0, %v8861
    %v8863 = vpop.f32.mrf.mxu0
    %8864 = vmatprep.mubr.f32.mxu0 0.0
    %8865 = vmatmul.mubr.f32.gmra.mxu0 %v8793
    %v8866 = vpop.f32.mrf.mxu0
    %v8867 = vadd.f32 0.0, %v8866
    %v8868 = vpop.f32.mrf.mxu0
    %8869 = vdwg.mxu0
    %v8870 = vadd.f32 %v8712, %v8862
    %v8871 = vadd.f32 %v8713, %v8867
    %v8872 = vadd.f32 %v5150, %v8870
    %v8873 = vadd.f32 %v5151, %v8871
    %v8874 = vsel %vm240, %v8872, 0.0
    %8875 = vadd.xlane.f32.xlu0 %v8874
    %v8876 = vpop.xlane.xlu0 %8875
    %v8877 = vsel %vm240, %v8873, 0.0
    %8878 = vadd.xlane.f32.xlu0 %v8877
    %v8879 = vpop.xlane.xlu0 %8878
    %v8880 = vmul.f32 %v8876, %v4887
    %v8881 = vmul.f32 %v8879, %v4887
    %v8882 = vsub.f32 %v8872, %v8880
    %v8883 = vsub.f32 %v8873, %v8881
    %v8884 = vmul.f32 %v8882, %v8882
    %v8885 = vmul.f32 %v8883, %v8883
    %v8886 = vsel %vm240, %v8884, 0.0
    %8887 = vadd.xlane.f32.xlu0 %v8886
    %v8888 = vpop.xlane.xlu0 %8887
    %v8889 = vsel %vm240, %v8885, 0.0
    %8890 = vadd.xlane.f32.xlu0 %v8889
    %v8891 = vpop.xlane.xlu0 %8890
    %v8892 = vmul.f32 %v8888, %v4887
    %v8893 = vmul.f32 %v8891, %v4887
    %v8894 = vadd.f32 %v8892, 1e-05
    %v8895 = vadd.f32 %v8893, 1e-05
    %v8896 = vrsqrt.pop %v8894
    %v8897 = vrsqrt.pop %v8895
    %v8898 = vmul.f32 %v8882, %v8896
    %v8899 = vmul.f32 %v8883, %v8897
    %v8900 = vmul.f32 %v8898, %v4912
    %v8901 = vmul.f32 %v8899, %v4912
    %v8902 = vadd.f32 %v8900, %v4920
    %v8903 = vadd.f32 %v8901, %v4920
    %v8905 = vsel %vm240, %v8902, 0
    %v8908 = vsel %vm240, %v8903, 0
    %8910 = vmatprep.subr.mxu0 0.0
    %8911 = vmatpush1.msra.mxu0 0.0
    %8912 = vmatprep.subr.mxu0 0.0
    %8913 = vmatpush1.msra.mxu0 0.0
    %8914 = vmatprep.subr.mxu0 0.0
    %8915 = vmatpush1.msra.mxu0 0.0
    %8916 = vmatprep.subr.mxu0 0.0
    %8917 = vmatpush1.msra.mxu0 0.0
    %8918 = vmatprep.subr.mxu0 0.0
    %8919 = vmatpush1.msra.mxu0 0.0
    %8920 = vmatprep.subr.mxu0 0.0
    %8921 = vmatpush1.msra.mxu0 0.0
    %8922 = vmatprep.subr.mxu0 0.0
    %8923 = vmatpush1.msra.mxu0 0.0
    %8924 = vmatprep.subr.mxu0 0.0
    %8925 = vmatpush1.msra.mxu0 0.0
    %8926 = vmatprep.subr.mxu0 0.0
    %8927 = vmatpush1.msra.mxu0 %v4931
    %8928 = vmatprep.subr.mxu0 0.0
    %8929 = vmatpush1.msra.mxu0 %v4930
    %8930 = vmatprep.subr.mxu0 0.0
    %8931 = vmatpush1.msra.mxu0 %v4929
    %8932 = vmatprep.subr.mxu0 0.0
    %8933 = vmatpush1.msra.mxu0 %v4928
    %8934 = vmatprep.subr.mxu0 0.0
    %8935 = vmatpush1.msra.mxu0 %v4927
    %8936 = vmatprep.subr.mxu0 0.0
    %8937 = vmatpush1.msra.mxu0 %v4926
    %8938 = vmatprep.subr.mxu0 0.0
    %8939 = vmatpush1.msra.mxu0 %v4925
    %8940 = vmatprep.subr.mxu0 0.0
    %8941 = vmatpush1.msra.mxu0 %v4924
    %8942 = vmatprep.subr.mxu0 0.0
    %8943 = vmatpush2.msra.mxu0 0.0
    %8944 = vmatprep.subr.mxu0 0.0
    %8945 = vmatpush2.msra.mxu0 0.0
    %8946 = vmatprep.subr.mxu0 0.0
    %8947 = vmatpush2.msra.mxu0 0.0
    %8948 = vmatprep.subr.mxu0 0.0
    %8949 = vmatpush2.msra.mxu0 0.0
    %8950 = vmatprep.subr.mxu0 0.0
    %8951 = vmatpush2.msra.mxu0 0.0
    %8952 = vmatprep.subr.mxu0 0.0
    %8953 = vmatpush2.msra.mxu0 0.0
    %8954 = vmatprep.subr.mxu0 0.0
    %8955 = vmatpush2.msra.mxu0 0.0
    %8956 = vmatprep.subr.mxu0 0.0
    %8957 = vmatpush2.msra.mxu0 0.0
    %8958 = vmatprep.subr.mxu0 0.0
    %8959 = vmatpush2.msra.mxu0 0.0
    %8960 = vmatprep.subr.mxu0 0.0
    %8961 = vmatpush2.msra.mxu0 0.0
    %8962 = vmatprep.subr.mxu0 0.0
    %8963 = vmatpush2.msra.mxu0 0.0
    %8964 = vmatprep.subr.mxu0 0.0
    %8965 = vmatpush2.msra.mxu0 0.0
    %8966 = vmatprep.subr.mxu0 0.0
    %8967 = vmatpush2.msra.mxu0 0.0
    %8968 = vmatprep.subr.mxu0 0.0
    %8969 = vmatpush2.msra.mxu0 0.0
    %8970 = vmatprep.subr.mxu0 0.0
    %8971 = vmatpush2.msra.mxu0 0.0
    %8972 = vmatprep.subr.mxu0 0.0
    %8973 = vmatpush2.msra.mxu0 0.0
    %8974 = vmatprep.mubr.f32.mxu0 0.0
    %8975 = vmatmul.mubr.f32.gmra.mxu0 %v8905
    %v8976 = vpop.f32.mrf.mxu0
    %v8977 = vadd.f32 %v4937, %v8976
    %v8978 = vpop.f32.mrf.mxu0
    %8979 = vmatprep.mubr.f32.mxu0 0.0
    %8980 = vmatmul.mubr.f32.gmra.mxu0 %v8908
    %v8981 = vpop.f32.mrf.mxu0
    %v8982 = vadd.f32 %v4937, %v8981
    %v8983 = vpop.f32.mrf.mxu0
    %8984 = vdwg.mxu0
    %v8985 = vmax.f32 %v8977, 0.0
    %v8986 = vmax.f32 %v8982, 0.0
    %8987 = vmatprep.subr.mxu0 0.0
    %8988 = vmatpush1.msra.mxu0 %v5037
    %8989 = vmatprep.subr.mxu0 0.0
    %8990 = vmatpush1.msra.mxu0 %v5036
    %8991 = vmatprep.subr.mxu0 0.0
    %8992 = vmatpush1.msra.mxu0 %v5035
    %8993 = vmatprep.subr.mxu0 0.0
    %8994 = vmatpush1.msra.mxu0 %v5034
    %8995 = vmatprep.subr.mxu0 0.0
    %8996 = vmatpush1.msra.mxu0 %v5033
    %8997 = vmatprep.subr.mxu0 0.0
    %8998 = vmatpush1.msra.mxu0 %v5032
    %8999 = vmatprep.subr.mxu0 0.0
    %9000 = vmatpush1.msra.mxu0 %v5031
    %9001 = vmatprep.subr.mxu0 0.0
    %9002 = vmatpush1.msra.mxu0 %v5030
    %9003 = vmatprep.subr.mxu0 0.0
    %9004 = vmatpush1.msra.mxu0 %v5029
    %9005 = vmatprep.subr.mxu0 0.0
    %9006 = vmatpush1.msra.mxu0 %v5028
    %9007 = vmatprep.subr.mxu0 0.0
    %9008 = vmatpush1.msra.mxu0 %v5027
    %9009 = vmatprep.subr.mxu0 0.0
    %9010 = vmatpush1.msra.mxu0 %v5026
    %9011 = vmatprep.subr.mxu0 0.0
    %9012 = vmatpush1.msra.mxu0 %v5025
    %9013 = vmatprep.subr.mxu0 0.0
    %9014 = vmatpush1.msra.mxu0 %v5024
    %9015 = vmatprep.subr.mxu0 0.0
    %9016 = vmatpush1.msra.mxu0 %v5023
    %9017 = vmatprep.subr.mxu0 0.0
    %9018 = vmatpush1.msra.mxu0 %v5022
    %9019 = vmatprep.subr.mxu0 0.0
    %9020 = vmatpush2.msra.mxu0 0.0
    %9021 = vmatprep.subr.mxu0 0.0
    %9022 = vmatpush2.msra.mxu0 0.0
    %9023 = vmatprep.subr.mxu0 0.0
    %9024 = vmatpush2.msra.mxu0 0.0
    %9025 = vmatprep.subr.mxu0 0.0
    %9026 = vmatpush2.msra.mxu0 0.0
    %9027 = vmatprep.subr.mxu0 0.0
    %9028 = vmatpush2.msra.mxu0 0.0
    %9029 = vmatprep.subr.mxu0 0.0
    %9030 = vmatpush2.msra.mxu0 0.0
    %9031 = vmatprep.subr.mxu0 0.0
    %9032 = vmatpush2.msra.mxu0 0.0
    %9033 = vmatprep.subr.mxu0 0.0
    %9034 = vmatpush2.msra.mxu0 0.0
    %9035 = vmatprep.subr.mxu0 0.0
    %9036 = vmatpush2.msra.mxu0 0.0
    %9037 = vmatprep.subr.mxu0 0.0
    %9038 = vmatpush2.msra.mxu0 0.0
    %9039 = vmatprep.subr.mxu0 0.0
    %9040 = vmatpush2.msra.mxu0 0.0
    %9041 = vmatprep.subr.mxu0 0.0
    %9042 = vmatpush2.msra.mxu0 0.0
    %9043 = vmatprep.subr.mxu0 0.0
    %9044 = vmatpush2.msra.mxu0 0.0
    %9045 = vmatprep.subr.mxu0 0.0
    %9046 = vmatpush2.msra.mxu0 0.0
    %9047 = vmatprep.subr.mxu0 0.0
    %9048 = vmatpush2.msra.mxu0 0.0
    %9049 = vmatprep.subr.mxu0 0.0
    %9050 = vmatpush2.msra.mxu0 0.0
    %9051 = vmatprep.mubr.f32.mxu0 0.0
    %9052 = vmatmul.mubr.f32.gmra.mxu0 %v8985
    %v9053 = vpop.f32.mrf.mxu0
    %v9054 = vadd.f32 %v5043, %v9053
    %v9055 = vpop.f32.mrf.mxu0
    %9056 = vmatprep.mubr.f32.mxu0 0.0
    %9057 = vmatmul.mubr.f32.gmra.mxu0 %v8986
    %v9058 = vpop.f32.mrf.mxu0
    %v9059 = vadd.f32 %v5043, %v9058
    %v9060 = vpop.f32.mrf.mxu0
    %9061 = vdwg.mxu0
    %v9062 = vadd.f32 %v8902, %v9054
    %v9063 = vadd.f32 %v8903, %v9059
    %v9064 = vsel %vm240, %v9062, 0.0
    %9065 = vadd.xlane.f32.xlu0 %v9064
    %v9066 = vpop.xlane.xlu0 %9065
    %v9067 = vsel %vm240, %v9063, 0.0
    %9068 = vadd.xlane.f32.xlu0 %v9067
    %v9069 = vpop.xlane.xlu0 %9068
    %v9070 = vmul.f32 %v9066, %v4887
    %v9071 = vmul.f32 %v9069, %v4887
    %v9072 = vsub.f32 %v9062, %v9070
    %v9073 = vsub.f32 %v9063, %v9071
    %v9074 = vmul.f32 %v9072, %v9072
    %v9075 = vmul.f32 %v9073, %v9073
    %v9076 = vsel %vm240, %v9074, 0.0
    %9077 = vadd.xlane.f32.xlu0 %v9076
    %v9078 = vpop.xlane.xlu0 %9077
    %v9079 = vsel %vm240, %v9075, 0.0
    %9080 = vadd.xlane.f32.xlu0 %v9079
    %v9081 = vpop.xlane.xlu0 %9080
    %v9082 = vmul.f32 %v9078, %v4887
    %v9083 = vmul.f32 %v9081, %v4887
    %v9084 = vadd.f32 %v9082, 1e-05
    %v9085 = vadd.f32 %v9083, 1e-05
    %v9086 = vrsqrt.pop %v9084
    %v9087 = vrsqrt.pop %v9085
    %v9088 = vmul.f32 %v9072, %v9086
    %v9089 = vmul.f32 %v9073, %v9087
    %v9090 = vmul.f32 %v9088, %v4912
    %v9091 = vmul.f32 %v9089, %v4912
    %v9092 = vadd.f32 %v9090, %v4920
    %v9093 = vadd.f32 %v9091, %v4920
    %v9094 = vld [vmem:[%s16] sm:$0x3]
    %v9095 = vsel %vm240, %v9092, 0.0
    %9096 = vadd.xlane.f32.xlu0 %v9095
    %v9097 = vpop.xlane.xlu0 %9096
    %v9098 = vsel %vm240, %v9093, 0.0
    %9099 = vadd.xlane.f32.xlu0 %v9098
    %v9100 = vpop.xlane.xlu0 %9099
    %v9101 = vmul.f32 %v9092, %v9092
    %v9102 = vmul.f32 %v9093, %v9093
    %v9103 = vsel %vm240, %v9101, 0.0
    %9104 = vadd.xlane.f32.xlu0 %v9103
    %v9105 = vpop.xlane.xlu0 %9104
    %v9106 = vsel %vm240, %v9102, 0.0
    %9107 = vadd.xlane.f32.xlu0 %v9106
    %v9108 = vpop.xlane.xlu0 %9107
    %v9110 = vsel %vm447, %v9094, 0
    %9112 = vmatprep.subr.mxu0 0.0
    %9113 = vmatpush1.msra.mxu0 0.0
    %9114 = vmatprep.subr.mxu0 0.0
    %9115 = vmatpush1.msra.mxu0 0.0
    %9116 = vmatprep.subr.mxu0 0.0
    %9117 = vmatpush1.msra.mxu0 0.0
    %9118 = vmatprep.subr.mxu0 0.0
    %9119 = vmatpush1.msra.mxu0 0.0
    %9120 = vmatprep.subr.mxu0 0.0
    %9121 = vmatpush1.msra.mxu0 0.0
    %9122 = vmatprep.subr.mxu0 0.0
    %9123 = vmatpush1.msra.mxu0 0.0
    %9124 = vmatprep.subr.mxu0 0.0
    %9125 = vmatpush1.msra.mxu0 0.0
    %9126 = vmatprep.subr.mxu0 0.0
    %9127 = vmatpush1.msra.mxu0 0.0
    %9128 = vmatprep.subr.mxu0 0.0
    %9129 = vmatpush1.msra.mxu0 0.0
    %9130 = vmatprep.subr.mxu0 0.0
    %9131 = vmatpush1.msra.mxu0 0.0
    %9132 = vmatprep.subr.mxu0 0.0
    %9133 = vmatpush1.msra.mxu0 0.0
    %9134 = vmatprep.subr.mxu0 0.0
    %9135 = vmatpush1.msra.mxu0 0.0
    %9136 = vmatprep.subr.mxu0 0.0
    %9137 = vmatpush1.msra.mxu0 0.0
    %9138 = vmatprep.subr.mxu0 0.0
    %9139 = vmatpush1.msra.mxu0 0.0
    %9140 = vmatprep.subr.mxu0 0.0
    %9141 = vmatpush1.msra.mxu0 %v9100
    %9142 = vmatprep.subr.mxu0 0.0
    %9143 = vmatpush1.msra.mxu0 %v9097
    %9144 = vmatprep.subr.mxu0 0.0
    %9145 = vmatpush2.msra.mxu0 0.0
    %9146 = vmatprep.subr.mxu0 0.0
    %9147 = vmatpush2.msra.mxu0 0.0
    %9148 = vmatprep.subr.mxu0 0.0
    %9149 = vmatpush2.msra.mxu0 0.0
    %9150 = vmatprep.subr.mxu0 0.0
    %9151 = vmatpush2.msra.mxu0 0.0
    %9152 = vmatprep.subr.mxu0 0.0
    %9153 = vmatpush2.msra.mxu0 0.0
    %9154 = vmatprep.subr.mxu0 0.0
    %9155 = vmatpush2.msra.mxu0 0.0
    %9156 = vmatprep.subr.mxu0 0.0
    %9157 = vmatpush2.msra.mxu0 0.0
    %9158 = vmatprep.subr.mxu0 0.0
    %9159 = vmatpush2.msra.mxu0 0.0
    %9160 = vmatprep.subr.mxu0 0.0
    %9161 = vmatpush2.msra.mxu0 0.0
    %9162 = vmatprep.subr.mxu0 0.0
    %9163 = vmatpush2.msra.mxu0 0.0
    %9164 = vmatprep.subr.mxu0 0.0
    %9165 = vmatpush2.msra.mxu0 0.0
    %9166 = vmatprep.subr.mxu0 0.0
    %9167 = vmatpush2.msra.mxu0 0.0
    %9168 = vmatprep.subr.mxu0 0.0
    %9169 = vmatpush2.msra.mxu0 0.0
    %9170 = vmatprep.subr.mxu0 0.0
    %9171 = vmatpush2.msra.mxu0 0.0
    %9172 = vmatprep.subr.mxu0 0.0
    %9173 = vmatpush2.msra.mxu0 0.0
    %9174 = vmatprep.subr.mxu0 0.0
    %9175 = vmatpush2.msra.mxu0 0.0
    %9176 = vmatprep.mubr.f32.mxu0 0.0
    %9177 = vmatmul.mubr.f32.gmra.mxu0 %v9110
    %v9178 = vpop.f32.mrf.mxu0
    %v9179 = vadd.f32 0.0, %v9178
    %v9180 = vpop.f32.mrf.mxu0
    %9181 = vdwg.mxu0
    %v9182 = vrcp.pop 512.0
    %v9183 = vmul.f32 %v9179, %v9182
    %9184 = vmatprep.subr.mxu0 0.0
    %9185 = vmatpush1.msra.mxu0 0.0
    %9186 = vmatprep.subr.mxu0 0.0
    %9187 = vmatpush1.msra.mxu0 0.0
    %9188 = vmatprep.subr.mxu0 0.0
    %9189 = vmatpush1.msra.mxu0 0.0
    %9190 = vmatprep.subr.mxu0 0.0
    %9191 = vmatpush1.msra.mxu0 0.0
    %9192 = vmatprep.subr.mxu0 0.0
    %9193 = vmatpush1.msra.mxu0 0.0
    %9194 = vmatprep.subr.mxu0 0.0
    %9195 = vmatpush1.msra.mxu0 0.0
    %9196 = vmatprep.subr.mxu0 0.0
    %9197 = vmatpush1.msra.mxu0 0.0
    %9198 = vmatprep.subr.mxu0 0.0
    %9199 = vmatpush1.msra.mxu0 0.0
    %9200 = vmatprep.subr.mxu0 0.0
    %9201 = vmatpush1.msra.mxu0 0.0
    %9202 = vmatprep.subr.mxu0 0.0
    %9203 = vmatpush1.msra.mxu0 0.0
    %9204 = vmatprep.subr.mxu0 0.0
    %9205 = vmatpush1.msra.mxu0 0.0
    %9206 = vmatprep.subr.mxu0 0.0
    %9207 = vmatpush1.msra.mxu0 0.0
    %9208 = vmatprep.subr.mxu0 0.0
    %9209 = vmatpush1.msra.mxu0 0.0
    %9210 = vmatprep.subr.mxu0 0.0
    %9211 = vmatpush1.msra.mxu0 0.0
    %9212 = vmatprep.subr.mxu0 0.0
    %9213 = vmatpush1.msra.mxu0 %v9108
    %9214 = vmatprep.subr.mxu0 0.0
    %9215 = vmatpush1.msra.mxu0 %v9105
    %9216 = vmatprep.subr.mxu0 0.0
    %9217 = vmatpush2.msra.mxu0 0.0
    %9218 = vmatprep.subr.mxu0 0.0
    %9219 = vmatpush2.msra.mxu0 0.0
    %9220 = vmatprep.subr.mxu0 0.0
    %9221 = vmatpush2.msra.mxu0 0.0
    %9222 = vmatprep.subr.mxu0 0.0
    %9223 = vmatpush2.msra.mxu0 0.0
    %9224 = vmatprep.subr.mxu0 0.0
    %9225 = vmatpush2.msra.mxu0 0.0
    %9226 = vmatprep.subr.mxu0 0.0
    %9227 = vmatpush2.msra.mxu0 0.0
    %9228 = vmatprep.subr.mxu0 0.0
    %9229 = vmatpush2.msra.mxu0 0.0
    %9230 = vmatprep.subr.mxu0 0.0
    %9231 = vmatpush2.msra.mxu0 0.0
    %9232 = vmatprep.subr.mxu0 0.0
    %9233 = vmatpush2.msra.mxu0 0.0
    %9234 = vmatprep.subr.mxu0 0.0
    %9235 = vmatpush2.msra.mxu0 0.0
    %9236 = vmatprep.subr.mxu0 0.0
    %9237 = vmatpush2.msra.mxu0 0.0
    %9238 = vmatprep.subr.mxu0 0.0
    %9239 = vmatpush2.msra.mxu0 0.0
    %9240 = vmatprep.subr.mxu0 0.0
    %9241 = vmatpush2.msra.mxu0 0.0
    %9242 = vmatprep.subr.mxu0 0.0
    %9243 = vmatpush2.msra.mxu0 0.0
    %9244 = vmatprep.subr.mxu0 0.0
    %9245 = vmatpush2.msra.mxu0 0.0
    %9246 = vmatprep.subr.mxu0 0.0
    %9247 = vmatpush2.msra.mxu0 0.0
    %9248 = vmatprep.mubr.f32.mxu0 0.0
    %9249 = vmatmul.mubr.f32.gmra.mxu0 %v9110
    %v9250 = vpop.f32.mrf.mxu0
    %v9251 = vadd.f32 0.0, %v9250
    %v9252 = vpop.f32.mrf.mxu0
    %9253 = vdwg.mxu0
    %v9254 = vmul.f32 %v9251, %v9182
    %v9255 = vmul.f32 %v9183, %v9183
    %v9256 = vsub.f32 %v9254, %v9255
    %9257 = vxpose.xlu0.b32.start [1/16] %v9094, 128
    %9258 = vxpose.xlu0.b32.cont [2/16] 0.0, 128
    %9259 = vxpose.xlu0.b32.cont [3/16] 0.0, 128
    %9260 = vxpose.xlu0.b32.cont [4/16] 0.0, 128
    %9261 = vxpose.xlu0.b32.cont [5/16] 0.0, 128
    %9262 = vxpose.xlu0.b32.cont [6/16] 0.0, 128
    %9263 = vxpose.xlu0.b32.cont [7/16] 0.0, 128
    %9264 = vxpose.xlu0.b32.cont [8/16] 0.0, 128
    %9265 = vxpose.xlu0.b32.cont [9/16] 0.0, 128
    %9266 = vxpose.xlu0.b32.cont [10/16] 0.0, 128
    %9267 = vxpose.xlu0.b32.cont [11/16] 0.0, 128
    %9268 = vxpose.xlu0.b32.cont [12/16] 0.0, 128
    %9269 = vxpose.xlu0.b32.cont [13/16] 0.0, 128
    %9270 = vxpose.xlu0.b32.cont [14/16] 0.0, 128
    %9271 = vxpose.xlu0.b32.cont [15/16] 0.0, 128
    %9272 = vxpose.xlu0.b32.end [16/16] 0.0, 128
    %v9273 = vpop.trf.xlu0
    %v9274 = vpop.trf.xlu0
    %v9275 = vpop.trf.xlu0
    %v9276 = vpop.trf.xlu0
    %v9277 = vpop.trf.xlu0
    %v9278 = vpop.trf.xlu0
    %v9279 = vpop.trf.xlu0
    %v9280 = vpop.trf.xlu0
    %v9281 = vpop.trf.xlu0
    %v9282 = vpop.trf.xlu0
    %v9283 = vpop.trf.xlu0
    %v9284 = vpop.trf.xlu0
    %v9285 = vpop.trf.xlu0
    %v9286 = vpop.trf.xlu0
    %v9287 = vpop.trf.xlu0
    %v9288 = vpop.trf.xlu0
    %vm9289 = vcmask 15360
    %v9291 = vsel %vm9289, %v9273, 0
    %v9294 = vsel %vm9289, %v9274, 0
    %vm9296 = vcmask 1041408
    %v9298 = vsel %vm9296, %v9183, 0
    %9300 = vmatprep.subr.mxu0 0.0
    %9301 = vmatpush1.msra.mxu0 0.0
    %9302 = vmatprep.subr.mxu0 0.0
    %9303 = vmatpush1.msra.mxu0 0.0
    %9304 = vmatprep.subr.mxu0 0.0
    %9305 = vmatpush1.msra.mxu0 0.0
    %9306 = vmatprep.subr.mxu0 0.0
    %9307 = vmatpush1.msra.mxu0 0.0
    %9308 = vmatprep.subr.mxu0 0.0
    %9309 = vmatpush1.msra.mxu0 0.0
    %9310 = vmatprep.subr.mxu0 0.0
    %9311 = vmatpush1.msra.mxu0 0.0
    %9312 = vmatprep.subr.mxu0 0.0
    %9313 = vmatpush1.msra.mxu0 0.0
    %9314 = vmatprep.subr.mxu0 0.0
    %9315 = vmatpush1.msra.mxu0 0.0
    %9316 = vmatprep.subr.mxu0 0.0
    %9317 = vmatpush1.msra.mxu0 0.0
    %9318 = vmatprep.subr.mxu0 0.0
    %9319 = vmatpush1.msra.mxu0 0.0
    %9320 = vmatprep.subr.mxu0 0.0
    %9321 = vmatpush1.msra.mxu0 0.0
    %9322 = vmatprep.subr.mxu0 0.0
    %9323 = vmatpush1.msra.mxu0 0.0
    %9324 = vmatprep.subr.mxu0 0.0
    %9325 = vmatpush1.msra.mxu0 0.0
    %9326 = vmatprep.subr.mxu0 0.0
    %9327 = vmatpush1.msra.mxu0 0.0
    %9328 = vmatprep.subr.mxu0 0.0
    %9329 = vmatpush1.msra.mxu0 0.0
    %9330 = vmatprep.subr.mxu0 0.0
    %9331 = vmatpush1.msra.mxu0 %v9298
    %9332 = vmatprep.subr.mxu0 0.0
    %9333 = vmatpush2.msra.mxu0 0.0
    %9334 = vmatprep.subr.mxu0 0.0
    %9335 = vmatpush2.msra.mxu0 0.0
    %9336 = vmatprep.subr.mxu0 0.0
    %9337 = vmatpush2.msra.mxu0 0.0
    %9338 = vmatprep.subr.mxu0 0.0
    %9339 = vmatpush2.msra.mxu0 0.0
    %9340 = vmatprep.subr.mxu0 0.0
    %9341 = vmatpush2.msra.mxu0 0.0
    %9342 = vmatprep.subr.mxu0 0.0
    %9343 = vmatpush2.msra.mxu0 0.0
    %9344 = vmatprep.subr.mxu0 0.0
    %9345 = vmatpush2.msra.mxu0 0.0
    %9346 = vmatprep.subr.mxu0 0.0
    %9347 = vmatpush2.msra.mxu0 0.0
    %9348 = vmatprep.subr.mxu0 0.0
    %9349 = vmatpush2.msra.mxu0 0.0
    %9350 = vmatprep.subr.mxu0 0.0
    %9351 = vmatpush2.msra.mxu0 0.0
    %9352 = vmatprep.subr.mxu0 0.0
    %9353 = vmatpush2.msra.mxu0 0.0
    %9354 = vmatprep.subr.mxu0 0.0
    %9355 = vmatpush2.msra.mxu0 0.0
    %9356 = vmatprep.subr.mxu0 0.0
    %9357 = vmatpush2.msra.mxu0 0.0
    %9358 = vmatprep.subr.mxu0 0.0
    %9359 = vmatpush2.msra.mxu0 0.0
    %9360 = vmatprep.subr.mxu0 0.0
    %9361 = vmatpush2.msra.mxu0 0.0
    %9362 = vmatprep.subr.mxu0 0.0
    %9363 = vmatpush2.msra.mxu0 0.0
    %9364 = vmatprep.mubr.f32.mxu0 0.0
    %9365 = vmatmul.mubr.f32.gmra.mxu0 %v9291
    %v9366 = vpop.f32.mrf.mxu0
    %v9367 = vadd.f32 0.0, %v9366
    %v9368 = vpop.f32.mrf.mxu0
    %9369 = vmatprep.mubr.f32.mxu0 0.0
    %9370 = vmatmul.mubr.f32.gmra.mxu0 %v9294
    %v9371 = vpop.f32.mrf.mxu0
    %v9372 = vadd.f32 0.0, %v9371
    %v9373 = vpop.f32.mrf.mxu0
    %9374 = vdwg.mxu0
    %v9375 = vadd.f32 %v9256, 1e-05
    %v9376 = vrsqrt.pop %v9375
    %v9378 = vsel %vm9296, %v9376, 0
    %9380 = vmatprep.subr.mxu0 0.0
    %9381 = vmatpush1.msra.mxu0 0.0
    %9382 = vmatprep.subr.mxu0 0.0
    %9383 = vmatpush1.msra.mxu0 0.0
    %9384 = vmatprep.subr.mxu0 0.0
    %9385 = vmatpush1.msra.mxu0 0.0
    %9386 = vmatprep.subr.mxu0 0.0
    %9387 = vmatpush1.msra.mxu0 0.0
    %9388 = vmatprep.subr.mxu0 0.0
    %9389 = vmatpush1.msra.mxu0 0.0
    %9390 = vmatprep.subr.mxu0 0.0
    %9391 = vmatpush1.msra.mxu0 0.0
    %9392 = vmatprep.subr.mxu0 0.0
    %9393 = vmatpush1.msra.mxu0 0.0
    %9394 = vmatprep.subr.mxu0 0.0
    %9395 = vmatpush1.msra.mxu0 0.0
    %9396 = vmatprep.subr.mxu0 0.0
    %9397 = vmatpush1.msra.mxu0 0.0
    %9398 = vmatprep.subr.mxu0 0.0
    %9399 = vmatpush1.msra.mxu0 0.0
    %9400 = vmatprep.subr.mxu0 0.0
    %9401 = vmatpush1.msra.mxu0 0.0
    %9402 = vmatprep.subr.mxu0 0.0
    %9403 = vmatpush1.msra.mxu0 0.0
    %9404 = vmatprep.subr.mxu0 0.0
    %9405 = vmatpush1.msra.mxu0 0.0
    %9406 = vmatprep.subr.mxu0 0.0
    %9407 = vmatpush1.msra.mxu0 0.0
    %9408 = vmatprep.subr.mxu0 0.0
    %9409 = vmatpush1.msra.mxu0 0.0
    %9410 = vmatprep.subr.mxu0 0.0
    %9411 = vmatpush1.msra.mxu0 %v9378
    %9412 = vmatprep.subr.mxu0 0.0
    %9413 = vmatpush2.msra.mxu0 0.0
    %9414 = vmatprep.subr.mxu0 0.0
    %9415 = vmatpush2.msra.mxu0 0.0
    %9416 = vmatprep.subr.mxu0 0.0
    %9417 = vmatpush2.msra.mxu0 0.0
    %9418 = vmatprep.subr.mxu0 0.0
    %9419 = vmatpush2.msra.mxu0 0.0
    %9420 = vmatprep.subr.mxu0 0.0
    %9421 = vmatpush2.msra.mxu0 0.0
    %9422 = vmatprep.subr.mxu0 0.0
    %9423 = vmatpush2.msra.mxu0 0.0
    %9424 = vmatprep.subr.mxu0 0.0
    %9425 = vmatpush2.msra.mxu0 0.0
    %9426 = vmatprep.subr.mxu0 0.0
    %9427 = vmatpush2.msra.mxu0 0.0
    %9428 = vmatprep.subr.mxu0 0.0
    %9429 = vmatpush2.msra.mxu0 0.0
    %9430 = vmatprep.subr.mxu0 0.0
    %9431 = vmatpush2.msra.mxu0 0.0
    %9432 = vmatprep.subr.mxu0 0.0
    %9433 = vmatpush2.msra.mxu0 0.0
    %9434 = vmatprep.subr.mxu0 0.0
    %9435 = vmatpush2.msra.mxu0 0.0
    %9436 = vmatprep.subr.mxu0 0.0
    %9437 = vmatpush2.msra.mxu0 0.0
    %9438 = vmatprep.subr.mxu0 0.0
    %9439 = vmatpush2.msra.mxu0 0.0
    %9440 = vmatprep.subr.mxu0 0.0
    %9441 = vmatpush2.msra.mxu0 0.0
    %9442 = vmatprep.subr.mxu0 0.0
    %9443 = vmatpush2.msra.mxu0 0.0
    %9444 = vmatprep.mubr.f32.mxu0 0.0
    %9445 = vmatmul.mubr.f32.gmra.mxu0 %v9291
    %v9446 = vpop.f32.mrf.mxu0
    %v9447 = vadd.f32 0.0, %v9446
    %v9448 = vpop.f32.mrf.mxu0
    %9449 = vmatprep.mubr.f32.mxu0 0.0
    %9450 = vmatmul.mubr.f32.gmra.mxu0 %v9294
    %v9451 = vpop.f32.mrf.mxu0
    %v9452 = vadd.f32 0.0, %v9451
    %v9453 = vpop.f32.mrf.mxu0
    %9454 = vdwg.mxu0
    %9456 = vset.pattern.permute.xlu0 0
    %9457 = vperm.xlu0 %9456, %v9367
    %v9458 = vpop.permute.xlu0 %9457
    %9461 = vset.pattern.permute.xlu0 0
    %9462 = vperm.xlu0 %9461, %v9372
    %v9463 = vpop.permute.xlu0 %9462
    %v9465 = vsub.f32 %v9092, %v9458
    %v9466 = vsub.f32 %v9093, %v9463
    %9468 = vset.pattern.permute.xlu0 0
    %9469 = vperm.xlu0 %9468, %v9447
    %v9470 = vpop.permute.xlu0 %9469
    %9473 = vset.pattern.permute.xlu0 0
    %9474 = vperm.xlu0 %9473, %v9452
    %v9475 = vpop.permute.xlu0 %9474
    %v9477 = vmul.f32 %v9465, %v9470
    %v9478 = vmul.f32 %v9466, %v9475
    %v9479 = vld [vmem:[%s17] sm:$0xff]
    %v9480 = vld [vmem:[%s17 + $0x8] sm:$0xff]
    %v9481 = vmul.f32 %v9477, %v9479
    %v9482 = vmul.f32 %v9478, %v9480
    %v9483 = vld [vmem:[%s18] sm:$0xff]
    %v9484 = vld [vmem:[%s18 + $0x8] sm:$0xff]
    %v9485 = vadd.f32 %v9481, %v9483
    %v9486 = vadd.f32 %v9482, %v9484
    %v9487 = vmax.f32 %v9485, 0.0
    %v9488 = vmax.f32 %v9486, 0.0
    %v9489 = vmin.f32 %v9487, 6.0
    %v9490 = vmin.f32 %v9488, 6.0
    %v9491 = vld [vmem:[%s21] sm:$0x1]
    %v9492 = vld [vmem:[%s19] sm:$0x3]
    %v9494 = vsel %vm447, %v9492, 0
    %9496 = vmatprep.subr.mxu0 0.0
    %9497 = vmatpush1.msra.mxu0 0.0
    %9498 = vmatprep.subr.mxu0 0.0
    %9499 = vmatpush1.msra.mxu0 0.0
    %9500 = vmatprep.subr.mxu0 0.0
    %9501 = vmatpush1.msra.mxu0 0.0
    %9502 = vmatprep.subr.mxu0 0.0
    %9503 = vmatpush1.msra.mxu0 0.0
    %9504 = vmatprep.subr.mxu0 0.0
    %9505 = vmatpush1.msra.mxu0 0.0
    %9506 = vmatprep.subr.mxu0 0.0
    %9507 = vmatpush1.msra.mxu0 0.0
    %9508 = vmatprep.subr.mxu0 0.0
    %9509 = vmatpush1.msra.mxu0 0.0
    %9510 = vmatprep.subr.mxu0 0.0
    %9511 = vmatpush1.msra.mxu0 0.0
    %9512 = vmatprep.subr.mxu0 0.0
    %9513 = vmatpush1.msra.mxu0 0.0
    %9514 = vmatprep.subr.mxu0 0.0
    %9515 = vmatpush1.msra.mxu0 0.0
    %9516 = vmatprep.subr.mxu0 0.0
    %9517 = vmatpush1.msra.mxu0 0.0
    %9518 = vmatprep.subr.mxu0 0.0
    %9519 = vmatpush1.msra.mxu0 0.0
    %9520 = vmatprep.subr.mxu0 0.0
    %9521 = vmatpush1.msra.mxu0 0.0
    %9522 = vmatprep.subr.mxu0 0.0
    %9523 = vmatpush1.msra.mxu0 0.0
    %9524 = vmatprep.subr.mxu0 0.0
    %9525 = vmatpush1.msra.mxu0 %v9490
    %9526 = vmatprep.subr.mxu0 0.0
    %9527 = vmatpush1.msra.mxu0 %v9489
    %9528 = vmatprep.subr.mxu0 0.0
    %9529 = vmatpush2.msra.mxu0 0.0
    %9530 = vmatprep.subr.mxu0 0.0
    %9531 = vmatpush2.msra.mxu0 0.0
    %9532 = vmatprep.subr.mxu0 0.0
    %9533 = vmatpush2.msra.mxu0 0.0
    %9534 = vmatprep.subr.mxu0 0.0
    %9535 = vmatpush2.msra.mxu0 0.0
    %9536 = vmatprep.subr.mxu0 0.0
    %9537 = vmatpush2.msra.mxu0 0.0
    %9538 = vmatprep.subr.mxu0 0.0
    %9539 = vmatpush2.msra.mxu0 0.0
    %9540 = vmatprep.subr.mxu0 0.0
    %9541 = vmatpush2.msra.mxu0 0.0
    %9542 = vmatprep.subr.mxu0 0.0
    %9543 = vmatpush2.msra.mxu0 0.0
    %9544 = vmatprep.subr.mxu0 0.0
    %9545 = vmatpush2.msra.mxu0 0.0
    %9546 = vmatprep.subr.mxu0 0.0
    %9547 = vmatpush2.msra.mxu0 0.0
    %9548 = vmatprep.subr.mxu0 0.0
    %9549 = vmatpush2.msra.mxu0 0.0
    %9550 = vmatprep.subr.mxu0 0.0
    %9551 = vmatpush2.msra.mxu0 0.0
    %9552 = vmatprep.subr.mxu0 0.0
    %9553 = vmatpush2.msra.mxu0 0.0
    %9554 = vmatprep.subr.mxu0 0.0
    %9555 = vmatpush2.msra.mxu0 0.0
    %9556 = vmatprep.subr.mxu0 0.0
    %9557 = vmatpush2.msra.mxu0 0.0
    %9558 = vmatprep.subr.mxu0 0.0
    %9559 = vmatpush2.msra.mxu0 0.0
    %9560 = vmatprep.mubr.f32.mxu0 0.0
    %9561 = vmatmul.mubr.f32.gmra.mxu0 %v9494
    %v9562 = vpop.f32.mrf.mxu0
    %v9563 = vadd.f32 0.0, %v9562
    %v9564 = vpop.f32.mrf.mxu0
    %9565 = vdwg.mxu0
    %v9566 = vld [vmem:[%s20] sm:$0xff]
    %v9567 = vld [vmem:[%s20 + $0x8] sm:$0xff]
    %v9568 = vld [vmem:[%s20 + $0x10] sm:$0xff]
    %v9569 = vld [vmem:[%s20 + $0x18] sm:$0xff]
    %v9570 = vld [vmem:[%s20 + $0x20] sm:$0xff]
    %v9571 = vld [vmem:[%s20 + $0x28] sm:$0xff]
    %v9572 = vld [vmem:[%s20 + $0x30] sm:$0xff]
    %v9573 = vld [vmem:[%s20 + $0x38] sm:$0xff]
    %v9575 = vsel %vm240, %v9563, 0
    %9577 = vmatprep.subr.mxu0 0.0
    %9578 = vmatpush1.msra.mxu0 0.0
    %9579 = vmatprep.subr.mxu0 0.0
    %9580 = vmatpush1.msra.mxu0 0.0
    %9581 = vmatprep.subr.mxu0 0.0
    %9582 = vmatpush1.msra.mxu0 0.0
    %9583 = vmatprep.subr.mxu0 0.0
    %9584 = vmatpush1.msra.mxu0 0.0
    %9585 = vmatprep.subr.mxu0 0.0
    %9586 = vmatpush1.msra.mxu0 0.0
    %9587 = vmatprep.subr.mxu0 0.0
    %9588 = vmatpush1.msra.mxu0 0.0
    %9589 = vmatprep.subr.mxu0 0.0
    %9590 = vmatpush1.msra.mxu0 0.0
    %9591 = vmatprep.subr.mxu0 0.0
    %9592 = vmatpush1.msra.mxu0 0.0
    %9593 = vmatprep.subr.mxu0 0.0
    %9594 = vmatpush1.msra.mxu0 %v9573
    %9595 = vmatprep.subr.mxu0 0.0
    %9596 = vmatpush1.msra.mxu0 %v9572
    %9597 = vmatprep.subr.mxu0 0.0
    %9598 = vmatpush1.msra.mxu0 %v9571
    %9599 = vmatprep.subr.mxu0 0.0
    %9600 = vmatpush1.msra.mxu0 %v9570
    %9601 = vmatprep.subr.mxu0 0.0
    %9602 = vmatpush1.msra.mxu0 %v9569
    %9603 = vmatprep.subr.mxu0 0.0
    %9604 = vmatpush1.msra.mxu0 %v9568
    %9605 = vmatprep.subr.mxu0 0.0
    %9606 = vmatpush1.msra.mxu0 %v9567
    %9607 = vmatprep.subr.mxu0 0.0
    %9608 = vmatpush1.msra.mxu0 %v9566
    %9609 = vmatprep.subr.mxu0 0.0
    %9610 = vmatpush2.msra.mxu0 0.0
    %9611 = vmatprep.subr.mxu0 0.0
    %9612 = vmatpush2.msra.mxu0 0.0
    %9613 = vmatprep.subr.mxu0 0.0
    %9614 = vmatpush2.msra.mxu0 0.0
    %9615 = vmatprep.subr.mxu0 0.0
    %9616 = vmatpush2.msra.mxu0 0.0
    %9617 = vmatprep.subr.mxu0 0.0
    %9618 = vmatpush2.msra.mxu0 0.0
    %9619 = vmatprep.subr.mxu0 0.0
    %9620 = vmatpush2.msra.mxu0 0.0
    %9621 = vmatprep.subr.mxu0 0.0
    %9622 = vmatpush2.msra.mxu0 0.0
    %9623 = vmatprep.subr.mxu0 0.0
    %9624 = vmatpush2.msra.mxu0 0.0
    %9625 = vmatprep.subr.mxu0 0.0
    %9626 = vmatpush2.msra.mxu0 0.0
    %9627 = vmatprep.subr.mxu0 0.0
    %9628 = vmatpush2.msra.mxu0 0.0
    %9629 = vmatprep.subr.mxu0 0.0
    %9630 = vmatpush2.msra.mxu0 0.0
    %9631 = vmatprep.subr.mxu0 0.0
    %9632 = vmatpush2.msra.mxu0 0.0
    %9633 = vmatprep.subr.mxu0 0.0
    %9634 = vmatpush2.msra.mxu0 0.0
    %9635 = vmatprep.subr.mxu0 0.0
    %9636 = vmatpush2.msra.mxu0 0.0
    %9637 = vmatprep.subr.mxu0 0.0
    %9638 = vmatpush2.msra.mxu0 0.0
    %9639 = vmatprep.subr.mxu0 0.0
    %9640 = vmatpush2.msra.mxu0 0.0
    %9641 = vmatprep.mubr.f32.mxu0 0.0
    %9642 = vmatmul.mubr.f32.gmra.mxu0 %v9575
    %v9643 = vpop.f32.mrf.mxu0
    %v9644 = vadd.f32 0.0, %v9643
    %v9645 = vpop.f32.mrf.mxu0
    %9646 = vdwg.mxu0
    %v9648 = vlaneseq
    %v9649 = vshrl.u32 %v9648, 7
    %v9650 = vsub.s32 0, %v9649
    %v9651 = vrot.slane %v9491, %v9650
    %v9653 = vadd.f32 %v9651, %v9644
    %s9654 = scalar_lea.vmem %s19, 2
    %v9655 = vld [vmem:[%s9654] sm:$0x3]
    %v9657 = vsel %vm447, %v9655, 0
    %9659 = vmatprep.subr.mxu0 0.0
    %9660 = vmatpush1.msra.mxu0 0.0
    %9661 = vmatprep.subr.mxu0 0.0
    %9662 = vmatpush1.msra.mxu0 0.0
    %9663 = vmatprep.subr.mxu0 0.0
    %9664 = vmatpush1.msra.mxu0 0.0
    %9665 = vmatprep.subr.mxu0 0.0
    %9666 = vmatpush1.msra.mxu0 0.0
    %9667 = vmatprep.subr.mxu0 0.0
    %9668 = vmatpush1.msra.mxu0 0.0
    %9669 = vmatprep.subr.mxu0 0.0
    %9670 = vmatpush1.msra.mxu0 0.0
    %9671 = vmatprep.subr.mxu0 0.0
    %9672 = vmatpush1.msra.mxu0 0.0
    %9673 = vmatprep.subr.mxu0 0.0
    %9674 = vmatpush1.msra.mxu0 0.0
    %9675 = vmatprep.subr.mxu0 0.0
    %9676 = vmatpush1.msra.mxu0 0.0
    %9677 = vmatprep.subr.mxu0 0.0
    %9678 = vmatpush1.msra.mxu0 0.0
    %9679 = vmatprep.subr.mxu0 0.0
    %9680 = vmatpush1.msra.mxu0 0.0
    %9681 = vmatprep.subr.mxu0 0.0
    %9682 = vmatpush1.msra.mxu0 0.0
    %9683 = vmatprep.subr.mxu0 0.0
    %9684 = vmatpush1.msra.mxu0 0.0
    %9685 = vmatprep.subr.mxu0 0.0
    %9686 = vmatpush1.msra.mxu0 0.0
    %9687 = vmatprep.subr.mxu0 0.0
    %9688 = vmatpush1.msra.mxu0 %v9490
    %9689 = vmatprep.subr.mxu0 0.0
    %9690 = vmatpush1.msra.mxu0 %v9489
    %9691 = vmatprep.subr.mxu0 0.0
    %9692 = vmatpush2.msra.mxu0 0.0
    %9693 = vmatprep.subr.mxu0 0.0
    %9694 = vmatpush2.msra.mxu0 0.0
    %9695 = vmatprep.subr.mxu0 0.0
    %9696 = vmatpush2.msra.mxu0 0.0
    %9697 = vmatprep.subr.mxu0 0.0
    %9698 = vmatpush2.msra.mxu0 0.0
    %9699 = vmatprep.subr.mxu0 0.0
    %9700 = vmatpush2.msra.mxu0 0.0
    %9701 = vmatprep.subr.mxu0 0.0
    %9702 = vmatpush2.msra.mxu0 0.0
    %9703 = vmatprep.subr.mxu0 0.0
    %9704 = vmatpush2.msra.mxu0 0.0
    %9705 = vmatprep.subr.mxu0 0.0
    %9706 = vmatpush2.msra.mxu0 0.0
    %9707 = vmatprep.subr.mxu0 0.0
    %9708 = vmatpush2.msra.mxu0 0.0
    %9709 = vmatprep.subr.mxu0 0.0
    %9710 = vmatpush2.msra.mxu0 0.0
    %9711 = vmatprep.subr.mxu0 0.0
    %9712 = vmatpush2.msra.mxu0 0.0
    %9713 = vmatprep.subr.mxu0 0.0
    %9714 = vmatpush2.msra.mxu0 0.0
    %9715 = vmatprep.subr.mxu0 0.0
    %9716 = vmatpush2.msra.mxu0 0.0
    %9717 = vmatprep.subr.mxu0 0.0
    %9718 = vmatpush2.msra.mxu0 0.0
    %9719 = vmatprep.subr.mxu0 0.0
    %9720 = vmatpush2.msra.mxu0 0.0
    %9721 = vmatprep.subr.mxu0 0.0
    %9722 = vmatpush2.msra.mxu0 0.0
    %9723 = vmatprep.mubr.f32.mxu0 0.0
    %9724 = vmatmul.mubr.f32.gmra.mxu0 %v9657
    %v9725 = vpop.f32.mrf.mxu0
    %v9726 = vadd.f32 0.0, %v9725
    %v9727 = vpop.f32.mrf.mxu0
    %9728 = vdwg.mxu0
    %s9729 = scalar_lea.vmem %s20, 64
    %v9730 = vld [vmem:[%s9729] sm:$0xff]
    %v9731 = vld [vmem:[%s9729 + $0x8] sm:$0xff]
    %v9732 = vld [vmem:[%s9729 + $0x10] sm:$0xff]
    %v9733 = vld [vmem:[%s9729 + $0x18] sm:$0xff]
    %v9734 = vld [vmem:[%s9729 + $0x20] sm:$0xff]
    %v9735 = vld [vmem:[%s9729 + $0x28] sm:$0xff]
    %v9736 = vld [vmem:[%s9729 + $0x30] sm:$0xff]
    %v9737 = vld [vmem:[%s9729 + $0x38] sm:$0xff]
    %v9739 = vsel %vm240, %v9726, 0
    %9741 = vmatprep.subr.mxu0 0.0
    %9742 = vmatpush1.msra.mxu0 0.0
    %9743 = vmatprep.subr.mxu0 0.0
    %9744 = vmatpush1.msra.mxu0 0.0
    %9745 = vmatprep.subr.mxu0 0.0
    %9746 = vmatpush1.msra.mxu0 0.0
    %9747 = vmatprep.subr.mxu0 0.0
    %9748 = vmatpush1.msra.mxu0 0.0
    %9749 = vmatprep.subr.mxu0 0.0
    %9750 = vmatpush1.msra.mxu0 0.0
    %9751 = vmatprep.subr.mxu0 0.0
    %9752 = vmatpush1.msra.mxu0 0.0
    %9753 = vmatprep.subr.mxu0 0.0
    %9754 = vmatpush1.msra.mxu0 0.0
    %9755 = vmatprep.subr.mxu0 0.0
    %9756 = vmatpush1.msra.mxu0 0.0
    %9757 = vmatprep.subr.mxu0 0.0
    %9758 = vmatpush1.msra.mxu0 %v9737
    %9759 = vmatprep.subr.mxu0 0.0
    %9760 = vmatpush1.msra.mxu0 %v9736
    %9761 = vmatprep.subr.mxu0 0.0
    %9762 = vmatpush1.msra.mxu0 %v9735
    %9763 = vmatprep.subr.mxu0 0.0
    %9764 = vmatpush1.msra.mxu0 %v9734
    %9765 = vmatprep.subr.mxu0 0.0
    %9766 = vmatpush1.msra.mxu0 %v9733
    %9767 = vmatprep.subr.mxu0 0.0
    %9768 = vmatpush1.msra.mxu0 %v9732
    %9769 = vmatprep.subr.mxu0 0.0
    %9770 = vmatpush1.msra.mxu0 %v9731
    %9771 = vmatprep.subr.mxu0 0.0
    %9772 = vmatpush1.msra.mxu0 %v9730
    %9773 = vmatprep.subr.mxu0 0.0
    %9774 = vmatpush2.msra.mxu0 0.0
    %9775 = vmatprep.subr.mxu0 0.0
    %9776 = vmatpush2.msra.mxu0 0.0
    %9777 = vmatprep.subr.mxu0 0.0
    %9778 = vmatpush2.msra.mxu0 0.0
    %9779 = vmatprep.subr.mxu0 0.0
    %9780 = vmatpush2.msra.mxu0 0.0
    %9781 = vmatprep.subr.mxu0 0.0
    %9782 = vmatpush2.msra.mxu0 0.0
    %9783 = vmatprep.subr.mxu0 0.0
    %9784 = vmatpush2.msra.mxu0 0.0
    %9785 = vmatprep.subr.mxu0 0.0
    %9786 = vmatpush2.msra.mxu0 0.0
    %9787 = vmatprep.subr.mxu0 0.0
    %9788 = vmatpush2.msra.mxu0 0.0
    %9789 = vmatprep.subr.mxu0 0.0
    %9790 = vmatpush2.msra.mxu0 0.0
    %9791 = vmatprep.subr.mxu0 0.0
    %9792 = vmatpush2.msra.mxu0 0.0
    %9793 = vmatprep.subr.mxu0 0.0
    %9794 = vmatpush2.msra.mxu0 0.0
    %9795 = vmatprep.subr.mxu0 0.0
    %9796 = vmatpush2.msra.mxu0 0.0
    %9797 = vmatprep.subr.mxu0 0.0
    %9798 = vmatpush2.msra.mxu0 0.0
    %9799 = vmatprep.subr.mxu0 0.0
    %9800 = vmatpush2.msra.mxu0 0.0
    %9801 = vmatprep.subr.mxu0 0.0
    %9802 = vmatpush2.msra.mxu0 0.0
    %9803 = vmatprep.subr.mxu0 0.0
    %9804 = vmatpush2.msra.mxu0 0.0
    %9805 = vmatprep.mubr.f32.mxu0 0.0
    %9806 = vmatmul.mubr.f32.gmra.mxu0 %v9739
    %v9807 = vpop.f32.mrf.mxu0
    %v9808 = vadd.f32 0.0, %v9807
    %v9809 = vpop.f32.mrf.mxu0
    %9810 = vdwg.mxu0
    %v9811 = vadd.f32 %v9653, %v9808
    %s9812 = scalar_lea.vmem %s19, 4
    %v9813 = vld [vmem:[%s9812] sm:$0x3]
    %v9815 = vsel %vm447, %v9813, 0
    %9817 = vmatprep.subr.mxu0 0.0
    %9818 = vmatpush1.msra.mxu0 0.0
    %9819 = vmatprep.subr.mxu0 0.0
    %9820 = vmatpush1.msra.mxu0 0.0
    %9821 = vmatprep.subr.mxu0 0.0
    %9822 = vmatpush1.msra.mxu0 0.0
    %9823 = vmatprep.subr.mxu0 0.0
    %9824 = vmatpush1.msra.mxu0 0.0
    %9825 = vmatprep.subr.mxu0 0.0
    %9826 = vmatpush1.msra.mxu0 0.0
    %9827 = vmatprep.subr.mxu0 0.0
    %9828 = vmatpush1.msra.mxu0 0.0
    %9829 = vmatprep.subr.mxu0 0.0
    %9830 = vmatpush1.msra.mxu0 0.0
    %9831 = vmatprep.subr.mxu0 0.0
    %9832 = vmatpush1.msra.mxu0 0.0
    %9833 = vmatprep.subr.mxu0 0.0
    %9834 = vmatpush1.msra.mxu0 0.0
    %9835 = vmatprep.subr.mxu0 0.0
    %9836 = vmatpush1.msra.mxu0 0.0
    %9837 = vmatprep.subr.mxu0 0.0
    %9838 = vmatpush1.msra.mxu0 0.0
    %9839 = vmatprep.subr.mxu0 0.0
    %9840 = vmatpush1.msra.mxu0 0.0
    %9841 = vmatprep.subr.mxu0 0.0
    %9842 = vmatpush1.msra.mxu0 0.0
    %9843 = vmatprep.subr.mxu0 0.0
    %9844 = vmatpush1.msra.mxu0 0.0
    %9845 = vmatprep.subr.mxu0 0.0
    %9846 = vmatpush1.msra.mxu0 %v9490
    %9847 = vmatprep.subr.mxu0 0.0
    %9848 = vmatpush1.msra.mxu0 %v9489
    %9849 = vmatprep.subr.mxu0 0.0
    %9850 = vmatpush2.msra.mxu0 0.0
    %9851 = vmatprep.subr.mxu0 0.0
    %9852 = vmatpush2.msra.mxu0 0.0
    %9853 = vmatprep.subr.mxu0 0.0
    %9854 = vmatpush2.msra.mxu0 0.0
    %9855 = vmatprep.subr.mxu0 0.0
    %9856 = vmatpush2.msra.mxu0 0.0
    %9857 = vmatprep.subr.mxu0 0.0
    %9858 = vmatpush2.msra.mxu0 0.0
    %9859 = vmatprep.subr.mxu0 0.0
    %9860 = vmatpush2.msra.mxu0 0.0
    %9861 = vmatprep.subr.mxu0 0.0
    %9862 = vmatpush2.msra.mxu0 0.0
    %9863 = vmatprep.subr.mxu0 0.0
    %9864 = vmatpush2.msra.mxu0 0.0
    %9865 = vmatprep.subr.mxu0 0.0
    %9866 = vmatpush2.msra.mxu0 0.0
    %9867 = vmatprep.subr.mxu0 0.0
    %9868 = vmatpush2.msra.mxu0 0.0
    %9869 = vmatprep.subr.mxu0 0.0
    %9870 = vmatpush2.msra.mxu0 0.0
    %9871 = vmatprep.subr.mxu0 0.0
    %9872 = vmatpush2.msra.mxu0 0.0
    %9873 = vmatprep.subr.mxu0 0.0
    %9874 = vmatpush2.msra.mxu0 0.0
    %9875 = vmatprep.subr.mxu0 0.0
    %9876 = vmatpush2.msra.mxu0 0.0
    %9877 = vmatprep.subr.mxu0 0.0
    %9878 = vmatpush2.msra.mxu0 0.0
    %9879 = vmatprep.subr.mxu0 0.0
    %9880 = vmatpush2.msra.mxu0 0.0
    %9881 = vmatprep.mubr.f32.mxu0 0.0
    %9882 = vmatmul.mubr.f32.gmra.mxu0 %v9815
    %v9883 = vpop.f32.mrf.mxu0
    %v9884 = vadd.f32 0.0, %v9883
    %v9885 = vpop.f32.mrf.mxu0
    %9886 = vdwg.mxu0
    %s9887 = scalar_lea.vmem %s20, 128
    %v9888 = vld [vmem:[%s9887] sm:$0xff]
    %v9889 = vld [vmem:[%s9887 + $0x8] sm:$0xff]
    %v9890 = vld [vmem:[%s9887 + $0x10] sm:$0xff]
    %v9891 = vld [vmem:[%s9887 + $0x18] sm:$0xff]
    %v9892 = vld [vmem:[%s9887 + $0x20] sm:$0xff]
    %v9893 = vld [vmem:[%s9887 + $0x28] sm:$0xff]
    %v9894 = vld [vmem:[%s9887 + $0x30] sm:$0xff]
    %v9895 = vld [vmem:[%s9887 + $0x38] sm:$0xff]
    %v9897 = vsel %vm240, %v9884, 0
    %9899 = vmatprep.subr.mxu0 0.0
    %9900 = vmatpush1.msra.mxu0 0.0
    %9901 = vmatprep.subr.mxu0 0.0
    %9902 = vmatpush1.msra.mxu0 0.0
    %9903 = vmatprep.subr.mxu0 0.0
    %9904 = vmatpush1.msra.mxu0 0.0
    %9905 = vmatprep.subr.mxu0 0.0
    %9906 = vmatpush1.msra.mxu0 0.0
    %9907 = vmatprep.subr.mxu0 0.0
    %9908 = vmatpush1.msra.mxu0 0.0
    %9909 = vmatprep.subr.mxu0 0.0
    %9910 = vmatpush1.msra.mxu0 0.0
    %9911 = vmatprep.subr.mxu0 0.0
    %9912 = vmatpush1.msra.mxu0 0.0
    %9913 = vmatprep.subr.mxu0 0.0
    %9914 = vmatpush1.msra.mxu0 0.0
    %9915 = vmatprep.subr.mxu0 0.0
    %9916 = vmatpush1.msra.mxu0 %v9895
    %9917 = vmatprep.subr.mxu0 0.0
    %9918 = vmatpush1.msra.mxu0 %v9894
    %9919 = vmatprep.subr.mxu0 0.0
    %9920 = vmatpush1.msra.mxu0 %v9893
    %9921 = vmatprep.subr.mxu0 0.0
    %9922 = vmatpush1.msra.mxu0 %v9892
    %9923 = vmatprep.subr.mxu0 0.0
    %9924 = vmatpush1.msra.mxu0 %v9891
    %9925 = vmatprep.subr.mxu0 0.0
    %9926 = vmatpush1.msra.mxu0 %v9890
    %9927 = vmatprep.subr.mxu0 0.0
    %9928 = vmatpush1.msra.mxu0 %v9889
    %9929 = vmatprep.subr.mxu0 0.0
    %9930 = vmatpush1.msra.mxu0 %v9888
    %9931 = vmatprep.subr.mxu0 0.0
    %9932 = vmatpush2.msra.mxu0 0.0
    %9933 = vmatprep.subr.mxu0 0.0
    %9934 = vmatpush2.msra.mxu0 0.0
    %9935 = vmatprep.subr.mxu0 0.0
    %9936 = vmatpush2.msra.mxu0 0.0
    %9937 = vmatprep.subr.mxu0 0.0
    %9938 = vmatpush2.msra.mxu0 0.0
    %9939 = vmatprep.subr.mxu0 0.0
    %9940 = vmatpush2.msra.mxu0 0.0
    %9941 = vmatprep.subr.mxu0 0.0
    %9942 = vmatpush2.msra.mxu0 0.0
    %9943 = vmatprep.subr.mxu0 0.0
    %9944 = vmatpush2.msra.mxu0 0.0
    %9945 = vmatprep.subr.mxu0 0.0
    %9946 = vmatpush2.msra.mxu0 0.0
    %9947 = vmatprep.subr.mxu0 0.0
    %9948 = vmatpush2.msra.mxu0 0.0
    %9949 = vmatprep.subr.mxu0 0.0
    %9950 = vmatpush2.msra.mxu0 0.0
    %9951 = vmatprep.subr.mxu0 0.0
    %9952 = vmatpush2.msra.mxu0 0.0
    %9953 = vmatprep.subr.mxu0 0.0
    %9954 = vmatpush2.msra.mxu0 0.0
    %9955 = vmatprep.subr.mxu0 0.0
    %9956 = vmatpush2.msra.mxu0 0.0
    %9957 = vmatprep.subr.mxu0 0.0
    %9958 = vmatpush2.msra.mxu0 0.0
    %9959 = vmatprep.subr.mxu0 0.0
    %9960 = vmatpush2.msra.mxu0 0.0
    %9961 = vmatprep.subr.mxu0 0.0
    %9962 = vmatpush2.msra.mxu0 0.0
    %9963 = vmatprep.mubr.f32.mxu0 0.0
    %9964 = vmatmul.mubr.f32.gmra.mxu0 %v9897
    %v9965 = vpop.f32.mrf.mxu0
    %v9966 = vadd.f32 0.0, %v9965
    %v9967 = vpop.f32.mrf.mxu0
    %9968 = vdwg.mxu0
    %v9969 = vadd.f32 %v9811, %v9966
    %s9970 = scalar_lea.vmem %s19, 6
    %v9971 = vld [vmem:[%s9970] sm:$0x3]
    %v9973 = vsel %vm447, %v9971, 0
    %9975 = vmatprep.subr.mxu0 0.0
    %9976 = vmatpush1.msra.mxu0 0.0
    %9977 = vmatprep.subr.mxu0 0.0
    %9978 = vmatpush1.msra.mxu0 0.0
    %9979 = vmatprep.subr.mxu0 0.0
    %9980 = vmatpush1.msra.mxu0 0.0
    %9981 = vmatprep.subr.mxu0 0.0
    %9982 = vmatpush1.msra.mxu0 0.0
    %9983 = vmatprep.subr.mxu0 0.0
    %9984 = vmatpush1.msra.mxu0 0.0
    %9985 = vmatprep.subr.mxu0 0.0
    %9986 = vmatpush1.msra.mxu0 0.0
    %9987 = vmatprep.subr.mxu0 0.0
    %9988 = vmatpush1.msra.mxu0 0.0
    %9989 = vmatprep.subr.mxu0 0.0
    %9990 = vmatpush1.msra.mxu0 0.0
    %9991 = vmatprep.subr.mxu0 0.0
    %9992 = vmatpush1.msra.mxu0 0.0
    %9993 = vmatprep.subr.mxu0 0.0
    %9994 = vmatpush1.msra.mxu0 0.0
    %9995 = vmatprep.subr.mxu0 0.0
    %9996 = vmatpush1.msra.mxu0 0.0
    %9997 = vmatprep.subr.mxu0 0.0
    %9998 = vmatpush1.msra.mxu0 0.0
    %9999 = vmatprep.subr.mxu0 0.0
    %10000 = vmatpush1.msra.mxu0 0.0
    %10001 = vmatprep.subr.mxu0 0.0
    %10002 = vmatpush1.msra.mxu0 0.0
    %10003 = vmatprep.subr.mxu0 0.0
    %10004 = vmatpush1.msra.mxu0 %v9490
    %10005 = vmatprep.subr.mxu0 0.0
    %10006 = vmatpush1.msra.mxu0 %v9489
    %10007 = vmatprep.subr.mxu0 0.0
    %10008 = vmatpush2.msra.mxu0 0.0
    %10009 = vmatprep.subr.mxu0 0.0
    %10010 = vmatpush2.msra.mxu0 0.0
    %10011 = vmatprep.subr.mxu0 0.0
    %10012 = vmatpush2.msra.mxu0 0.0
    %10013 = vmatprep.subr.mxu0 0.0
    %10014 = vmatpush2.msra.mxu0 0.0
    %10015 = vmatprep.subr.mxu0 0.0
    %10016 = vmatpush2.msra.mxu0 0.0
    %10017 = vmatprep.subr.mxu0 0.0
    %10018 = vmatpush2.msra.mxu0 0.0
    %10019 = vmatprep.subr.mxu0 0.0
    %10020 = vmatpush2.msra.mxu0 0.0
    %10021 = vmatprep.subr.mxu0 0.0
    %10022 = vmatpush2.msra.mxu0 0.0
    %10023 = vmatprep.subr.mxu0 0.0
    %10024 = vmatpush2.msra.mxu0 0.0
    %10025 = vmatprep.subr.mxu0 0.0
    %10026 = vmatpush2.msra.mxu0 0.0
    %10027 = vmatprep.subr.mxu0 0.0
    %10028 = vmatpush2.msra.mxu0 0.0
    %10029 = vmatprep.subr.mxu0 0.0
    %10030 = vmatpush2.msra.mxu0 0.0
    %10031 = vmatprep.subr.mxu0 0.0
    %10032 = vmatpush2.msra.mxu0 0.0
    %10033 = vmatprep.subr.mxu0 0.0
    %10034 = vmatpush2.msra.mxu0 0.0
    %10035 = vmatprep.subr.mxu0 0.0
    %10036 = vmatpush2.msra.mxu0 0.0
    %10037 = vmatprep.subr.mxu0 0.0
    %10038 = vmatpush2.msra.mxu0 0.0
    %10039 = vmatprep.mubr.f32.mxu0 0.0
    %10040 = vmatmul.mubr.f32.gmra.mxu0 %v9973
    %v10041 = vpop.f32.mrf.mxu0
    %v10042 = vadd.f32 0.0, %v10041
    %v10043 = vpop.f32.mrf.mxu0
    %10044 = vdwg.mxu0
    %s10045 = scalar_lea.vmem %s20, 192
    %v10046 = vld [vmem:[%s10045] sm:$0xff]
    %v10047 = vld [vmem:[%s10045 + $0x8] sm:$0xff]
    %v10048 = vld [vmem:[%s10045 + $0x10] sm:$0xff]
    %v10049 = vld [vmem:[%s10045 + $0x18] sm:$0xff]
    %v10050 = vld [vmem:[%s10045 + $0x20] sm:$0xff]
    %v10051 = vld [vmem:[%s10045 + $0x28] sm:$0xff]
    %v10052 = vld [vmem:[%s10045 + $0x30] sm:$0xff]
    %v10053 = vld [vmem:[%s10045 + $0x38] sm:$0xff]
    %v10055 = vsel %vm240, %v10042, 0
    %10057 = vmatprep.subr.mxu0 0.0
    %10058 = vmatpush1.msra.mxu0 0.0
    %10059 = vmatprep.subr.mxu0 0.0
    %10060 = vmatpush1.msra.mxu0 0.0
    %10061 = vmatprep.subr.mxu0 0.0
    %10062 = vmatpush1.msra.mxu0 0.0
    %10063 = vmatprep.subr.mxu0 0.0
    %10064 = vmatpush1.msra.mxu0 0.0
    %10065 = vmatprep.subr.mxu0 0.0
    %10066 = vmatpush1.msra.mxu0 0.0
    %10067 = vmatprep.subr.mxu0 0.0
    %10068 = vmatpush1.msra.mxu0 0.0
    %10069 = vmatprep.subr.mxu0 0.0
    %10070 = vmatpush1.msra.mxu0 0.0
    %10071 = vmatprep.subr.mxu0 0.0
    %10072 = vmatpush1.msra.mxu0 0.0
    %10073 = vmatprep.subr.mxu0 0.0
    %10074 = vmatpush1.msra.mxu0 %v10053
    %10075 = vmatprep.subr.mxu0 0.0
    %10076 = vmatpush1.msra.mxu0 %v10052
    %10077 = vmatprep.subr.mxu0 0.0
    %10078 = vmatpush1.msra.mxu0 %v10051
    %10079 = vmatprep.subr.mxu0 0.0
    %10080 = vmatpush1.msra.mxu0 %v10050
    %10081 = vmatprep.subr.mxu0 0.0
    %10082 = vmatpush1.msra.mxu0 %v10049
    %10083 = vmatprep.subr.mxu0 0.0
    %10084 = vmatpush1.msra.mxu0 %v10048
    %10085 = vmatprep.subr.mxu0 0.0
    %10086 = vmatpush1.msra.mxu0 %v10047
    %10087 = vmatprep.subr.mxu0 0.0
    %10088 = vmatpush1.msra.mxu0 %v10046
    %10089 = vmatprep.subr.mxu0 0.0
    %10090 = vmatpush2.msra.mxu0 0.0
    %10091 = vmatprep.subr.mxu0 0.0
    %10092 = vmatpush2.msra.mxu0 0.0
    %10093 = vmatprep.subr.mxu0 0.0
    %10094 = vmatpush2.msra.mxu0 0.0
    %10095 = vmatprep.subr.mxu0 0.0
    %10096 = vmatpush2.msra.mxu0 0.0
    %10097 = vmatprep.subr.mxu0 0.0
    %10098 = vmatpush2.msra.mxu0 0.0
    %10099 = vmatprep.subr.mxu0 0.0
    %10100 = vmatpush2.msra.mxu0 0.0
    %10101 = vmatprep.subr.mxu0 0.0
    %10102 = vmatpush2.msra.mxu0 0.0
    %10103 = vmatprep.subr.mxu0 0.0
    %10104 = vmatpush2.msra.mxu0 0.0
    %10105 = vmatprep.subr.mxu0 0.0
    %10106 = vmatpush2.msra.mxu0 0.0
    %10107 = vmatprep.subr.mxu0 0.0
    %10108 = vmatpush2.msra.mxu0 0.0
    %10109 = vmatprep.subr.mxu0 0.0
    %10110 = vmatpush2.msra.mxu0 0.0
    %10111 = vmatprep.subr.mxu0 0.0
    %10112 = vmatpush2.msra.mxu0 0.0
    %10113 = vmatprep.subr.mxu0 0.0
    %10114 = vmatpush2.msra.mxu0 0.0
    %10115 = vmatprep.subr.mxu0 0.0
    %10116 = vmatpush2.msra.mxu0 0.0
    %10117 = vmatprep.subr.mxu0 0.0
    %10118 = vmatpush2.msra.mxu0 0.0
    %10119 = vmatprep.subr.mxu0 0.0
    %10120 = vmatpush2.msra.mxu0 0.0
    %10121 = vmatprep.mubr.f32.mxu0 0.0
    %10122 = vmatmul.mubr.f32.gmra.mxu0 %v10055
    %v10123 = vpop.f32.mrf.mxu0
    %v10124 = vadd.f32 0.0, %v10123
    %v10125 = vpop.f32.mrf.mxu0
    %10126 = vdwg.mxu0
    %v10127 = vadd.f32 %v9969, %v10124
    %s10128 = scalar_lea.vmem %s19, 8
    %v10129 = vld [vmem:[%s10128] sm:$0x3]
    %v10131 = vsel %vm447, %v10129, 0
    %10133 = vmatprep.subr.mxu0 0.0
    %10134 = vmatpush1.msra.mxu0 0.0
    %10135 = vmatprep.subr.mxu0 0.0
    %10136 = vmatpush1.msra.mxu0 0.0
    %10137 = vmatprep.subr.mxu0 0.0
    %10138 = vmatpush1.msra.mxu0 0.0
    %10139 = vmatprep.subr.mxu0 0.0
    %10140 = vmatpush1.msra.mxu0 0.0
    %10141 = vmatprep.subr.mxu0 0.0
    %10142 = vmatpush1.msra.mxu0 0.0
    %10143 = vmatprep.subr.mxu0 0.0
    %10144 = vmatpush1.msra.mxu0 0.0
    %10145 = vmatprep.subr.mxu0 0.0
    %10146 = vmatpush1.msra.mxu0 0.0
    %10147 = vmatprep.subr.mxu0 0.0
    %10148 = vmatpush1.msra.mxu0 0.0
    %10149 = vmatprep.subr.mxu0 0.0
    %10150 = vmatpush1.msra.mxu0 0.0
    %10151 = vmatprep.subr.mxu0 0.0
    %10152 = vmatpush1.msra.mxu0 0.0
    %10153 = vmatprep.subr.mxu0 0.0
    %10154 = vmatpush1.msra.mxu0 0.0
    %10155 = vmatprep.subr.mxu0 0.0
    %10156 = vmatpush1.msra.mxu0 0.0
    %10157 = vmatprep.subr.mxu0 0.0
    %10158 = vmatpush1.msra.mxu0 0.0
    %10159 = vmatprep.subr.mxu0 0.0
    %10160 = vmatpush1.msra.mxu0 0.0
    %10161 = vmatprep.subr.mxu0 0.0
    %10162 = vmatpush1.msra.mxu0 %v9490
    %10163 = vmatprep.subr.mxu0 0.0
    %10164 = vmatpush1.msra.mxu0 %v9489
    %10165 = vmatprep.subr.mxu0 0.0
    %10166 = vmatpush2.msra.mxu0 0.0
    %10167 = vmatprep.subr.mxu0 0.0
    %10168 = vmatpush2.msra.mxu0 0.0
    %10169 = vmatprep.subr.mxu0 0.0
    %10170 = vmatpush2.msra.mxu0 0.0
    %10171 = vmatprep.subr.mxu0 0.0
    %10172 = vmatpush2.msra.mxu0 0.0
    %10173 = vmatprep.subr.mxu0 0.0
    %10174 = vmatpush2.msra.mxu0 0.0
    %10175 = vmatprep.subr.mxu0 0.0
    %10176 = vmatpush2.msra.mxu0 0.0
    %10177 = vmatprep.subr.mxu0 0.0
    %10178 = vmatpush2.msra.mxu0 0.0
    %10179 = vmatprep.subr.mxu0 0.0
    %10180 = vmatpush2.msra.mxu0 0.0
    %10181 = vmatprep.subr.mxu0 0.0
    %10182 = vmatpush2.msra.mxu0 0.0
    %10183 = vmatprep.subr.mxu0 0.0
    %10184 = vmatpush2.msra.mxu0 0.0
    %10185 = vmatprep.subr.mxu0 0.0
    %10186 = vmatpush2.msra.mxu0 0.0
    %10187 = vmatprep.subr.mxu0 0.0
    %10188 = vmatpush2.msra.mxu0 0.0
    %10189 = vmatprep.subr.mxu0 0.0
    %10190 = vmatpush2.msra.mxu0 0.0
    %10191 = vmatprep.subr.mxu0 0.0
    %10192 = vmatpush2.msra.mxu0 0.0
    %10193 = vmatprep.subr.mxu0 0.0
    %10194 = vmatpush2.msra.mxu0 0.0
    %10195 = vmatprep.subr.mxu0 0.0
    %10196 = vmatpush2.msra.mxu0 0.0
    %10197 = vmatprep.mubr.f32.mxu0 0.0
    %10198 = vmatmul.mubr.f32.gmra.mxu0 %v10131
    %v10199 = vpop.f32.mrf.mxu0
    %v10200 = vadd.f32 0.0, %v10199
    %v10201 = vpop.f32.mrf.mxu0
    %10202 = vdwg.mxu0
    %s10203 = scalar_lea.vmem %s20, 256
    %v10204 = vld [vmem:[%s10203] sm:$0xff]
    %v10205 = vld [vmem:[%s10203 + $0x8] sm:$0xff]
    %v10206 = vld [vmem:[%s10203 + $0x10] sm:$0xff]
    %v10207 = vld [vmem:[%s10203 + $0x18] sm:$0xff]
    %v10208 = vld [vmem:[%s10203 + $0x20] sm:$0xff]
    %v10209 = vld [vmem:[%s10203 + $0x28] sm:$0xff]
    %v10210 = vld [vmem:[%s10203 + $0x30] sm:$0xff]
    %v10211 = vld [vmem:[%s10203 + $0x38] sm:$0xff]
    %v10213 = vsel %vm240, %v10200, 0
    %10215 = vmatprep.subr.mxu0 0.0
    %10216 = vmatpush1.msra.mxu0 0.0
    %10217 = vmatprep.subr.mxu0 0.0
    %10218 = vmatpush1.msra.mxu0 0.0
    %10219 = vmatprep.subr.mxu0 0.0
    %10220 = vmatpush1.msra.mxu0 0.0
    %10221 = vmatprep.subr.mxu0 0.0
    %10222 = vmatpush1.msra.mxu0 0.0
    %10223 = vmatprep.subr.mxu0 0.0
    %10224 = vmatpush1.msra.mxu0 0.0
    %10225 = vmatprep.subr.mxu0 0.0
    %10226 = vmatpush1.msra.mxu0 0.0
    %10227 = vmatprep.subr.mxu0 0.0
    %10228 = vmatpush1.msra.mxu0 0.0
    %10229 = vmatprep.subr.mxu0 0.0
    %10230 = vmatpush1.msra.mxu0 0.0
    %10231 = vmatprep.subr.mxu0 0.0
    %10232 = vmatpush1.msra.mxu0 %v10211
    %10233 = vmatprep.subr.mxu0 0.0
    %10234 = vmatpush1.msra.mxu0 %v10210
    %10235 = vmatprep.subr.mxu0 0.0
    %10236 = vmatpush1.msra.mxu0 %v10209
    %10237 = vmatprep.subr.mxu0 0.0
    %10238 = vmatpush1.msra.mxu0 %v10208
    %10239 = vmatprep.subr.mxu0 0.0
    %10240 = vmatpush1.msra.mxu0 %v10207
    %10241 = vmatprep.subr.mxu0 0.0
    %10242 = vmatpush1.msra.mxu0 %v10206
    %10243 = vmatprep.subr.mxu0 0.0
    %10244 = vmatpush1.msra.mxu0 %v10205
    %10245 = vmatprep.subr.mxu0 0.0
    %10246 = vmatpush1.msra.mxu0 %v10204
    %10247 = vmatprep.subr.mxu0 0.0
    %10248 = vmatpush2.msra.mxu0 0.0
    %10249 = vmatprep.subr.mxu0 0.0
    %10250 = vmatpush2.msra.mxu0 0.0
    %10251 = vmatprep.subr.mxu0 0.0
    %10252 = vmatpush2.msra.mxu0 0.0
    %10253 = vmatprep.subr.mxu0 0.0
    %10254 = vmatpush2.msra.mxu0 0.0
    %10255 = vmatprep.subr.mxu0 0.0
    %10256 = vmatpush2.msra.mxu0 0.0
    %10257 = vmatprep.subr.mxu0 0.0
    %10258 = vmatpush2.msra.mxu0 0.0
    %10259 = vmatprep.subr.mxu0 0.0
    %10260 = vmatpush2.msra.mxu0 0.0
    %10261 = vmatprep.subr.mxu0 0.0
    %10262 = vmatpush2.msra.mxu0 0.0
    %10263 = vmatprep.subr.mxu0 0.0
    %10264 = vmatpush2.msra.mxu0 0.0
    %10265 = vmatprep.subr.mxu0 0.0
    %10266 = vmatpush2.msra.mxu0 0.0
    %10267 = vmatprep.subr.mxu0 0.0
    %10268 = vmatpush2.msra.mxu0 0.0
    %10269 = vmatprep.subr.mxu0 0.0
    %10270 = vmatpush2.msra.mxu0 0.0
    %10271 = vmatprep.subr.mxu0 0.0
    %10272 = vmatpush2.msra.mxu0 0.0
    %10273 = vmatprep.subr.mxu0 0.0
    %10274 = vmatpush2.msra.mxu0 0.0
    %10275 = vmatprep.subr.mxu0 0.0
    %10276 = vmatpush2.msra.mxu0 0.0
    %10277 = vmatprep.subr.mxu0 0.0
    %10278 = vmatpush2.msra.mxu0 0.0
    %10279 = vmatprep.mubr.f32.mxu0 0.0
    %10280 = vmatmul.mubr.f32.gmra.mxu0 %v10213
    %v10281 = vpop.f32.mrf.mxu0
    %v10282 = vadd.f32 0.0, %v10281
    %v10283 = vpop.f32.mrf.mxu0
    %10284 = vdwg.mxu0
    %v10285 = vadd.f32 %v10127, %v10282
    %s10286 = scalar_lea.vmem %s19, 10
    %v10287 = vld [vmem:[%s10286] sm:$0x3]
    %v10289 = vsel %vm447, %v10287, 0
    %10291 = vmatprep.subr.mxu0 0.0
    %10292 = vmatpush1.msra.mxu0 0.0
    %10293 = vmatprep.subr.mxu0 0.0
    %10294 = vmatpush1.msra.mxu0 0.0
    %10295 = vmatprep.subr.mxu0 0.0
    %10296 = vmatpush1.msra.mxu0 0.0
    %10297 = vmatprep.subr.mxu0 0.0
    %10298 = vmatpush1.msra.mxu0 0.0
    %10299 = vmatprep.subr.mxu0 0.0
    %10300 = vmatpush1.msra.mxu0 0.0
    %10301 = vmatprep.subr.mxu0 0.0
    %10302 = vmatpush1.msra.mxu0 0.0
    %10303 = vmatprep.subr.mxu0 0.0
    %10304 = vmatpush1.msra.mxu0 0.0
    %10305 = vmatprep.subr.mxu0 0.0
    %10306 = vmatpush1.msra.mxu0 0.0
    %10307 = vmatprep.subr.mxu0 0.0
    %10308 = vmatpush1.msra.mxu0 0.0
    %10309 = vmatprep.subr.mxu0 0.0
    %10310 = vmatpush1.msra.mxu0 0.0
    %10311 = vmatprep.subr.mxu0 0.0
    %10312 = vmatpush1.msra.mxu0 0.0
    %10313 = vmatprep.subr.mxu0 0.0
    %10314 = vmatpush1.msra.mxu0 0.0
    %10315 = vmatprep.subr.mxu0 0.0
    %10316 = vmatpush1.msra.mxu0 0.0
    %10317 = vmatprep.subr.mxu0 0.0
    %10318 = vmatpush1.msra.mxu0 0.0
    %10319 = vmatprep.subr.mxu0 0.0
    %10320 = vmatpush1.msra.mxu0 %v9490
    %10321 = vmatprep.subr.mxu0 0.0
    %10322 = vmatpush1.msra.mxu0 %v9489
    %10323 = vmatprep.subr.mxu0 0.0
    %10324 = vmatpush2.msra.mxu0 0.0
    %10325 = vmatprep.subr.mxu0 0.0
    %10326 = vmatpush2.msra.mxu0 0.0
    %10327 = vmatprep.subr.mxu0 0.0
    %10328 = vmatpush2.msra.mxu0 0.0
    %10329 = vmatprep.subr.mxu0 0.0
    %10330 = vmatpush2.msra.mxu0 0.0
    %10331 = vmatprep.subr.mxu0 0.0
    %10332 = vmatpush2.msra.mxu0 0.0
    %10333 = vmatprep.subr.mxu0 0.0
    %10334 = vmatpush2.msra.mxu0 0.0
    %10335 = vmatprep.subr.mxu0 0.0
    %10336 = vmatpush2.msra.mxu0 0.0
    %10337 = vmatprep.subr.mxu0 0.0
    %10338 = vmatpush2.msra.mxu0 0.0
    %10339 = vmatprep.subr.mxu0 0.0
    %10340 = vmatpush2.msra.mxu0 0.0
    %10341 = vmatprep.subr.mxu0 0.0
    %10342 = vmatpush2.msra.mxu0 0.0
    %10343 = vmatprep.subr.mxu0 0.0
    %10344 = vmatpush2.msra.mxu0 0.0
    %10345 = vmatprep.subr.mxu0 0.0
    %10346 = vmatpush2.msra.mxu0 0.0
    %10347 = vmatprep.subr.mxu0 0.0
    %10348 = vmatpush2.msra.mxu0 0.0
    %10349 = vmatprep.subr.mxu0 0.0
    %10350 = vmatpush2.msra.mxu0 0.0
    %10351 = vmatprep.subr.mxu0 0.0
    %10352 = vmatpush2.msra.mxu0 0.0
    %10353 = vmatprep.subr.mxu0 0.0
    %10354 = vmatpush2.msra.mxu0 0.0
    %10355 = vmatprep.mubr.f32.mxu0 0.0
    %10356 = vmatmul.mubr.f32.gmra.mxu0 %v10289
    %v10357 = vpop.f32.mrf.mxu0
    %v10358 = vadd.f32 0.0, %v10357
    %v10359 = vpop.f32.mrf.mxu0
    %10360 = vdwg.mxu0
    %s10361 = scalar_lea.vmem %s20, 320
    %v10362 = vld [vmem:[%s10361] sm:$0xff]
    %v10363 = vld [vmem:[%s10361 + $0x8] sm:$0xff]
    %v10364 = vld [vmem:[%s10361 + $0x10] sm:$0xff]
    %v10365 = vld [vmem:[%s10361 + $0x18] sm:$0xff]
    %v10366 = vld [vmem:[%s10361 + $0x20] sm:$0xff]
    %v10367 = vld [vmem:[%s10361 + $0x28] sm:$0xff]
    %v10368 = vld [vmem:[%s10361 + $0x30] sm:$0xff]
    %v10369 = vld [vmem:[%s10361 + $0x38] sm:$0xff]
    %v10371 = vsel %vm240, %v10358, 0
    %10373 = vmatprep.subr.mxu0 0.0
    %10374 = vmatpush1.msra.mxu0 0.0
    %10375 = vmatprep.subr.mxu0 0.0
    %10376 = vmatpush1.msra.mxu0 0.0
    %10377 = vmatprep.subr.mxu0 0.0
    %10378 = vmatpush1.msra.mxu0 0.0
    %10379 = vmatprep.subr.mxu0 0.0
    %10380 = vmatpush1.msra.mxu0 0.0
    %10381 = vmatprep.subr.mxu0 0.0
    %10382 = vmatpush1.msra.mxu0 0.0
    %10383 = vmatprep.subr.mxu0 0.0
    %10384 = vmatpush1.msra.mxu0 0.0
    %10385 = vmatprep.subr.mxu0 0.0
    %10386 = vmatpush1.msra.mxu0 0.0
    %10387 = vmatprep.subr.mxu0 0.0
    %10388 = vmatpush1.msra.mxu0 0.0
    %10389 = vmatprep.subr.mxu0 0.0
    %10390 = vmatpush1.msra.mxu0 %v10369
    %10391 = vmatprep.subr.mxu0 0.0
    %10392 = vmatpush1.msra.mxu0 %v10368
    %10393 = vmatprep.subr.mxu0 0.0
    %10394 = vmatpush1.msra.mxu0 %v10367
    %10395 = vmatprep.subr.mxu0 0.0
    %10396 = vmatpush1.msra.mxu0 %v10366
    %10397 = vmatprep.subr.mxu0 0.0
    %10398 = vmatpush1.msra.mxu0 %v10365
    %10399 = vmatprep.subr.mxu0 0.0
    %10400 = vmatpush1.msra.mxu0 %v10364
    %10401 = vmatprep.subr.mxu0 0.0
    %10402 = vmatpush1.msra.mxu0 %v10363
    %10403 = vmatprep.subr.mxu0 0.0
    %10404 = vmatpush1.msra.mxu0 %v10362
    %10405 = vmatprep.subr.mxu0 0.0
    %10406 = vmatpush2.msra.mxu0 0.0
    %10407 = vmatprep.subr.mxu0 0.0
    %10408 = vmatpush2.msra.mxu0 0.0
    %10409 = vmatprep.subr.mxu0 0.0
    %10410 = vmatpush2.msra.mxu0 0.0
    %10411 = vmatprep.subr.mxu0 0.0
    %10412 = vmatpush2.msra.mxu0 0.0
    %10413 = vmatprep.subr.mxu0 0.0
    %10414 = vmatpush2.msra.mxu0 0.0
    %10415 = vmatprep.subr.mxu0 0.0
    %10416 = vmatpush2.msra.mxu0 0.0
    %10417 = vmatprep.subr.mxu0 0.0
    %10418 = vmatpush2.msra.mxu0 0.0
    %10419 = vmatprep.subr.mxu0 0.0
    %10420 = vmatpush2.msra.mxu0 0.0
    %10421 = vmatprep.subr.mxu0 0.0
    %10422 = vmatpush2.msra.mxu0 0.0
    %10423 = vmatprep.subr.mxu0 0.0
    %10424 = vmatpush2.msra.mxu0 0.0
    %10425 = vmatprep.subr.mxu0 0.0
    %10426 = vmatpush2.msra.mxu0 0.0
    %10427 = vmatprep.subr.mxu0 0.0
    %10428 = vmatpush2.msra.mxu0 0.0
    %10429 = vmatprep.subr.mxu0 0.0
    %10430 = vmatpush2.msra.mxu0 0.0
    %10431 = vmatprep.subr.mxu0 0.0
    %10432 = vmatpush2.msra.mxu0 0.0
    %10433 = vmatprep.subr.mxu0 0.0
    %10434 = vmatpush2.msra.mxu0 0.0
    %10435 = vmatprep.subr.mxu0 0.0
    %10436 = vmatpush2.msra.mxu0 0.0
    %10437 = vmatprep.mubr.f32.mxu0 0.0
    %10438 = vmatmul.mubr.f32.gmra.mxu0 %v10371
    %v10439 = vpop.f32.mrf.mxu0
    %v10440 = vadd.f32 0.0, %v10439
    %v10441 = vpop.f32.mrf.mxu0
    %10442 = vdwg.mxu0
    %v10443 = vadd.f32 %v10285, %v10440
    %s10444 = scalar_lea.vmem %s19, 12
    %v10445 = vld [vmem:[%s10444] sm:$0x3]
    %v10447 = vsel %vm447, %v10445, 0
    %10449 = vmatprep.subr.mxu0 0.0
    %10450 = vmatpush1.msra.mxu0 0.0
    %10451 = vmatprep.subr.mxu0 0.0
    %10452 = vmatpush1.msra.mxu0 0.0
    %10453 = vmatprep.subr.mxu0 0.0
    %10454 = vmatpush1.msra.mxu0 0.0
    %10455 = vmatprep.subr.mxu0 0.0
    %10456 = vmatpush1.msra.mxu0 0.0
    %10457 = vmatprep.subr.mxu0 0.0
    %10458 = vmatpush1.msra.mxu0 0.0
    %10459 = vmatprep.subr.mxu0 0.0
    %10460 = vmatpush1.msra.mxu0 0.0
    %10461 = vmatprep.subr.mxu0 0.0
    %10462 = vmatpush1.msra.mxu0 0.0
    %10463 = vmatprep.subr.mxu0 0.0
    %10464 = vmatpush1.msra.mxu0 0.0
    %10465 = vmatprep.subr.mxu0 0.0
    %10466 = vmatpush1.msra.mxu0 0.0
    %10467 = vmatprep.subr.mxu0 0.0
    %10468 = vmatpush1.msra.mxu0 0.0
    %10469 = vmatprep.subr.mxu0 0.0
    %10470 = vmatpush1.msra.mxu0 0.0
    %10471 = vmatprep.subr.mxu0 0.0
    %10472 = vmatpush1.msra.mxu0 0.0
    %10473 = vmatprep.subr.mxu0 0.0
    %10474 = vmatpush1.msra.mxu0 0.0
    %10475 = vmatprep.subr.mxu0 0.0
    %10476 = vmatpush1.msra.mxu0 0.0
    %10477 = vmatprep.subr.mxu0 0.0
    %10478 = vmatpush1.msra.mxu0 %v9490
    %10479 = vmatprep.subr.mxu0 0.0
    %10480 = vmatpush1.msra.mxu0 %v9489
    %10481 = vmatprep.subr.mxu0 0.0
    %10482 = vmatpush2.msra.mxu0 0.0
    %10483 = vmatprep.subr.mxu0 0.0
    %10484 = vmatpush2.msra.mxu0 0.0
    %10485 = vmatprep.subr.mxu0 0.0
    %10486 = vmatpush2.msra.mxu0 0.0
    %10487 = vmatprep.subr.mxu0 0.0
    %10488 = vmatpush2.msra.mxu0 0.0
    %10489 = vmatprep.subr.mxu0 0.0
    %10490 = vmatpush2.msra.mxu0 0.0
    %10491 = vmatprep.subr.mxu0 0.0
    %10492 = vmatpush2.msra.mxu0 0.0
    %10493 = vmatprep.subr.mxu0 0.0
    %10494 = vmatpush2.msra.mxu0 0.0
    %10495 = vmatprep.subr.mxu0 0.0
    %10496 = vmatpush2.msra.mxu0 0.0
    %10497 = vmatprep.subr.mxu0 0.0
    %10498 = vmatpush2.msra.mxu0 0.0
    %10499 = vmatprep.subr.mxu0 0.0
    %10500 = vmatpush2.msra.mxu0 0.0
    %10501 = vmatprep.subr.mxu0 0.0
    %10502 = vmatpush2.msra.mxu0 0.0
    %10503 = vmatprep.subr.mxu0 0.0
    %10504 = vmatpush2.msra.mxu0 0.0
    %10505 = vmatprep.subr.mxu0 0.0
    %10506 = vmatpush2.msra.mxu0 0.0
    %10507 = vmatprep.subr.mxu0 0.0
    %10508 = vmatpush2.msra.mxu0 0.0
    %10509 = vmatprep.subr.mxu0 0.0
    %10510 = vmatpush2.msra.mxu0 0.0
    %10511 = vmatprep.subr.mxu0 0.0
    %10512 = vmatpush2.msra.mxu0 0.0
    %10513 = vmatprep.mubr.f32.mxu0 0.0
    %10514 = vmatmul.mubr.f32.gmra.mxu0 %v10447
    %v10515 = vpop.f32.mrf.mxu0
    %v10516 = vadd.f32 0.0, %v10515
    %v10517 = vpop.f32.mrf.mxu0
    %10518 = vdwg.mxu0
    %s10519 = scalar_lea.vmem %s20, 384
    %v10520 = vld [vmem:[%s10519] sm:$0xff]
    %v10521 = vld [vmem:[%s10519 + $0x8] sm:$0xff]
    %v10522 = vld [vmem:[%s10519 + $0x10] sm:$0xff]
    %v10523 = vld [vmem:[%s10519 + $0x18] sm:$0xff]
    %v10524 = vld [vmem:[%s10519 + $0x20] sm:$0xff]
    %v10525 = vld [vmem:[%s10519 + $0x28] sm:$0xff]
    %v10526 = vld [vmem:[%s10519 + $0x30] sm:$0xff]
    %v10527 = vld [vmem:[%s10519 + $0x38] sm:$0xff]
    %v10529 = vsel %vm240, %v10516, 0
    %10531 = vmatprep.subr.mxu0 0.0
    %10532 = vmatpush1.msra.mxu0 0.0
    %10533 = vmatprep.subr.mxu0 0.0
    %10534 = vmatpush1.msra.mxu0 0.0
    %10535 = vmatprep.subr.mxu0 0.0
    %10536 = vmatpush1.msra.mxu0 0.0
    %10537 = vmatprep.subr.mxu0 0.0
    %10538 = vmatpush1.msra.mxu0 0.0
    %10539 = vmatprep.subr.mxu0 0.0
    %10540 = vmatpush1.msra.mxu0 0.0
    %10541 = vmatprep.subr.mxu0 0.0
    %10542 = vmatpush1.msra.mxu0 0.0
    %10543 = vmatprep.subr.mxu0 0.0
    %10544 = vmatpush1.msra.mxu0 0.0
    %10545 = vmatprep.subr.mxu0 0.0
    %10546 = vmatpush1.msra.mxu0 0.0
    %10547 = vmatprep.subr.mxu0 0.0
    %10548 = vmatpush1.msra.mxu0 %v10527
    %10549 = vmatprep.subr.mxu0 0.0
    %10550 = vmatpush1.msra.mxu0 %v10526
    %10551 = vmatprep.subr.mxu0 0.0
    %10552 = vmatpush1.msra.mxu0 %v10525
    %10553 = vmatprep.subr.mxu0 0.0
    %10554 = vmatpush1.msra.mxu0 %v10524
    %10555 = vmatprep.subr.mxu0 0.0
    %10556 = vmatpush1.msra.mxu0 %v10523
    %10557 = vmatprep.subr.mxu0 0.0
    %10558 = vmatpush1.msra.mxu0 %v10522
    %10559 = vmatprep.subr.mxu0 0.0
    %10560 = vmatpush1.msra.mxu0 %v10521
    %10561 = vmatprep.subr.mxu0 0.0
    %10562 = vmatpush1.msra.mxu0 %v10520
    %10563 = vmatprep.subr.mxu0 0.0
    %10564 = vmatpush2.msra.mxu0 0.0
    %10565 = vmatprep.subr.mxu0 0.0
    %10566 = vmatpush2.msra.mxu0 0.0
    %10567 = vmatprep.subr.mxu0 0.0
    %10568 = vmatpush2.msra.mxu0 0.0
    %10569 = vmatprep.subr.mxu0 0.0
    %10570 = vmatpush2.msra.mxu0 0.0
    %10571 = vmatprep.subr.mxu0 0.0
    %10572 = vmatpush2.msra.mxu0 0.0
    %10573 = vmatprep.subr.mxu0 0.0
    %10574 = vmatpush2.msra.mxu0 0.0
    %10575 = vmatprep.subr.mxu0 0.0
    %10576 = vmatpush2.msra.mxu0 0.0
    %10577 = vmatprep.subr.mxu0 0.0
    %10578 = vmatpush2.msra.mxu0 0.0
    %10579 = vmatprep.subr.mxu0 0.0
    %10580 = vmatpush2.msra.mxu0 0.0
    %10581 = vmatprep.subr.mxu0 0.0
    %10582 = vmatpush2.msra.mxu0 0.0
    %10583 = vmatprep.subr.mxu0 0.0
    %10584 = vmatpush2.msra.mxu0 0.0
    %10585 = vmatprep.subr.mxu0 0.0
    %10586 = vmatpush2.msra.mxu0 0.0
    %10587 = vmatprep.subr.mxu0 0.0
    %10588 = vmatpush2.msra.mxu0 0.0
    %10589 = vmatprep.subr.mxu0 0.0
    %10590 = vmatpush2.msra.mxu0 0.0
    %10591 = vmatprep.subr.mxu0 0.0
    %10592 = vmatpush2.msra.mxu0 0.0
    %10593 = vmatprep.subr.mxu0 0.0
    %10594 = vmatpush2.msra.mxu0 0.0
    %10595 = vmatprep.mubr.f32.mxu0 0.0
    %10596 = vmatmul.mubr.f32.gmra.mxu0 %v10529
    %v10597 = vpop.f32.mrf.mxu0
    %v10598 = vadd.f32 0.0, %v10597
    %v10599 = vpop.f32.mrf.mxu0
    %10600 = vdwg.mxu0
    %v10601 = vadd.f32 %v10443, %v10598
    %s10602 = scalar_lea.vmem %s19, 14
    %v10603 = vld [vmem:[%s10602] sm:$0x3]
    %v10605 = vsel %vm447, %v10603, 0
    %10607 = vmatprep.subr.mxu0 0.0
    %10608 = vmatpush1.msra.mxu0 0.0
    %10609 = vmatprep.subr.mxu0 0.0
    %10610 = vmatpush1.msra.mxu0 0.0
    %10611 = vmatprep.subr.mxu0 0.0
    %10612 = vmatpush1.msra.mxu0 0.0
    %10613 = vmatprep.subr.mxu0 0.0
    %10614 = vmatpush1.msra.mxu0 0.0
    %10615 = vmatprep.subr.mxu0 0.0
    %10616 = vmatpush1.msra.mxu0 0.0
    %10617 = vmatprep.subr.mxu0 0.0
    %10618 = vmatpush1.msra.mxu0 0.0
    %10619 = vmatprep.subr.mxu0 0.0
    %10620 = vmatpush1.msra.mxu0 0.0
    %10621 = vmatprep.subr.mxu0 0.0
    %10622 = vmatpush1.msra.mxu0 0.0
    %10623 = vmatprep.subr.mxu0 0.0
    %10624 = vmatpush1.msra.mxu0 0.0
    %10625 = vmatprep.subr.mxu0 0.0
    %10626 = vmatpush1.msra.mxu0 0.0
    %10627 = vmatprep.subr.mxu0 0.0
    %10628 = vmatpush1.msra.mxu0 0.0
    %10629 = vmatprep.subr.mxu0 0.0
    %10630 = vmatpush1.msra.mxu0 0.0
    %10631 = vmatprep.subr.mxu0 0.0
    %10632 = vmatpush1.msra.mxu0 0.0
    %10633 = vmatprep.subr.mxu0 0.0
    %10634 = vmatpush1.msra.mxu0 0.0
    %10635 = vmatprep.subr.mxu0 0.0
    %10636 = vmatpush1.msra.mxu0 %v9490
    %10637 = vmatprep.subr.mxu0 0.0
    %10638 = vmatpush1.msra.mxu0 %v9489
    %10639 = vmatprep.subr.mxu0 0.0
    %10640 = vmatpush2.msra.mxu0 0.0
    %10641 = vmatprep.subr.mxu0 0.0
    %10642 = vmatpush2.msra.mxu0 0.0
    %10643 = vmatprep.subr.mxu0 0.0
    %10644 = vmatpush2.msra.mxu0 0.0
    %10645 = vmatprep.subr.mxu0 0.0
    %10646 = vmatpush2.msra.mxu0 0.0
    %10647 = vmatprep.subr.mxu0 0.0
    %10648 = vmatpush2.msra.mxu0 0.0
    %10649 = vmatprep.subr.mxu0 0.0
    %10650 = vmatpush2.msra.mxu0 0.0
    %10651 = vmatprep.subr.mxu0 0.0
    %10652 = vmatpush2.msra.mxu0 0.0
    %10653 = vmatprep.subr.mxu0 0.0
    %10654 = vmatpush2.msra.mxu0 0.0
    %10655 = vmatprep.subr.mxu0 0.0
    %10656 = vmatpush2.msra.mxu0 0.0
    %10657 = vmatprep.subr.mxu0 0.0
    %10658 = vmatpush2.msra.mxu0 0.0
    %10659 = vmatprep.subr.mxu0 0.0
    %10660 = vmatpush2.msra.mxu0 0.0
    %10661 = vmatprep.subr.mxu0 0.0
    %10662 = vmatpush2.msra.mxu0 0.0
    %10663 = vmatprep.subr.mxu0 0.0
    %10664 = vmatpush2.msra.mxu0 0.0
    %10665 = vmatprep.subr.mxu0 0.0
    %10666 = vmatpush2.msra.mxu0 0.0
    %10667 = vmatprep.subr.mxu0 0.0
    %10668 = vmatpush2.msra.mxu0 0.0
    %10669 = vmatprep.subr.mxu0 0.0
    %10670 = vmatpush2.msra.mxu0 0.0
    %10671 = vmatprep.mubr.f32.mxu0 0.0
    %10672 = vmatmul.mubr.f32.gmra.mxu0 %v10605
    %v10673 = vpop.f32.mrf.mxu0
    %v10674 = vadd.f32 0.0, %v10673
    %v10675 = vpop.f32.mrf.mxu0
    %10676 = vdwg.mxu0
    %s10677 = scalar_lea.vmem %s20, 448
    %v10678 = vld [vmem:[%s10677] sm:$0xff]
    %v10679 = vld [vmem:[%s10677 + $0x8] sm:$0xff]
    %v10680 = vld [vmem:[%s10677 + $0x10] sm:$0xff]
    %v10681 = vld [vmem:[%s10677 + $0x18] sm:$0xff]
    %v10682 = vld [vmem:[%s10677 + $0x20] sm:$0xff]
    %v10683 = vld [vmem:[%s10677 + $0x28] sm:$0xff]
    %v10684 = vld [vmem:[%s10677 + $0x30] sm:$0xff]
    %v10685 = vld [vmem:[%s10677 + $0x38] sm:$0xff]
    %v10687 = vsel %vm240, %v10674, 0
    %10689 = vmatprep.subr.mxu0 0.0
    %10690 = vmatpush1.msra.mxu0 0.0
    %10691 = vmatprep.subr.mxu0 0.0
    %10692 = vmatpush1.msra.mxu0 0.0
    %10693 = vmatprep.subr.mxu0 0.0
    %10694 = vmatpush1.msra.mxu0 0.0
    %10695 = vmatprep.subr.mxu0 0.0
    %10696 = vmatpush1.msra.mxu0 0.0
    %10697 = vmatprep.subr.mxu0 0.0
    %10698 = vmatpush1.msra.mxu0 0.0
    %10699 = vmatprep.subr.mxu0 0.0
    %10700 = vmatpush1.msra.mxu0 0.0
    %10701 = vmatprep.subr.mxu0 0.0
    %10702 = vmatpush1.msra.mxu0 0.0
    %10703 = vmatprep.subr.mxu0 0.0
    %10704 = vmatpush1.msra.mxu0 0.0
    %10705 = vmatprep.subr.mxu0 0.0
    %10706 = vmatpush1.msra.mxu0 %v10685
    %10707 = vmatprep.subr.mxu0 0.0
    %10708 = vmatpush1.msra.mxu0 %v10684
    %10709 = vmatprep.subr.mxu0 0.0
    %10710 = vmatpush1.msra.mxu0 %v10683
    %10711 = vmatprep.subr.mxu0 0.0
    %10712 = vmatpush1.msra.mxu0 %v10682
    %10713 = vmatprep.subr.mxu0 0.0
    %10714 = vmatpush1.msra.mxu0 %v10681
    %10715 = vmatprep.subr.mxu0 0.0
    %10716 = vmatpush1.msra.mxu0 %v10680
    %10717 = vmatprep.subr.mxu0 0.0
    %10718 = vmatpush1.msra.mxu0 %v10679
    %10719 = vmatprep.subr.mxu0 0.0
    %10720 = vmatpush1.msra.mxu0 %v10678
    %10721 = vmatprep.subr.mxu0 0.0
    %10722 = vmatpush2.msra.mxu0 0.0
    %10723 = vmatprep.subr.mxu0 0.0
    %10724 = vmatpush2.msra.mxu0 0.0
    %10725 = vmatprep.subr.mxu0 0.0
    %10726 = vmatpush2.msra.mxu0 0.0
    %10727 = vmatprep.subr.mxu0 0.0
    %10728 = vmatpush2.msra.mxu0 0.0
    %10729 = vmatprep.subr.mxu0 0.0
    %10730 = vmatpush2.msra.mxu0 0.0
    %10731 = vmatprep.subr.mxu0 0.0
    %10732 = vmatpush2.msra.mxu0 0.0
    %10733 = vmatprep.subr.mxu0 0.0
    %10734 = vmatpush2.msra.mxu0 0.0
    %10735 = vmatprep.subr.mxu0 0.0
    %10736 = vmatpush2.msra.mxu0 0.0
    %10737 = vmatprep.subr.mxu0 0.0
    %10738 = vmatpush2.msra.mxu0 0.0
    %10739 = vmatprep.subr.mxu0 0.0
    %10740 = vmatpush2.msra.mxu0 0.0
    %10741 = vmatprep.subr.mxu0 0.0
    %10742 = vmatpush2.msra.mxu0 0.0
    %10743 = vmatprep.subr.mxu0 0.0
    %10744 = vmatpush2.msra.mxu0 0.0
    %10745 = vmatprep.subr.mxu0 0.0
    %10746 = vmatpush2.msra.mxu0 0.0
    %10747 = vmatprep.subr.mxu0 0.0
    %10748 = vmatpush2.msra.mxu0 0.0
    %10749 = vmatprep.subr.mxu0 0.0
    %10750 = vmatpush2.msra.mxu0 0.0
    %10751 = vmatprep.subr.mxu0 0.0
    %10752 = vmatpush2.msra.mxu0 0.0
    %10753 = vmatprep.mubr.f32.mxu0 0.0
    %10754 = vmatmul.mubr.f32.gmra.mxu0 %v10687
    %v10755 = vpop.f32.mrf.mxu0
    %v10756 = vadd.f32 0.0, %v10755
    %v10757 = vpop.f32.mrf.mxu0
    %10758 = vdwg.mxu0
    %v10759 = vadd.f32 %v10601, %v10756
    %v10760 = vld [vmem:[%s22] sm:$0x1]
    %v10761 = vld [vmem:[%s23] sm:$0x1]
    %vm10762 = vcmask 517120
    %v10763 = vsel %vm10762, %v10759, 0.0
    %10764 = vadd.xlane.f32.xlu0 %v10763
    %v10765 = vpop.xlane.xlu0 %10764
    %v10766 = vmul.f32 %v10765, %v4887
    %v10767 = vsub.f32 %v10759, %v10766
    %v10768 = vmul.f32 %v10767, %v10767
    %v10769 = vsel %vm10762, %v10768, 0.0
    %10770 = vadd.xlane.f32.xlu0 %v10769
    %v10771 = vpop.xlane.xlu0 %10770
    %v10772 = vmul.f32 %v10771, %v4887
    %v10773 = vadd.f32 %v10772, 1e-05
    %v10774 = vrsqrt.pop %v10773
    %v10775 = vmul.f32 %v10767, %v10774
    %v10777 = vlaneseq
    %v10778 = vshrl.u32 %v10777, 7
    %v10779 = vsub.s32 0, %v10778
    %v10780 = vrot.slane %v10760, %v10779
    %v10782 = vmul.f32 %v10775, %v10780
    %v10784 = vlaneseq
    %v10785 = vshrl.u32 %v10784, 7
    %v10786 = vsub.s32 0, %v10785
    %v10787 = vrot.slane %v10761, %v10786
    %v10789 = vadd.f32 %v10782, %v10787
    %v10790 = vmax.f32 %v10789, 0.0
    %v10791 = vmin.f32 %v10790, 6.0
    %v10792 = vld [vmem:[%s24] sm:$0xff]
    %v10793 = vld [vmem:[%s24 + $0x8] sm:$0xff]
    %v10794 = vld [vmem:[%s24 + $0x10] sm:$0xff]
    %v10795 = vld [vmem:[%s24 + $0x18] sm:$0xff]
    %v10796 = vld [vmem:[%s24 + $0x20] sm:$0xff]
    %v10797 = vld [vmem:[%s24 + $0x28] sm:$0xff]
    %v10798 = vld [vmem:[%s24 + $0x30] sm:$0xff]
    %v10799 = vld [vmem:[%s24 + $0x38] sm:$0xff]
    %v10800 = vld [vmem:[%s25] sm:$0x1]
    %v10802 = vlaneseq
    %v10803 = vshrl.u32 %v10802, 7
    %v10804 = vsub.s32 0, %v10803
    %v10805 = vrot.slane %v10800, %v10804
    %v10808 = vsel %vm240, %v10791, 0
    %10810 = vmatprep.subr.mxu0 0.0
    %10811 = vmatpush1.msra.mxu0 0.0
    %10812 = vmatprep.subr.mxu0 0.0
    %10813 = vmatpush1.msra.mxu0 0.0
    %10814 = vmatprep.subr.mxu0 0.0
    %10815 = vmatpush1.msra.mxu0 0.0
    %10816 = vmatprep.subr.mxu0 0.0
    %10817 = vmatpush1.msra.mxu0 0.0
    %10818 = vmatprep.subr.mxu0 0.0
    %10819 = vmatpush1.msra.mxu0 0.0
    %10820 = vmatprep.subr.mxu0 0.0
    %10821 = vmatpush1.msra.mxu0 0.0
    %10822 = vmatprep.subr.mxu0 0.0
    %10823 = vmatpush1.msra.mxu0 0.0
    %10824 = vmatprep.subr.mxu0 0.0
    %10825 = vmatpush1.msra.mxu0 0.0
    %10826 = vmatprep.subr.mxu0 0.0
    %10827 = vmatpush1.msra.mxu0 %v10799
    %10828 = vmatprep.subr.mxu0 0.0
    %10829 = vmatpush1.msra.mxu0 %v10798
    %10830 = vmatprep.subr.mxu0 0.0
    %10831 = vmatpush1.msra.mxu0 %v10797
    %10832 = vmatprep.subr.mxu0 0.0
    %10833 = vmatpush1.msra.mxu0 %v10796
    %10834 = vmatprep.subr.mxu0 0.0
    %10835 = vmatpush1.msra.mxu0 %v10795
    %10836 = vmatprep.subr.mxu0 0.0
    %10837 = vmatpush1.msra.mxu0 %v10794
    %10838 = vmatprep.subr.mxu0 0.0
    %10839 = vmatpush1.msra.mxu0 %v10793
    %10840 = vmatprep.subr.mxu0 0.0
    %10841 = vmatpush1.msra.mxu0 %v10792
    %10842 = vmatprep.subr.mxu0 0.0
    %10843 = vmatpush2.msra.mxu0 0.0
    %10844 = vmatprep.subr.mxu0 0.0
    %10845 = vmatpush2.msra.mxu0 0.0
    %10846 = vmatprep.subr.mxu0 0.0
    %10847 = vmatpush2.msra.mxu0 0.0
    %10848 = vmatprep.subr.mxu0 0.0
    %10849 = vmatpush2.msra.mxu0 0.0
    %10850 = vmatprep.subr.mxu0 0.0
    %10851 = vmatpush2.msra.mxu0 0.0
    %10852 = vmatprep.subr.mxu0 0.0
    %10853 = vmatpush2.msra.mxu0 0.0
    %10854 = vmatprep.subr.mxu0 0.0
    %10855 = vmatpush2.msra.mxu0 0.0
    %10856 = vmatprep.subr.mxu0 0.0
    %10857 = vmatpush2.msra.mxu0 0.0
    %10858 = vmatprep.subr.mxu0 0.0
    %10859 = vmatpush2.msra.mxu0 0.0
    %10860 = vmatprep.subr.mxu0 0.0
    %10861 = vmatpush2.msra.mxu0 0.0
    %10862 = vmatprep.subr.mxu0 0.0
    %10863 = vmatpush2.msra.mxu0 0.0
    %10864 = vmatprep.subr.mxu0 0.0
    %10865 = vmatpush2.msra.mxu0 0.0
    %10866 = vmatprep.subr.mxu0 0.0
    %10867 = vmatpush2.msra.mxu0 0.0
    %10868 = vmatprep.subr.mxu0 0.0
    %10869 = vmatpush2.msra.mxu0 0.0
    %10870 = vmatprep.subr.mxu0 0.0
    %10871 = vmatpush2.msra.mxu0 0.0
    %10872 = vmatprep.subr.mxu0 0.0
    %10873 = vmatpush2.msra.mxu0 0.0
    %10874 = vmatprep.mubr.f32.mxu0 0.0
    %10875 = vmatmul.mubr.f32.gmra.mxu0 %v10808
    %v10876 = vpop.f32.mrf.mxu0
    %v10877 = vadd.f32 %v10805, %v10876
    %v10878 = vpop.f32.mrf.mxu0
    %10879 = vdwg.mxu0
    %vm10880 = vcmask 9216
    %10881 = vst.msk [vmem:[#allocation2] sm:$0x3] %vm10880, %v10877
    // Predicated region
    $region106: #{transformer_encoder.1} parent=1 // pred_check
      _
    $region107: #{transformer_encoder.1} parent=1 // pred_check_branch
      %10883 = sbr.rel (0) target = $region109
    $region108: #{transformer_encoder.1} parent=1 // pred_region
      %s10885 = ssub.s32 32, 32
      %10886 = vsyncadd [#allocation3], %s10885
      %s10888 = sshll.u32 [#allocation2], 4
      %s10889 = int_to_ptr.vmem [resolvable:$true] %s10888
      %10891 = dma.vmem_to_hbm [thread:$0]  %s10889, 32, %s26, [#allocation3]
    $region109: #{transformer_encoder.1} parent=1 // pred_fallthru
      _
    // Predicated region
    $region110: #{transformer_encoder.1} parent=1 // pred_check
      _
    $region111: #{transformer_encoder.1} parent=1 // pred_check_branch
      %10893 = sbr.rel (0) target = $region113
    $region112: #{transformer_encoder.1} parent=1 // pred_region
      %10894 = dma.done [#allocation3], 32
    $region113: #{transformer_encoder.1} parent=1 // pred_fallthru
      _
    %10895 = vsyncpa [#allocation3], 1

</llo_original>
